<compile_context>
chip_gen: v5e
topology: v5e:2x2
jax: 0.10.0
libtpu: 0.0.40
codegen_flags: <defaults>
</compile_context>

<pallas_src>
import jax
import jax.numpy as jnp
from jax.experimental import pallas as pl
from jax.experimental.pallas import tpu as pltpu

CH = 9 ** 2 * 3 + 7 ** 2 * 3           # 390
HID = CH * 2                            # 780
OUT = 6
EPS = 1e-5                              # PyTorch BatchNorm1d default eps


def _round_up(n, m):
    return ((n + m - 1) // m) * m


# Lane (last-dim) padding: 128.  K (row) padding for the bf16 weight slabs
# shipped from HBM: 16 (bf16 sublane tile); the rest of the K padding up to
# 128 lives only as zeroed VMEM scratch rows inside the kernel.
CH_P = _round_up(CH, 128)    # 512
HID_P = _round_up(HID, 128)  # 896
OUT_P = _round_up(OUT, 128)  # 128
CH_K = _round_up(CH, 16)     # 400   rows shipped for W1 / W4
HID_K = _round_up(HID, 16)   # 784   rows shipped for W2 / W3


def _bn_relu(h, gamma, beta):
    # BatchNorm1d (training mode): batch mean + *biased* batch variance.
    # Zero-padded lane columns stay exactly zero: (0-0)*rsqrt(eps)*0 + 0 -> 0.
    # TODO(synk): the module's training-time running_mean/var update is a
    # stateful side effect with no output; not reproduced here.
    mean = jnp.mean(h, axis=0, keepdims=True)
    var = jnp.mean((h - mean) ** 2, axis=0, keepdims=True)
    hn = (h - mean) * jax.lax.rsqrt(var + EPS)
    return jnp.maximum(hn * gamma + beta, 0.0)


def locnet_kernel(x_ref, vec_ref,
                  w1_hbm, w2_hbm, w3_hbm, w4_hbm,
                  o_ref,
                  w1_vm, w2_vm, w3_vm, w4_vm, sem):
    # Issue every weight DMA immediately, in layer order (same DMA queue =>
    # serviced in order, so layer 1's weight arrives first).  Later layers'
    # transfers overlap earlier layers' matmul + BN/ReLU compute.
    c1 = pltpu.make_async_copy(w1_hbm, w1_vm.at[0:CH_K, :], sem.at[0]); c1.start()
    c2 = pltpu.make_async_copy(w2_hbm, w2_vm.at[0:HID_K, :], sem.at[1]); c2.start()
    c3 = pltpu.make_async_copy(w3_hbm, w3_vm.at[0:HID_K, :], sem.at[2]); c3.start()
    c4 = pltpu.make_async_copy(w4_hbm, w4_vm.at[0:CH_K, :], sem.at[3]); c4.start()

    # Zero-fill the K-padding tail rows (disjoint from the DMA destinations)
    # while the copies are in flight, so uninitialized VMEM can never inject
    # NaN/Inf into the padded contraction rows.  The matching activation
    # columns are zero, so zeroed rows contribute nothing to the dots.
    w1_vm[CH_K:, :] = jnp.zeros((CH_P - CH_K, HID_P), jnp.bfloat16)
    w2_vm[HID_K:, :] = jnp.zeros((HID_P - HID_K, HID_P), jnp.bfloat16)
    w3_vm[HID_K:, :] = jnp.zeros((HID_P - HID_K, CH_P), jnp.bfloat16)
    w4_vm[CH_K:, :] = jnp.zeros((CH_P - CH_K, OUT_P), jnp.bfloat16)

    # One packed slab of all per-column vectors; static row / lane slices.
    vecs = vec_ref[...]                         # (8, HID_P) f32
    g1, be1 = vecs[0:1, :], vecs[1:2, :]
    g2, be2 = vecs[2:3, :], vecs[3:4, :]
    g3, be3 = vecs[4:5, :CH_P], vecs[5:6, :CH_P]
    b4 = vecs[6:7, :OUT_P]

    x = x_ref[...].astype(jnp.bfloat16)         # (B, CH_P) bf16

    # Layer 1: Linear (bias cancels in training-mode BN) + BN + ReLU.
    c1.wait()
    h = jnp.dot(x, w1_vm[...], preferred_element_type=jnp.float32)
    h = _bn_relu(h, g1, be1)

    # Layer 2
    c2.wait()
    h = jnp.dot(h.astype(jnp.bfloat16), w2_vm[...],
                preferred_element_type=jnp.float32)
    h = _bn_relu(h, g2, be2)

    # Layer 3
    c3.wait()
    h = jnp.dot(h.astype(jnp.bfloat16), w3_vm[...],
                preferred_element_type=jnp.float32)
    h = _bn_relu(h, g3, be3)

    # Layer 4: Linear with bias, no BN / ReLU.
    c4.wait()
    h = jnp.dot(h.astype(jnp.bfloat16), w4_vm[...],
                preferred_element_type=jnp.float32)
    o_ref[...] = (h + b4).astype(o_ref.dtype)


def locnet_forward(x, p):
    """x: (B, CH) f32; p: packed params from pack_params."""
    B = x.shape[0]
    x_pad = jnp.pad(x.astype(jnp.float32), ((0, 0), (0, CH_P - CH)))

    vmem = pl.BlockSpec(memory_space=pltpu.MemorySpace.VMEM)
    hbm = pl.BlockSpec(memory_space=pl.ANY)

    flops = 2 * B * (CH_K * HID_P + HID_K * HID_P + HID_K * CH_P + CH_K * OUT_P)
    w_bytes = 2 * (CH_K * HID_P + HID_K * HID_P + HID_K * CH_P + CH_K * OUT_P)
    io_bytes = 4 * (B * CH_P + B * OUT_P + 8 * HID_P)

    # TODO(synk): for real throughput, batch many LocNet calls and add a
    # "parallel" batch grid axis with a two-pass (sum/sumsq) BatchNorm; at
    # B=8 a single all-resident invocation is both correct and fastest.
    out_pad = pl.pallas_call(
        locnet_kernel,
        out_shape=jax.ShapeDtypeStruct((B, OUT_P), jnp.float32),
        in_specs=[vmem, vmem, hbm, hbm, hbm, hbm],
        out_specs=vmem,
        scratch_shapes=[
            pltpu.VMEM((CH_P, HID_P), jnp.bfloat16),    # W1 (rows >= CH_K zeroed)
            pltpu.VMEM((HID_P, HID_P), jnp.bfloat16),   # W2 (rows >= HID_K zeroed)
            pltpu.VMEM((HID_P, CH_P), jnp.bfloat16),    # W3 (rows >= HID_K zeroed)
            pltpu.VMEM((CH_P, OUT_P), jnp.bfloat16),    # W4 (rows >= CH_K zeroed)
            pltpu.SemaphoreType.DMA((4,)),
        ],
        compiler_params=pltpu.CompilerParams(
            vmem_limit_bytes=12 * 1024 * 1024),
        cost_estimate=pl.CostEstimate(
            flops=flops,
            transcendentals=2 * HID_P + CH_P,
            bytes_accessed=w_bytes + io_bytes),
    )(x_pad, p["vecs"], p["w1"], p["w2"], p["w3"], p["w4"])

    return out_pad[:, :OUT]


def init_params(key):
    """Raw f32 parameters in PyTorch semantics (weights stored as (in, out))."""
    keys = jax.random.split(key, 8)

    def linear(kw, kb, fan_in, fan_out):
        w = jax.random.normal(kw, (fan_in, fan_out), jnp.float32) * 0.02
        b = jax.random.normal(kb, (1, fan_out), jnp.float32) * 0.01
        return w, b

    w1, b1 = linear(keys[0], keys[1], CH, HID)
    w2, b2 = linear(keys[2], keys[3], HID, HID)
    w3, b3 = linear(keys[4], keys[5], HID, CH)
    w4, b4 = linear(keys[6], keys[7], CH, OUT)

    def bn(n):
        return jnp.ones((1, n), jnp.float32), jnp.zeros((1, n), jnp.float32)

    g1, be1 = bn(HID)
    g2, be2 = bn(HID)
    g3, be3 = bn(CH)

    return dict(w1=w1, b1=b1, w2=w2, b2=b2, w3=w3, b3=b3, w4=w4, b4=b4,
                g1=g1, be1=be1, g2=g2, be2=be2, g3=g3, be3=be3)


def pack_params(raw):
    """One-time host-side packing:
      * weights -> bf16, lane dim padded to 128, K (row) dim padded only to 16;
      * the 7 per-column f32 vectors -> one (8, HID_P) slab (single DMA).
    b1/b2/b3 are intentionally NOT packed: they cancel exactly inside
    training-mode BatchNorm (valid only while BN uses batch statistics)."""
    def pad_w(w, rows, cols):
        return jnp.pad(w, ((0, rows - w.shape[0]), (0, cols - w.shape[1]))
                       ).astype(jnp.bfloat16)

    def pad_row(v):
        return jnp.pad(v, ((0, 0), (0, HID_P - v.shape[1])))

    vecs = jnp.concatenate([
        pad_row(raw["g1"]), pad_row(raw["be1"]),
        pad_row(raw["g2"]), pad_row(raw["be2"]),
        pad_row(raw["g3"]), pad_row(raw["be3"]),
        pad_row(raw["b4"]),
        jnp.zeros((1, HID_P), jnp.float32),
    ], axis=0).astype(jnp.float32)                       # (8, HID_P)

    # Padded gamma/beta lanes must be exactly zero so padded activation
    # columns stay zero through BN/ReLU (the kernel relies on this).
    assert bool(jnp.all(vecs[0:6, HID:] == 0.0))
    assert bool(jnp.all(vecs[4:6, CH:] == 0.0))

    return {
        "w1": pad_w(raw["w1"], CH_K, HID_P),
        "w2": pad_w(raw["w2"], HID_K, HID_P),
        "w3": pad_w(raw["w3"], HID_K, CH_P),
        "w4": pad_w(raw["w4"], CH_K, OUT_P),
        "vecs": vecs,
    }


def reference_forward(x, raw):
    """Pure-JAX reference with the original module semantics (incl. b1/b2/b3).
    It mirrors the kernel's precision policy (bf16 weights & activations into
    the MXU, f32 accumulation, f32 BN/ReLU) so the comparison isolates the
    structural transformations (bias cancellation, padding, fusion)."""
    def dot(a, w):
        return jnp.dot(a.astype(jnp.bfloat16), w.astype(jnp.bfloat16),
                       preferred_element_type=jnp.float32)

    def bn_relu(h, g, be):
        m = jnp.mean(h, axis=0, keepdims=True)
        v = jnp.mean((h - m) ** 2, axis=0, keepdims=True)
        return jnp.maximum((h - m) / jnp.sqrt(v + EPS) * g + be, 0.0)

    h = dot(x, raw["w1"]) + raw["b1"]
    h = bn_relu(h, raw["g1"], raw["be1"])
    h = dot(h, raw["w2"]) + raw["b2"]
    h = bn_relu(h, raw["g2"], raw["be2"])
    h = dot(h, raw["w3"]) + raw["b3"]
    h = bn_relu(h, raw["g3"], raw["be3"])
    return dot(h, raw["w4"]) + raw["b4"]


if __name__ == "__main__":
    key = jax.random.PRNGKey(0)
    kx, kp = jax.random.split(key)

    # BatchNorm1d in training mode needs batch > 1; 8 = one f32 sublane group.
    B = 8
    x = jax.random.normal(kx, (B, CH), jnp.float32)

    raw = init_params(kp)
    packed = pack_params(raw)

    out = locnet_forward(x, packed)
    out = jax.block_until_ready(out)

    ref = reference_forward(x, raw)
    assert out.shape == (B, OUT)
    assert jnp.allclose(out, ref, atol=2e-3, rtol=2e-3), (
        "max abs err = %g" % float(jnp.max(jnp.abs(out - ref))))

    print("KERNEL_OK")
</pallas_src>

<mosaic_0001>
module attributes {stable_mosaic.version = 11 : i64} {
  func.func @locnet_kernel(%arg0: memref<8x512xf32, #tpu.memory_space<vmem>>, %arg1: memref<8x896xf32, #tpu.memory_space<vmem>>, %arg2: memref<400x896xbf16, #tpu.memory_space<any>>, %arg3: memref<784x896xbf16, #tpu.memory_space<any>>, %arg4: memref<784x512xbf16, #tpu.memory_space<any>>, %arg5: memref<400x128xbf16, #tpu.memory_space<any>>, %arg6: memref<8x128xf32, #tpu.memory_space<vmem>>, %arg7: memref<512x896xbf16, #tpu.memory_space<vmem>>, %arg8: memref<896x896xbf16, #tpu.memory_space<vmem>>, %arg9: memref<896x512xbf16, #tpu.memory_space<vmem>>, %arg10: memref<512x128xbf16, #tpu.memory_space<vmem>>, %arg11: memref<4x!tpu.dma_semaphore, #tpu.memory_space<semaphore_mem>>) attributes {dimension_semantics = [], scalar_prefetch = 0 : i64, scratch_operands = 5 : i64, tpu.core_type = #tpu.core_type<tc>} {
    %c0_i32 = arith.constant 0 : i32
    %c0_i32_0 = arith.constant 0 : i32
    %c0_i32_1 = arith.constant 0 : i32
    %0 = tpu.memref_slice %arg7[%c0_i32_0, %c0_i32_1] : memref<512x896xbf16, #tpu.memory_space<vmem>> -> memref<400x896xbf16, #tpu.memory_space<vmem>>
    %1 = tpu.memref_slice %arg11[%c0_i32] : memref<4x!tpu.dma_semaphore, #tpu.memory_space<semaphore_mem>> -> memref<1x!tpu.dma_semaphore, #tpu.memory_space<semaphore_mem>>
    %2 = tpu.memref_squeeze %1 : memref<1x!tpu.dma_semaphore, #tpu.memory_space<semaphore_mem>> -> memref<!tpu.dma_semaphore, #tpu.memory_space<semaphore_mem>>
    tpu.enqueue_dma source(%arg2 : memref<400x896xbf16, #tpu.memory_space<any>>) target(%0 : memref<400x896xbf16, #tpu.memory_space<vmem>>) target_semaphore(%2 : memref<!tpu.dma_semaphore, #tpu.memory_space<semaphore_mem>>)
    %c1_i32 = arith.constant 1 : i32
    %c0_i32_2 = arith.constant 0 : i32
    %c0_i32_3 = arith.constant 0 : i32
    %3 = tpu.memref_slice %arg8[%c0_i32_2, %c0_i32_3] : memref<896x896xbf16, #tpu.memory_space<vmem>> -> memref<784x896xbf16, #tpu.memory_space<vmem>>
    %4 = tpu.memref_slice %arg11[%c1_i32] : memref<4x!tpu.dma_semaphore, #tpu.memory_space<semaphore_mem>> -> memref<1x!tpu.dma_semaphore, #tpu.memory_space<semaphore_mem>>
    %5 = tpu.memref_squeeze %4 : memref<1x!tpu.dma_semaphore, #tpu.memory_space<semaphore_mem>> -> memref<!tpu.dma_semaphore, #tpu.memory_space<semaphore_mem>>
    tpu.enqueue_dma source(%arg3 : memref<784x896xbf16, #tpu.memory_space<any>>) target(%3 : memref<784x896xbf16, #tpu.memory_space<vmem>>) target_semaphore(%5 : memref<!tpu.dma_semaphore, #tpu.memory_space<semaphore_mem>>)
    %c2_i32 = arith.constant 2 : i32
    %c0_i32_4 = arith.constant 0 : i32
    %c0_i32_5 = arith.constant 0 : i32
    %6 = tpu.memref_slice %arg9[%c0_i32_4, %c0_i32_5] : memref<896x512xbf16, #tpu.memory_space<vmem>> -> memref<784x512xbf16, #tpu.memory_space<vmem>>
    %7 = tpu.memref_slice %arg11[%c2_i32] : memref<4x!tpu.dma_semaphore, #tpu.memory_space<semaphore_mem>> -> memref<1x!tpu.dma_semaphore, #tpu.memory_space<semaphore_mem>>
    %8 = tpu.memref_squeeze %7 : memref<1x!tpu.dma_semaphore, #tpu.memory_space<semaphore_mem>> -> memref<!tpu.dma_semaphore, #tpu.memory_space<semaphore_mem>>
    tpu.enqueue_dma source(%arg4 : memref<784x512xbf16, #tpu.memory_space<any>>) target(%6 : memref<784x512xbf16, #tpu.memory_space<vmem>>) target_semaphore(%8 : memref<!tpu.dma_semaphore, #tpu.memory_space<semaphore_mem>>)
    %c3_i32 = arith.constant 3 : i32
    %c0_i32_6 = arith.constant 0 : i32
    %c0_i32_7 = arith.constant 0 : i32
    %9 = tpu.memref_slice %arg10[%c0_i32_6, %c0_i32_7] : memref<512x128xbf16, #tpu.memory_space<vmem>> -> memref<400x128xbf16, #tpu.memory_space<vmem>>
    %10 = tpu.memref_slice %arg11[%c3_i32] : memref<4x!tpu.dma_semaphore, #tpu.memory_space<semaphore_mem>> -> memref<1x!tpu.dma_semaphore, #tpu.memory_space<semaphore_mem>>
    %11 = tpu.memref_squeeze %10 : memref<1x!tpu.dma_semaphore, #tpu.memory_space<semaphore_mem>> -> memref<!tpu.dma_semaphore, #tpu.memory_space<semaphore_mem>>
    tpu.enqueue_dma source(%arg5 : memref<400x128xbf16, #tpu.memory_space<any>>) target(%9 : memref<400x128xbf16, #tpu.memory_space<vmem>>) target_semaphore(%11 : memref<!tpu.dma_semaphore, #tpu.memory_space<semaphore_mem>>)
    %cst = arith.constant 0.000000e+00 : bf16
    %12 = vector.broadcast %cst : bf16 to vector<112x896xbf16>
    %c400 = arith.constant 400 : index
    %c0 = arith.constant 0 : index
    %13 = vector.load %arg7[%c400, %c0] : memref<512x896xbf16, #tpu.memory_space<vmem>>, vector<112x896xbf16>
    tpu.vector_store %arg7[%c400, %c0], %12 {strides = array<i32>} : memref<512x896xbf16, #tpu.memory_space<vmem>>, vector<112x896xbf16>,
    %cst_8 = arith.constant 0.000000e+00 : bf16
    %14 = vector.broadcast %cst_8 : bf16 to vector<112x896xbf16>
    %c784 = arith.constant 784 : index
    %c0_9 = arith.constant 0 : index
    %15 = vector.load %arg8[%c784, %c0_9] : memref<896x896xbf16, #tpu.memory_space<vmem>>, vector<112x896xbf16>
    tpu.vector_store %arg8[%c784, %c0_9], %14 {strides = array<i32>} : memref<896x896xbf16, #tpu.memory_space<vmem>>, vector<112x896xbf16>,
    %cst_10 = arith.constant 0.000000e+00 : bf16
    %16 = vector.broadcast %cst_10 : bf16 to vector<112x512xbf16>
    %c784_11 = arith.constant 784 : index
    %c0_12 = arith.constant 0 : index
    %17 = vector.load %arg9[%c784_11, %c0_12] : memref<896x512xbf16, #tpu.memory_space<vmem>>, vector<112x512xbf16>
    tpu.vector_store %arg9[%c784_11, %c0_12], %16 {strides = array<i32>} : memref<896x512xbf16, #tpu.memory_space<vmem>>, vector<112x512xbf16>,
    %cst_13 = arith.constant 0.000000e+00 : bf16
    %18 = vector.broadcast %cst_13 : bf16 to vector<112x128xbf16>
    %c400_14 = arith.constant 400 : index
    %c0_15 = arith.constant 0 : index
    %19 = vector.load %arg10[%c400_14, %c0_15] : memref<512x128xbf16, #tpu.memory_space<vmem>>, vector<112x128xbf16>
    tpu.vector_store %arg10[%c400_14, %c0_15], %18 {strides = array<i32>} : memref<512x128xbf16, #tpu.memory_space<vmem>>, vector<112x128xbf16>,
    %c0_16 = arith.constant 0 : index
    %c0_17 = arith.constant 0 : index
    %20 = vector.load %arg1[%c0_16, %c0_17] : memref<8x896xf32, #tpu.memory_space<vmem>>, vector<8x896xf32>
    %21 = vector.extract_strided_slice %20 {offsets = [0, 0], sizes = [1, 896], strides = [1, 1]} : vector<8x896xf32> to vector<1x896xf32>
    %22 = vector.extract_strided_slice %20 {offsets = [1, 0], sizes = [1, 896], strides = [1, 1]} : vector<8x896xf32> to vector<1x896xf32>
    %23 = vector.extract_strided_slice %20 {offsets = [2, 0], sizes = [1, 896], strides = [1, 1]} : vector<8x896xf32> to vector<1x896xf32>
    %24 = vector.extract_strided_slice %20 {offsets = [3, 0], sizes = [1, 896], strides = [1, 1]} : vector<8x896xf32> to vector<1x896xf32>
    %25 = vector.extract_strided_slice %20 {offsets = [4, 0], sizes = [1, 512], strides = [1, 1]} : vector<8x896xf32> to vector<1x512xf32>
    %26 = vector.extract_strided_slice %20 {offsets = [5, 0], sizes = [1, 512], strides = [1, 1]} : vector<8x896xf32> to vector<1x512xf32>
    %27 = vector.extract_strided_slice %20 {offsets = [6, 0], sizes = [1, 128], strides = [1, 1]} : vector<8x896xf32> to vector<1x128xf32>
    %c0_18 = arith.constant 0 : index
    %c0_19 = arith.constant 0 : index
    %28 = vector.load %arg0[%c0_18, %c0_19] : memref<8x512xf32, #tpu.memory_space<vmem>>, vector<8x512xf32>
    %29 = arith.truncf %28 : vector<8x512xf32> to vector<8x512xbf16>
    %c0_i32_20 = arith.constant 0 : i32
    %c0_i32_21 = arith.constant 0 : i32
    %c0_i32_22 = arith.constant 0 : i32
    %30 = tpu.memref_slice %arg7[%c0_i32_21, %c0_i32_22] : memref<512x896xbf16, #tpu.memory_space<vmem>> -> memref<400x896xbf16, #tpu.memory_space<vmem>>
    %31 = tpu.memref_slice %arg11[%c0_i32_20] : memref<4x!tpu.dma_semaphore, #tpu.memory_space<semaphore_mem>> -> memref<1x!tpu.dma_semaphore, #tpu.memory_space<semaphore_mem>>
    %32 = tpu.memref_squeeze %31 : memref<1x!tpu.dma_semaphore, #tpu.memory_space<semaphore_mem>> -> memref<!tpu.dma_semaphore, #tpu.memory_space<semaphore_mem>>
    tpu.wait_dma2 semaphore(%32 : memref<!tpu.dma_semaphore, #tpu.memory_space<semaphore_mem>>) src(%arg2 : memref<400x896xbf16, #tpu.memory_space<any>>) dst(%30 : memref<400x896xbf16, #tpu.memory_space<vmem>>)
    %c0_23 = arith.constant 0 : index
    %c0_24 = arith.constant 0 : index
    %33 = vector.load %arg7[%c0_23, %c0_24] : memref<512x896xbf16, #tpu.memory_space<vmem>>, vector<512x896xbf16>
    %cst_25 = arith.constant dense<0.000000e+00> : vector<8x896xf32>
    %34 = tpu.matmul %29, %33, %cst_25 {dimension_numbers = #tpu.dot_dimension_numbers<[1], [0], [0], [1], [0, 0, 1, 1], [], []>} : vector<8x512xbf16>, vector<512x896xbf16>, vector<8x896xf32> -> vector<8x896xf32>
    %cst_26 = arith.constant dense<0.000000e+00> : vector<896xf32>
    %35 = vector.multi_reduction <add>, %34, %cst_26 [0] : vector<8x896xf32> to vector<896xf32>
    %36 = vector.shape_cast %35 : vector<896xf32> to vector<1x896xf32>
    %cst_27 = arith.constant 8.000000e+00 : f32
    %37 = vector.broadcast %cst_27 : f32 to vector<1x896xf32>
    %38 = arith.divf %36, %37 : vector<1x896xf32>
    %39 = vector.broadcast %38 : vector<1x896xf32> to vector<8x896xf32>
    %40 = arith.subf %34, %39 : vector<8x896xf32>
    %41 = arith.mulf %40, %40 : vector<8x896xf32>
    %cst_28 = arith.constant dense<0.000000e+00> : vector<896xf32>
    %42 = vector.multi_reduction <add>, %41, %cst_28 [0] : vector<8x896xf32> to vector<896xf32>
    %43 = vector.shape_cast %42 : vector<896xf32> to vector<1x896xf32>
    %cst_29 = arith.constant 8.000000e+00 : f32
    %44 = vector.broadcast %cst_29 : f32 to vector<1x896xf32>
    %45 = arith.divf %43, %44 : vector<1x896xf32>
    %46 = vector.broadcast %38 : vector<1x896xf32> to vector<8x896xf32>
    %47 = arith.subf %34, %46 : vector<8x896xf32>
    %cst_30 = arith.constant 9.99999974E-6 : f32
    %48 = vector.broadcast %cst_30 : f32 to vector<1x896xf32>
    %49 = arith.addf %45, %48 : vector<1x896xf32>
    %50 = math.rsqrt %49 : vector<1x896xf32>
    %51 = vector.broadcast %50 : vector<1x896xf32> to vector<8x896xf32>
    %52 = arith.mulf %47, %51 : vector<8x896xf32>
    %53 = vector.broadcast %21 : vector<1x896xf32> to vector<8x896xf32>
    %54 = arith.mulf %52, %53 : vector<8x896xf32>
    %55 = vector.broadcast %22 : vector<1x896xf32> to vector<8x896xf32>
    %56 = arith.addf %54, %55 : vector<8x896xf32>
    %cst_31 = arith.constant 0.000000e+00 : f32
    %57 = vector.broadcast %cst_31 : f32 to vector<8x896xf32>
    %58 = arith.maximumf %56, %57 : vector<8x896xf32>
    %c1_i32_32 = arith.constant 1 : i32
    %c0_i32_33 = arith.constant 0 : i32
    %c0_i32_34 = arith.constant 0 : i32
    %59 = tpu.memref_slice %arg8[%c0_i32_33, %c0_i32_34] : memref<896x896xbf16, #tpu.memory_space<vmem>> -> memref<784x896xbf16, #tpu.memory_space<vmem>>
    %60 = tpu.memref_slice %arg11[%c1_i32_32] : memref<4x!tpu.dma_semaphore, #tpu.memory_space<semaphore_mem>> -> memref<1x!tpu.dma_semaphore, #tpu.memory_space<semaphore_mem>>
    %61 = tpu.memref_squeeze %60 : memref<1x!tpu.dma_semaphore, #tpu.memory_space<semaphore_mem>> -> memref<!tpu.dma_semaphore, #tpu.memory_space<semaphore_mem>>
    tpu.wait_dma2 semaphore(%61 : memref<!tpu.dma_semaphore, #tpu.memory_space<semaphore_mem>>) src(%arg3 : memref<784x896xbf16, #tpu.memory_space<any>>) dst(%59 : memref<784x896xbf16, #tpu.memory_space<vmem>>)
    %62 = arith.truncf %58 : vector<8x896xf32> to vector<8x896xbf16>
    %c0_35 = arith.constant 0 : index
    %c0_36 = arith.constant 0 : index
    %63 = vector.load %arg8[%c0_35, %c0_36] : memref<896x896xbf16, #tpu.memory_space<vmem>>, vector<896x896xbf16>
    %cst_37 = arith.constant dense<0.000000e+00> : vector<8x896xf32>
    %64 = tpu.matmul %62, %63, %cst_37 {dimension_numbers = #tpu.dot_dimension_numbers<[1], [0], [0], [1], [0, 0, 1, 1], [], []>} : vector<8x896xbf16>, vector<896x896xbf16>, vector<8x896xf32> -> vector<8x896xf32>
    %cst_38 = arith.constant dense<0.000000e+00> : vector<896xf32>
    %65 = vector.multi_reduction <add>, %64, %cst_38 [0] : vector<8x896xf32> to vector<896xf32>
    %66 = vector.shape_cast %65 : vector<896xf32> to vector<1x896xf32>
    %cst_39 = arith.constant 8.000000e+00 : f32
    %67 = vector.broadcast %cst_39 : f32 to vector<1x896xf32>
    %68 = arith.divf %66, %67 : vector<1x896xf32>
    %69 = vector.broadcast %68 : vector<1x896xf32> to vector<8x896xf32>
    %70 = arith.subf %64, %69 : vector<8x896xf32>
    %71 = arith.mulf %70, %70 : vector<8x896xf32>
    %cst_40 = arith.constant dense<0.000000e+00> : vector<896xf32>
    %72 = vector.multi_reduction <add>, %71, %cst_40 [0] : vector<8x896xf32> to vector<896xf32>
    %73 = vector.shape_cast %72 : vector<896xf32> to vector<1x896xf32>
    %cst_41 = arith.constant 8.000000e+00 : f32
    %74 = vector.broadcast %cst_41 : f32 to vector<1x896xf32>
    %75 = arith.divf %73, %74 : vector<1x896xf32>
    %76 = vector.broadcast %68 : vector<1x896xf32> to vector<8x896xf32>
    %77 = arith.subf %64, %76 : vector<8x896xf32>
    %cst_42 = arith.constant 9.99999974E-6 : f32
    %78 = vector.broadcast %cst_42 : f32 to vector<1x896xf32>
    %79 = arith.addf %75, %78 : vector<1x896xf32>
    %80 = math.rsqrt %79 : vector<1x896xf32>
    %81 = vector.broadcast %80 : vector<1x896xf32> to vector<8x896xf32>
    %82 = arith.mulf %77, %81 : vector<8x896xf32>
    %83 = vector.broadcast %23 : vector<1x896xf32> to vector<8x896xf32>
    %84 = arith.mulf %82, %83 : vector<8x896xf32>
    %85 = vector.broadcast %24 : vector<1x896xf32> to vector<8x896xf32>
    %86 = arith.addf %84, %85 : vector<8x896xf32>
    %cst_43 = arith.constant 0.000000e+00 : f32
    %87 = vector.broadcast %cst_43 : f32 to vector<8x896xf32>
    %88 = arith.maximumf %86, %87 : vector<8x896xf32>
    %c2_i32_44 = arith.constant 2 : i32
    %c0_i32_45 = arith.constant 0 : i32
    %c0_i32_46 = arith.constant 0 : i32
    %89 = tpu.memref_slice %arg9[%c0_i32_45, %c0_i32_46] : memref<896x512xbf16, #tpu.memory_space<vmem>> -> memref<784x512xbf16, #tpu.memory_space<vmem>>
    %90 = tpu.memref_slice %arg11[%c2_i32_44] : memref<4x!tpu.dma_semaphore, #tpu.memory_space<semaphore_mem>> -> memref<1x!tpu.dma_semaphore, #tpu.memory_space<semaphore_mem>>
    %91 = tpu.memref_squeeze %90 : memref<1x!tpu.dma_semaphore, #tpu.memory_space<semaphore_mem>> -> memref<!tpu.dma_semaphore, #tpu.memory_space<semaphore_mem>>
    tpu.wait_dma2 semaphore(%91 : memref<!tpu.dma_semaphore, #tpu.memory_space<semaphore_mem>>) src(%arg4 : memref<784x512xbf16, #tpu.memory_space<any>>) dst(%89 : memref<784x512xbf16, #tpu.memory_space<vmem>>)
    %92 = arith.truncf %88 : vector<8x896xf32> to vector<8x896xbf16>
    %c0_47 = arith.constant 0 : index
    %c0_48 = arith.constant 0 : index
    %93 = vector.load %arg9[%c0_47, %c0_48] : memref<896x512xbf16, #tpu.memory_space<vmem>>, vector<896x512xbf16>
    %cst_49 = arith.constant dense<0.000000e+00> : vector<8x512xf32>
    %94 = tpu.matmul %92, %93, %cst_49 {dimension_numbers = #tpu.dot_dimension_numbers<[1], [0], [0], [1], [0, 0, 1, 1], [], []>} : vector<8x896xbf16>, vector<896x512xbf16>, vector<8x512xf32> -> vector<8x512xf32>
    %cst_50 = arith.constant dense<0.000000e+00> : vector<512xf32>
    %95 = vector.multi_reduction <add>, %94, %cst_50 [0] : vector<8x512xf32> to vector<512xf32>
    %96 = vector.shape_cast %95 : vector<512xf32> to vector<1x512xf32>
    %cst_51 = arith.constant 8.000000e+00 : f32
    %97 = vector.broadcast %cst_51 : f32 to vector<1x512xf32>
    %98 = arith.divf %96, %97 : vector<1x512xf32>
    %99 = vector.broadcast %98 : vector<1x512xf32> to vector<8x512xf32>
    %100 = arith.subf %94, %99 : vector<8x512xf32>
    %101 = arith.mulf %100, %100 : vector<8x512xf32>
    %cst_52 = arith.constant dense<0.000000e+00> : vector<512xf32>
    %102 = vector.multi_reduction <add>, %101, %cst_52 [0] : vector<8x512xf32> to vector<512xf32>
    %103 = vector.shape_cast %102 : vector<512xf32> to vector<1x512xf32>
    %cst_53 = arith.constant 8.000000e+00 : f32
    %104 = vector.broadcast %cst_53 : f32 to vector<1x512xf32>
    %105 = arith.divf %103, %104 : vector<1x512xf32>
    %106 = vector.broadcast %98 : vector<1x512xf32> to vector<8x512xf32>
    %107 = arith.subf %94, %106 : vector<8x512xf32>
    %cst_54 = arith.constant 9.99999974E-6 : f32
    %108 = vector.broadcast %cst_54 : f32 to vector<1x512xf32>
    %109 = arith.addf %105, %108 : vector<1x512xf32>
    %110 = math.rsqrt %109 : vector<1x512xf32>
    %111 = vector.broadcast %110 : vector<1x512xf32> to vector<8x512xf32>
    %112 = arith.mulf %107, %111 : vector<8x512xf32>
    %113 = vector.broadcast %25 : vector<1x512xf32> to vector<8x512xf32>
    %114 = arith.mulf %112, %113 : vector<8x512xf32>
    %115 = vector.broadcast %26 : vector<1x512xf32> to vector<8x512xf32>
    %116 = arith.addf %114, %115 : vector<8x512xf32>
    %cst_55 = arith.constant 0.000000e+00 : f32
    %117 = vector.broadcast %cst_55 : f32 to vector<8x512xf32>
    %118 = arith.maximumf %116, %117 : vector<8x512xf32>
    %c3_i32_56 = arith.constant 3 : i32
    %c0_i32_57 = arith.constant 0 : i32
    %c0_i32_58 = arith.constant 0 : i32
    %119 = tpu.memref_slice %arg10[%c0_i32_57, %c0_i32_58] : memref<512x128xbf16, #tpu.memory_space<vmem>> -> memref<400x128xbf16, #tpu.memory_space<vmem>>
    %120 = tpu.memref_slice %arg11[%c3_i32_56] : memref<4x!tpu.dma_semaphore, #tpu.memory_space<semaphore_mem>> -> memref<1x!tpu.dma_semaphore, #tpu.memory_space<semaphore_mem>>
    %121 = tpu.memref_squeeze %120 : memref<1x!tpu.dma_semaphore, #tpu.memory_space<semaphore_mem>> -> memref<!tpu.dma_semaphore, #tpu.memory_space<semaphore_mem>>
    tpu.wait_dma2 semaphore(%121 : memref<!tpu.dma_semaphore, #tpu.memory_space<semaphore_mem>>) src(%arg5 : memref<400x128xbf16, #tpu.memory_space<any>>) dst(%119 : memref<400x128xbf16, #tpu.memory_space<vmem>>)
    %122 = arith.truncf %118 : vector<8x512xf32> to vector<8x512xbf16>
    %c0_59 = arith.constant 0 : index
    %c0_60 = arith.constant 0 : index
    %123 = vector.load %arg10[%c0_59, %c0_60] : memref<512x128xbf16, #tpu.memory_space<vmem>>, vector<512x128xbf16>
    %cst_61 = arith.constant dense<0.000000e+00> : vector<8x128xf32>
    %124 = tpu.matmul %122, %123, %cst_61 {dimension_numbers = #tpu.dot_dimension_numbers<[1], [0], [0], [1], [0, 0, 1, 1], [], []>} : vector<8x512xbf16>, vector<512x128xbf16>, vector<8x128xf32> -> vector<8x128xf32>
    %125 = vector.broadcast %27 : vector<1x128xf32> to vector<8x128xf32>
    %126 = arith.addf %124, %125 : vector<8x128xf32>
    %c0_62 = arith.constant 0 : index
    %c0_63 = arith.constant 0 : index
    %127 = vector.load %arg6[%c0_62, %c0_63] : memref<8x128xf32, #tpu.memory_space<vmem>>, vector<8x128xf32>
    tpu.vector_store %arg6[%c0_62, %c0_63], %126 {strides = array<i32>} : memref<8x128xf32, #tpu.memory_space<vmem>>, vector<8x128xf32>,
    return
  }
}

</mosaic_0001>

<llo_original>
// kernel: tpu_custom_call.1
$region0: #{tpu_custom_call.1}
  #allocation0 [shape = 'u32[]', space=smem, size = 0x4, offset = 0x4, fixed_abs, tag = 'smem constant byte address 0x4 - core index']
  #allocation1 [shape = 'u32[72,128]{1,0:T(1,128)}', space=vmem, size = 0x9000, scoped, tag = 'internal scratch']
  #allocation2 [shape = 'bf16[512,896]{1,0:T(8,128)(2,1)}', space=vmem, size = 0xe0000, scoped, tag = 'scratch operand']
  #allocation3 [shape = 'bf16[896,896]{1,0:T(8,128)(2,1)}', space=vmem, size = 0x188000, scoped, tag = 'scratch operand']
  #allocation4 [shape = 'bf16[896,512]{1,0:T(8,128)(2,1)}', space=vmem, size = 0xe0000, scoped, tag = 'scratch operand']
  #allocation5 [shape = 'bf16[512,128]{1,0:T(8,128)(2,1)}', space=vmem, size = 0x20000, scoped, tag = 'scratch operand']
  #allocation6 [shape = 's32[4]{0}', space=sflag, size = 0x10, scoped, tag = 'scratch operand']
  #allocation13 [shape = 's32[]', space=sflag, size = 0x4, offset = 0, fixed_abs, tag = 'sflag constant byte address 0x0 - dummy sync flag']
  #allocation14 [shape = 's32[]', space=sflag, size = 0x4, offset = 0, fixed_abs, tag = 'sflag constant byte address 0x0 - dummy sync flag']
  #allocation15 [shape = 'u32[]', space=smem, size = 0x4, offset = 0x44, fixed_abs, tag = 'smem constant byte address 0x44 - assertion arg 0']
  #allocation16 [shape = 'u32[]', space=smem, size = 0x4, offset = 0x48, fixed_abs, tag = 'smem constant byte address 0x48 - assertion arg 1']
  #allocation17 [shape = 's32[]', space=sflag, size = 0x4, offset = 0, fixed_abs, tag = 'sflag constant byte address 0x0 - dummy sync flag']
  #allocation18 [shape = 's32[]', space=sflag, size = 0x4, offset = 0, fixed_abs, tag = 'sflag constant byte address 0x0 - dummy sync flag']
  #allocation19 [shape = 's32[]', space=sflag, size = 0x4, offset = 0, fixed_abs, tag = 'sflag constant byte address 0x0 - dummy sync flag']
  #allocation20 [shape = 's32[]', space=sflag, size = 0x4, offset = 0, fixed_abs, tag = 'sflag constant byte address 0x0 - dummy sync flag']
  #allocation21 [shape = 's32[]', space=sflag, size = 0x4, offset = 0, fixed_abs, tag = 'sflag constant byte address 0x0 - dummy sync flag']
  #allocation22 [shape = 's32[]', space=sflag, size = 0x4, offset = 0, fixed_abs, tag = 'sflag constant byte address 0x0 - dummy sync flag']
  %s0 = inlined_call_operand.hbm [shape: f32[8,512], index: 0, kind: input, shape index: {}]
  %s1 = inlined_call_operand.hbm [shape: f32[8,896], index: 1, kind: input, shape index: {}]
  %s2 = inlined_call_operand.hbm [shape: bf16[400,896], index: 2, kind: input, shape index: {}]
  %s3 = inlined_call_operand.hbm [shape: bf16[784,896], index: 3, kind: input, shape index: {}]
  %s4 = inlined_call_operand.hbm [shape: bf16[784,512], index: 4, kind: input, shape index: {}]
  %s5 = inlined_call_operand.hbm [shape: bf16[400,128], index: 5, kind: input, shape index: {}]
  %s6 = inlined_call_operand.hbm [shape: f32[8,128], index: 6, kind: output, shape index: {}]
  %s7 = sld [smem:[#allocation0]]
  $region42: #{tpu_custom_call.1} parent=0
    _
  %s9 = ssub.s32 1, %s7
  %s10 = scalar_select 0, %s9, %s7
  $region1: #{tpu_custom_call.1} parent=0
    #allocation7 [shape = 'u8[16384]{0}', space=vmem, size = 0x4000, scoped, tag = 'input window, operand 0, single buffered']
    #allocation8 [shape = 's32[1]{0}', space=sflag, size = 0x4, scoped, tag = 'scoped memory for tpu_custom_call.1']
    #allocation9 [shape = 's32[1]{0}', space=sflag, size = 0x4, scoped, tag = 'scoped memory for tpu_custom_call.1']
    #allocation10 [shape = 'u8[28672]{0}', space=vmem, size = 0x7000, scoped, tag = 'input window, operand 1, single buffered']
    #allocation11 [shape = 's32[1]{0}', space=sflag, size = 0x4, scoped, tag = 'scoped memory for tpu_custom_call.1']
    #allocation12 [shape = 'u8[4096]{0}', space=vmem, size = 0x1000, scoped, tag = 'output window, operand 0, single buffered']
    %11 = vsyncpa [#allocation8], 0
    %12 = vsyncpa [#allocation11], 0
    %13 = vsyncpa [#allocation9], 0
    // Predicated region
    $region2: #{tpu_custom_call.1} parent=1 // pred_check
      _
    $region3: #{tpu_custom_call.1} parent=1 // pred_check_branch
      %15 = sbr.rel (0) target = $region5
    $region4: #{tpu_custom_call.1} parent=1 // pred_region
      %17 = vsyncadd [#allocation8], 0
      %s19 = sshll.u32 %s0, 4
      %s20 = int_to_ptr.hbm [resolvable:$true] %s19
      %s21 = sshll.u32 [#allocation7], 4
      %s22 = int_to_ptr.vmem [resolvable:$true] %s21
      %24 = dma.hbm_to_vmem [thread:$0]  %s20, 512, %s22, [#allocation8]
    $region5: #{tpu_custom_call.1} parent=1 // pred_fallthru
      _
    // Predicated region
    $region6: #{tpu_custom_call.1} parent=1 // pred_check
      _
    $region7: #{tpu_custom_call.1} parent=1 // pred_check_branch
      %26 = sbr.rel (0) target = $region9
    $region8: #{tpu_custom_call.1} parent=1 // pred_region
      %28 = vsyncadd [#allocation11], 0
      %s30 = sshll.u32 %s1, 4
      %s31 = int_to_ptr.hbm [resolvable:$true] %s30
      %s32 = sshll.u32 [#allocation10], 4
      %s33 = int_to_ptr.vmem [resolvable:$true] %s32
      %35 = dma.hbm_to_vmem [thread:$0]  %s31, 896, %s33, [#allocation11]
    $region9: #{tpu_custom_call.1} parent=1 // pred_fallthru
      _
    // Predicated region
    $region10: #{tpu_custom_call.1} parent=1 // pred_check
      _
    $region11: #{tpu_custom_call.1} parent=1 // pred_check_branch
      %37 = sbr.rel (0) target = $region13
    $region12: #{tpu_custom_call.1} parent=1 // pred_region
      %39 = dma.done [#allocation8], 512
    $region13: #{tpu_custom_call.1} parent=1 // pred_fallthru
      _
    // Predicated region
    $region14: #{tpu_custom_call.1} parent=1 // pred_check
      _
    $region15: #{tpu_custom_call.1} parent=1 // pred_check_branch
      %41 = sbr.rel (0) target = $region17
    $region16: #{tpu_custom_call.1} parent=1 // pred_region
      %43 = dma.done [#allocation11], 896
    $region17: #{tpu_custom_call.1} parent=1 // pred_fallthru
      _
    // Predicated region
    $region18: #{tpu_custom_call.1} parent=1 // pred_check
      _
    $region19: #{tpu_custom_call.1} parent=1 // pred_check_branch
      %46 = sbr.rel target = $region21
    $region20: #{tpu_custom_call.1} parent=1 // pred_region
      %47 = sst [smem:[#allocation15]] [#allocation14]
      %48 = sst [smem:[#allocation16]] [#allocation13]
    $region21: #{tpu_custom_call.1} parent=1 // pred_fallthru
      _
    %50 = shalt.err (0)
    %s52 = sshll.u32 %s2, 4
    %s53 = int_to_ptr.hbm [resolvable:$true] %s52
    %s54 = sshll.u32 [#allocation2], 4
    %s55 = int_to_ptr.vmem [resolvable:$true] %s54
    %57 = dma.hbm_to_vmem [thread:$0]  %s53, 22400, %s55, [#allocation6]
    %s58 = scalar_lea.sflag [#allocation6], 1
    // Predicated region
    $region22: #{tpu_custom_call.1} parent=1 // pred_check
      _
    $region23: #{tpu_custom_call.1} parent=1 // pred_check_branch
      %60 = sbr.rel target = $region25
    $region24: #{tpu_custom_call.1} parent=1 // pred_region
      %61 = sst [smem:[#allocation15]] [#allocation18]
      %62 = sst [smem:[#allocation16]] [#allocation17]
    $region25: #{tpu_custom_call.1} parent=1 // pred_fallthru
      _
    %64 = shalt.err (0)
    %s66 = sshll.u32 %s3, 4
    %s67 = int_to_ptr.hbm [resolvable:$true] %s66
    %s68 = sshll.u32 [#allocation3], 4
    %s69 = int_to_ptr.vmem [resolvable:$true] %s68
    %71 = dma.hbm_to_vmem [thread:$0]  %s67, 43904, %s69, %s58
    %s72 = scalar_lea.sflag [#allocation6], 2
    // Predicated region
    $region26: #{tpu_custom_call.1} parent=1 // pred_check
      _
    $region27: #{tpu_custom_call.1} parent=1 // pred_check_branch
      %74 = sbr.rel target = $region29
    $region28: #{tpu_custom_call.1} parent=1 // pred_region
      %75 = sst [smem:[#allocation15]] [#allocation20]
      %76 = sst [smem:[#allocation16]] [#allocation19]
    $region29: #{tpu_custom_call.1} parent=1 // pred_fallthru
      _
    %78 = shalt.err (0)
    %s80 = sshll.u32 %s4, 4
    %s81 = int_to_ptr.hbm [resolvable:$true] %s80
    %s82 = sshll.u32 [#allocation4], 4
    %s83 = int_to_ptr.vmem [resolvable:$true] %s82
    %85 = dma.hbm_to_vmem [thread:$0]  %s81, 25088, %s83, %s72
    %s86 = scalar_lea.sflag [#allocation6], 3
    // Predicated region
    $region30: #{tpu_custom_call.1} parent=1 // pred_check
      _
    $region31: #{tpu_custom_call.1} parent=1 // pred_check_branch
      %88 = sbr.rel target = $region33
    $region32: #{tpu_custom_call.1} parent=1 // pred_region
      %89 = sst [smem:[#allocation15]] [#allocation22]
      %90 = sst [smem:[#allocation16]] [#allocation21]
    $region33: #{tpu_custom_call.1} parent=1 // pred_fallthru
      _
    %92 = shalt.err (0)
    %s94 = sshll.u32 %s5, 4
    %s95 = int_to_ptr.hbm [resolvable:$true] %s94
    %s96 = sshll.u32 [#allocation5], 4
    %s97 = int_to_ptr.vmem [resolvable:$true] %s96
    %99 = dma.hbm_to_vmem [thread:$0]  %s95, 3200, %s97, %s86
    %100 = vst [vmem:[#allocation2 + $0x578] sm:$0xff] 0
    %101 = vst [vmem:[#allocation2 + $0x580] sm:$0xff] 0
    %102 = vst [vmem:[#allocation2 + $0x588] sm:$0xff] 0
    %103 = vst [vmem:[#allocation2 + $0x590] sm:$0xf] 0
    %104 = vst [vmem:[#allocation2 + $0x594] sm:$0xff] 0
    %105 = vst [vmem:[#allocation2 + $0x59c] sm:$0xff] 0
    %106 = vst [vmem:[#allocation2 + $0x5a4] sm:$0xff] 0
    %107 = vst [vmem:[#allocation2 + $0x5ac] sm:$0xf] 0
    %108 = vst [vmem:[#allocation2 + $0x5b0] sm:$0xff] 0
    %109 = vst [vmem:[#allocation2 + $0x5b8] sm:$0xff] 0
    %110 = vst [vmem:[#allocation2 + $0x5c0] sm:$0xff] 0
    %111 = vst [vmem:[#allocation2 + $0x5c8] sm:$0xf] 0
    %112 = vst [vmem:[#allocation2 + $0x5cc] sm:$0xff] 0
    %113 = vst [vmem:[#allocation2 + $0x5d4] sm:$0xff] 0
    %114 = vst [vmem:[#allocation2 + $0x5dc] sm:$0xff] 0
    %115 = vst [vmem:[#allocation2 + $0x5e4] sm:$0xf] 0
    %116 = vst [vmem:[#allocation2 + $0x5e8] sm:$0xff] 0
    %117 = vst [vmem:[#allocation2 + $0x5f0] sm:$0xff] 0
    %118 = vst [vmem:[#allocation2 + $0x5f8] sm:$0xff] 0
    %119 = vst [vmem:[#allocation2 + $0x600] sm:$0xf] 0
    %120 = vst [vmem:[#allocation2 + $0x604] sm:$0xff] 0
    %121 = vst [vmem:[#allocation2 + $0x60c] sm:$0xff] 0
    %122 = vst [vmem:[#allocation2 + $0x614] sm:$0xff] 0
    %123 = vst [vmem:[#allocation2 + $0x61c] sm:$0xf] 0
    %124 = vst [vmem:[#allocation2 + $0x620] sm:$0xff] 0
    %125 = vst [vmem:[#allocation2 + $0x628] sm:$0xff] 0
    %126 = vst [vmem:[#allocation2 + $0x630] sm:$0xff] 0
    %127 = vst [vmem:[#allocation2 + $0x638] sm:$0xf] 0
    %128 = vst [vmem:[#allocation2 + $0x63c] sm:$0xff] 0
    %129 = vst [vmem:[#allocation2 + $0x644] sm:$0xff] 0
    %130 = vst [vmem:[#allocation2 + $0x64c] sm:$0xff] 0
    %131 = vst [vmem:[#allocation2 + $0x654] sm:$0xf] 0
    %132 = vst [vmem:[#allocation2 + $0x658] sm:$0xff] 0
    %133 = vst [vmem:[#allocation2 + $0x660] sm:$0xff] 0
    %134 = vst [vmem:[#allocation2 + $0x668] sm:$0xff] 0
    %135 = vst [vmem:[#allocation2 + $0x670] sm:$0xf] 0
    %136 = vst [vmem:[#allocation2 + $0x674] sm:$0xff] 0
    %137 = vst [vmem:[#allocation2 + $0x67c] sm:$0xff] 0
    %138 = vst [vmem:[#allocation2 + $0x684] sm:$0xff] 0
    %139 = vst [vmem:[#allocation2 + $0x68c] sm:$0xf] 0
    %140 = vst [vmem:[#allocation2 + $0x690] sm:$0xff] 0
    %141 = vst [vmem:[#allocation2 + $0x698] sm:$0xff] 0
    %142 = vst [vmem:[#allocation2 + $0x6a0] sm:$0xff] 0
    %143 = vst [vmem:[#allocation2 + $0x6a8] sm:$0xf] 0
    %144 = vst [vmem:[#allocation2 + $0x6ac] sm:$0xff] 0
    %145 = vst [vmem:[#allocation2 + $0x6b4] sm:$0xff] 0
    %146 = vst [vmem:[#allocation2 + $0x6bc] sm:$0xff] 0
    %147 = vst [vmem:[#allocation2 + $0x6c4] sm:$0xf] 0
    %148 = vst [vmem:[#allocation2 + $0x6c8] sm:$0xff] 0
    %149 = vst [vmem:[#allocation2 + $0x6d0] sm:$0xff] 0
    %150 = vst [vmem:[#allocation2 + $0x6d8] sm:$0xff] 0
    %151 = vst [vmem:[#allocation2 + $0x6e0] sm:$0xf] 0
    %152 = vst [vmem:[#allocation2 + $0x6e4] sm:$0xff] 0
    %153 = vst [vmem:[#allocation2 + $0x6ec] sm:$0xff] 0
    %154 = vst [vmem:[#allocation2 + $0x6f4] sm:$0xff] 0
    %155 = vst [vmem:[#allocation2 + $0x6fc] sm:$0xf] 0
    %156 = vst [vmem:[#allocation3 + $0xab8] sm:$0xff] 0
    %157 = vst [vmem:[#allocation3 + $0xac0] sm:$0xff] 0
    %158 = vst [vmem:[#allocation3 + $0xac8] sm:$0xff] 0
    %159 = vst [vmem:[#allocation3 + $0xad0] sm:$0xf] 0
    %160 = vst [vmem:[#allocation3 + $0xad4] sm:$0xff] 0
    %161 = vst [vmem:[#allocation3 + $0xadc] sm:$0xff] 0
    %162 = vst [vmem:[#allocation3 + $0xae4] sm:$0xff] 0
    %163 = vst [vmem:[#allocation3 + $0xaec] sm:$0xf] 0
    %164 = vst [vmem:[#allocation3 + $0xaf0] sm:$0xff] 0
    %165 = vst [vmem:[#allocation3 + $0xaf8] sm:$0xff] 0
    %166 = vst [vmem:[#allocation3 + $0xb00] sm:$0xff] 0
    %167 = vst [vmem:[#allocation3 + $0xb08] sm:$0xf] 0
    %168 = vst [vmem:[#allocation3 + $0xb0c] sm:$0xff] 0
    %169 = vst [vmem:[#allocation3 + $0xb14] sm:$0xff] 0
    %170 = vst [vmem:[#allocation3 + $0xb1c] sm:$0xff] 0
    %171 = vst [vmem:[#allocation3 + $0xb24] sm:$0xf] 0
    %172 = vst [vmem:[#allocation3 + $0xb28] sm:$0xff] 0
    %173 = vst [vmem:[#allocation3 + $0xb30] sm:$0xff] 0
    %174 = vst [vmem:[#allocation3 + $0xb38] sm:$0xff] 0
    %175 = vst [vmem:[#allocation3 + $0xb40] sm:$0xf] 0
    %176 = vst [vmem:[#allocation3 + $0xb44] sm:$0xff] 0
    %177 = vst [vmem:[#allocation3 + $0xb4c] sm:$0xff] 0
    %178 = vst [vmem:[#allocation3 + $0xb54] sm:$0xff] 0
    %179 = vst [vmem:[#allocation3 + $0xb5c] sm:$0xf] 0
    %180 = vst [vmem:[#allocation3 + $0xb60] sm:$0xff] 0
    %181 = vst [vmem:[#allocation3 + $0xb68] sm:$0xff] 0
    %182 = vst [vmem:[#allocation3 + $0xb70] sm:$0xff] 0
    %183 = vst [vmem:[#allocation3 + $0xb78] sm:$0xf] 0
    %184 = vst [vmem:[#allocation3 + $0xb7c] sm:$0xff] 0
    %185 = vst [vmem:[#allocation3 + $0xb84] sm:$0xff] 0
    %186 = vst [vmem:[#allocation3 + $0xb8c] sm:$0xff] 0
    %187 = vst [vmem:[#allocation3 + $0xb94] sm:$0xf] 0
    %188 = vst [vmem:[#allocation3 + $0xb98] sm:$0xff] 0
    %189 = vst [vmem:[#allocation3 + $0xba0] sm:$0xff] 0
    %190 = vst [vmem:[#allocation3 + $0xba8] sm:$0xff] 0
    %191 = vst [vmem:[#allocation3 + $0xbb0] sm:$0xf] 0
    %192 = vst [vmem:[#allocation3 + $0xbb4] sm:$0xff] 0
    %193 = vst [vmem:[#allocation3 + $0xbbc] sm:$0xff] 0
    %194 = vst [vmem:[#allocation3 + $0xbc4] sm:$0xff] 0
    %195 = vst [vmem:[#allocation3 + $0xbcc] sm:$0xf] 0
    %196 = vst [vmem:[#allocation3 + $0xbd0] sm:$0xff] 0
    %197 = vst [vmem:[#allocation3 + $0xbd8] sm:$0xff] 0
    %198 = vst [vmem:[#allocation3 + $0xbe0] sm:$0xff] 0
    %199 = vst [vmem:[#allocation3 + $0xbe8] sm:$0xf] 0
    %200 = vst [vmem:[#allocation3 + $0xbec] sm:$0xff] 0
    %201 = vst [vmem:[#allocation3 + $0xbf4] sm:$0xff] 0
    %202 = vst [vmem:[#allocation3 + $0xbfc] sm:$0xff] 0
    %203 = vst [vmem:[#allocation3 + $0xc04] sm:$0xf] 0
    %204 = vst [vmem:[#allocation3 + $0xc08] sm:$0xff] 0
    %205 = vst [vmem:[#allocation3 + $0xc10] sm:$0xff] 0
    %206 = vst [vmem:[#allocation3 + $0xc18] sm:$0xff] 0
    %207 = vst [vmem:[#allocation3 + $0xc20] sm:$0xf] 0
    %208 = vst [vmem:[#allocation3 + $0xc24] sm:$0xff] 0
    %209 = vst [vmem:[#allocation3 + $0xc2c] sm:$0xff] 0
    %210 = vst [vmem:[#allocation3 + $0xc34] sm:$0xff] 0
    %211 = vst [vmem:[#allocation3 + $0xc3c] sm:$0xf] 0
    %212 = vst [vmem:[#allocation4 + $0x620] sm:$0xff] 0
    %213 = vst [vmem:[#allocation4 + $0x628] sm:$0xff] 0
    %214 = vst [vmem:[#allocation4 + $0x630] sm:$0xff] 0
    %215 = vst [vmem:[#allocation4 + $0x638] sm:$0xff] 0
    %216 = vst [vmem:[#allocation4 + $0x640] sm:$0xff] 0
    %217 = vst [vmem:[#allocation4 + $0x648] sm:$0xff] 0
    %218 = vst [vmem:[#allocation4 + $0x650] sm:$0xff] 0
    %219 = vst [vmem:[#allocation4 + $0x658] sm:$0xff] 0
    %220 = vst [vmem:[#allocation4 + $0x660] sm:$0xff] 0
    %221 = vst [vmem:[#allocation4 + $0x668] sm:$0xff] 0
    %222 = vst [vmem:[#allocation4 + $0x670] sm:$0xff] 0
    %223 = vst [vmem:[#allocation4 + $0x678] sm:$0xff] 0
    %224 = vst [vmem:[#allocation4 + $0x680] sm:$0xff] 0
    %225 = vst [vmem:[#allocation4 + $0x688] sm:$0xff] 0
    %226 = vst [vmem:[#allocation4 + $0x690] sm:$0xff] 0
    %227 = vst [vmem:[#allocation4 + $0x698] sm:$0xff] 0
    %228 = vst [vmem:[#allocation4 + $0x6a0] sm:$0xff] 0
    %229 = vst [vmem:[#allocation4 + $0x6a8] sm:$0xff] 0
    %230 = vst [vmem:[#allocation4 + $0x6b0] sm:$0xff] 0
    %231 = vst [vmem:[#allocation4 + $0x6b8] sm:$0xff] 0
    %232 = vst [vmem:[#allocation4 + $0x6c0] sm:$0xff] 0
    %233 = vst [vmem:[#allocation4 + $0x6c8] sm:$0xff] 0
    %234 = vst [vmem:[#allocation4 + $0x6d0] sm:$0xff] 0
    %235 = vst [vmem:[#allocation4 + $0x6d8] sm:$0xff] 0
    %236 = vst [vmem:[#allocation4 + $0x6e0] sm:$0xff] 0
    %237 = vst [vmem:[#allocation4 + $0x6e8] sm:$0xff] 0
    %238 = vst [vmem:[#allocation4 + $0x6f0] sm:$0xff] 0
    %239 = vst [vmem:[#allocation4 + $0x6f8] sm:$0xff] 0
    %240 = vst [vmem:[#allocation5 + $0xc8] sm:$0xf] 0
    %241 = vst [vmem:[#allocation5 + $0xcc] sm:$0xf] 0
    %242 = vst [vmem:[#allocation5 + $0xd0] sm:$0xf] 0
    %243 = vst [vmem:[#allocation5 + $0xd4] sm:$0xf] 0
    %244 = vst [vmem:[#allocation5 + $0xd8] sm:$0xf] 0
    %245 = vst [vmem:[#allocation5 + $0xdc] sm:$0xf] 0
    %246 = vst [vmem:[#allocation5 + $0xe0] sm:$0xf] 0
    %247 = vst [vmem:[#allocation5 + $0xe4] sm:$0xf] 0
    %248 = vst [vmem:[#allocation5 + $0xe8] sm:$0xf] 0
    %249 = vst [vmem:[#allocation5 + $0xec] sm:$0xf] 0
    %250 = vst [vmem:[#allocation5 + $0xf0] sm:$0xf] 0
    %251 = vst [vmem:[#allocation5 + $0xf4] sm:$0xf] 0
    %252 = vst [vmem:[#allocation5 + $0xf8] sm:$0xf] 0
    %253 = vst [vmem:[#allocation5 + $0xfc] sm:$0xf] 0
    %v254 = vld [vmem:[#allocation10] sm:$0xff]
    %v255 = vld [vmem:[#allocation10 + $0x8] sm:$0xff]
    %v256 = vld [vmem:[#allocation10 + $0x10] sm:$0xff]
    %v257 = vld [vmem:[#allocation10 + $0x18] sm:$0xff]
    %v258 = vld [vmem:[#allocation10 + $0x20] sm:$0xff]
    %v259 = vld [vmem:[#allocation10 + $0x28] sm:$0xff]
    %v260 = vld [vmem:[#allocation10 + $0x30] sm:$0xff]
    %v261 = vld [vmem:[#allocation7] sm:$0xff]
    %v262 = vld [vmem:[#allocation7 + $0x8] sm:$0xff]
    %v263 = vld [vmem:[#allocation7 + $0x10] sm:$0xff]
    %v264 = vld [vmem:[#allocation7 + $0x18] sm:$0xff]
    %v265 = vpack.c.bf16 %v261, %v261
    %v266 = vpack.c.bf16 %v262, %v262
    %v267 = vpack.c.bf16 %v263, %v263
    %v268 = vpack.c.bf16 %v264, %v264
    %s269 = smul.u32 4, 50
    %s270 = smul.u32 %s269, 7
    %s271 = sshll.u32 %s270, 4
    %272 = dma.done [#allocation6], %s271
    %v273 = vld [vmem:[#allocation2] sm:$0xff]
    %v274 = vld [vmem:[#allocation2 + $0x8] sm:$0xff]
    %v275 = vld [vmem:[#allocation2 + $0x10] sm:$0xff]
    %v276 = vld [vmem:[#allocation2 + $0x18] sm:$0xf]
    %v277 = vld [vmem:[#allocation2 + $0x1c] sm:$0xff]
    %v278 = vld [vmem:[#allocation2 + $0x24] sm:$0xff]
    %v279 = vld [vmem:[#allocation2 + $0x2c] sm:$0xff]
    %v280 = vld [vmem:[#allocation2 + $0x34] sm:$0xf]
    %v281 = vld [vmem:[#allocation2 + $0x38] sm:$0xff]
    %v282 = vld [vmem:[#allocation2 + $0x40] sm:$0xff]
    %v283 = vld [vmem:[#allocation2 + $0x48] sm:$0xff]
    %v284 = vld [vmem:[#allocation2 + $0x50] sm:$0xf]
    %v285 = vld [vmem:[#allocation2 + $0x54] sm:$0xff]
    %v286 = vld [vmem:[#allocation2 + $0x5c] sm:$0xff]
    %v287 = vld [vmem:[#allocation2 + $0x64] sm:$0xff]
    %v288 = vld [vmem:[#allocation2 + $0x6c] sm:$0xf]
    %v289 = vld [vmem:[#allocation2 + $0x70] sm:$0xff]
    %v290 = vld [vmem:[#allocation2 + $0x78] sm:$0xff]
    %v291 = vld [vmem:[#allocation2 + $0x80] sm:$0xff]
    %v292 = vld [vmem:[#allocation2 + $0x88] sm:$0xf]
    %v293 = vld [vmem:[#allocation2 + $0x8c] sm:$0xff]
    %v294 = vld [vmem:[#allocation2 + $0x94] sm:$0xff]
    %v295 = vld [vmem:[#allocation2 + $0x9c] sm:$0xff]
    %v296 = vld [vmem:[#allocation2 + $0xa4] sm:$0xf]
    %v297 = vld [vmem:[#allocation2 + $0xa8] sm:$0xff]
    %v298 = vld [vmem:[#allocation2 + $0xb0] sm:$0xff]
    %v299 = vld [vmem:[#allocation2 + $0xb8] sm:$0xff]
    %v300 = vld [vmem:[#allocation2 + $0xc0] sm:$0xf]
    %v301 = vld [vmem:[#allocation2 + $0xc4] sm:$0xff]
    %v302 = vld [vmem:[#allocation2 + $0xcc] sm:$0xff]
    %v303 = vld [vmem:[#allocation2 + $0xd4] sm:$0xff]
    %v304 = vld [vmem:[#allocation2 + $0xdc] sm:$0xf]
    %v305 = vld [vmem:[#allocation2 + $0xe0] sm:$0xff]
    %v306 = vld [vmem:[#allocation2 + $0xe8] sm:$0xff]
    %v307 = vld [vmem:[#allocation2 + $0xf0] sm:$0xff]
    %v308 = vld [vmem:[#allocation2 + $0xf8] sm:$0xf]
    %v309 = vld [vmem:[#allocation2 + $0xfc] sm:$0xff]
    %v310 = vld [vmem:[#allocation2 + $0x104] sm:$0xff]
    %v311 = vld [vmem:[#allocation2 + $0x10c] sm:$0xff]
    %v312 = vld [vmem:[#allocation2 + $0x114] sm:$0xf]
    %v313 = vld [vmem:[#allocation2 + $0x118] sm:$0xff]
    %v314 = vld [vmem:[#allocation2 + $0x120] sm:$0xff]
    %v315 = vld [vmem:[#allocation2 + $0x128] sm:$0xff]
    %v316 = vld [vmem:[#allocation2 + $0x130] sm:$0xf]
    %v317 = vld [vmem:[#allocation2 + $0x134] sm:$0xff]
    %v318 = vld [vmem:[#allocation2 + $0x13c] sm:$0xff]
    %v319 = vld [vmem:[#allocation2 + $0x144] sm:$0xff]
    %v320 = vld [vmem:[#allocation2 + $0x14c] sm:$0xf]
    %v321 = vld [vmem:[#allocation2 + $0x150] sm:$0xff]
    %v322 = vld [vmem:[#allocation2 + $0x158] sm:$0xff]
    %v323 = vld [vmem:[#allocation2 + $0x160] sm:$0xff]
    %v324 = vld [vmem:[#allocation2 + $0x168] sm:$0xf]
    %v325 = vld [vmem:[#allocation2 + $0x16c] sm:$0xff]
    %v326 = vld [vmem:[#allocation2 + $0x174] sm:$0xff]
    %v327 = vld [vmem:[#allocation2 + $0x17c] sm:$0xff]
    %v328 = vld [vmem:[#allocation2 + $0x184] sm:$0xf]
    %v329 = vld [vmem:[#allocation2 + $0x188] sm:$0xff]
    %v330 = vld [vmem:[#allocation2 + $0x190] sm:$0xff]
    %v331 = vld [vmem:[#allocation2 + $0x198] sm:$0xff]
    %v332 = vld [vmem:[#allocation2 + $0x1a0] sm:$0xf]
    %v333 = vld [vmem:[#allocation2 + $0x1a4] sm:$0xff]
    %v334 = vld [vmem:[#allocation2 + $0x1ac] sm:$0xff]
    %v335 = vld [vmem:[#allocation2 + $0x1b4] sm:$0xff]
    %v336 = vld [vmem:[#allocation2 + $0x1bc] sm:$0xf]
    %v337 = vld [vmem:[#allocation2 + $0x1c0] sm:$0xff]
    %v338 = vld [vmem:[#allocation2 + $0x1c8] sm:$0xff]
    %v339 = vld [vmem:[#allocation2 + $0x1d0] sm:$0xff]
    %v340 = vld [vmem:[#allocation2 + $0x1d8] sm:$0xf]
    %v341 = vld [vmem:[#allocation2 + $0x1dc] sm:$0xff]
    %v342 = vld [vmem:[#allocation2 + $0x1e4] sm:$0xff]
    %v343 = vld [vmem:[#allocation2 + $0x1ec] sm:$0xff]
    %v344 = vld [vmem:[#allocation2 + $0x1f4] sm:$0xf]
    %v345 = vld [vmem:[#allocation2 + $0x1f8] sm:$0xff]
    %v346 = vld [vmem:[#allocation2 + $0x200] sm:$0xff]
    %v347 = vld [vmem:[#allocation2 + $0x208] sm:$0xff]
    %v348 = vld [vmem:[#allocation2 + $0x210] sm:$0xf]
    %v349 = vld [vmem:[#allocation2 + $0x214] sm:$0xff]
    %v350 = vld [vmem:[#allocation2 + $0x21c] sm:$0xff]
    %v351 = vld [vmem:[#allocation2 + $0x224] sm:$0xff]
    %v352 = vld [vmem:[#allocation2 + $0x22c] sm:$0xf]
    %v353 = vld [vmem:[#allocation2 + $0x230] sm:$0xff]
    %v354 = vld [vmem:[#allocation2 + $0x238] sm:$0xff]
    %v355 = vld [vmem:[#allocation2 + $0x240] sm:$0xff]
    %v356 = vld [vmem:[#allocation2 + $0x248] sm:$0xf]
    %v357 = vld [vmem:[#allocation2 + $0x24c] sm:$0xff]
    %v358 = vld [vmem:[#allocation2 + $0x254] sm:$0xff]
    %v359 = vld [vmem:[#allocation2 + $0x25c] sm:$0xff]
    %v360 = vld [vmem:[#allocation2 + $0x264] sm:$0xf]
    %v361 = vld [vmem:[#allocation2 + $0x268] sm:$0xff]
    %v362 = vld [vmem:[#allocation2 + $0x270] sm:$0xff]
    %v363 = vld [vmem:[#allocation2 + $0x278] sm:$0xff]
    %v364 = vld [vmem:[#allocation2 + $0x280] sm:$0xf]
    %v365 = vld [vmem:[#allocation2 + $0x284] sm:$0xff]
    %v366 = vld [vmem:[#allocation2 + $0x28c] sm:$0xff]
    %v367 = vld [vmem:[#allocation2 + $0x294] sm:$0xff]
    %v368 = vld [vmem:[#allocation2 + $0x29c] sm:$0xf]
    %v369 = vld [vmem:[#allocation2 + $0x2a0] sm:$0xff]
    %v370 = vld [vmem:[#allocation2 + $0x2a8] sm:$0xff]
    %v371 = vld [vmem:[#allocation2 + $0x2b0] sm:$0xff]
    %v372 = vld [vmem:[#allocation2 + $0x2b8] sm:$0xf]
    %v373 = vld [vmem:[#allocation2 + $0x2bc] sm:$0xff]
    %v374 = vld [vmem:[#allocation2 + $0x2c4] sm:$0xff]
    %v375 = vld [vmem:[#allocation2 + $0x2cc] sm:$0xff]
    %v376 = vld [vmem:[#allocation2 + $0x2d4] sm:$0xf]
    %v377 = vld [vmem:[#allocation2 + $0x2d8] sm:$0xff]
    %v378 = vld [vmem:[#allocation2 + $0x2e0] sm:$0xff]
    %v379 = vld [vmem:[#allocation2 + $0x2e8] sm:$0xff]
    %v380 = vld [vmem:[#allocation2 + $0x2f0] sm:$0xf]
    %v381 = vld [vmem:[#allocation2 + $0x2f4] sm:$0xff]
    %v382 = vld [vmem:[#allocation2 + $0x2fc] sm:$0xff]
    %v383 = vld [vmem:[#allocation2 + $0x304] sm:$0xff]
    %v384 = vld [vmem:[#allocation2 + $0x30c] sm:$0xf]
    %v385 = vld [vmem:[#allocation2 + $0x310] sm:$0xff]
    %v386 = vld [vmem:[#allocation2 + $0x318] sm:$0xff]
    %v387 = vld [vmem:[#allocation2 + $0x320] sm:$0xff]
    %v388 = vld [vmem:[#allocation2 + $0x328] sm:$0xf]
    %v389 = vld [vmem:[#allocation2 + $0x32c] sm:$0xff]
    %v390 = vld [vmem:[#allocation2 + $0x334] sm:$0xff]
    %v391 = vld [vmem:[#allocation2 + $0x33c] sm:$0xff]
    %v392 = vld [vmem:[#allocation2 + $0x344] sm:$0xf]
    %v393 = vld [vmem:[#allocation2 + $0x348] sm:$0xff]
    %v394 = vld [vmem:[#allocation2 + $0x350] sm:$0xff]
    %v395 = vld [vmem:[#allocation2 + $0x358] sm:$0xff]
    %v396 = vld [vmem:[#allocation2 + $0x360] sm:$0xf]
    %v397 = vld [vmem:[#allocation2 + $0x364] sm:$0xff]
    %v398 = vld [vmem:[#allocation2 + $0x36c] sm:$0xff]
    %v399 = vld [vmem:[#allocation2 + $0x374] sm:$0xff]
    %v400 = vld [vmem:[#allocation2 + $0x37c] sm:$0xf]
    %v401 = vld [vmem:[#allocation2 + $0x380] sm:$0xff]
    %v402 = vld [vmem:[#allocation2 + $0x388] sm:$0xff]
    %v403 = vld [vmem:[#allocation2 + $0x390] sm:$0xff]
    %v404 = vld [vmem:[#allocation2 + $0x398] sm:$0xf]
    %v405 = vld [vmem:[#allocation2 + $0x39c] sm:$0xff]
    %v406 = vld [vmem:[#allocation2 + $0x3a4] sm:$0xff]
    %v407 = vld [vmem:[#allocation2 + $0x3ac] sm:$0xff]
    %v408 = vld [vmem:[#allocation2 + $0x3b4] sm:$0xf]
    %v409 = vld [vmem:[#allocation2 + $0x3b8] sm:$0xff]
    %v410 = vld [vmem:[#allocation2 + $0x3c0] sm:$0xff]
    %v411 = vld [vmem:[#allocation2 + $0x3c8] sm:$0xff]
    %v412 = vld [vmem:[#allocation2 + $0x3d0] sm:$0xf]
    %v413 = vld [vmem:[#allocation2 + $0x3d4] sm:$0xff]
    %v414 = vld [vmem:[#allocation2 + $0x3dc] sm:$0xff]
    %v415 = vld [vmem:[#allocation2 + $0x3e4] sm:$0xff]
    %v416 = vld [vmem:[#allocation2 + $0x3ec] sm:$0xf]
    %v417 = vld [vmem:[#allocation2 + $0x3f0] sm:$0xff]
    %v418 = vld [vmem:[#allocation2 + $0x3f8] sm:$0xff]
    %v419 = vld [vmem:[#allocation2 + $0x400] sm:$0xff]
    %v420 = vld [vmem:[#allocation2 + $0x408] sm:$0xf]
    %v421 = vld [vmem:[#allocation2 + $0x40c] sm:$0xff]
    %v422 = vld [vmem:[#allocation2 + $0x414] sm:$0xff]
    %v423 = vld [vmem:[#allocation2 + $0x41c] sm:$0xff]
    %v424 = vld [vmem:[#allocation2 + $0x424] sm:$0xf]
    %v425 = vld [vmem:[#allocation2 + $0x428] sm:$0xff]
    %v426 = vld [vmem:[#allocation2 + $0x430] sm:$0xff]
    %v427 = vld [vmem:[#allocation2 + $0x438] sm:$0xff]
    %v428 = vld [vmem:[#allocation2 + $0x440] sm:$0xf]
    %v429 = vld [vmem:[#allocation2 + $0x444] sm:$0xff]
    %v430 = vld [vmem:[#allocation2 + $0x44c] sm:$0xff]
    %v431 = vld [vmem:[#allocation2 + $0x454] sm:$0xff]
    %v432 = vld [vmem:[#allocation2 + $0x45c] sm:$0xf]
    %v433 = vld [vmem:[#allocation2 + $0x460] sm:$0xff]
    %v434 = vld [vmem:[#allocation2 + $0x468] sm:$0xff]
    %v435 = vld [vmem:[#allocation2 + $0x470] sm:$0xff]
    %v436 = vld [vmem:[#allocation2 + $0x478] sm:$0xf]
    %v437 = vld [vmem:[#allocation2 + $0x47c] sm:$0xff]
    %v438 = vld [vmem:[#allocation2 + $0x484] sm:$0xff]
    %v439 = vld [vmem:[#allocation2 + $0x48c] sm:$0xff]
    %v440 = vld [vmem:[#allocation2 + $0x494] sm:$0xf]
    %v441 = vld [vmem:[#allocation2 + $0x498] sm:$0xff]
    %v442 = vld [vmem:[#allocation2 + $0x4a0] sm:$0xff]
    %v443 = vld [vmem:[#allocation2 + $0x4a8] sm:$0xff]
    %v444 = vld [vmem:[#allocation2 + $0x4b0] sm:$0xf]
    %v445 = vld [vmem:[#allocation2 + $0x4b4] sm:$0xff]
    %v446 = vld [vmem:[#allocation2 + $0x4bc] sm:$0xff]
    %v447 = vld [vmem:[#allocation2 + $0x4c4] sm:$0xff]
    %v448 = vld [vmem:[#allocation2 + $0x4cc] sm:$0xf]
    %v449 = vld [vmem:[#allocation2 + $0x4d0] sm:$0xff]
    %v450 = vld [vmem:[#allocation2 + $0x4d8] sm:$0xff]
    %v451 = vld [vmem:[#allocation2 + $0x4e0] sm:$0xff]
    %v452 = vld [vmem:[#allocation2 + $0x4e8] sm:$0xf]
    %v453 = vld [vmem:[#allocation2 + $0x4ec] sm:$0xff]
    %v454 = vld [vmem:[#allocation2 + $0x4f4] sm:$0xff]
    %v455 = vld [vmem:[#allocation2 + $0x4fc] sm:$0xff]
    %v456 = vld [vmem:[#allocation2 + $0x504] sm:$0xf]
    %v457 = vld [vmem:[#allocation2 + $0x508] sm:$0xff]
    %v458 = vld [vmem:[#allocation2 + $0x510] sm:$0xff]
    %v459 = vld [vmem:[#allocation2 + $0x518] sm:$0xff]
    %v460 = vld [vmem:[#allocation2 + $0x520] sm:$0xf]
    %v461 = vld [vmem:[#allocation2 + $0x524] sm:$0xff]
    %v462 = vld [vmem:[#allocation2 + $0x52c] sm:$0xff]
    %v463 = vld [vmem:[#allocation2 + $0x534] sm:$0xff]
    %v464 = vld [vmem:[#allocation2 + $0x53c] sm:$0xf]
    %v465 = vld [vmem:[#allocation2 + $0x540] sm:$0xff]
    %v466 = vld [vmem:[#allocation2 + $0x548] sm:$0xff]
    %v467 = vld [vmem:[#allocation2 + $0x550] sm:$0xff]
    %v468 = vld [vmem:[#allocation2 + $0x558] sm:$0xf]
    %v469 = vld [vmem:[#allocation2 + $0x55c] sm:$0xff]
    %v470 = vld [vmem:[#allocation2 + $0x564] sm:$0xff]
    %v471 = vld [vmem:[#allocation2 + $0x56c] sm:$0xff]
    %v472 = vld [vmem:[#allocation2 + $0x574] sm:$0xf]
    %v473 = vld [vmem:[#allocation2 + $0x578] sm:$0xff]
    %v474 = vld [vmem:[#allocation2 + $0x580] sm:$0xff]
    %v475 = vld [vmem:[#allocation2 + $0x588] sm:$0xff]
    %v476 = vld [vmem:[#allocation2 + $0x590] sm:$0xf]
    %v477 = vld [vmem:[#allocation2 + $0x594] sm:$0xff]
    %v478 = vld [vmem:[#allocation2 + $0x59c] sm:$0xff]
    %v479 = vld [vmem:[#allocation2 + $0x5a4] sm:$0xff]
    %v480 = vld [vmem:[#allocation2 + $0x5ac] sm:$0xf]
    %v481 = vld [vmem:[#allocation2 + $0x5b0] sm:$0xff]
    %v482 = vld [vmem:[#allocation2 + $0x5b8] sm:$0xff]
    %v483 = vld [vmem:[#allocation2 + $0x5c0] sm:$0xff]
    %v484 = vld [vmem:[#allocation2 + $0x5c8] sm:$0xf]
    %v485 = vld [vmem:[#allocation2 + $0x5cc] sm:$0xff]
    %v486 = vld [vmem:[#allocation2 + $0x5d4] sm:$0xff]
    %v487 = vld [vmem:[#allocation2 + $0x5dc] sm:$0xff]
    %v488 = vld [vmem:[#allocation2 + $0x5e4] sm:$0xf]
    %v489 = vld [vmem:[#allocation2 + $0x5e8] sm:$0xff]
    %v490 = vld [vmem:[#allocation2 + $0x5f0] sm:$0xff]
    %v491 = vld [vmem:[#allocation2 + $0x5f8] sm:$0xff]
    %v492 = vld [vmem:[#allocation2 + $0x600] sm:$0xf]
    %v493 = vld [vmem:[#allocation2 + $0x604] sm:$0xff]
    %v494 = vld [vmem:[#allocation2 + $0x60c] sm:$0xff]
    %v495 = vld [vmem:[#allocation2 + $0x614] sm:$0xff]
    %v496 = vld [vmem:[#allocation2 + $0x61c] sm:$0xf]
    %v497 = vld [vmem:[#allocation2 + $0x620] sm:$0xff]
    %v498 = vld [vmem:[#allocation2 + $0x628] sm:$0xff]
    %v499 = vld [vmem:[#allocation2 + $0x630] sm:$0xff]
    %v500 = vld [vmem:[#allocation2 + $0x638] sm:$0xf]
    %v501 = vld [vmem:[#allocation2 + $0x63c] sm:$0xff]
    %v502 = vld [vmem:[#allocation2 + $0x644] sm:$0xff]
    %v503 = vld [vmem:[#allocation2 + $0x64c] sm:$0xff]
    %v504 = vld [vmem:[#allocation2 + $0x654] sm:$0xf]
    %v505 = vld [vmem:[#allocation2 + $0x658] sm:$0xff]
    %v506 = vld [vmem:[#allocation2 + $0x660] sm:$0xff]
    %v507 = vld [vmem:[#allocation2 + $0x668] sm:$0xff]
    %v508 = vld [vmem:[#allocation2 + $0x670] sm:$0xf]
    %v509 = vld [vmem:[#allocation2 + $0x674] sm:$0xff]
    %v510 = vld [vmem:[#allocation2 + $0x67c] sm:$0xff]
    %v511 = vld [vmem:[#allocation2 + $0x684] sm:$0xff]
    %v512 = vld [vmem:[#allocation2 + $0x68c] sm:$0xf]
    %v513 = vld [vmem:[#allocation2 + $0x690] sm:$0xff]
    %v514 = vld [vmem:[#allocation2 + $0x698] sm:$0xff]
    %v515 = vld [vmem:[#allocation2 + $0x6a0] sm:$0xff]
    %v516 = vld [vmem:[#allocation2 + $0x6a8] sm:$0xf]
    %v517 = vld [vmem:[#allocation2 + $0x6ac] sm:$0xff]
    %v518 = vld [vmem:[#allocation2 + $0x6b4] sm:$0xff]
    %v519 = vld [vmem:[#allocation2 + $0x6bc] sm:$0xff]
    %v520 = vld [vmem:[#allocation2 + $0x6c4] sm:$0xf]
    %v521 = vld [vmem:[#allocation2 + $0x6c8] sm:$0xff]
    %v522 = vld [vmem:[#allocation2 + $0x6d0] sm:$0xff]
    %v523 = vld [vmem:[#allocation2 + $0x6d8] sm:$0xff]
    %v524 = vld [vmem:[#allocation2 + $0x6e0] sm:$0xf]
    %v525 = vld [vmem:[#allocation2 + $0x6e4] sm:$0xff]
    %v526 = vld [vmem:[#allocation2 + $0x6ec] sm:$0xff]
    %v527 = vld [vmem:[#allocation2 + $0x6f4] sm:$0xff]
    %v528 = vld [vmem:[#allocation2 + $0x6fc] sm:$0xf]
    %v785 = vunpack.c.l.b16 %v273
    %v786 = vunpack.c.h.b16 %v273
    %v787 = vunpack.c.l.b16 %v274
    %v788 = vunpack.c.h.b16 %v274
    %v789 = vunpack.c.l.b16 %v275
    %v790 = vunpack.c.h.b16 %v275
    %v791 = vunpack.c.l.b16 %v276
    %v792 = vunpack.c.l.b16 %v277
    %v793 = vunpack.c.h.b16 %v277
    %v794 = vunpack.c.l.b16 %v278
    %v795 = vunpack.c.h.b16 %v278
    %v796 = vunpack.c.l.b16 %v279
    %v797 = vunpack.c.h.b16 %v279
    %v798 = vunpack.c.l.b16 %v280
    %v799 = vunpack.c.l.b16 %v281
    %v800 = vunpack.c.h.b16 %v281
    %v801 = vunpack.c.l.b16 %v282
    %v802 = vunpack.c.h.b16 %v282
    %v803 = vunpack.c.l.b16 %v283
    %v804 = vunpack.c.h.b16 %v283
    %v805 = vunpack.c.l.b16 %v284
    %v806 = vunpack.c.l.b16 %v285
    %v807 = vunpack.c.h.b16 %v285
    %v808 = vunpack.c.l.b16 %v286
    %v809 = vunpack.c.h.b16 %v286
    %v810 = vunpack.c.l.b16 %v287
    %v811 = vunpack.c.h.b16 %v287
    %v812 = vunpack.c.l.b16 %v288
    %v813 = vunpack.c.l.b16 %v289
    %v814 = vunpack.c.h.b16 %v289
    %v815 = vunpack.c.l.b16 %v290
    %v816 = vunpack.c.h.b16 %v290
    %v817 = vunpack.c.l.b16 %v291
    %v818 = vunpack.c.h.b16 %v291
    %v819 = vunpack.c.l.b16 %v292
    %v820 = vunpack.c.l.b16 %v293
    %v821 = vunpack.c.h.b16 %v293
    %v822 = vunpack.c.l.b16 %v294
    %v823 = vunpack.c.h.b16 %v294
    %v824 = vunpack.c.l.b16 %v295
    %v825 = vunpack.c.h.b16 %v295
    %v826 = vunpack.c.l.b16 %v296
    %v827 = vunpack.c.l.b16 %v297
    %v828 = vunpack.c.h.b16 %v297
    %v829 = vunpack.c.l.b16 %v298
    %v830 = vunpack.c.h.b16 %v298
    %v831 = vunpack.c.l.b16 %v299
    %v832 = vunpack.c.h.b16 %v299
    %v833 = vunpack.c.l.b16 %v300
    %v834 = vunpack.c.l.b16 %v301
    %v835 = vunpack.c.h.b16 %v301
    %v836 = vunpack.c.l.b16 %v302
    %v837 = vunpack.c.h.b16 %v302
    %v838 = vunpack.c.l.b16 %v303
    %v839 = vunpack.c.h.b16 %v303
    %v840 = vunpack.c.l.b16 %v304
    %v841 = vunpack.c.l.b16 %v305
    %v842 = vunpack.c.h.b16 %v305
    %v843 = vunpack.c.l.b16 %v306
    %v844 = vunpack.c.h.b16 %v306
    %v845 = vunpack.c.l.b16 %v307
    %v846 = vunpack.c.h.b16 %v307
    %v847 = vunpack.c.l.b16 %v308
    %v848 = vunpack.c.l.b16 %v309
    %v849 = vunpack.c.h.b16 %v309
    %v850 = vunpack.c.l.b16 %v310
    %v851 = vunpack.c.h.b16 %v310
    %v852 = vunpack.c.l.b16 %v311
    %v853 = vunpack.c.h.b16 %v311
    %v854 = vunpack.c.l.b16 %v312
    %v855 = vunpack.c.l.b16 %v313
    %v856 = vunpack.c.h.b16 %v313
    %v857 = vunpack.c.l.b16 %v314
    %v858 = vunpack.c.h.b16 %v314
    %v859 = vunpack.c.l.b16 %v315
    %v860 = vunpack.c.h.b16 %v315
    %v861 = vunpack.c.l.b16 %v316
    %v862 = vunpack.c.l.b16 %v317
    %v863 = vunpack.c.h.b16 %v317
    %v864 = vunpack.c.l.b16 %v318
    %v865 = vunpack.c.h.b16 %v318
    %v866 = vunpack.c.l.b16 %v319
    %v867 = vunpack.c.h.b16 %v319
    %v868 = vunpack.c.l.b16 %v320
    %v869 = vunpack.c.l.b16 %v321
    %v870 = vunpack.c.h.b16 %v321
    %v871 = vunpack.c.l.b16 %v322
    %v872 = vunpack.c.h.b16 %v322
    %v873 = vunpack.c.l.b16 %v323
    %v874 = vunpack.c.h.b16 %v323
    %v875 = vunpack.c.l.b16 %v324
    %v876 = vunpack.c.l.b16 %v325
    %v877 = vunpack.c.h.b16 %v325
    %v878 = vunpack.c.l.b16 %v326
    %v879 = vunpack.c.h.b16 %v326
    %v880 = vunpack.c.l.b16 %v327
    %v881 = vunpack.c.h.b16 %v327
    %v882 = vunpack.c.l.b16 %v328
    %v883 = vunpack.c.l.b16 %v329
    %v884 = vunpack.c.h.b16 %v329
    %v885 = vunpack.c.l.b16 %v330
    %v886 = vunpack.c.h.b16 %v330
    %v887 = vunpack.c.l.b16 %v331
    %v888 = vunpack.c.h.b16 %v331
    %v889 = vunpack.c.l.b16 %v332
    %v890 = vunpack.c.l.b16 %v333
    %v891 = vunpack.c.h.b16 %v333
    %v892 = vunpack.c.l.b16 %v334
    %v893 = vunpack.c.h.b16 %v334
    %v894 = vunpack.c.l.b16 %v335
    %v895 = vunpack.c.h.b16 %v335
    %v896 = vunpack.c.l.b16 %v336
    %v897 = vunpack.c.l.b16 %v337
    %v898 = vunpack.c.h.b16 %v337
    %v899 = vunpack.c.l.b16 %v338
    %v900 = vunpack.c.h.b16 %v338
    %v901 = vunpack.c.l.b16 %v339
    %v902 = vunpack.c.h.b16 %v339
    %v903 = vunpack.c.l.b16 %v340
    %v904 = vunpack.c.l.b16 %v341
    %v905 = vunpack.c.h.b16 %v341
    %v906 = vunpack.c.l.b16 %v342
    %v907 = vunpack.c.h.b16 %v342
    %v908 = vunpack.c.l.b16 %v343
    %v909 = vunpack.c.h.b16 %v343
    %v910 = vunpack.c.l.b16 %v344
    %v911 = vunpack.c.l.b16 %v345
    %v912 = vunpack.c.h.b16 %v345
    %v913 = vunpack.c.l.b16 %v346
    %v914 = vunpack.c.h.b16 %v346
    %v915 = vunpack.c.l.b16 %v347
    %v916 = vunpack.c.h.b16 %v347
    %v917 = vunpack.c.l.b16 %v348
    %v918 = vunpack.c.l.b16 %v349
    %v919 = vunpack.c.h.b16 %v349
    %v920 = vunpack.c.l.b16 %v350
    %v921 = vunpack.c.h.b16 %v350
    %v922 = vunpack.c.l.b16 %v351
    %v923 = vunpack.c.h.b16 %v351
    %v924 = vunpack.c.l.b16 %v352
    %v925 = vunpack.c.l.b16 %v353
    %v926 = vunpack.c.h.b16 %v353
    %v927 = vunpack.c.l.b16 %v354
    %v928 = vunpack.c.h.b16 %v354
    %v929 = vunpack.c.l.b16 %v355
    %v930 = vunpack.c.h.b16 %v355
    %v931 = vunpack.c.l.b16 %v356
    %v932 = vunpack.c.l.b16 %v357
    %v933 = vunpack.c.h.b16 %v357
    %v934 = vunpack.c.l.b16 %v358
    %v935 = vunpack.c.h.b16 %v358
    %v936 = vunpack.c.l.b16 %v359
    %v937 = vunpack.c.h.b16 %v359
    %v938 = vunpack.c.l.b16 %v360
    %v939 = vunpack.c.l.b16 %v361
    %v940 = vunpack.c.h.b16 %v361
    %v941 = vunpack.c.l.b16 %v362
    %v942 = vunpack.c.h.b16 %v362
    %v943 = vunpack.c.l.b16 %v363
    %v944 = vunpack.c.h.b16 %v363
    %v945 = vunpack.c.l.b16 %v364
    %v946 = vunpack.c.l.b16 %v365
    %v947 = vunpack.c.h.b16 %v365
    %v948 = vunpack.c.l.b16 %v366
    %v949 = vunpack.c.h.b16 %v366
    %v950 = vunpack.c.l.b16 %v367
    %v951 = vunpack.c.h.b16 %v367
    %v952 = vunpack.c.l.b16 %v368
    %v953 = vunpack.c.l.b16 %v369
    %v954 = vunpack.c.h.b16 %v369
    %v955 = vunpack.c.l.b16 %v370
    %v956 = vunpack.c.h.b16 %v370
    %v957 = vunpack.c.l.b16 %v371
    %v958 = vunpack.c.h.b16 %v371
    %v959 = vunpack.c.l.b16 %v372
    %v960 = vunpack.c.l.b16 %v373
    %v961 = vunpack.c.h.b16 %v373
    %v962 = vunpack.c.l.b16 %v374
    %v963 = vunpack.c.h.b16 %v374
    %v964 = vunpack.c.l.b16 %v375
    %v965 = vunpack.c.h.b16 %v375
    %v966 = vunpack.c.l.b16 %v376
    %v967 = vunpack.c.l.b16 %v377
    %v968 = vunpack.c.h.b16 %v377
    %v969 = vunpack.c.l.b16 %v378
    %v970 = vunpack.c.h.b16 %v378
    %v971 = vunpack.c.l.b16 %v379
    %v972 = vunpack.c.h.b16 %v379
    %v973 = vunpack.c.l.b16 %v380
    %v974 = vunpack.c.l.b16 %v381
    %v975 = vunpack.c.h.b16 %v381
    %v976 = vunpack.c.l.b16 %v382
    %v977 = vunpack.c.h.b16 %v382
    %v978 = vunpack.c.l.b16 %v383
    %v979 = vunpack.c.h.b16 %v383
    %v980 = vunpack.c.l.b16 %v384
    %v981 = vunpack.c.l.b16 %v385
    %v982 = vunpack.c.h.b16 %v385
    %v983 = vunpack.c.l.b16 %v386
    %v984 = vunpack.c.h.b16 %v386
    %v985 = vunpack.c.l.b16 %v387
    %v986 = vunpack.c.h.b16 %v387
    %v987 = vunpack.c.l.b16 %v388
    %v988 = vunpack.c.l.b16 %v389
    %v989 = vunpack.c.h.b16 %v389
    %v990 = vunpack.c.l.b16 %v390
    %v991 = vunpack.c.h.b16 %v390
    %v992 = vunpack.c.l.b16 %v391
    %v993 = vunpack.c.h.b16 %v391
    %v994 = vunpack.c.l.b16 %v392
    %v995 = vunpack.c.l.b16 %v393
    %v996 = vunpack.c.h.b16 %v393
    %v997 = vunpack.c.l.b16 %v394
    %v998 = vunpack.c.h.b16 %v394
    %v999 = vunpack.c.l.b16 %v395
    %v1000 = vunpack.c.h.b16 %v395
    %v1001 = vunpack.c.l.b16 %v396
    %v1002 = vunpack.c.l.b16 %v397
    %v1003 = vunpack.c.h.b16 %v397
    %v1004 = vunpack.c.l.b16 %v398
    %v1005 = vunpack.c.h.b16 %v398
    %v1006 = vunpack.c.l.b16 %v399
    %v1007 = vunpack.c.h.b16 %v399
    %v1008 = vunpack.c.l.b16 %v400
    %v1009 = vunpack.c.l.b16 %v401
    %v1010 = vunpack.c.h.b16 %v401
    %v1011 = vunpack.c.l.b16 %v402
    %v1012 = vunpack.c.h.b16 %v402
    %v1013 = vunpack.c.l.b16 %v403
    %v1014 = vunpack.c.h.b16 %v403
    %v1015 = vunpack.c.l.b16 %v404
    %v1016 = vunpack.c.l.b16 %v405
    %v1017 = vunpack.c.h.b16 %v405
    %v1018 = vunpack.c.l.b16 %v406
    %v1019 = vunpack.c.h.b16 %v406
    %v1020 = vunpack.c.l.b16 %v407
    %v1021 = vunpack.c.h.b16 %v407
    %v1022 = vunpack.c.l.b16 %v408
    %v1023 = vunpack.c.l.b16 %v409
    %v1024 = vunpack.c.h.b16 %v409
    %v1025 = vunpack.c.l.b16 %v410
    %v1026 = vunpack.c.h.b16 %v410
    %v1027 = vunpack.c.l.b16 %v411
    %v1028 = vunpack.c.h.b16 %v411
    %v1029 = vunpack.c.l.b16 %v412
    %v1030 = vunpack.c.l.b16 %v413
    %v1031 = vunpack.c.h.b16 %v413
    %v1032 = vunpack.c.l.b16 %v414
    %v1033 = vunpack.c.h.b16 %v414
    %v1034 = vunpack.c.l.b16 %v415
    %v1035 = vunpack.c.h.b16 %v415
    %v1036 = vunpack.c.l.b16 %v416
    %v1037 = vunpack.c.l.b16 %v417
    %v1038 = vunpack.c.h.b16 %v417
    %v1039 = vunpack.c.l.b16 %v418
    %v1040 = vunpack.c.h.b16 %v418
    %v1041 = vunpack.c.l.b16 %v419
    %v1042 = vunpack.c.h.b16 %v419
    %v1043 = vunpack.c.l.b16 %v420
    %v1044 = vunpack.c.l.b16 %v421
    %v1045 = vunpack.c.h.b16 %v421
    %v1046 = vunpack.c.l.b16 %v422
    %v1047 = vunpack.c.h.b16 %v422
    %v1048 = vunpack.c.l.b16 %v423
    %v1049 = vunpack.c.h.b16 %v423
    %v1050 = vunpack.c.l.b16 %v424
    %v1051 = vunpack.c.l.b16 %v425
    %v1052 = vunpack.c.h.b16 %v425
    %v1053 = vunpack.c.l.b16 %v426
    %v1054 = vunpack.c.h.b16 %v426
    %v1055 = vunpack.c.l.b16 %v427
    %v1056 = vunpack.c.h.b16 %v427
    %v1057 = vunpack.c.l.b16 %v428
    %v1058 = vunpack.c.l.b16 %v429
    %v1059 = vunpack.c.h.b16 %v429
    %v1060 = vunpack.c.l.b16 %v430
    %v1061 = vunpack.c.h.b16 %v430
    %v1062 = vunpack.c.l.b16 %v431
    %v1063 = vunpack.c.h.b16 %v431
    %v1064 = vunpack.c.l.b16 %v432
    %v1065 = vunpack.c.l.b16 %v433
    %v1066 = vunpack.c.h.b16 %v433
    %v1067 = vunpack.c.l.b16 %v434
    %v1068 = vunpack.c.h.b16 %v434
    %v1069 = vunpack.c.l.b16 %v435
    %v1070 = vunpack.c.h.b16 %v435
    %v1071 = vunpack.c.l.b16 %v436
    %v1072 = vunpack.c.l.b16 %v437
    %v1073 = vunpack.c.h.b16 %v437
    %v1074 = vunpack.c.l.b16 %v438
    %v1075 = vunpack.c.h.b16 %v438
    %v1076 = vunpack.c.l.b16 %v439
    %v1077 = vunpack.c.h.b16 %v439
    %v1078 = vunpack.c.l.b16 %v440
    %v1079 = vunpack.c.l.b16 %v441
    %v1080 = vunpack.c.h.b16 %v441
    %v1081 = vunpack.c.l.b16 %v442
    %v1082 = vunpack.c.h.b16 %v442
    %v1083 = vunpack.c.l.b16 %v443
    %v1084 = vunpack.c.h.b16 %v443
    %v1085 = vunpack.c.l.b16 %v444
    %v1086 = vunpack.c.l.b16 %v445
    %v1087 = vunpack.c.h.b16 %v445
    %v1088 = vunpack.c.l.b16 %v446
    %v1089 = vunpack.c.h.b16 %v446
    %v1090 = vunpack.c.l.b16 %v447
    %v1091 = vunpack.c.h.b16 %v447
    %v1092 = vunpack.c.l.b16 %v448
    %v1093 = vunpack.c.l.b16 %v449
    %v1094 = vunpack.c.h.b16 %v449
    %v1095 = vunpack.c.l.b16 %v450
    %v1096 = vunpack.c.h.b16 %v450
    %v1097 = vunpack.c.l.b16 %v451
    %v1098 = vunpack.c.h.b16 %v451
    %v1099 = vunpack.c.l.b16 %v452
    %v1100 = vunpack.c.l.b16 %v453
    %v1101 = vunpack.c.h.b16 %v453
    %v1102 = vunpack.c.l.b16 %v454
    %v1103 = vunpack.c.h.b16 %v454
    %v1104 = vunpack.c.l.b16 %v455
    %v1105 = vunpack.c.h.b16 %v455
    %v1106 = vunpack.c.l.b16 %v456
    %v1107 = vunpack.c.l.b16 %v457
    %v1108 = vunpack.c.h.b16 %v457
    %v1109 = vunpack.c.l.b16 %v458
    %v1110 = vunpack.c.h.b16 %v458
    %v1111 = vunpack.c.l.b16 %v459
    %v1112 = vunpack.c.h.b16 %v459
    %v1113 = vunpack.c.l.b16 %v460
    %v1114 = vunpack.c.l.b16 %v461
    %v1115 = vunpack.c.h.b16 %v461
    %v1116 = vunpack.c.l.b16 %v462
    %v1117 = vunpack.c.h.b16 %v462
    %v1118 = vunpack.c.l.b16 %v463
    %v1119 = vunpack.c.h.b16 %v463
    %v1120 = vunpack.c.l.b16 %v464
    %v1121 = vunpack.c.l.b16 %v465
    %v1122 = vunpack.c.h.b16 %v465
    %v1123 = vunpack.c.l.b16 %v466
    %v1124 = vunpack.c.h.b16 %v466
    %v1125 = vunpack.c.l.b16 %v467
    %v1126 = vunpack.c.h.b16 %v467
    %v1127 = vunpack.c.l.b16 %v468
    %v1128 = vunpack.c.l.b16 %v469
    %v1129 = vunpack.c.h.b16 %v469
    %v1130 = vunpack.c.l.b16 %v470
    %v1131 = vunpack.c.h.b16 %v470
    %v1132 = vunpack.c.l.b16 %v471
    %v1133 = vunpack.c.h.b16 %v471
    %v1134 = vunpack.c.l.b16 %v472
    %v1135 = vunpack.c.l.b16 %v473
    %v1136 = vunpack.c.h.b16 %v473
    %v1137 = vunpack.c.l.b16 %v474
    %v1138 = vunpack.c.h.b16 %v474
    %v1139 = vunpack.c.l.b16 %v475
    %v1140 = vunpack.c.h.b16 %v475
    %v1141 = vunpack.c.l.b16 %v476
    %v1142 = vunpack.c.l.b16 %v477
    %v1143 = vunpack.c.h.b16 %v477
    %v1144 = vunpack.c.l.b16 %v478
    %v1145 = vunpack.c.h.b16 %v478
    %v1146 = vunpack.c.l.b16 %v479
    %v1147 = vunpack.c.h.b16 %v479
    %v1148 = vunpack.c.l.b16 %v480
    %v1149 = vunpack.c.l.b16 %v481
    %v1150 = vunpack.c.h.b16 %v481
    %v1151 = vunpack.c.l.b16 %v482
    %v1152 = vunpack.c.h.b16 %v482
    %v1153 = vunpack.c.l.b16 %v483
    %v1154 = vunpack.c.h.b16 %v483
    %v1155 = vunpack.c.l.b16 %v484
    %v1156 = vunpack.c.l.b16 %v485
    %v1157 = vunpack.c.h.b16 %v485
    %v1158 = vunpack.c.l.b16 %v486
    %v1159 = vunpack.c.h.b16 %v486
    %v1160 = vunpack.c.l.b16 %v487
    %v1161 = vunpack.c.h.b16 %v487
    %v1162 = vunpack.c.l.b16 %v488
    %v1163 = vunpack.c.l.b16 %v489
    %v1164 = vunpack.c.h.b16 %v489
    %v1165 = vunpack.c.l.b16 %v490
    %v1166 = vunpack.c.h.b16 %v490
    %v1167 = vunpack.c.l.b16 %v491
    %v1168 = vunpack.c.h.b16 %v491
    %v1169 = vunpack.c.l.b16 %v492
    %v1170 = vunpack.c.l.b16 %v493
    %v1171 = vunpack.c.h.b16 %v493
    %v1172 = vunpack.c.l.b16 %v494
    %v1173 = vunpack.c.h.b16 %v494
    %v1174 = vunpack.c.l.b16 %v495
    %v1175 = vunpack.c.h.b16 %v495
    %v1176 = vunpack.c.l.b16 %v496
    %v1177 = vunpack.c.l.b16 %v497
    %v1178 = vunpack.c.h.b16 %v497
    %v1179 = vunpack.c.l.b16 %v498
    %v1180 = vunpack.c.h.b16 %v498
    %v1181 = vunpack.c.l.b16 %v499
    %v1182 = vunpack.c.h.b16 %v499
    %v1183 = vunpack.c.l.b16 %v500
    %v1184 = vunpack.c.l.b16 %v501
    %v1185 = vunpack.c.h.b16 %v501
    %v1186 = vunpack.c.l.b16 %v502
    %v1187 = vunpack.c.h.b16 %v502
    %v1188 = vunpack.c.l.b16 %v503
    %v1189 = vunpack.c.h.b16 %v503
    %v1190 = vunpack.c.l.b16 %v504
    %v1191 = vunpack.c.l.b16 %v505
    %v1192 = vunpack.c.h.b16 %v505
    %v1193 = vunpack.c.l.b16 %v506
    %v1194 = vunpack.c.h.b16 %v506
    %v1195 = vunpack.c.l.b16 %v507
    %v1196 = vunpack.c.h.b16 %v507
    %v1197 = vunpack.c.l.b16 %v508
    %v1198 = vunpack.c.l.b16 %v509
    %v1199 = vunpack.c.h.b16 %v509
    %v1200 = vunpack.c.l.b16 %v510
    %v1201 = vunpack.c.h.b16 %v510
    %v1202 = vunpack.c.l.b16 %v511
    %v1203 = vunpack.c.h.b16 %v511
    %v1204 = vunpack.c.l.b16 %v512
    %v1205 = vunpack.c.l.b16 %v513
    %v1206 = vunpack.c.h.b16 %v513
    %v1207 = vunpack.c.l.b16 %v514
    %v1208 = vunpack.c.h.b16 %v514
    %v1209 = vunpack.c.l.b16 %v515
    %v1210 = vunpack.c.h.b16 %v515
    %v1211 = vunpack.c.l.b16 %v516
    %v1212 = vunpack.c.l.b16 %v517
    %v1213 = vunpack.c.h.b16 %v517
    %v1214 = vunpack.c.l.b16 %v518
    %v1215 = vunpack.c.h.b16 %v518
    %v1216 = vunpack.c.l.b16 %v519
    %v1217 = vunpack.c.h.b16 %v519
    %v1218 = vunpack.c.l.b16 %v520
    %v1219 = vunpack.c.l.b16 %v521
    %v1220 = vunpack.c.h.b16 %v521
    %v1221 = vunpack.c.l.b16 %v522
    %v1222 = vunpack.c.h.b16 %v522
    %v1223 = vunpack.c.l.b16 %v523
    %v1224 = vunpack.c.h.b16 %v523
    %v1225 = vunpack.c.l.b16 %v524
    %v1226 = vunpack.c.l.b16 %v525
    %v1227 = vunpack.c.h.b16 %v525
    %v1228 = vunpack.c.l.b16 %v526
    %v1229 = vunpack.c.h.b16 %v526
    %v1230 = vunpack.c.l.b16 %v527
    %v1231 = vunpack.c.h.b16 %v527
    %v1232 = vunpack.c.l.b16 %v528
    %v1233 = vpack.c.b16 %v792, %v785
    %v1234 = vpack.c.b16 %v793, %v786
    %v1235 = vpack.c.b16 %v794, %v787
    %v1236 = vpack.c.b16 %v795, %v788
    %v1237 = vpack.c.b16 %v796, %v789
    %v1238 = vpack.c.b16 %v797, %v790
    %v1239 = vpack.c.b16 %v798, %v791
    %v1240 = vpack.c.b16 %v806, %v799
    %v1241 = vpack.c.b16 %v807, %v800
    %v1242 = vpack.c.b16 %v808, %v801
    %v1243 = vpack.c.b16 %v809, %v802
    %v1244 = vpack.c.b16 %v810, %v803
    %v1245 = vpack.c.b16 %v811, %v804
    %v1246 = vpack.c.b16 %v812, %v805
    %v1247 = vpack.c.b16 %v820, %v813
    %v1248 = vpack.c.b16 %v821, %v814
    %v1249 = vpack.c.b16 %v822, %v815
    %v1250 = vpack.c.b16 %v823, %v816
    %v1251 = vpack.c.b16 %v824, %v817
    %v1252 = vpack.c.b16 %v825, %v818
    %v1253 = vpack.c.b16 %v826, %v819
    %v1254 = vpack.c.b16 %v834, %v827
    %v1255 = vpack.c.b16 %v835, %v828
    %v1256 = vpack.c.b16 %v836, %v829
    %v1257 = vpack.c.b16 %v837, %v830
    %v1258 = vpack.c.b16 %v838, %v831
    %v1259 = vpack.c.b16 %v839, %v832
    %v1260 = vpack.c.b16 %v840, %v833
    %v1261 = vpack.c.b16 %v848, %v841
    %v1262 = vpack.c.b16 %v849, %v842
    %v1263 = vpack.c.b16 %v850, %v843
    %v1264 = vpack.c.b16 %v851, %v844
    %v1265 = vpack.c.b16 %v852, %v845
    %v1266 = vpack.c.b16 %v853, %v846
    %v1267 = vpack.c.b16 %v854, %v847
    %v1268 = vpack.c.b16 %v862, %v855
    %v1269 = vpack.c.b16 %v863, %v856
    %v1270 = vpack.c.b16 %v864, %v857
    %v1271 = vpack.c.b16 %v865, %v858
    %v1272 = vpack.c.b16 %v866, %v859
    %v1273 = vpack.c.b16 %v867, %v860
    %v1274 = vpack.c.b16 %v868, %v861
    %v1275 = vpack.c.b16 %v876, %v869
    %v1276 = vpack.c.b16 %v877, %v870
    %v1277 = vpack.c.b16 %v878, %v871
    %v1278 = vpack.c.b16 %v879, %v872
    %v1279 = vpack.c.b16 %v880, %v873
    %v1280 = vpack.c.b16 %v881, %v874
    %v1281 = vpack.c.b16 %v882, %v875
    %v1282 = vpack.c.b16 %v890, %v883
    %v1283 = vpack.c.b16 %v891, %v884
    %v1284 = vpack.c.b16 %v892, %v885
    %v1285 = vpack.c.b16 %v893, %v886
    %v1286 = vpack.c.b16 %v894, %v887
    %v1287 = vpack.c.b16 %v895, %v888
    %v1288 = vpack.c.b16 %v896, %v889
    %v1289 = vpack.c.b16 %v904, %v897
    %v1290 = vpack.c.b16 %v905, %v898
    %v1291 = vpack.c.b16 %v906, %v899
    %v1292 = vpack.c.b16 %v907, %v900
    %v1293 = vpack.c.b16 %v908, %v901
    %v1294 = vpack.c.b16 %v909, %v902
    %v1295 = vpack.c.b16 %v910, %v903
    %v1296 = vpack.c.b16 %v918, %v911
    %v1297 = vpack.c.b16 %v919, %v912
    %v1298 = vpack.c.b16 %v920, %v913
    %v1299 = vpack.c.b16 %v921, %v914
    %v1300 = vpack.c.b16 %v922, %v915
    %v1301 = vpack.c.b16 %v923, %v916
    %v1302 = vpack.c.b16 %v924, %v917
    %v1303 = vpack.c.b16 %v932, %v925
    %v1304 = vpack.c.b16 %v933, %v926
    %v1305 = vpack.c.b16 %v934, %v927
    %v1306 = vpack.c.b16 %v935, %v928
    %v1307 = vpack.c.b16 %v936, %v929
    %v1308 = vpack.c.b16 %v937, %v930
    %v1309 = vpack.c.b16 %v938, %v931
    %v1310 = vpack.c.b16 %v946, %v939
    %v1311 = vpack.c.b16 %v947, %v940
    %v1312 = vpack.c.b16 %v948, %v941
    %v1313 = vpack.c.b16 %v949, %v942
    %v1314 = vpack.c.b16 %v950, %v943
    %v1315 = vpack.c.b16 %v951, %v944
    %v1316 = vpack.c.b16 %v952, %v945
    %v1317 = vpack.c.b16 %v960, %v953
    %v1318 = vpack.c.b16 %v961, %v954
    %v1319 = vpack.c.b16 %v962, %v955
    %v1320 = vpack.c.b16 %v963, %v956
    %v1321 = vpack.c.b16 %v964, %v957
    %v1322 = vpack.c.b16 %v965, %v958
    %v1323 = vpack.c.b16 %v966, %v959
    %v1324 = vpack.c.b16 %v974, %v967
    %v1325 = vpack.c.b16 %v975, %v968
    %v1326 = vpack.c.b16 %v976, %v969
    %v1327 = vpack.c.b16 %v977, %v970
    %v1328 = vpack.c.b16 %v978, %v971
    %v1329 = vpack.c.b16 %v979, %v972
    %v1330 = vpack.c.b16 %v980, %v973
    %v1331 = vpack.c.b16 %v988, %v981
    %v1332 = vpack.c.b16 %v989, %v982
    %v1333 = vpack.c.b16 %v990, %v983
    %v1334 = vpack.c.b16 %v991, %v984
    %v1335 = vpack.c.b16 %v992, %v985
    %v1336 = vpack.c.b16 %v993, %v986
    %v1337 = vpack.c.b16 %v994, %v987
    %v1338 = vpack.c.b16 %v1002, %v995
    %v1339 = vpack.c.b16 %v1003, %v996
    %v1340 = vpack.c.b16 %v1004, %v997
    %v1341 = vpack.c.b16 %v1005, %v998
    %v1342 = vpack.c.b16 %v1006, %v999
    %v1343 = vpack.c.b16 %v1007, %v1000
    %v1344 = vpack.c.b16 %v1008, %v1001
    %v1345 = vpack.c.b16 %v1016, %v1009
    %v1346 = vpack.c.b16 %v1017, %v1010
    %v1347 = vpack.c.b16 %v1018, %v1011
    %v1348 = vpack.c.b16 %v1019, %v1012
    %v1349 = vpack.c.b16 %v1020, %v1013
    %v1350 = vpack.c.b16 %v1021, %v1014
    %v1351 = vpack.c.b16 %v1022, %v1015
    %v1352 = vpack.c.b16 %v1030, %v1023
    %v1353 = vpack.c.b16 %v1031, %v1024
    %v1354 = vpack.c.b16 %v1032, %v1025
    %v1355 = vpack.c.b16 %v1033, %v1026
    %v1356 = vpack.c.b16 %v1034, %v1027
    %v1357 = vpack.c.b16 %v1035, %v1028
    %v1358 = vpack.c.b16 %v1036, %v1029
    %v1359 = vpack.c.b16 %v1044, %v1037
    %v1360 = vpack.c.b16 %v1045, %v1038
    %v1361 = vpack.c.b16 %v1046, %v1039
    %v1362 = vpack.c.b16 %v1047, %v1040
    %v1363 = vpack.c.b16 %v1048, %v1041
    %v1364 = vpack.c.b16 %v1049, %v1042
    %v1365 = vpack.c.b16 %v1050, %v1043
    %v1366 = vpack.c.b16 %v1058, %v1051
    %v1367 = vpack.c.b16 %v1059, %v1052
    %v1368 = vpack.c.b16 %v1060, %v1053
    %v1369 = vpack.c.b16 %v1061, %v1054
    %v1370 = vpack.c.b16 %v1062, %v1055
    %v1371 = vpack.c.b16 %v1063, %v1056
    %v1372 = vpack.c.b16 %v1064, %v1057
    %v1373 = vpack.c.b16 %v1072, %v1065
    %v1374 = vpack.c.b16 %v1073, %v1066
    %v1375 = vpack.c.b16 %v1074, %v1067
    %v1376 = vpack.c.b16 %v1075, %v1068
    %v1377 = vpack.c.b16 %v1076, %v1069
    %v1378 = vpack.c.b16 %v1077, %v1070
    %v1379 = vpack.c.b16 %v1078, %v1071
    %v1380 = vpack.c.b16 %v1086, %v1079
    %v1381 = vpack.c.b16 %v1087, %v1080
    %v1382 = vpack.c.b16 %v1088, %v1081
    %v1383 = vpack.c.b16 %v1089, %v1082
    %v1384 = vpack.c.b16 %v1090, %v1083
    %v1385 = vpack.c.b16 %v1091, %v1084
    %v1386 = vpack.c.b16 %v1092, %v1085
    %v1387 = vpack.c.b16 %v1100, %v1093
    %v1388 = vpack.c.b16 %v1101, %v1094
    %v1389 = vpack.c.b16 %v1102, %v1095
    %v1390 = vpack.c.b16 %v1103, %v1096
    %v1391 = vpack.c.b16 %v1104, %v1097
    %v1392 = vpack.c.b16 %v1105, %v1098
    %v1393 = vpack.c.b16 %v1106, %v1099
    %v1394 = vpack.c.b16 %v1114, %v1107
    %v1395 = vpack.c.b16 %v1115, %v1108
    %v1396 = vpack.c.b16 %v1116, %v1109
    %v1397 = vpack.c.b16 %v1117, %v1110
    %v1398 = vpack.c.b16 %v1118, %v1111
    %v1399 = vpack.c.b16 %v1119, %v1112
    %v1400 = vpack.c.b16 %v1120, %v1113
    %v1401 = vpack.c.b16 %v1128, %v1121
    %v1402 = vpack.c.b16 %v1129, %v1122
    %v1403 = vpack.c.b16 %v1130, %v1123
    %v1404 = vpack.c.b16 %v1131, %v1124
    %v1405 = vpack.c.b16 %v1132, %v1125
    %v1406 = vpack.c.b16 %v1133, %v1126
    %v1407 = vpack.c.b16 %v1134, %v1127
    %v1408 = vpack.c.b16 %v1142, %v1135
    %v1409 = vpack.c.b16 %v1143, %v1136
    %v1410 = vpack.c.b16 %v1144, %v1137
    %v1411 = vpack.c.b16 %v1145, %v1138
    %v1412 = vpack.c.b16 %v1146, %v1139
    %v1413 = vpack.c.b16 %v1147, %v1140
    %v1414 = vpack.c.b16 %v1148, %v1141
    %v1415 = vpack.c.b16 %v1156, %v1149
    %v1416 = vpack.c.b16 %v1157, %v1150
    %v1417 = vpack.c.b16 %v1158, %v1151
    %v1418 = vpack.c.b16 %v1159, %v1152
    %v1419 = vpack.c.b16 %v1160, %v1153
    %v1420 = vpack.c.b16 %v1161, %v1154
    %v1421 = vpack.c.b16 %v1162, %v1155
    %v1422 = vpack.c.b16 %v1170, %v1163
    %v1423 = vpack.c.b16 %v1171, %v1164
    %v1424 = vpack.c.b16 %v1172, %v1165
    %v1425 = vpack.c.b16 %v1173, %v1166
    %v1426 = vpack.c.b16 %v1174, %v1167
    %v1427 = vpack.c.b16 %v1175, %v1168
    %v1428 = vpack.c.b16 %v1176, %v1169
    %v1429 = vpack.c.b16 %v1184, %v1177
    %v1430 = vpack.c.b16 %v1185, %v1178
    %v1431 = vpack.c.b16 %v1186, %v1179
    %v1432 = vpack.c.b16 %v1187, %v1180
    %v1433 = vpack.c.b16 %v1188, %v1181
    %v1434 = vpack.c.b16 %v1189, %v1182
    %v1435 = vpack.c.b16 %v1190, %v1183
    %v1436 = vpack.c.b16 %v1198, %v1191
    %v1437 = vpack.c.b16 %v1199, %v1192
    %v1438 = vpack.c.b16 %v1200, %v1193
    %v1439 = vpack.c.b16 %v1201, %v1194
    %v1440 = vpack.c.b16 %v1202, %v1195
    %v1441 = vpack.c.b16 %v1203, %v1196
    %v1442 = vpack.c.b16 %v1204, %v1197
    %v1443 = vpack.c.b16 %v1212, %v1205
    %v1444 = vpack.c.b16 %v1213, %v1206
    %v1445 = vpack.c.b16 %v1214, %v1207
    %v1446 = vpack.c.b16 %v1215, %v1208
    %v1447 = vpack.c.b16 %v1216, %v1209
    %v1448 = vpack.c.b16 %v1217, %v1210
    %v1449 = vpack.c.b16 %v1218, %v1211
    %v1450 = vpack.c.b16 %v1226, %v1219
    %v1451 = vpack.c.b16 %v1227, %v1220
    %v1452 = vpack.c.b16 %v1228, %v1221
    %v1453 = vpack.c.b16 %v1229, %v1222
    %v1454 = vpack.c.b16 %v1230, %v1223
    %v1455 = vpack.c.b16 %v1231, %v1224
    %v1456 = vpack.c.b16 %v1232, %v1225
    %1681 = vmatpush.bf16.msra.mxu0 %v1282
    %1682 = vmatpush.bf16.msra.mxu0 %v1275
    %1683 = vmatpush.bf16.msra.mxu0 %v1268
    %1684 = vmatpush.bf16.msra.mxu0 %v1261
    %1685 = vmatpush.bf16.msra.mxu0 %v1254
    %1686 = vmatpush.bf16.msra.mxu0 %v1247
    %1687 = vmatpush.bf16.msra.mxu0 %v1240
    %1688 = vmatpush.bf16.msra.mxu0 %v1233
    %1689 = vmatmul.bf16.gmra.mxu0 %v265
    %v1690 = vpop.f32.mrf.mxu0
    %v1691 = vadd.f32 0.0, %v1690
    %v1692 = vpop.f32.mrf.mxu0
    %1693 = vdwg.mxu0
    %1694 = vmatpush.bf16.msra.mxu0 %v1338
    %1695 = vmatpush.bf16.msra.mxu0 %v1331
    %1696 = vmatpush.bf16.msra.mxu0 %v1324
    %1697 = vmatpush.bf16.msra.mxu0 %v1317
    %1698 = vmatpush.bf16.msra.mxu0 %v1310
    %1699 = vmatpush.bf16.msra.mxu0 %v1303
    %1700 = vmatpush.bf16.msra.mxu0 %v1296
    %1701 = vmatpush.bf16.msra.mxu0 %v1289
    %1702 = vmatmul.bf16.gmra.mxu0 %v266
    %v1703 = vpop.f32.mrf.mxu0
    %v1704 = vadd.f32 %v1691, %v1703
    %v1705 = vpop.f32.mrf.mxu0
    %1706 = vdwg.mxu0
    %1707 = vmatpush.bf16.msra.mxu0 %v1394
    %1708 = vmatpush.bf16.msra.mxu0 %v1387
    %1709 = vmatpush.bf16.msra.mxu0 %v1380
    %1710 = vmatpush.bf16.msra.mxu0 %v1373
    %1711 = vmatpush.bf16.msra.mxu0 %v1366
    %1712 = vmatpush.bf16.msra.mxu0 %v1359
    %1713 = vmatpush.bf16.msra.mxu0 %v1352
    %1714 = vmatpush.bf16.msra.mxu0 %v1345
    %1715 = vmatmul.bf16.gmra.mxu0 %v267
    %v1716 = vpop.f32.mrf.mxu0
    %v1717 = vadd.f32 %v1704, %v1716
    %v1718 = vpop.f32.mrf.mxu0
    %1719 = vdwg.mxu0
    %1720 = vmatpush.bf16.msra.mxu0 %v1450
    %1721 = vmatpush.bf16.msra.mxu0 %v1443
    %1722 = vmatpush.bf16.msra.mxu0 %v1436
    %1723 = vmatpush.bf16.msra.mxu0 %v1429
    %1724 = vmatpush.bf16.msra.mxu0 %v1422
    %1725 = vmatpush.bf16.msra.mxu0 %v1415
    %1726 = vmatpush.bf16.msra.mxu0 %v1408
    %1727 = vmatpush.bf16.msra.mxu0 %v1401
    %1728 = vmatmul.bf16.gmra.mxu0 %v268
    %v1729 = vpop.f32.mrf.mxu0
    %v1730 = vadd.f32 %v1717, %v1729
    %v1731 = vpop.f32.mrf.mxu0
    %1732 = vdwg.mxu0
    %1733 = vmatpush.bf16.msra.mxu0 %v1283
    %1734 = vmatpush.bf16.msra.mxu0 %v1276
    %1735 = vmatpush.bf16.msra.mxu0 %v1269
    %1736 = vmatpush.bf16.msra.mxu0 %v1262
    %1737 = vmatpush.bf16.msra.mxu0 %v1255
    %1738 = vmatpush.bf16.msra.mxu0 %v1248
    %1739 = vmatpush.bf16.msra.mxu0 %v1241
    %1740 = vmatpush.bf16.msra.mxu0 %v1234
    %1741 = vmatmul.bf16.gmra.mxu0 %v265
    %v1742 = vpop.f32.mrf.mxu0
    %v1743 = vadd.f32 0.0, %v1742
    %v1744 = vpop.f32.mrf.mxu0
    %1745 = vdwg.mxu0
    %1746 = vmatpush.bf16.msra.mxu0 %v1339
    %1747 = vmatpush.bf16.msra.mxu0 %v1332
    %1748 = vmatpush.bf16.msra.mxu0 %v1325
    %1749 = vmatpush.bf16.msra.mxu0 %v1318
    %1750 = vmatpush.bf16.msra.mxu0 %v1311
    %1751 = vmatpush.bf16.msra.mxu0 %v1304
    %1752 = vmatpush.bf16.msra.mxu0 %v1297
    %1753 = vmatpush.bf16.msra.mxu0 %v1290
    %1754 = vmatmul.bf16.gmra.mxu0 %v266
    %v1755 = vpop.f32.mrf.mxu0
    %v1756 = vadd.f32 %v1743, %v1755
    %v1757 = vpop.f32.mrf.mxu0
    %1758 = vdwg.mxu0
    %1759 = vmatpush.bf16.msra.mxu0 %v1395
    %1760 = vmatpush.bf16.msra.mxu0 %v1388
    %1761 = vmatpush.bf16.msra.mxu0 %v1381
    %1762 = vmatpush.bf16.msra.mxu0 %v1374
    %1763 = vmatpush.bf16.msra.mxu0 %v1367
    %1764 = vmatpush.bf16.msra.mxu0 %v1360
    %1765 = vmatpush.bf16.msra.mxu0 %v1353
    %1766 = vmatpush.bf16.msra.mxu0 %v1346
    %1767 = vmatmul.bf16.gmra.mxu0 %v267
    %v1768 = vpop.f32.mrf.mxu0
    %v1769 = vadd.f32 %v1756, %v1768
    %v1770 = vpop.f32.mrf.mxu0
    %1771 = vdwg.mxu0
    %1772 = vmatpush.bf16.msra.mxu0 %v1451
    %1773 = vmatpush.bf16.msra.mxu0 %v1444
    %1774 = vmatpush.bf16.msra.mxu0 %v1437
    %1775 = vmatpush.bf16.msra.mxu0 %v1430
    %1776 = vmatpush.bf16.msra.mxu0 %v1423
    %1777 = vmatpush.bf16.msra.mxu0 %v1416
    %1778 = vmatpush.bf16.msra.mxu0 %v1409
    %1779 = vmatpush.bf16.msra.mxu0 %v1402
    %1780 = vmatmul.bf16.gmra.mxu0 %v268
    %v1781 = vpop.f32.mrf.mxu0
    %v1782 = vadd.f32 %v1769, %v1781
    %v1783 = vpop.f32.mrf.mxu0
    %1784 = vdwg.mxu0
    %1785 = vmatpush.bf16.msra.mxu0 %v1284
    %1786 = vmatpush.bf16.msra.mxu0 %v1277
    %1787 = vmatpush.bf16.msra.mxu0 %v1270
    %1788 = vmatpush.bf16.msra.mxu0 %v1263
    %1789 = vmatpush.bf16.msra.mxu0 %v1256
    %1790 = vmatpush.bf16.msra.mxu0 %v1249
    %1791 = vmatpush.bf16.msra.mxu0 %v1242
    %1792 = vmatpush.bf16.msra.mxu0 %v1235
    %1793 = vmatmul.bf16.gmra.mxu0 %v265
    %v1794 = vpop.f32.mrf.mxu0
    %v1795 = vadd.f32 0.0, %v1794
    %v1796 = vpop.f32.mrf.mxu0
    %1797 = vdwg.mxu0
    %1798 = vmatpush.bf16.msra.mxu0 %v1340
    %1799 = vmatpush.bf16.msra.mxu0 %v1333
    %1800 = vmatpush.bf16.msra.mxu0 %v1326
    %1801 = vmatpush.bf16.msra.mxu0 %v1319
    %1802 = vmatpush.bf16.msra.mxu0 %v1312
    %1803 = vmatpush.bf16.msra.mxu0 %v1305
    %1804 = vmatpush.bf16.msra.mxu0 %v1298
    %1805 = vmatpush.bf16.msra.mxu0 %v1291
    %1806 = vmatmul.bf16.gmra.mxu0 %v266
    %v1807 = vpop.f32.mrf.mxu0
    %v1808 = vadd.f32 %v1795, %v1807
    %v1809 = vpop.f32.mrf.mxu0
    %1810 = vdwg.mxu0
    %1811 = vmatpush.bf16.msra.mxu0 %v1396
    %1812 = vmatpush.bf16.msra.mxu0 %v1389
    %1813 = vmatpush.bf16.msra.mxu0 %v1382
    %1814 = vmatpush.bf16.msra.mxu0 %v1375
    %1815 = vmatpush.bf16.msra.mxu0 %v1368
    %1816 = vmatpush.bf16.msra.mxu0 %v1361
    %1817 = vmatpush.bf16.msra.mxu0 %v1354
    %1818 = vmatpush.bf16.msra.mxu0 %v1347
    %1819 = vmatmul.bf16.gmra.mxu0 %v267
    %v1820 = vpop.f32.mrf.mxu0
    %v1821 = vadd.f32 %v1808, %v1820
    %v1822 = vpop.f32.mrf.mxu0
    %1823 = vdwg.mxu0
    %1824 = vmatpush.bf16.msra.mxu0 %v1452
    %1825 = vmatpush.bf16.msra.mxu0 %v1445
    %1826 = vmatpush.bf16.msra.mxu0 %v1438
    %1827 = vmatpush.bf16.msra.mxu0 %v1431
    %1828 = vmatpush.bf16.msra.mxu0 %v1424
    %1829 = vmatpush.bf16.msra.mxu0 %v1417
    %1830 = vmatpush.bf16.msra.mxu0 %v1410
    %1831 = vmatpush.bf16.msra.mxu0 %v1403
    %1832 = vmatmul.bf16.gmra.mxu0 %v268
    %v1833 = vpop.f32.mrf.mxu0
    %v1834 = vadd.f32 %v1821, %v1833
    %v1835 = vpop.f32.mrf.mxu0
    %1836 = vdwg.mxu0
    %1837 = vmatpush.bf16.msra.mxu0 %v1285
    %1838 = vmatpush.bf16.msra.mxu0 %v1278
    %1839 = vmatpush.bf16.msra.mxu0 %v1271
    %1840 = vmatpush.bf16.msra.mxu0 %v1264
    %1841 = vmatpush.bf16.msra.mxu0 %v1257
    %1842 = vmatpush.bf16.msra.mxu0 %v1250
    %1843 = vmatpush.bf16.msra.mxu0 %v1243
    %1844 = vmatpush.bf16.msra.mxu0 %v1236
    %1845 = vmatmul.bf16.gmra.mxu0 %v265
    %v1846 = vpop.f32.mrf.mxu0
    %v1847 = vadd.f32 0.0, %v1846
    %v1848 = vpop.f32.mrf.mxu0
    %1849 = vdwg.mxu0
    %1850 = vmatpush.bf16.msra.mxu0 %v1341
    %1851 = vmatpush.bf16.msra.mxu0 %v1334
    %1852 = vmatpush.bf16.msra.mxu0 %v1327
    %1853 = vmatpush.bf16.msra.mxu0 %v1320
    %1854 = vmatpush.bf16.msra.mxu0 %v1313
    %1855 = vmatpush.bf16.msra.mxu0 %v1306
    %1856 = vmatpush.bf16.msra.mxu0 %v1299
    %1857 = vmatpush.bf16.msra.mxu0 %v1292
    %1858 = vmatmul.bf16.gmra.mxu0 %v266
    %v1859 = vpop.f32.mrf.mxu0
    %v1860 = vadd.f32 %v1847, %v1859
    %v1861 = vpop.f32.mrf.mxu0
    %1862 = vdwg.mxu0
    %1863 = vmatpush.bf16.msra.mxu0 %v1397
    %1864 = vmatpush.bf16.msra.mxu0 %v1390
    %1865 = vmatpush.bf16.msra.mxu0 %v1383
    %1866 = vmatpush.bf16.msra.mxu0 %v1376
    %1867 = vmatpush.bf16.msra.mxu0 %v1369
    %1868 = vmatpush.bf16.msra.mxu0 %v1362
    %1869 = vmatpush.bf16.msra.mxu0 %v1355
    %1870 = vmatpush.bf16.msra.mxu0 %v1348
    %1871 = vmatmul.bf16.gmra.mxu0 %v267
    %v1872 = vpop.f32.mrf.mxu0
    %v1873 = vadd.f32 %v1860, %v1872
    %v1874 = vpop.f32.mrf.mxu0
    %1875 = vdwg.mxu0
    %1876 = vmatpush.bf16.msra.mxu0 %v1453
    %1877 = vmatpush.bf16.msra.mxu0 %v1446
    %1878 = vmatpush.bf16.msra.mxu0 %v1439
    %1879 = vmatpush.bf16.msra.mxu0 %v1432
    %1880 = vmatpush.bf16.msra.mxu0 %v1425
    %1881 = vmatpush.bf16.msra.mxu0 %v1418
    %1882 = vmatpush.bf16.msra.mxu0 %v1411
    %1883 = vmatpush.bf16.msra.mxu0 %v1404
    %1884 = vmatmul.bf16.gmra.mxu0 %v268
    %v1885 = vpop.f32.mrf.mxu0
    %v1886 = vadd.f32 %v1873, %v1885
    %v1887 = vpop.f32.mrf.mxu0
    %1888 = vdwg.mxu0
    %1889 = vmatpush.bf16.msra.mxu0 %v1286
    %1890 = vmatpush.bf16.msra.mxu0 %v1279
    %1891 = vmatpush.bf16.msra.mxu0 %v1272
    %1892 = vmatpush.bf16.msra.mxu0 %v1265
    %1893 = vmatpush.bf16.msra.mxu0 %v1258
    %1894 = vmatpush.bf16.msra.mxu0 %v1251
    %1895 = vmatpush.bf16.msra.mxu0 %v1244
    %1896 = vmatpush.bf16.msra.mxu0 %v1237
    %1897 = vmatmul.bf16.gmra.mxu0 %v265
    %v1898 = vpop.f32.mrf.mxu0
    %v1899 = vadd.f32 0.0, %v1898
    %v1900 = vpop.f32.mrf.mxu0
    %1901 = vdwg.mxu0
    %1902 = vmatpush.bf16.msra.mxu0 %v1342
    %1903 = vmatpush.bf16.msra.mxu0 %v1335
    %1904 = vmatpush.bf16.msra.mxu0 %v1328
    %1905 = vmatpush.bf16.msra.mxu0 %v1321
    %1906 = vmatpush.bf16.msra.mxu0 %v1314
    %1907 = vmatpush.bf16.msra.mxu0 %v1307
    %1908 = vmatpush.bf16.msra.mxu0 %v1300
    %1909 = vmatpush.bf16.msra.mxu0 %v1293
    %1910 = vmatmul.bf16.gmra.mxu0 %v266
    %v1911 = vpop.f32.mrf.mxu0
    %v1912 = vadd.f32 %v1899, %v1911
    %v1913 = vpop.f32.mrf.mxu0
    %1914 = vdwg.mxu0
    %1915 = vmatpush.bf16.msra.mxu0 %v1398
    %1916 = vmatpush.bf16.msra.mxu0 %v1391
    %1917 = vmatpush.bf16.msra.mxu0 %v1384
    %1918 = vmatpush.bf16.msra.mxu0 %v1377
    %1919 = vmatpush.bf16.msra.mxu0 %v1370
    %1920 = vmatpush.bf16.msra.mxu0 %v1363
    %1921 = vmatpush.bf16.msra.mxu0 %v1356
    %1922 = vmatpush.bf16.msra.mxu0 %v1349
    %1923 = vmatmul.bf16.gmra.mxu0 %v267
    %v1924 = vpop.f32.mrf.mxu0
    %v1925 = vadd.f32 %v1912, %v1924
    %v1926 = vpop.f32.mrf.mxu0
    %1927 = vdwg.mxu0
    %1928 = vmatpush.bf16.msra.mxu0 %v1454
    %1929 = vmatpush.bf16.msra.mxu0 %v1447
    %1930 = vmatpush.bf16.msra.mxu0 %v1440
    %1931 = vmatpush.bf16.msra.mxu0 %v1433
    %1932 = vmatpush.bf16.msra.mxu0 %v1426
    %1933 = vmatpush.bf16.msra.mxu0 %v1419
    %1934 = vmatpush.bf16.msra.mxu0 %v1412
    %1935 = vmatpush.bf16.msra.mxu0 %v1405
    %1936 = vmatmul.bf16.gmra.mxu0 %v268
    %v1937 = vpop.f32.mrf.mxu0
    %v1938 = vadd.f32 %v1925, %v1937
    %v1939 = vpop.f32.mrf.mxu0
    %1940 = vdwg.mxu0
    %1941 = vmatpush.bf16.msra.mxu0 %v1287
    %1942 = vmatpush.bf16.msra.mxu0 %v1280
    %1943 = vmatpush.bf16.msra.mxu0 %v1273
    %1944 = vmatpush.bf16.msra.mxu0 %v1266
    %1945 = vmatpush.bf16.msra.mxu0 %v1259
    %1946 = vmatpush.bf16.msra.mxu0 %v1252
    %1947 = vmatpush.bf16.msra.mxu0 %v1245
    %1948 = vmatpush.bf16.msra.mxu0 %v1238
    %1949 = vmatmul.bf16.gmra.mxu0 %v265
    %v1950 = vpop.f32.mrf.mxu0
    %v1951 = vadd.f32 0.0, %v1950
    %v1952 = vpop.f32.mrf.mxu0
    %1953 = vdwg.mxu0
    %1954 = vmatpush.bf16.msra.mxu0 %v1343
    %1955 = vmatpush.bf16.msra.mxu0 %v1336
    %1956 = vmatpush.bf16.msra.mxu0 %v1329
    %1957 = vmatpush.bf16.msra.mxu0 %v1322
    %1958 = vmatpush.bf16.msra.mxu0 %v1315
    %1959 = vmatpush.bf16.msra.mxu0 %v1308
    %1960 = vmatpush.bf16.msra.mxu0 %v1301
    %1961 = vmatpush.bf16.msra.mxu0 %v1294
    %1962 = vmatmul.bf16.gmra.mxu0 %v266
    %v1963 = vpop.f32.mrf.mxu0
    %v1964 = vadd.f32 %v1951, %v1963
    %v1965 = vpop.f32.mrf.mxu0
    %1966 = vdwg.mxu0
    %1967 = vmatpush.bf16.msra.mxu0 %v1399
    %1968 = vmatpush.bf16.msra.mxu0 %v1392
    %1969 = vmatpush.bf16.msra.mxu0 %v1385
    %1970 = vmatpush.bf16.msra.mxu0 %v1378
    %1971 = vmatpush.bf16.msra.mxu0 %v1371
    %1972 = vmatpush.bf16.msra.mxu0 %v1364
    %1973 = vmatpush.bf16.msra.mxu0 %v1357
    %1974 = vmatpush.bf16.msra.mxu0 %v1350
    %1975 = vmatmul.bf16.gmra.mxu0 %v267
    %v1976 = vpop.f32.mrf.mxu0
    %v1977 = vadd.f32 %v1964, %v1976
    %v1978 = vpop.f32.mrf.mxu0
    %1979 = vdwg.mxu0
    %1980 = vmatpush.bf16.msra.mxu0 %v1455
    %1981 = vmatpush.bf16.msra.mxu0 %v1448
    %1982 = vmatpush.bf16.msra.mxu0 %v1441
    %1983 = vmatpush.bf16.msra.mxu0 %v1434
    %1984 = vmatpush.bf16.msra.mxu0 %v1427
    %1985 = vmatpush.bf16.msra.mxu0 %v1420
    %1986 = vmatpush.bf16.msra.mxu0 %v1413
    %1987 = vmatpush.bf16.msra.mxu0 %v1406
    %1988 = vmatmul.bf16.gmra.mxu0 %v268
    %v1989 = vpop.f32.mrf.mxu0
    %v1990 = vadd.f32 %v1977, %v1989
    %v1991 = vpop.f32.mrf.mxu0
    %1992 = vdwg.mxu0
    %1993 = vmatpush.bf16.msra.mxu0 %v1288
    %1994 = vmatpush.bf16.msra.mxu0 %v1281
    %1995 = vmatpush.bf16.msra.mxu0 %v1274
    %1996 = vmatpush.bf16.msra.mxu0 %v1267
    %1997 = vmatpush.bf16.msra.mxu0 %v1260
    %1998 = vmatpush.bf16.msra.mxu0 %v1253
    %1999 = vmatpush.bf16.msra.mxu0 %v1246
    %2000 = vmatpush.bf16.msra.mxu0 %v1239
    %2001 = vmatmul.bf16.gmra.mxu0 %v265
    %v2002 = vpop.f32.mrf.mxu0
    %v2003 = vadd.f32 0.0, %v2002
    %v2004 = vpop.f32.mrf.mxu0
    %2005 = vdwg.mxu0
    %2006 = vmatpush.bf16.msra.mxu0 %v1344
    %2007 = vmatpush.bf16.msra.mxu0 %v1337
    %2008 = vmatpush.bf16.msra.mxu0 %v1330
    %2009 = vmatpush.bf16.msra.mxu0 %v1323
    %2010 = vmatpush.bf16.msra.mxu0 %v1316
    %2011 = vmatpush.bf16.msra.mxu0 %v1309
    %2012 = vmatpush.bf16.msra.mxu0 %v1302
    %2013 = vmatpush.bf16.msra.mxu0 %v1295
    %2014 = vmatmul.bf16.gmra.mxu0 %v266
    %v2015 = vpop.f32.mrf.mxu0
    %v2016 = vadd.f32 %v2003, %v2015
    %v2017 = vpop.f32.mrf.mxu0
    %2018 = vdwg.mxu0
    %2019 = vmatpush.bf16.msra.mxu0 %v1400
    %2020 = vmatpush.bf16.msra.mxu0 %v1393
    %2021 = vmatpush.bf16.msra.mxu0 %v1386
    %2022 = vmatpush.bf16.msra.mxu0 %v1379
    %2023 = vmatpush.bf16.msra.mxu0 %v1372
    %2024 = vmatpush.bf16.msra.mxu0 %v1365
    %2025 = vmatpush.bf16.msra.mxu0 %v1358
    %2026 = vmatpush.bf16.msra.mxu0 %v1351
    %2027 = vmatmul.bf16.gmra.mxu0 %v267
    %v2028 = vpop.f32.mrf.mxu0
    %v2029 = vadd.f32 %v2016, %v2028
    %v2030 = vpop.f32.mrf.mxu0
    %2031 = vdwg.mxu0
    %2032 = vmatpush.bf16.msra.mxu0 %v1456
    %2033 = vmatpush.bf16.msra.mxu0 %v1449
    %2034 = vmatpush.bf16.msra.mxu0 %v1442
    %2035 = vmatpush.bf16.msra.mxu0 %v1435
    %2036 = vmatpush.bf16.msra.mxu0 %v1428
    %2037 = vmatpush.bf16.msra.mxu0 %v1421
    %2038 = vmatpush.bf16.msra.mxu0 %v1414
    %2039 = vmatpush.bf16.msra.mxu0 %v1407
    %2040 = vmatmul.bf16.gmra.mxu0 %v268
    %v2041 = vpop.f32.mrf.mxu0
    %v2042 = vadd.f32 %v2029, %v2041
    %v2043 = vpop.f32.mrf.mxu0
    %2044 = vdwg.mxu0
    %v2045 = vrot.slane %v1730, 4
    %v2046 = vadd.f32 %v1730, %v2045
    %v2047 = vrot.slane %v2046, 2
    %v2048 = vadd.f32 %v2046, %v2047
    %v2049 = vrot.slane %v2048, 1
    %v2050 = vadd.f32 %v2048, %v2049
    %v2051 = vrot.slane %v1782, 4
    %v2052 = vadd.f32 %v1782, %v2051
    %v2053 = vrot.slane %v2052, 2
    %v2054 = vadd.f32 %v2052, %v2053
    %v2055 = vrot.slane %v2054, 1
    %v2056 = vadd.f32 %v2054, %v2055
    %v2057 = vrot.slane %v1834, 4
    %v2058 = vadd.f32 %v1834, %v2057
    %v2059 = vrot.slane %v2058, 2
    %v2060 = vadd.f32 %v2058, %v2059
    %v2061 = vrot.slane %v2060, 1
    %v2062 = vadd.f32 %v2060, %v2061
    %v2063 = vrot.slane %v1886, 4
    %v2064 = vadd.f32 %v1886, %v2063
    %v2065 = vrot.slane %v2064, 2
    %v2066 = vadd.f32 %v2064, %v2065
    %v2067 = vrot.slane %v2066, 1
    %v2068 = vadd.f32 %v2066, %v2067
    %v2069 = vrot.slane %v1938, 4
    %v2070 = vadd.f32 %v1938, %v2069
    %v2071 = vrot.slane %v2070, 2
    %v2072 = vadd.f32 %v2070, %v2071
    %v2073 = vrot.slane %v2072, 1
    %v2074 = vadd.f32 %v2072, %v2073
    %v2075 = vrot.slane %v1990, 4
    %v2076 = vadd.f32 %v1990, %v2075
    %v2077 = vrot.slane %v2076, 2
    %v2078 = vadd.f32 %v2076, %v2077
    %v2079 = vrot.slane %v2078, 1
    %v2080 = vadd.f32 %v2078, %v2079
    %v2081 = vrot.slane %v2042, 4
    %v2082 = vadd.f32 %v2042, %v2081
    %v2083 = vrot.slane %v2082, 2
    %v2084 = vadd.f32 %v2082, %v2083
    %v2085 = vrot.slane %v2084, 1
    %v2086 = vadd.f32 %v2084, %v2085
    %v2087 = vrcp.pop 8.0
    %v2088 = vmul.f32 8.0, %v2087
    %v2089 = vsub.f32 1.0, %v2088
    %v2090 = vmul.f32 %v2087, %v2089
    %v2091 = vadd.f32 %v2087, %v2090
    %vm2092 = vweird.f32 %v2087
    %v2093 = vsel %vm2092, %v2087, %v2091
    %v2094 = vmul.f32 %v2050, %v2093
    %v2095 = vmul.f32 %v2056, %v2093
    %v2096 = vmul.f32 %v2062, %v2093
    %v2097 = vmul.f32 %v2068, %v2093
    %v2098 = vmul.f32 %v2074, %v2093
    %v2099 = vmul.f32 %v2080, %v2093
    %v2100 = vmul.f32 %v2086, %v2093
    %v2101 = vsub.f32 %v1730, %v2094
    %v2102 = vsub.f32 %v1782, %v2095
    %v2103 = vsub.f32 %v1834, %v2096
    %v2104 = vsub.f32 %v1886, %v2097
    %v2105 = vsub.f32 %v1938, %v2098
    %v2106 = vsub.f32 %v1990, %v2099
    %v2107 = vsub.f32 %v2042, %v2100
    %v2108 = vmul.f32 %v2101, %v2101
    %v2109 = vmul.f32 %v2102, %v2102
    %v2110 = vmul.f32 %v2103, %v2103
    %v2111 = vmul.f32 %v2104, %v2104
    %v2112 = vmul.f32 %v2105, %v2105
    %v2113 = vmul.f32 %v2106, %v2106
    %v2114 = vmul.f32 %v2107, %v2107
    %v2115 = vrot.slane %v2108, 4
    %v2116 = vadd.f32 %v2108, %v2115
    %v2117 = vrot.slane %v2116, 2
    %v2118 = vadd.f32 %v2116, %v2117
    %v2119 = vrot.slane %v2118, 1
    %v2120 = vadd.f32 %v2118, %v2119
    %v2121 = vrot.slane %v2109, 4
    %v2122 = vadd.f32 %v2109, %v2121
    %v2123 = vrot.slane %v2122, 2
    %v2124 = vadd.f32 %v2122, %v2123
    %v2125 = vrot.slane %v2124, 1
    %v2126 = vadd.f32 %v2124, %v2125
    %v2127 = vrot.slane %v2110, 4
    %v2128 = vadd.f32 %v2110, %v2127
    %v2129 = vrot.slane %v2128, 2
    %v2130 = vadd.f32 %v2128, %v2129
    %v2131 = vrot.slane %v2130, 1
    %v2132 = vadd.f32 %v2130, %v2131
    %v2133 = vrot.slane %v2111, 4
    %v2134 = vadd.f32 %v2111, %v2133
    %v2135 = vrot.slane %v2134, 2
    %v2136 = vadd.f32 %v2134, %v2135
    %v2137 = vrot.slane %v2136, 1
    %v2138 = vadd.f32 %v2136, %v2137
    %v2139 = vrot.slane %v2112, 4
    %v2140 = vadd.f32 %v2112, %v2139
    %v2141 = vrot.slane %v2140, 2
    %v2142 = vadd.f32 %v2140, %v2141
    %v2143 = vrot.slane %v2142, 1
    %v2144 = vadd.f32 %v2142, %v2143
    %v2145 = vrot.slane %v2113, 4
    %v2146 = vadd.f32 %v2113, %v2145
    %v2147 = vrot.slane %v2146, 2
    %v2148 = vadd.f32 %v2146, %v2147
    %v2149 = vrot.slane %v2148, 1
    %v2150 = vadd.f32 %v2148, %v2149
    %v2151 = vrot.slane %v2114, 4
    %v2152 = vadd.f32 %v2114, %v2151
    %v2153 = vrot.slane %v2152, 2
    %v2154 = vadd.f32 %v2152, %v2153
    %v2155 = vrot.slane %v2154, 1
    %v2156 = vadd.f32 %v2154, %v2155
    %v2157 = vmul.f32 %v2120, %v2093
    %v2158 = vmul.f32 %v2126, %v2093
    %v2159 = vmul.f32 %v2132, %v2093
    %v2160 = vmul.f32 %v2138, %v2093
    %v2161 = vmul.f32 %v2144, %v2093
    %v2162 = vmul.f32 %v2150, %v2093
    %v2163 = vmul.f32 %v2156, %v2093
    %v2164 = vadd.f32 %v2157, 1e-05
    %v2165 = vadd.f32 %v2158, 1e-05
    %v2166 = vadd.f32 %v2159, 1e-05
    %v2167 = vadd.f32 %v2160, 1e-05
    %v2168 = vadd.f32 %v2161, 1e-05
    %v2169 = vadd.f32 %v2162, 1e-05
    %v2170 = vadd.f32 %v2163, 1e-05
    %v2171 = vrsqrt.pop %v2164
    %v2172 = vmul.f32 %v2171, %v2164
    %v2173 = vmul.f32 %v2172, %v2171
    %v2174 = vmul.f32 0.5, %v2173
    %v2175 = vsub.f32 1.5, %v2174
    %v2176 = vmul.f32 %v2171, %v2175
    %vm2177 = vweird.f32 %v2164
    %vm2178 = vweird.f32 %v2171
    %vm2179 = vmor %vm2177, %vm2178
    %v2180 = vsel %vm2179, %v2171, %v2176
    %v2181 = vrsqrt.pop %v2165
    %v2182 = vmul.f32 %v2181, %v2165
    %v2183 = vmul.f32 %v2182, %v2181
    %v2184 = vmul.f32 0.5, %v2183
    %v2185 = vsub.f32 1.5, %v2184
    %v2186 = vmul.f32 %v2181, %v2185
    %vm2187 = vweird.f32 %v2165
    %vm2188 = vweird.f32 %v2181
    %vm2189 = vmor %vm2187, %vm2188
    %v2190 = vsel %vm2189, %v2181, %v2186
    %v2191 = vrsqrt.pop %v2166
    %v2192 = vmul.f32 %v2191, %v2166
    %v2193 = vmul.f32 %v2192, %v2191
    %v2194 = vmul.f32 0.5, %v2193
    %v2195 = vsub.f32 1.5, %v2194
    %v2196 = vmul.f32 %v2191, %v2195
    %vm2197 = vweird.f32 %v2166
    %vm2198 = vweird.f32 %v2191
    %vm2199 = vmor %vm2197, %vm2198
    %v2200 = vsel %vm2199, %v2191, %v2196
    %v2201 = vrsqrt.pop %v2167
    %v2202 = vmul.f32 %v2201, %v2167
    %v2203 = vmul.f32 %v2202, %v2201
    %v2204 = vmul.f32 0.5, %v2203
    %v2205 = vsub.f32 1.5, %v2204
    %v2206 = vmul.f32 %v2201, %v2205
    %vm2207 = vweird.f32 %v2167
    %vm2208 = vweird.f32 %v2201
    %vm2209 = vmor %vm2207, %vm2208
    %v2210 = vsel %vm2209, %v2201, %v2206
    %v2211 = vrsqrt.pop %v2168
    %v2212 = vmul.f32 %v2211, %v2168
    %v2213 = vmul.f32 %v2212, %v2211
    %v2214 = vmul.f32 0.5, %v2213
    %v2215 = vsub.f32 1.5, %v2214
    %v2216 = vmul.f32 %v2211, %v2215
    %vm2217 = vweird.f32 %v2168
    %vm2218 = vweird.f32 %v2211
    %vm2219 = vmor %vm2217, %vm2218
    %v2220 = vsel %vm2219, %v2211, %v2216
    %v2221 = vrsqrt.pop %v2169
    %v2222 = vmul.f32 %v2221, %v2169
    %v2223 = vmul.f32 %v2222, %v2221
    %v2224 = vmul.f32 0.5, %v2223
    %v2225 = vsub.f32 1.5, %v2224
    %v2226 = vmul.f32 %v2221, %v2225
    %vm2227 = vweird.f32 %v2169
    %vm2228 = vweird.f32 %v2221
    %vm2229 = vmor %vm2227, %vm2228
    %v2230 = vsel %vm2229, %v2221, %v2226
    %v2231 = vrsqrt.pop %v2170
    %v2232 = vmul.f32 %v2231, %v2170
    %v2233 = vmul.f32 %v2232, %v2231
    %v2234 = vmul.f32 0.5, %v2233
    %v2235 = vsub.f32 1.5, %v2234
    %v2236 = vmul.f32 %v2231, %v2235
    %vm2237 = vweird.f32 %v2170
    %vm2238 = vweird.f32 %v2231
    %vm2239 = vmor %vm2237, %vm2238
    %v2240 = vsel %vm2239, %v2231, %v2236
    %v2241 = vmul.f32 %v2101, %v2180
    %v2242 = vmul.f32 %v2102, %v2190
    %v2243 = vmul.f32 %v2103, %v2200
    %v2244 = vmul.f32 %v2104, %v2210
    %v2245 = vmul.f32 %v2105, %v2220
    %v2246 = vmul.f32 %v2106, %v2230
    %v2247 = vmul.f32 %v2107, %v2240
    %v2248 = vperm.slane %v254, 0
    %v2249 = vperm.slane %v255, 0
    %v2250 = vperm.slane %v256, 0
    %v2251 = vperm.slane %v257, 0
    %v2252 = vperm.slane %v258, 0
    %v2253 = vperm.slane %v259, 0
    %v2254 = vperm.slane %v260, 0
    %v2255 = vmul.f32 %v2241, %v2248
    %v2256 = vmul.f32 %v2242, %v2249
    %v2257 = vmul.f32 %v2243, %v2250
    %v2258 = vmul.f32 %v2244, %v2251
    %v2259 = vmul.f32 %v2245, %v2252
    %v2260 = vmul.f32 %v2246, %v2253
    %v2261 = vmul.f32 %v2247, %v2254
    %v2262 = vperm.slane %v254, 1
    %v2263 = vperm.slane %v255, 1
    %v2264 = vperm.slane %v256, 1
    %v2265 = vperm.slane %v257, 1
    %v2266 = vperm.slane %v258, 1
    %v2267 = vperm.slane %v259, 1
    %v2268 = vperm.slane %v260, 1
    %v2269 = vadd.f32 %v2255, %v2262
    %v2270 = vadd.f32 %v2256, %v2263
    %v2271 = vadd.f32 %v2257, %v2264
    %v2272 = vadd.f32 %v2258, %v2265
    %v2273 = vadd.f32 %v2259, %v2266
    %v2274 = vadd.f32 %v2260, %v2267
    %v2275 = vadd.f32 %v2261, %v2268
    %v2276 = vmax.f32 %v2269, 0.0
    %v2277 = vmax.f32 %v2270, 0.0
    %v2278 = vmax.f32 %v2271, 0.0
    %v2279 = vmax.f32 %v2272, 0.0
    %v2280 = vmax.f32 %v2273, 0.0
    %v2281 = vmax.f32 %v2274, 0.0
    %v2282 = vmax.f32 %v2275, 0.0
    %s2283 = smul.u32 4, 98
    %s2284 = smul.u32 %s2283, 7
    %s2285 = sshll.u32 %s2284, 4
    %2286 = dma.done %s58, %s2285
    %v2287 = vpack.c.bf16 %v2276, %v2276
    %v2288 = vpack.c.bf16 %v2277, %v2277
    %v2289 = vpack.c.bf16 %v2278, %v2278
    %v2290 = vpack.c.bf16 %v2279, %v2279
    %v2291 = vpack.c.bf16 %v2280, %v2280
    %v2292 = vpack.c.bf16 %v2281, %v2281
    %v2293 = vpack.c.bf16 %v2282, %v2282
    %v2294 = vld [vmem:[#allocation3] sm:$0xff]
    %v2295 = vld [vmem:[#allocation3 + $0x8] sm:$0xff]
    %v2296 = vld [vmem:[#allocation3 + $0x10] sm:$0xff]
    %v2297 = vld [vmem:[#allocation3 + $0x18] sm:$0xf]
    %v2298 = vld [vmem:[#allocation3 + $0x1c] sm:$0xff]
    %v2299 = vld [vmem:[#allocation3 + $0x24] sm:$0xff]
    %v2300 = vld [vmem:[#allocation3 + $0x2c] sm:$0xff]
    %v2301 = vld [vmem:[#allocation3 + $0x34] sm:$0xf]
    %v2302 = vld [vmem:[#allocation3 + $0x38] sm:$0xff]
    %v2303 = vld [vmem:[#allocation3 + $0x40] sm:$0xff]
    %v2304 = vld [vmem:[#allocation3 + $0x48] sm:$0xff]
    %v2305 = vld [vmem:[#allocation3 + $0x50] sm:$0xf]
    %v2306 = vld [vmem:[#allocation3 + $0x54] sm:$0xff]
    %v2307 = vld [vmem:[#allocation3 + $0x5c] sm:$0xff]
    %v2308 = vld [vmem:[#allocation3 + $0x64] sm:$0xff]
    %v2309 = vld [vmem:[#allocation3 + $0x6c] sm:$0xf]
    %v2310 = vld [vmem:[#allocation3 + $0x70] sm:$0xff]
    %v2311 = vld [vmem:[#allocation3 + $0x78] sm:$0xff]
    %v2312 = vld [vmem:[#allocation3 + $0x80] sm:$0xff]
    %v2313 = vld [vmem:[#allocation3 + $0x88] sm:$0xf]
    %v2314 = vld [vmem:[#allocation3 + $0x8c] sm:$0xff]
    %v2315 = vld [vmem:[#allocation3 + $0x94] sm:$0xff]
    %v2316 = vld [vmem:[#allocation3 + $0x9c] sm:$0xff]
    %v2317 = vld [vmem:[#allocation3 + $0xa4] sm:$0xf]
    %v2318 = vld [vmem:[#allocation3 + $0xa8] sm:$0xff]
    %v2319 = vld [vmem:[#allocation3 + $0xb0] sm:$0xff]
    %v2320 = vld [vmem:[#allocation3 + $0xb8] sm:$0xff]
    %v2321 = vld [vmem:[#allocation3 + $0xc0] sm:$0xf]
    %v2322 = vld [vmem:[#allocation3 + $0xc4] sm:$0xff]
    %v2323 = vld [vmem:[#allocation3 + $0xcc] sm:$0xff]
    %v2324 = vld [vmem:[#allocation3 + $0xd4] sm:$0xff]
    %v2325 = vld [vmem:[#allocation3 + $0xdc] sm:$0xf]
    %v2326 = vld [vmem:[#allocation3 + $0xe0] sm:$0xff]
    %v2327 = vld [vmem:[#allocation3 + $0xe8] sm:$0xff]
    %v2328 = vld [vmem:[#allocation3 + $0xf0] sm:$0xff]
    %v2329 = vld [vmem:[#allocation3 + $0xf8] sm:$0xf]
    %v2330 = vld [vmem:[#allocation3 + $0xfc] sm:$0xff]
    %v2331 = vld [vmem:[#allocation3 + $0x104] sm:$0xff]
    %v2332 = vld [vmem:[#allocation3 + $0x10c] sm:$0xff]
    %v2333 = vld [vmem:[#allocation3 + $0x114] sm:$0xf]
    %v2334 = vld [vmem:[#allocation3 + $0x118] sm:$0xff]
    %v2335 = vld [vmem:[#allocation3 + $0x120] sm:$0xff]
    %v2336 = vld [vmem:[#allocation3 + $0x128] sm:$0xff]
    %v2337 = vld [vmem:[#allocation3 + $0x130] sm:$0xf]
    %v2338 = vld [vmem:[#allocation3 + $0x134] sm:$0xff]
    %v2339 = vld [vmem:[#allocation3 + $0x13c] sm:$0xff]
    %v2340 = vld [vmem:[#allocation3 + $0x144] sm:$0xff]
    %v2341 = vld [vmem:[#allocation3 + $0x14c] sm:$0xf]
    %v2342 = vld [vmem:[#allocation3 + $0x150] sm:$0xff]
    %v2343 = vld [vmem:[#allocation3 + $0x158] sm:$0xff]
    %v2344 = vld [vmem:[#allocation3 + $0x160] sm:$0xff]
    %v2345 = vld [vmem:[#allocation3 + $0x168] sm:$0xf]
    %v2346 = vld [vmem:[#allocation3 + $0x16c] sm:$0xff]
    %v2347 = vld [vmem:[#allocation3 + $0x174] sm:$0xff]
    %v2348 = vld [vmem:[#allocation3 + $0x17c] sm:$0xff]
    %v2349 = vld [vmem:[#allocation3 + $0x184] sm:$0xf]
    %v2350 = vld [vmem:[#allocation3 + $0x188] sm:$0xff]
    %v2351 = vld [vmem:[#allocation3 + $0x190] sm:$0xff]
    %v2352 = vld [vmem:[#allocation3 + $0x198] sm:$0xff]
    %v2353 = vld [vmem:[#allocation3 + $0x1a0] sm:$0xf]
    %v2354 = vld [vmem:[#allocation3 + $0x1a4] sm:$0xff]
    %v2355 = vld [vmem:[#allocation3 + $0x1ac] sm:$0xff]
    %v2356 = vld [vmem:[#allocation3 + $0x1b4] sm:$0xff]
    %v2357 = vld [vmem:[#allocation3 + $0x1bc] sm:$0xf]
    %v2358 = vld [vmem:[#allocation3 + $0x1c0] sm:$0xff]
    %v2359 = vld [vmem:[#allocation3 + $0x1c8] sm:$0xff]
    %v2360 = vld [vmem:[#allocation3 + $0x1d0] sm:$0xff]
    %v2361 = vld [vmem:[#allocation3 + $0x1d8] sm:$0xf]
    %v2362 = vld [vmem:[#allocation3 + $0x1dc] sm:$0xff]
    %v2363 = vld [vmem:[#allocation3 + $0x1e4] sm:$0xff]
    %v2364 = vld [vmem:[#allocation3 + $0x1ec] sm:$0xff]
    %v2365 = vld [vmem:[#allocation3 + $0x1f4] sm:$0xf]
    %v2366 = vld [vmem:[#allocation3 + $0x1f8] sm:$0xff]
    %v2367 = vld [vmem:[#allocation3 + $0x200] sm:$0xff]
    %v2368 = vld [vmem:[#allocation3 + $0x208] sm:$0xff]
    %v2369 = vld [vmem:[#allocation3 + $0x210] sm:$0xf]
    %v2370 = vld [vmem:[#allocation3 + $0x214] sm:$0xff]
    %v2371 = vld [vmem:[#allocation3 + $0x21c] sm:$0xff]
    %v2372 = vld [vmem:[#allocation3 + $0x224] sm:$0xff]
    %v2373 = vld [vmem:[#allocation3 + $0x22c] sm:$0xf]
    %v2374 = vld [vmem:[#allocation3 + $0x230] sm:$0xff]
    %v2375 = vld [vmem:[#allocation3 + $0x238] sm:$0xff]
    %v2376 = vld [vmem:[#allocation3 + $0x240] sm:$0xff]
    %v2377 = vld [vmem:[#allocation3 + $0x248] sm:$0xf]
    %v2378 = vld [vmem:[#allocation3 + $0x24c] sm:$0xff]
    %v2379 = vld [vmem:[#allocation3 + $0x254] sm:$0xff]
    %v2380 = vld [vmem:[#allocation3 + $0x25c] sm:$0xff]
    %v2381 = vld [vmem:[#allocation3 + $0x264] sm:$0xf]
    %v2382 = vld [vmem:[#allocation3 + $0x268] sm:$0xff]
    %v2383 = vld [vmem:[#allocation3 + $0x270] sm:$0xff]
    %v2384 = vld [vmem:[#allocation3 + $0x278] sm:$0xff]
    %v2385 = vld [vmem:[#allocation3 + $0x280] sm:$0xf]
    %v2386 = vld [vmem:[#allocation3 + $0x284] sm:$0xff]
    %v2387 = vld [vmem:[#allocation3 + $0x28c] sm:$0xff]
    %v2388 = vld [vmem:[#allocation3 + $0x294] sm:$0xff]
    %v2389 = vld [vmem:[#allocation3 + $0x29c] sm:$0xf]
    %v2390 = vld [vmem:[#allocation3 + $0x2a0] sm:$0xff]
    %v2391 = vld [vmem:[#allocation3 + $0x2a8] sm:$0xff]
    %v2392 = vld [vmem:[#allocation3 + $0x2b0] sm:$0xff]
    %v2393 = vld [vmem:[#allocation3 + $0x2b8] sm:$0xf]
    %v2394 = vld [vmem:[#allocation3 + $0x2bc] sm:$0xff]
    %v2395 = vld [vmem:[#allocation3 + $0x2c4] sm:$0xff]
    %v2396 = vld [vmem:[#allocation3 + $0x2cc] sm:$0xff]
    %v2397 = vld [vmem:[#allocation3 + $0x2d4] sm:$0xf]
    %v2398 = vld [vmem:[#allocation3 + $0x2d8] sm:$0xff]
    %v2399 = vld [vmem:[#allocation3 + $0x2e0] sm:$0xff]
    %v2400 = vld [vmem:[#allocation3 + $0x2e8] sm:$0xff]
    %v2401 = vld [vmem:[#allocation3 + $0x2f0] sm:$0xf]
    %v2402 = vld [vmem:[#allocation3 + $0x2f4] sm:$0xff]
    %v2403 = vld [vmem:[#allocation3 + $0x2fc] sm:$0xff]
    %v2404 = vld [vmem:[#allocation3 + $0x304] sm:$0xff]
    %v2405 = vld [vmem:[#allocation3 + $0x30c] sm:$0xf]
    %v2406 = vld [vmem:[#allocation3 + $0x310] sm:$0xff]
    %v2407 = vld [vmem:[#allocation3 + $0x318] sm:$0xff]
    %v2408 = vld [vmem:[#allocation3 + $0x320] sm:$0xff]
    %v2409 = vld [vmem:[#allocation3 + $0x328] sm:$0xf]
    %v2410 = vld [vmem:[#allocation3 + $0x32c] sm:$0xff]
    %v2411 = vld [vmem:[#allocation3 + $0x334] sm:$0xff]
    %v2412 = vld [vmem:[#allocation3 + $0x33c] sm:$0xff]
    %v2413 = vld [vmem:[#allocation3 + $0x344] sm:$0xf]
    %v2414 = vld [vmem:[#allocation3 + $0x348] sm:$0xff]
    %v2415 = vld [vmem:[#allocation3 + $0x350] sm:$0xff]
    %v2416 = vld [vmem:[#allocation3 + $0x358] sm:$0xff]
    %v2417 = vld [vmem:[#allocation3 + $0x360] sm:$0xf]
    %v2418 = vld [vmem:[#allocation3 + $0x364] sm:$0xff]
    %v2419 = vld [vmem:[#allocation3 + $0x36c] sm:$0xff]
    %v2420 = vld [vmem:[#allocation3 + $0x374] sm:$0xff]
    %v2421 = vld [vmem:[#allocation3 + $0x37c] sm:$0xf]
    %v2422 = vld [vmem:[#allocation3 + $0x380] sm:$0xff]
    %v2423 = vld [vmem:[#allocation3 + $0x388] sm:$0xff]
    %v2424 = vld [vmem:[#allocation3 + $0x390] sm:$0xff]
    %v2425 = vld [vmem:[#allocation3 + $0x398] sm:$0xf]
    %v2426 = vld [vmem:[#allocation3 + $0x39c] sm:$0xff]
    %v2427 = vld [vmem:[#allocation3 + $0x3a4] sm:$0xff]
    %v2428 = vld [vmem:[#allocation3 + $0x3ac] sm:$0xff]
    %v2429 = vld [vmem:[#allocation3 + $0x3b4] sm:$0xf]
    %v2430 = vld [vmem:[#allocation3 + $0x3b8] sm:$0xff]
    %v2431 = vld [vmem:[#allocation3 + $0x3c0] sm:$0xff]
    %v2432 = vld [vmem:[#allocation3 + $0x3c8] sm:$0xff]
    %v2433 = vld [vmem:[#allocation3 + $0x3d0] sm:$0xf]
    %v2434 = vld [vmem:[#allocation3 + $0x3d4] sm:$0xff]
    %v2435 = vld [vmem:[#allocation3 + $0x3dc] sm:$0xff]
    %v2436 = vld [vmem:[#allocation3 + $0x3e4] sm:$0xff]
    %v2437 = vld [vmem:[#allocation3 + $0x3ec] sm:$0xf]
    %v2438 = vld [vmem:[#allocation3 + $0x3f0] sm:$0xff]
    %v2439 = vld [vmem:[#allocation3 + $0x3f8] sm:$0xff]
    %v2440 = vld [vmem:[#allocation3 + $0x400] sm:$0xff]
    %v2441 = vld [vmem:[#allocation3 + $0x408] sm:$0xf]
    %v2442 = vld [vmem:[#allocation3 + $0x40c] sm:$0xff]
    %v2443 = vld [vmem:[#allocation3 + $0x414] sm:$0xff]
    %v2444 = vld [vmem:[#allocation3 + $0x41c] sm:$0xff]
    %v2445 = vld [vmem:[#allocation3 + $0x424] sm:$0xf]
    %v2446 = vld [vmem:[#allocation3 + $0x428] sm:$0xff]
    %v2447 = vld [vmem:[#allocation3 + $0x430] sm:$0xff]
    %v2448 = vld [vmem:[#allocation3 + $0x438] sm:$0xff]
    %v2449 = vld [vmem:[#allocation3 + $0x440] sm:$0xf]
    %v2450 = vld [vmem:[#allocation3 + $0x444] sm:$0xff]
    %v2451 = vld [vmem:[#allocation3 + $0x44c] sm:$0xff]
    %v2452 = vld [vmem:[#allocation3 + $0x454] sm:$0xff]
    %v2453 = vld [vmem:[#allocation3 + $0x45c] sm:$0xf]
    %v2454 = vld [vmem:[#allocation3 + $0x460] sm:$0xff]
    %v2455 = vld [vmem:[#allocation3 + $0x468] sm:$0xff]
    %v2456 = vld [vmem:[#allocation3 + $0x470] sm:$0xff]
    %v2457 = vld [vmem:[#allocation3 + $0x478] sm:$0xf]
    %v2458 = vld [vmem:[#allocation3 + $0x47c] sm:$0xff]
    %v2459 = vld [vmem:[#allocation3 + $0x484] sm:$0xff]
    %v2460 = vld [vmem:[#allocation3 + $0x48c] sm:$0xff]
    %v2461 = vld [vmem:[#allocation3 + $0x494] sm:$0xf]
    %v2462 = vld [vmem:[#allocation3 + $0x498] sm:$0xff]
    %v2463 = vld [vmem:[#allocation3 + $0x4a0] sm:$0xff]
    %v2464 = vld [vmem:[#allocation3 + $0x4a8] sm:$0xff]
    %v2465 = vld [vmem:[#allocation3 + $0x4b0] sm:$0xf]
    %v2466 = vld [vmem:[#allocation3 + $0x4b4] sm:$0xff]
    %v2467 = vld [vmem:[#allocation3 + $0x4bc] sm:$0xff]
    %v2468 = vld [vmem:[#allocation3 + $0x4c4] sm:$0xff]
    %v2469 = vld [vmem:[#allocation3 + $0x4cc] sm:$0xf]
    %v2470 = vld [vmem:[#allocation3 + $0x4d0] sm:$0xff]
    %v2471 = vld [vmem:[#allocation3 + $0x4d8] sm:$0xff]
    %v2472 = vld [vmem:[#allocation3 + $0x4e0] sm:$0xff]
    %v2473 = vld [vmem:[#allocation3 + $0x4e8] sm:$0xf]
    %v2474 = vld [vmem:[#allocation3 + $0x4ec] sm:$0xff]
    %v2475 = vld [vmem:[#allocation3 + $0x4f4] sm:$0xff]
    %v2476 = vld [vmem:[#allocation3 + $0x4fc] sm:$0xff]
    %v2477 = vld [vmem:[#allocation3 + $0x504] sm:$0xf]
    %v2478 = vld [vmem:[#allocation3 + $0x508] sm:$0xff]
    %v2479 = vld [vmem:[#allocation3 + $0x510] sm:$0xff]
    %v2480 = vld [vmem:[#allocation3 + $0x518] sm:$0xff]
    %v2481 = vld [vmem:[#allocation3 + $0x520] sm:$0xf]
    %v2482 = vld [vmem:[#allocation3 + $0x524] sm:$0xff]
    %v2483 = vld [vmem:[#allocation3 + $0x52c] sm:$0xff]
    %v2484 = vld [vmem:[#allocation3 + $0x534] sm:$0xff]
    %v2485 = vld [vmem:[#allocation3 + $0x53c] sm:$0xf]
    %v2486 = vld [vmem:[#allocation3 + $0x540] sm:$0xff]
    %v2487 = vld [vmem:[#allocation3 + $0x548] sm:$0xff]
    %v2488 = vld [vmem:[#allocation3 + $0x550] sm:$0xff]
    %v2489 = vld [vmem:[#allocation3 + $0x558] sm:$0xf]
    %v2490 = vld [vmem:[#allocation3 + $0x55c] sm:$0xff]
    %v2491 = vld [vmem:[#allocation3 + $0x564] sm:$0xff]
    %v2492 = vld [vmem:[#allocation3 + $0x56c] sm:$0xff]
    %v2493 = vld [vmem:[#allocation3 + $0x574] sm:$0xf]
    %v2494 = vld [vmem:[#allocation3 + $0x578] sm:$0xff]
    %v2495 = vld [vmem:[#allocation3 + $0x580] sm:$0xff]
    %v2496 = vld [vmem:[#allocation3 + $0x588] sm:$0xff]
    %v2497 = vld [vmem:[#allocation3 + $0x590] sm:$0xf]
    %v2498 = vld [vmem:[#allocation3 + $0x594] sm:$0xff]
    %v2499 = vld [vmem:[#allocation3 + $0x59c] sm:$0xff]
    %v2500 = vld [vmem:[#allocation3 + $0x5a4] sm:$0xff]
    %v2501 = vld [vmem:[#allocation3 + $0x5ac] sm:$0xf]
    %v2502 = vld [vmem:[#allocation3 + $0x5b0] sm:$0xff]
    %v2503 = vld [vmem:[#allocation3 + $0x5b8] sm:$0xff]
    %v2504 = vld [vmem:[#allocation3 + $0x5c0] sm:$0xff]
    %v2505 = vld [vmem:[#allocation3 + $0x5c8] sm:$0xf]
    %v2506 = vld [vmem:[#allocation3 + $0x5cc] sm:$0xff]
    %v2507 = vld [vmem:[#allocation3 + $0x5d4] sm:$0xff]
    %v2508 = vld [vmem:[#allocation3 + $0x5dc] sm:$0xff]
    %v2509 = vld [vmem:[#allocation3 + $0x5e4] sm:$0xf]
    %v2510 = vld [vmem:[#allocation3 + $0x5e8] sm:$0xff]
    %v2511 = vld [vmem:[#allocation3 + $0x5f0] sm:$0xff]
    %v2512 = vld [vmem:[#allocation3 + $0x5f8] sm:$0xff]
    %v2513 = vld [vmem:[#allocation3 + $0x600] sm:$0xf]
    %v2514 = vld [vmem:[#allocation3 + $0x604] sm:$0xff]
    %v2515 = vld [vmem:[#allocation3 + $0x60c] sm:$0xff]
    %v2516 = vld [vmem:[#allocation3 + $0x614] sm:$0xff]
    %v2517 = vld [vmem:[#allocation3 + $0x61c] sm:$0xf]
    %v2518 = vld [vmem:[#allocation3 + $0x620] sm:$0xff]
    %v2519 = vld [vmem:[#allocation3 + $0x628] sm:$0xff]
    %v2520 = vld [vmem:[#allocation3 + $0x630] sm:$0xff]
    %v2521 = vld [vmem:[#allocation3 + $0x638] sm:$0xf]
    %v2522 = vld [vmem:[#allocation3 + $0x63c] sm:$0xff]
    %v2523 = vld [vmem:[#allocation3 + $0x644] sm:$0xff]
    %v2524 = vld [vmem:[#allocation3 + $0x64c] sm:$0xff]
    %v2525 = vld [vmem:[#allocation3 + $0x654] sm:$0xf]
    %v2526 = vld [vmem:[#allocation3 + $0x658] sm:$0xff]
    %v2527 = vld [vmem:[#allocation3 + $0x660] sm:$0xff]
    %v2528 = vld [vmem:[#allocation3 + $0x668] sm:$0xff]
    %v2529 = vld [vmem:[#allocation3 + $0x670] sm:$0xf]
    %v2530 = vld [vmem:[#allocation3 + $0x674] sm:$0xff]
    %v2531 = vld [vmem:[#allocation3 + $0x67c] sm:$0xff]
    %v2532 = vld [vmem:[#allocation3 + $0x684] sm:$0xff]
    %v2533 = vld [vmem:[#allocation3 + $0x68c] sm:$0xf]
    %v2534 = vld [vmem:[#allocation3 + $0x690] sm:$0xff]
    %v2535 = vld [vmem:[#allocation3 + $0x698] sm:$0xff]
    %v2536 = vld [vmem:[#allocation3 + $0x6a0] sm:$0xff]
    %v2537 = vld [vmem:[#allocation3 + $0x6a8] sm:$0xf]
    %v2538 = vld [vmem:[#allocation3 + $0x6ac] sm:$0xff]
    %v2539 = vld [vmem:[#allocation3 + $0x6b4] sm:$0xff]
    %v2540 = vld [vmem:[#allocation3 + $0x6bc] sm:$0xff]
    %v2541 = vld [vmem:[#allocation3 + $0x6c4] sm:$0xf]
    %v2542 = vld [vmem:[#allocation3 + $0x6c8] sm:$0xff]
    %v2543 = vld [vmem:[#allocation3 + $0x6d0] sm:$0xff]
    %v2544 = vld [vmem:[#allocation3 + $0x6d8] sm:$0xff]
    %v2545 = vld [vmem:[#allocation3 + $0x6e0] sm:$0xf]
    %v2546 = vld [vmem:[#allocation3 + $0x6e4] sm:$0xff]
    %v2547 = vld [vmem:[#allocation3 + $0x6ec] sm:$0xff]
    %v2548 = vld [vmem:[#allocation3 + $0x6f4] sm:$0xff]
    %v2549 = vld [vmem:[#allocation3 + $0x6fc] sm:$0xf]
    %v2550 = vld [vmem:[#allocation3 + $0x700] sm:$0xff]
    %v2551 = vld [vmem:[#allocation3 + $0x708] sm:$0xff]
    %v2552 = vld [vmem:[#allocation3 + $0x710] sm:$0xff]
    %v2553 = vld [vmem:[#allocation3 + $0x718] sm:$0xf]
    %v2554 = vld [vmem:[#allocation3 + $0x71c] sm:$0xff]
    %v2555 = vld [vmem:[#allocation3 + $0x724] sm:$0xff]
    %v2556 = vld [vmem:[#allocation3 + $0x72c] sm:$0xff]
    %v2557 = vld [vmem:[#allocation3 + $0x734] sm:$0xf]
    %v2558 = vld [vmem:[#allocation3 + $0x738] sm:$0xff]
    %v2559 = vld [vmem:[#allocation3 + $0x740] sm:$0xff]
    %v2560 = vld [vmem:[#allocation3 + $0x748] sm:$0xff]
    %v2561 = vld [vmem:[#allocation3 + $0x750] sm:$0xf]
    %v2562 = vld [vmem:[#allocation3 + $0x754] sm:$0xff]
    %v2563 = vld [vmem:[#allocation3 + $0x75c] sm:$0xff]
    %v2564 = vld [vmem:[#allocation3 + $0x764] sm:$0xff]
    %v2565 = vld [vmem:[#allocation3 + $0x76c] sm:$0xf]
    %v2566 = vld [vmem:[#allocation3 + $0x770] sm:$0xff]
    %v2567 = vld [vmem:[#allocation3 + $0x778] sm:$0xff]
    %v2568 = vld [vmem:[#allocation3 + $0x780] sm:$0xff]
    %v2569 = vld [vmem:[#allocation3 + $0x788] sm:$0xf]
    %v2570 = vld [vmem:[#allocation3 + $0x78c] sm:$0xff]
    %v2571 = vld [vmem:[#allocation3 + $0x794] sm:$0xff]
    %v2572 = vld [vmem:[#allocation3 + $0x79c] sm:$0xff]
    %v2573 = vld [vmem:[#allocation3 + $0x7a4] sm:$0xf]
    %v2574 = vld [vmem:[#allocation3 + $0x7a8] sm:$0xff]
    %v2575 = vld [vmem:[#allocation3 + $0x7b0] sm:$0xff]
    %v2576 = vld [vmem:[#allocation3 + $0x7b8] sm:$0xff]
    %v2577 = vld [vmem:[#allocation3 + $0x7c0] sm:$0xf]
    %v2578 = vld [vmem:[#allocation3 + $0x7c4] sm:$0xff]
    %v2579 = vld [vmem:[#allocation3 + $0x7cc] sm:$0xff]
    %v2580 = vld [vmem:[#allocation3 + $0x7d4] sm:$0xff]
    %v2581 = vld [vmem:[#allocation3 + $0x7dc] sm:$0xf]
    %v2582 = vld [vmem:[#allocation3 + $0x7e0] sm:$0xff]
    %v2583 = vld [vmem:[#allocation3 + $0x7e8] sm:$0xff]
    %v2584 = vld [vmem:[#allocation3 + $0x7f0] sm:$0xff]
    %v2585 = vld [vmem:[#allocation3 + $0x7f8] sm:$0xf]
    %v2586 = vld [vmem:[#allocation3 + $0x7fc] sm:$0xff]
    %v2587 = vld [vmem:[#allocation3 + $0x804] sm:$0xff]
    %v2588 = vld [vmem:[#allocation3 + $0x80c] sm:$0xff]
    %v2589 = vld [vmem:[#allocation3 + $0x814] sm:$0xf]
    %v2590 = vld [vmem:[#allocation3 + $0x818] sm:$0xff]
    %v2591 = vld [vmem:[#allocation3 + $0x820] sm:$0xff]
    %v2592 = vld [vmem:[#allocation3 + $0x828] sm:$0xff]
    %v2593 = vld [vmem:[#allocation3 + $0x830] sm:$0xf]
    %v2594 = vld [vmem:[#allocation3 + $0x834] sm:$0xff]
    %v2595 = vld [vmem:[#allocation3 + $0x83c] sm:$0xff]
    %v2596 = vld [vmem:[#allocation3 + $0x844] sm:$0xff]
    %v2597 = vld [vmem:[#allocation3 + $0x84c] sm:$0xf]
    %v2598 = vld [vmem:[#allocation3 + $0x850] sm:$0xff]
    %v2599 = vld [vmem:[#allocation3 + $0x858] sm:$0xff]
    %v2600 = vld [vmem:[#allocation3 + $0x860] sm:$0xff]
    %v2601 = vld [vmem:[#allocation3 + $0x868] sm:$0xf]
    %v2602 = vld [vmem:[#allocation3 + $0x86c] sm:$0xff]
    %v2603 = vld [vmem:[#allocation3 + $0x874] sm:$0xff]
    %v2604 = vld [vmem:[#allocation3 + $0x87c] sm:$0xff]
    %v2605 = vld [vmem:[#allocation3 + $0x884] sm:$0xf]
    %v2606 = vld [vmem:[#allocation3 + $0x888] sm:$0xff]
    %v2607 = vld [vmem:[#allocation3 + $0x890] sm:$0xff]
    %v2608 = vld [vmem:[#allocation3 + $0x898] sm:$0xff]
    %v2609 = vld [vmem:[#allocation3 + $0x8a0] sm:$0xf]
    %v2610 = vld [vmem:[#allocation3 + $0x8a4] sm:$0xff]
    %v2611 = vld [vmem:[#allocation3 + $0x8ac] sm:$0xff]
    %v2612 = vld [vmem:[#allocation3 + $0x8b4] sm:$0xff]
    %v2613 = vld [vmem:[#allocation3 + $0x8bc] sm:$0xf]
    %v2614 = vld [vmem:[#allocation3 + $0x8c0] sm:$0xff]
    %v2615 = vld [vmem:[#allocation3 + $0x8c8] sm:$0xff]
    %v2616 = vld [vmem:[#allocation3 + $0x8d0] sm:$0xff]
    %v2617 = vld [vmem:[#allocation3 + $0x8d8] sm:$0xf]
    %v2618 = vld [vmem:[#allocation3 + $0x8dc] sm:$0xff]
    %v2619 = vld [vmem:[#allocation3 + $0x8e4] sm:$0xff]
    %v2620 = vld [vmem:[#allocation3 + $0x8ec] sm:$0xff]
    %v2621 = vld [vmem:[#allocation3 + $0x8f4] sm:$0xf]
    %v2622 = vld [vmem:[#allocation3 + $0x8f8] sm:$0xff]
    %v2623 = vld [vmem:[#allocation3 + $0x900] sm:$0xff]
    %v2624 = vld [vmem:[#allocation3 + $0x908] sm:$0xff]
    %v2625 = vld [vmem:[#allocation3 + $0x910] sm:$0xf]
    %v2626 = vld [vmem:[#allocation3 + $0x914] sm:$0xff]
    %v2627 = vld [vmem:[#allocation3 + $0x91c] sm:$0xff]
    %v2628 = vld [vmem:[#allocation3 + $0x924] sm:$0xff]
    %v2629 = vld [vmem:[#allocation3 + $0x92c] sm:$0xf]
    %v2630 = vld [vmem:[#allocation3 + $0x930] sm:$0xff]
    %v2631 = vld [vmem:[#allocation3 + $0x938] sm:$0xff]
    %v2632 = vld [vmem:[#allocation3 + $0x940] sm:$0xff]
    %v2633 = vld [vmem:[#allocation3 + $0x948] sm:$0xf]
    %v2634 = vld [vmem:[#allocation3 + $0x94c] sm:$0xff]
    %v2635 = vld [vmem:[#allocation3 + $0x954] sm:$0xff]
    %v2636 = vld [vmem:[#allocation3 + $0x95c] sm:$0xff]
    %v2637 = vld [vmem:[#allocation3 + $0x964] sm:$0xf]
    %v2638 = vld [vmem:[#allocation3 + $0x968] sm:$0xff]
    %v2639 = vld [vmem:[#allocation3 + $0x970] sm:$0xff]
    %v2640 = vld [vmem:[#allocation3 + $0x978] sm:$0xff]
    %v2641 = vld [vmem:[#allocation3 + $0x980] sm:$0xf]
    %v2642 = vld [vmem:[#allocation3 + $0x984] sm:$0xff]
    %v2643 = vld [vmem:[#allocation3 + $0x98c] sm:$0xff]
    %v2644 = vld [vmem:[#allocation3 + $0x994] sm:$0xff]
    %v2645 = vld [vmem:[#allocation3 + $0x99c] sm:$0xf]
    %v2646 = vld [vmem:[#allocation3 + $0x9a0] sm:$0xff]
    %v2647 = vld [vmem:[#allocation3 + $0x9a8] sm:$0xff]
    %v2648 = vld [vmem:[#allocation3 + $0x9b0] sm:$0xff]
    %v2649 = vld [vmem:[#allocation3 + $0x9b8] sm:$0xf]
    %v2650 = vld [vmem:[#allocation3 + $0x9bc] sm:$0xff]
    %v2651 = vld [vmem:[#allocation3 + $0x9c4] sm:$0xff]
    %v2652 = vld [vmem:[#allocation3 + $0x9cc] sm:$0xff]
    %v2653 = vld [vmem:[#allocation3 + $0x9d4] sm:$0xf]
    %v2654 = vld [vmem:[#allocation3 + $0x9d8] sm:$0xff]
    %v2655 = vld [vmem:[#allocation3 + $0x9e0] sm:$0xff]
    %v2656 = vld [vmem:[#allocation3 + $0x9e8] sm:$0xff]
    %v2657 = vld [vmem:[#allocation3 + $0x9f0] sm:$0xf]
    %v2658 = vld [vmem:[#allocation3 + $0x9f4] sm:$0xff]
    %v2659 = vld [vmem:[#allocation3 + $0x9fc] sm:$0xff]
    %v2660 = vld [vmem:[#allocation3 + $0xa04] sm:$0xff]
    %v2661 = vld [vmem:[#allocation3 + $0xa0c] sm:$0xf]
    %v2662 = vld [vmem:[#allocation3 + $0xa10] sm:$0xff]
    %v2663 = vld [vmem:[#allocation3 + $0xa18] sm:$0xff]
    %v2664 = vld [vmem:[#allocation3 + $0xa20] sm:$0xff]
    %v2665 = vld [vmem:[#allocation3 + $0xa28] sm:$0xf]
    %v2666 = vld [vmem:[#allocation3 + $0xa2c] sm:$0xff]
    %v2667 = vld [vmem:[#allocation3 + $0xa34] sm:$0xff]
    %v2668 = vld [vmem:[#allocation3 + $0xa3c] sm:$0xff]
    %v2669 = vld [vmem:[#allocation3 + $0xa44] sm:$0xf]
    %v2670 = vld [vmem:[#allocation3 + $0xa48] sm:$0xff]
    %v2671 = vld [vmem:[#allocation3 + $0xa50] sm:$0xff]
    %v2672 = vld [vmem:[#allocation3 + $0xa58] sm:$0xff]
    %v2673 = vld [vmem:[#allocation3 + $0xa60] sm:$0xf]
    %v2674 = vld [vmem:[#allocation3 + $0xa64] sm:$0xff]
    %v2675 = vld [vmem:[#allocation3 + $0xa6c] sm:$0xff]
    %v2676 = vld [vmem:[#allocation3 + $0xa74] sm:$0xff]
    %v2677 = vld [vmem:[#allocation3 + $0xa7c] sm:$0xf]
    %v2678 = vld [vmem:[#allocation3 + $0xa80] sm:$0xff]
    %v2679 = vld [vmem:[#allocation3 + $0xa88] sm:$0xff]
    %v2680 = vld [vmem:[#allocation3 + $0xa90] sm:$0xff]
    %v2681 = vld [vmem:[#allocation3 + $0xa98] sm:$0xf]
    %v2682 = vld [vmem:[#allocation3 + $0xa9c] sm:$0xff]
    %v2683 = vld [vmem:[#allocation3 + $0xaa4] sm:$0xff]
    %v2684 = vld [vmem:[#allocation3 + $0xaac] sm:$0xff]
    %v2685 = vld [vmem:[#allocation3 + $0xab4] sm:$0xf]
    %v2686 = vld [vmem:[#allocation3 + $0xab8] sm:$0xff]
    %v2687 = vld [vmem:[#allocation3 + $0xac0] sm:$0xff]
    %v2688 = vld [vmem:[#allocation3 + $0xac8] sm:$0xff]
    %v2689 = vld [vmem:[#allocation3 + $0xad0] sm:$0xf]
    %v2690 = vld [vmem:[#allocation3 + $0xad4] sm:$0xff]
    %v2691 = vld [vmem:[#allocation3 + $0xadc] sm:$0xff]
    %v2692 = vld [vmem:[#allocation3 + $0xae4] sm:$0xff]
    %v2693 = vld [vmem:[#allocation3 + $0xaec] sm:$0xf]
    %v2694 = vld [vmem:[#allocation3 + $0xaf0] sm:$0xff]
    %v2695 = vld [vmem:[#allocation3 + $0xaf8] sm:$0xff]
    %v2696 = vld [vmem:[#allocation3 + $0xb00] sm:$0xff]
    %v2697 = vld [vmem:[#allocation3 + $0xb08] sm:$0xf]
    %v2698 = vld [vmem:[#allocation3 + $0xb0c] sm:$0xff]
    %v2699 = vld [vmem:[#allocation3 + $0xb14] sm:$0xff]
    %v2700 = vld [vmem:[#allocation3 + $0xb1c] sm:$0xff]
    %v2701 = vld [vmem:[#allocation3 + $0xb24] sm:$0xf]
    %v2702 = vld [vmem:[#allocation3 + $0xb28] sm:$0xff]
    %v2703 = vld [vmem:[#allocation3 + $0xb30] sm:$0xff]
    %v2704 = vld [vmem:[#allocation3 + $0xb38] sm:$0xff]
    %v2705 = vld [vmem:[#allocation3 + $0xb40] sm:$0xf]
    %v2706 = vld [vmem:[#allocation3 + $0xb44] sm:$0xff]
    %v2707 = vld [vmem:[#allocation3 + $0xb4c] sm:$0xff]
    %v2708 = vld [vmem:[#allocation3 + $0xb54] sm:$0xff]
    %v2709 = vld [vmem:[#allocation3 + $0xb5c] sm:$0xf]
    %v2710 = vld [vmem:[#allocation3 + $0xb60] sm:$0xff]
    %v2711 = vld [vmem:[#allocation3 + $0xb68] sm:$0xff]
    %v2712 = vld [vmem:[#allocation3 + $0xb70] sm:$0xff]
    %v2713 = vld [vmem:[#allocation3 + $0xb78] sm:$0xf]
    %v2714 = vld [vmem:[#allocation3 + $0xb7c] sm:$0xff]
    %v2715 = vld [vmem:[#allocation3 + $0xb84] sm:$0xff]
    %v2716 = vld [vmem:[#allocation3 + $0xb8c] sm:$0xff]
    %v2717 = vld [vmem:[#allocation3 + $0xb94] sm:$0xf]
    %v2718 = vld [vmem:[#allocation3 + $0xb98] sm:$0xff]
    %v2719 = vld [vmem:[#allocation3 + $0xba0] sm:$0xff]
    %v2720 = vld [vmem:[#allocation3 + $0xba8] sm:$0xff]
    %v2721 = vld [vmem:[#allocation3 + $0xbb0] sm:$0xf]
    %v2722 = vld [vmem:[#allocation3 + $0xbb4] sm:$0xff]
    %v2723 = vld [vmem:[#allocation3 + $0xbbc] sm:$0xff]
    %v2724 = vld [vmem:[#allocation3 + $0xbc4] sm:$0xff]
    %v2725 = vld [vmem:[#allocation3 + $0xbcc] sm:$0xf]
    %v2726 = vld [vmem:[#allocation3 + $0xbd0] sm:$0xff]
    %v2727 = vld [vmem:[#allocation3 + $0xbd8] sm:$0xff]
    %v2728 = vld [vmem:[#allocation3 + $0xbe0] sm:$0xff]
    %v2729 = vld [vmem:[#allocation3 + $0xbe8] sm:$0xf]
    %v2730 = vld [vmem:[#allocation3 + $0xbec] sm:$0xff]
    %v2731 = vld [vmem:[#allocation3 + $0xbf4] sm:$0xff]
    %v2732 = vld [vmem:[#allocation3 + $0xbfc] sm:$0xff]
    %v2733 = vld [vmem:[#allocation3 + $0xc04] sm:$0xf]
    %v2734 = vld [vmem:[#allocation3 + $0xc08] sm:$0xff]
    %v2735 = vld [vmem:[#allocation3 + $0xc10] sm:$0xff]
    %v2736 = vld [vmem:[#allocation3 + $0xc18] sm:$0xff]
    %v2737 = vld [vmem:[#allocation3 + $0xc20] sm:$0xf]
    %v2738 = vld [vmem:[#allocation3 + $0xc24] sm:$0xff]
    %v2739 = vld [vmem:[#allocation3 + $0xc2c] sm:$0xff]
    %v2740 = vld [vmem:[#allocation3 + $0xc34] sm:$0xff]
    %v2741 = vld [vmem:[#allocation3 + $0xc3c] sm:$0xf]
    %v3190 = vunpack.c.l.b16 %v2294
    %v3191 = vunpack.c.h.b16 %v2294
    %v3192 = vunpack.c.l.b16 %v2295
    %v3193 = vunpack.c.h.b16 %v2295
    %v3194 = vunpack.c.l.b16 %v2296
    %v3195 = vunpack.c.h.b16 %v2296
    %v3196 = vunpack.c.l.b16 %v2297
    %v3197 = vunpack.c.l.b16 %v2298
    %v3198 = vunpack.c.h.b16 %v2298
    %v3199 = vunpack.c.l.b16 %v2299
    %v3200 = vunpack.c.h.b16 %v2299
    %v3201 = vunpack.c.l.b16 %v2300
    %v3202 = vunpack.c.h.b16 %v2300
    %v3203 = vunpack.c.l.b16 %v2301
    %v3204 = vunpack.c.l.b16 %v2302
    %v3205 = vunpack.c.h.b16 %v2302
    %v3206 = vunpack.c.l.b16 %v2303
    %v3207 = vunpack.c.h.b16 %v2303
    %v3208 = vunpack.c.l.b16 %v2304
    %v3209 = vunpack.c.h.b16 %v2304
    %v3210 = vunpack.c.l.b16 %v2305
    %v3211 = vunpack.c.l.b16 %v2306
    %v3212 = vunpack.c.h.b16 %v2306
    %v3213 = vunpack.c.l.b16 %v2307
    %v3214 = vunpack.c.h.b16 %v2307
    %v3215 = vunpack.c.l.b16 %v2308
    %v3216 = vunpack.c.h.b16 %v2308
    %v3217 = vunpack.c.l.b16 %v2309
    %v3218 = vunpack.c.l.b16 %v2310
    %v3219 = vunpack.c.h.b16 %v2310
    %v3220 = vunpack.c.l.b16 %v2311
    %v3221 = vunpack.c.h.b16 %v2311
    %v3222 = vunpack.c.l.b16 %v2312
    %v3223 = vunpack.c.h.b16 %v2312
    %v3224 = vunpack.c.l.b16 %v2313
    %v3225 = vunpack.c.l.b16 %v2314
    %v3226 = vunpack.c.h.b16 %v2314
    %v3227 = vunpack.c.l.b16 %v2315
    %v3228 = vunpack.c.h.b16 %v2315
    %v3229 = vunpack.c.l.b16 %v2316
    %v3230 = vunpack.c.h.b16 %v2316
    %v3231 = vunpack.c.l.b16 %v2317
    %v3232 = vunpack.c.l.b16 %v2318
    %v3233 = vunpack.c.h.b16 %v2318
    %v3234 = vunpack.c.l.b16 %v2319
    %v3235 = vunpack.c.h.b16 %v2319
    %v3236 = vunpack.c.l.b16 %v2320
    %v3237 = vunpack.c.h.b16 %v2320
    %v3238 = vunpack.c.l.b16 %v2321
    %v3239 = vunpack.c.l.b16 %v2322
    %v3240 = vunpack.c.h.b16 %v2322
    %v3241 = vunpack.c.l.b16 %v2323
    %v3242 = vunpack.c.h.b16 %v2323
    %v3243 = vunpack.c.l.b16 %v2324
    %v3244 = vunpack.c.h.b16 %v2324
    %v3245 = vunpack.c.l.b16 %v2325
    %v3246 = vunpack.c.l.b16 %v2326
    %v3247 = vunpack.c.h.b16 %v2326
    %v3248 = vunpack.c.l.b16 %v2327
    %v3249 = vunpack.c.h.b16 %v2327
    %v3250 = vunpack.c.l.b16 %v2328
    %v3251 = vunpack.c.h.b16 %v2328
    %v3252 = vunpack.c.l.b16 %v2329
    %v3253 = vunpack.c.l.b16 %v2330
    %v3254 = vunpack.c.h.b16 %v2330
    %v3255 = vunpack.c.l.b16 %v2331
    %v3256 = vunpack.c.h.b16 %v2331
    %v3257 = vunpack.c.l.b16 %v2332
    %v3258 = vunpack.c.h.b16 %v2332
    %v3259 = vunpack.c.l.b16 %v2333
    %v3260 = vunpack.c.l.b16 %v2334
    %v3261 = vunpack.c.h.b16 %v2334
    %v3262 = vunpack.c.l.b16 %v2335
    %v3263 = vunpack.c.h.b16 %v2335
    %v3264 = vunpack.c.l.b16 %v2336
    %v3265 = vunpack.c.h.b16 %v2336
    %v3266 = vunpack.c.l.b16 %v2337
    %v3267 = vunpack.c.l.b16 %v2338
    %v3268 = vunpack.c.h.b16 %v2338
    %v3269 = vunpack.c.l.b16 %v2339
    %v3270 = vunpack.c.h.b16 %v2339
    %v3271 = vunpack.c.l.b16 %v2340
    %v3272 = vunpack.c.h.b16 %v2340
    %v3273 = vunpack.c.l.b16 %v2341
    %v3274 = vunpack.c.l.b16 %v2342
    %v3275 = vunpack.c.h.b16 %v2342
    %v3276 = vunpack.c.l.b16 %v2343
    %v3277 = vunpack.c.h.b16 %v2343
    %v3278 = vunpack.c.l.b16 %v2344
    %v3279 = vunpack.c.h.b16 %v2344
    %v3280 = vunpack.c.l.b16 %v2345
    %v3281 = vunpack.c.l.b16 %v2346
    %v3282 = vunpack.c.h.b16 %v2346
    %v3283 = vunpack.c.l.b16 %v2347
    %v3284 = vunpack.c.h.b16 %v2347
    %v3285 = vunpack.c.l.b16 %v2348
    %v3286 = vunpack.c.h.b16 %v2348
    %v3287 = vunpack.c.l.b16 %v2349
    %v3288 = vunpack.c.l.b16 %v2350
    %v3289 = vunpack.c.h.b16 %v2350
    %v3290 = vunpack.c.l.b16 %v2351
    %v3291 = vunpack.c.h.b16 %v2351
    %v3292 = vunpack.c.l.b16 %v2352
    %v3293 = vunpack.c.h.b16 %v2352
    %v3294 = vunpack.c.l.b16 %v2353
    %v3295 = vunpack.c.l.b16 %v2354
    %v3296 = vunpack.c.h.b16 %v2354
    %v3297 = vunpack.c.l.b16 %v2355
    %v3298 = vunpack.c.h.b16 %v2355
    %v3299 = vunpack.c.l.b16 %v2356
    %v3300 = vunpack.c.h.b16 %v2356
    %v3301 = vunpack.c.l.b16 %v2357
    %v3302 = vunpack.c.l.b16 %v2358
    %v3303 = vunpack.c.h.b16 %v2358
    %v3304 = vunpack.c.l.b16 %v2359
    %v3305 = vunpack.c.h.b16 %v2359
    %v3306 = vunpack.c.l.b16 %v2360
    %v3307 = vunpack.c.h.b16 %v2360
    %v3308 = vunpack.c.l.b16 %v2361
    %v3309 = vunpack.c.l.b16 %v2362
    %v3310 = vunpack.c.h.b16 %v2362
    %v3311 = vunpack.c.l.b16 %v2363
    %v3312 = vunpack.c.h.b16 %v2363
    %v3313 = vunpack.c.l.b16 %v2364
    %v3314 = vunpack.c.h.b16 %v2364
    %v3315 = vunpack.c.l.b16 %v2365
    %v3316 = vunpack.c.l.b16 %v2366
    %v3317 = vunpack.c.h.b16 %v2366
    %v3318 = vunpack.c.l.b16 %v2367
    %v3319 = vunpack.c.h.b16 %v2367
    %v3320 = vunpack.c.l.b16 %v2368
    %v3321 = vunpack.c.h.b16 %v2368
    %v3322 = vunpack.c.l.b16 %v2369
    %v3323 = vunpack.c.l.b16 %v2370
    %v3324 = vunpack.c.h.b16 %v2370
    %v3325 = vunpack.c.l.b16 %v2371
    %v3326 = vunpack.c.h.b16 %v2371
    %v3327 = vunpack.c.l.b16 %v2372
    %v3328 = vunpack.c.h.b16 %v2372
    %v3329 = vunpack.c.l.b16 %v2373
    %v3330 = vunpack.c.l.b16 %v2374
    %v3331 = vunpack.c.h.b16 %v2374
    %v3332 = vunpack.c.l.b16 %v2375
    %v3333 = vunpack.c.h.b16 %v2375
    %v3334 = vunpack.c.l.b16 %v2376
    %v3335 = vunpack.c.h.b16 %v2376
    %v3336 = vunpack.c.l.b16 %v2377
    %v3337 = vunpack.c.l.b16 %v2378
    %v3338 = vunpack.c.h.b16 %v2378
    %v3339 = vunpack.c.l.b16 %v2379
    %v3340 = vunpack.c.h.b16 %v2379
    %v3341 = vunpack.c.l.b16 %v2380
    %v3342 = vunpack.c.h.b16 %v2380
    %v3343 = vunpack.c.l.b16 %v2381
    %v3344 = vunpack.c.l.b16 %v2382
    %v3345 = vunpack.c.h.b16 %v2382
    %v3346 = vunpack.c.l.b16 %v2383
    %v3347 = vunpack.c.h.b16 %v2383
    %v3348 = vunpack.c.l.b16 %v2384
    %v3349 = vunpack.c.h.b16 %v2384
    %v3350 = vunpack.c.l.b16 %v2385
    %v3351 = vunpack.c.l.b16 %v2386
    %v3352 = vunpack.c.h.b16 %v2386
    %v3353 = vunpack.c.l.b16 %v2387
    %v3354 = vunpack.c.h.b16 %v2387
    %v3355 = vunpack.c.l.b16 %v2388
    %v3356 = vunpack.c.h.b16 %v2388
    %v3357 = vunpack.c.l.b16 %v2389
    %v3358 = vunpack.c.l.b16 %v2390
    %v3359 = vunpack.c.h.b16 %v2390
    %v3360 = vunpack.c.l.b16 %v2391
    %v3361 = vunpack.c.h.b16 %v2391
    %v3362 = vunpack.c.l.b16 %v2392
    %v3363 = vunpack.c.h.b16 %v2392
    %v3364 = vunpack.c.l.b16 %v2393
    %v3365 = vunpack.c.l.b16 %v2394
    %v3366 = vunpack.c.h.b16 %v2394
    %v3367 = vunpack.c.l.b16 %v2395
    %v3368 = vunpack.c.h.b16 %v2395
    %v3369 = vunpack.c.l.b16 %v2396
    %v3370 = vunpack.c.h.b16 %v2396
    %v3371 = vunpack.c.l.b16 %v2397
    %v3372 = vunpack.c.l.b16 %v2398
    %v3373 = vunpack.c.h.b16 %v2398
    %v3374 = vunpack.c.l.b16 %v2399
    %v3375 = vunpack.c.h.b16 %v2399
    %v3376 = vunpack.c.l.b16 %v2400
    %v3377 = vunpack.c.h.b16 %v2400
    %v3378 = vunpack.c.l.b16 %v2401
    %v3379 = vunpack.c.l.b16 %v2402
    %v3380 = vunpack.c.h.b16 %v2402
    %v3381 = vunpack.c.l.b16 %v2403
    %v3382 = vunpack.c.h.b16 %v2403
    %v3383 = vunpack.c.l.b16 %v2404
    %v3384 = vunpack.c.h.b16 %v2404
    %v3385 = vunpack.c.l.b16 %v2405
    %v3386 = vunpack.c.l.b16 %v2406
    %v3387 = vunpack.c.h.b16 %v2406
    %v3388 = vunpack.c.l.b16 %v2407
    %v3389 = vunpack.c.h.b16 %v2407
    %v3390 = vunpack.c.l.b16 %v2408
    %v3391 = vunpack.c.h.b16 %v2408
    %v3392 = vunpack.c.l.b16 %v2409
    %v3393 = vunpack.c.l.b16 %v2410
    %v3394 = vunpack.c.h.b16 %v2410
    %v3395 = vunpack.c.l.b16 %v2411
    %v3396 = vunpack.c.h.b16 %v2411
    %v3397 = vunpack.c.l.b16 %v2412
    %v3398 = vunpack.c.h.b16 %v2412
    %v3399 = vunpack.c.l.b16 %v2413
    %v3400 = vunpack.c.l.b16 %v2414
    %v3401 = vunpack.c.h.b16 %v2414
    %v3402 = vunpack.c.l.b16 %v2415
    %v3403 = vunpack.c.h.b16 %v2415
    %v3404 = vunpack.c.l.b16 %v2416
    %v3405 = vunpack.c.h.b16 %v2416
    %v3406 = vunpack.c.l.b16 %v2417
    %v3407 = vunpack.c.l.b16 %v2418
    %v3408 = vunpack.c.h.b16 %v2418
    %v3409 = vunpack.c.l.b16 %v2419
    %v3410 = vunpack.c.h.b16 %v2419
    %v3411 = vunpack.c.l.b16 %v2420
    %v3412 = vunpack.c.h.b16 %v2420
    %v3413 = vunpack.c.l.b16 %v2421
    %v3414 = vunpack.c.l.b16 %v2422
    %v3415 = vunpack.c.h.b16 %v2422
    %v3416 = vunpack.c.l.b16 %v2423
    %v3417 = vunpack.c.h.b16 %v2423
    %v3418 = vunpack.c.l.b16 %v2424
    %v3419 = vunpack.c.h.b16 %v2424
    %v3420 = vunpack.c.l.b16 %v2425
    %v3421 = vunpack.c.l.b16 %v2426
    %v3422 = vunpack.c.h.b16 %v2426
    %v3423 = vunpack.c.l.b16 %v2427
    %v3424 = vunpack.c.h.b16 %v2427
    %v3425 = vunpack.c.l.b16 %v2428
    %v3426 = vunpack.c.h.b16 %v2428
    %v3427 = vunpack.c.l.b16 %v2429
    %v3428 = vunpack.c.l.b16 %v2430
    %v3429 = vunpack.c.h.b16 %v2430
    %v3430 = vunpack.c.l.b16 %v2431
    %v3431 = vunpack.c.h.b16 %v2431
    %v3432 = vunpack.c.l.b16 %v2432
    %v3433 = vunpack.c.h.b16 %v2432
    %v3434 = vunpack.c.l.b16 %v2433
    %v3435 = vunpack.c.l.b16 %v2434
    %v3436 = vunpack.c.h.b16 %v2434
    %v3437 = vunpack.c.l.b16 %v2435
    %v3438 = vunpack.c.h.b16 %v2435
    %v3439 = vunpack.c.l.b16 %v2436
    %v3440 = vunpack.c.h.b16 %v2436
    %v3441 = vunpack.c.l.b16 %v2437
    %v3442 = vunpack.c.l.b16 %v2438
    %v3443 = vunpack.c.h.b16 %v2438
    %v3444 = vunpack.c.l.b16 %v2439
    %v3445 = vunpack.c.h.b16 %v2439
    %v3446 = vunpack.c.l.b16 %v2440
    %v3447 = vunpack.c.h.b16 %v2440
    %v3448 = vunpack.c.l.b16 %v2441
    %v3449 = vunpack.c.l.b16 %v2442
    %v3450 = vunpack.c.h.b16 %v2442
    %v3451 = vunpack.c.l.b16 %v2443
    %v3452 = vunpack.c.h.b16 %v2443
    %v3453 = vunpack.c.l.b16 %v2444
    %v3454 = vunpack.c.h.b16 %v2444
    %v3455 = vunpack.c.l.b16 %v2445
    %v3456 = vunpack.c.l.b16 %v2446
    %v3457 = vunpack.c.h.b16 %v2446
    %v3458 = vunpack.c.l.b16 %v2447
    %v3459 = vunpack.c.h.b16 %v2447
    %v3460 = vunpack.c.l.b16 %v2448
    %v3461 = vunpack.c.h.b16 %v2448
    %v3462 = vunpack.c.l.b16 %v2449
    %v3463 = vunpack.c.l.b16 %v2450
    %v3464 = vunpack.c.h.b16 %v2450
    %v3465 = vunpack.c.l.b16 %v2451
    %v3466 = vunpack.c.h.b16 %v2451
    %v3467 = vunpack.c.l.b16 %v2452
    %v3468 = vunpack.c.h.b16 %v2452
    %v3469 = vunpack.c.l.b16 %v2453
    %v3470 = vunpack.c.l.b16 %v2454
    %v3471 = vunpack.c.h.b16 %v2454
    %v3472 = vunpack.c.l.b16 %v2455
    %v3473 = vunpack.c.h.b16 %v2455
    %v3474 = vunpack.c.l.b16 %v2456
    %v3475 = vunpack.c.h.b16 %v2456
    %v3476 = vunpack.c.l.b16 %v2457
    %v3477 = vunpack.c.l.b16 %v2458
    %v3478 = vunpack.c.h.b16 %v2458
    %v3479 = vunpack.c.l.b16 %v2459
    %v3480 = vunpack.c.h.b16 %v2459
    %v3481 = vunpack.c.l.b16 %v2460
    %v3482 = vunpack.c.h.b16 %v2460
    %v3483 = vunpack.c.l.b16 %v2461
    %v3484 = vunpack.c.l.b16 %v2462
    %v3485 = vunpack.c.h.b16 %v2462
    %v3486 = vunpack.c.l.b16 %v2463
    %v3487 = vunpack.c.h.b16 %v2463
    %v3488 = vunpack.c.l.b16 %v2464
    %v3489 = vunpack.c.h.b16 %v2464
    %v3490 = vunpack.c.l.b16 %v2465
    %v3491 = vunpack.c.l.b16 %v2466
    %v3492 = vunpack.c.h.b16 %v2466
    %v3493 = vunpack.c.l.b16 %v2467
    %v3494 = vunpack.c.h.b16 %v2467
    %v3495 = vunpack.c.l.b16 %v2468
    %v3496 = vunpack.c.h.b16 %v2468
    %v3497 = vunpack.c.l.b16 %v2469
    %v3498 = vunpack.c.l.b16 %v2470
    %v3499 = vunpack.c.h.b16 %v2470
    %v3500 = vunpack.c.l.b16 %v2471
    %v3501 = vunpack.c.h.b16 %v2471
    %v3502 = vunpack.c.l.b16 %v2472
    %v3503 = vunpack.c.h.b16 %v2472
    %v3504 = vunpack.c.l.b16 %v2473
    %v3505 = vunpack.c.l.b16 %v2474
    %v3506 = vunpack.c.h.b16 %v2474
    %v3507 = vunpack.c.l.b16 %v2475
    %v3508 = vunpack.c.h.b16 %v2475
    %v3509 = vunpack.c.l.b16 %v2476
    %v3510 = vunpack.c.h.b16 %v2476
    %v3511 = vunpack.c.l.b16 %v2477
    %v3512 = vunpack.c.l.b16 %v2478
    %v3513 = vunpack.c.h.b16 %v2478
    %v3514 = vunpack.c.l.b16 %v2479
    %v3515 = vunpack.c.h.b16 %v2479
    %v3516 = vunpack.c.l.b16 %v2480
    %v3517 = vunpack.c.h.b16 %v2480
    %v3518 = vunpack.c.l.b16 %v2481
    %v3519 = vunpack.c.l.b16 %v2482
    %v3520 = vunpack.c.h.b16 %v2482
    %v3521 = vunpack.c.l.b16 %v2483
    %v3522 = vunpack.c.h.b16 %v2483
    %v3523 = vunpack.c.l.b16 %v2484
    %v3524 = vunpack.c.h.b16 %v2484
    %v3525 = vunpack.c.l.b16 %v2485
    %v3526 = vunpack.c.l.b16 %v2486
    %v3527 = vunpack.c.h.b16 %v2486
    %v3528 = vunpack.c.l.b16 %v2487
    %v3529 = vunpack.c.h.b16 %v2487
    %v3530 = vunpack.c.l.b16 %v2488
    %v3531 = vunpack.c.h.b16 %v2488
    %v3532 = vunpack.c.l.b16 %v2489
    %v3533 = vunpack.c.l.b16 %v2490
    %v3534 = vunpack.c.h.b16 %v2490
    %v3535 = vunpack.c.l.b16 %v2491
    %v3536 = vunpack.c.h.b16 %v2491
    %v3537 = vunpack.c.l.b16 %v2492
    %v3538 = vunpack.c.h.b16 %v2492
    %v3539 = vunpack.c.l.b16 %v2493
    %v3540 = vunpack.c.l.b16 %v2494
    %v3541 = vunpack.c.h.b16 %v2494
    %v3542 = vunpack.c.l.b16 %v2495
    %v3543 = vunpack.c.h.b16 %v2495
    %v3544 = vunpack.c.l.b16 %v2496
    %v3545 = vunpack.c.h.b16 %v2496
    %v3546 = vunpack.c.l.b16 %v2497
    %v3547 = vunpack.c.l.b16 %v2498
    %v3548 = vunpack.c.h.b16 %v2498
    %v3549 = vunpack.c.l.b16 %v2499
    %v3550 = vunpack.c.h.b16 %v2499
    %v3551 = vunpack.c.l.b16 %v2500
    %v3552 = vunpack.c.h.b16 %v2500
    %v3553 = vunpack.c.l.b16 %v2501
    %v3554 = vunpack.c.l.b16 %v2502
    %v3555 = vunpack.c.h.b16 %v2502
    %v3556 = vunpack.c.l.b16 %v2503
    %v3557 = vunpack.c.h.b16 %v2503
    %v3558 = vunpack.c.l.b16 %v2504
    %v3559 = vunpack.c.h.b16 %v2504
    %v3560 = vunpack.c.l.b16 %v2505
    %v3561 = vunpack.c.l.b16 %v2506
    %v3562 = vunpack.c.h.b16 %v2506
    %v3563 = vunpack.c.l.b16 %v2507
    %v3564 = vunpack.c.h.b16 %v2507
    %v3565 = vunpack.c.l.b16 %v2508
    %v3566 = vunpack.c.h.b16 %v2508
    %v3567 = vunpack.c.l.b16 %v2509
    %v3568 = vunpack.c.l.b16 %v2510
    %v3569 = vunpack.c.h.b16 %v2510
    %v3570 = vunpack.c.l.b16 %v2511
    %v3571 = vunpack.c.h.b16 %v2511
    %v3572 = vunpack.c.l.b16 %v2512
    %v3573 = vunpack.c.h.b16 %v2512
    %v3574 = vunpack.c.l.b16 %v2513
    %v3575 = vunpack.c.l.b16 %v2514
    %v3576 = vunpack.c.h.b16 %v2514
    %v3577 = vunpack.c.l.b16 %v2515
    %v3578 = vunpack.c.h.b16 %v2515
    %v3579 = vunpack.c.l.b16 %v2516
    %v3580 = vunpack.c.h.b16 %v2516
    %v3581 = vunpack.c.l.b16 %v2517
    %v3582 = vunpack.c.l.b16 %v2518
    %v3583 = vunpack.c.h.b16 %v2518
    %v3584 = vunpack.c.l.b16 %v2519
    %v3585 = vunpack.c.h.b16 %v2519
    %v3586 = vunpack.c.l.b16 %v2520
    %v3587 = vunpack.c.h.b16 %v2520
    %v3588 = vunpack.c.l.b16 %v2521
    %v3589 = vunpack.c.l.b16 %v2522
    %v3590 = vunpack.c.h.b16 %v2522
    %v3591 = vunpack.c.l.b16 %v2523
    %v3592 = vunpack.c.h.b16 %v2523
    %v3593 = vunpack.c.l.b16 %v2524
    %v3594 = vunpack.c.h.b16 %v2524
    %v3595 = vunpack.c.l.b16 %v2525
    %v3596 = vunpack.c.l.b16 %v2526
    %v3597 = vunpack.c.h.b16 %v2526
    %v3598 = vunpack.c.l.b16 %v2527
    %v3599 = vunpack.c.h.b16 %v2527
    %v3600 = vunpack.c.l.b16 %v2528
    %v3601 = vunpack.c.h.b16 %v2528
    %v3602 = vunpack.c.l.b16 %v2529
    %v3603 = vunpack.c.l.b16 %v2530
    %v3604 = vunpack.c.h.b16 %v2530
    %v3605 = vunpack.c.l.b16 %v2531
    %v3606 = vunpack.c.h.b16 %v2531
    %v3607 = vunpack.c.l.b16 %v2532
    %v3608 = vunpack.c.h.b16 %v2532
    %v3609 = vunpack.c.l.b16 %v2533
    %v3610 = vunpack.c.l.b16 %v2534
    %v3611 = vunpack.c.h.b16 %v2534
    %v3612 = vunpack.c.l.b16 %v2535
    %v3613 = vunpack.c.h.b16 %v2535
    %v3614 = vunpack.c.l.b16 %v2536
    %v3615 = vunpack.c.h.b16 %v2536
    %v3616 = vunpack.c.l.b16 %v2537
    %v3617 = vunpack.c.l.b16 %v2538
    %v3618 = vunpack.c.h.b16 %v2538
    %v3619 = vunpack.c.l.b16 %v2539
    %v3620 = vunpack.c.h.b16 %v2539
    %v3621 = vunpack.c.l.b16 %v2540
    %v3622 = vunpack.c.h.b16 %v2540
    %v3623 = vunpack.c.l.b16 %v2541
    %v3624 = vunpack.c.l.b16 %v2542
    %v3625 = vunpack.c.h.b16 %v2542
    %v3626 = vunpack.c.l.b16 %v2543
    %v3627 = vunpack.c.h.b16 %v2543
    %v3628 = vunpack.c.l.b16 %v2544
    %v3629 = vunpack.c.h.b16 %v2544
    %v3630 = vunpack.c.l.b16 %v2545
    %v3631 = vunpack.c.l.b16 %v2546
    %v3632 = vunpack.c.h.b16 %v2546
    %v3633 = vunpack.c.l.b16 %v2547
    %v3634 = vunpack.c.h.b16 %v2547
    %v3635 = vunpack.c.l.b16 %v2548
    %v3636 = vunpack.c.h.b16 %v2548
    %v3637 = vunpack.c.l.b16 %v2549
    %v3638 = vunpack.c.l.b16 %v2550
    %v3639 = vunpack.c.h.b16 %v2550
    %v3640 = vunpack.c.l.b16 %v2551
    %v3641 = vunpack.c.h.b16 %v2551
    %v3642 = vunpack.c.l.b16 %v2552
    %v3643 = vunpack.c.h.b16 %v2552
    %v3644 = vunpack.c.l.b16 %v2553
    %v3645 = vunpack.c.l.b16 %v2554
    %v3646 = vunpack.c.h.b16 %v2554
    %v3647 = vunpack.c.l.b16 %v2555
    %v3648 = vunpack.c.h.b16 %v2555
    %v3649 = vunpack.c.l.b16 %v2556
    %v3650 = vunpack.c.h.b16 %v2556
    %v3651 = vunpack.c.l.b16 %v2557
    %v3652 = vunpack.c.l.b16 %v2558
    %v3653 = vunpack.c.h.b16 %v2558
    %v3654 = vunpack.c.l.b16 %v2559
    %v3655 = vunpack.c.h.b16 %v2559
    %v3656 = vunpack.c.l.b16 %v2560
    %v3657 = vunpack.c.h.b16 %v2560
    %v3658 = vunpack.c.l.b16 %v2561
    %v3659 = vunpack.c.l.b16 %v2562
    %v3660 = vunpack.c.h.b16 %v2562
    %v3661 = vunpack.c.l.b16 %v2563
    %v3662 = vunpack.c.h.b16 %v2563
    %v3663 = vunpack.c.l.b16 %v2564
    %v3664 = vunpack.c.h.b16 %v2564
    %v3665 = vunpack.c.l.b16 %v2565
    %v3666 = vunpack.c.l.b16 %v2566
    %v3667 = vunpack.c.h.b16 %v2566
    %v3668 = vunpack.c.l.b16 %v2567
    %v3669 = vunpack.c.h.b16 %v2567
    %v3670 = vunpack.c.l.b16 %v2568
    %v3671 = vunpack.c.h.b16 %v2568
    %v3672 = vunpack.c.l.b16 %v2569
    %v3673 = vunpack.c.l.b16 %v2570
    %v3674 = vunpack.c.h.b16 %v2570
    %v3675 = vunpack.c.l.b16 %v2571
    %v3676 = vunpack.c.h.b16 %v2571
    %v3677 = vunpack.c.l.b16 %v2572
    %v3678 = vunpack.c.h.b16 %v2572
    %v3679 = vunpack.c.l.b16 %v2573
    %v3680 = vunpack.c.l.b16 %v2574
    %v3681 = vunpack.c.h.b16 %v2574
    %v3682 = vunpack.c.l.b16 %v2575
    %v3683 = vunpack.c.h.b16 %v2575
    %v3684 = vunpack.c.l.b16 %v2576
    %v3685 = vunpack.c.h.b16 %v2576
    %v3686 = vunpack.c.l.b16 %v2577
    %v3687 = vunpack.c.l.b16 %v2578
    %v3688 = vunpack.c.h.b16 %v2578
    %v3689 = vunpack.c.l.b16 %v2579
    %v3690 = vunpack.c.h.b16 %v2579
    %v3691 = vunpack.c.l.b16 %v2580
    %v3692 = vunpack.c.h.b16 %v2580
    %v3693 = vunpack.c.l.b16 %v2581
    %v3694 = vunpack.c.l.b16 %v2582
    %v3695 = vunpack.c.h.b16 %v2582
    %v3696 = vunpack.c.l.b16 %v2583
    %v3697 = vunpack.c.h.b16 %v2583
    %v3698 = vunpack.c.l.b16 %v2584
    %v3699 = vunpack.c.h.b16 %v2584
    %v3700 = vunpack.c.l.b16 %v2585
    %v3701 = vunpack.c.l.b16 %v2586
    %v3702 = vunpack.c.h.b16 %v2586
    %v3703 = vunpack.c.l.b16 %v2587
    %v3704 = vunpack.c.h.b16 %v2587
    %v3705 = vunpack.c.l.b16 %v2588
    %v3706 = vunpack.c.h.b16 %v2588
    %v3707 = vunpack.c.l.b16 %v2589
    %v3708 = vunpack.c.l.b16 %v2590
    %v3709 = vunpack.c.h.b16 %v2590
    %v3710 = vunpack.c.l.b16 %v2591
    %v3711 = vunpack.c.h.b16 %v2591
    %v3712 = vunpack.c.l.b16 %v2592
    %v3713 = vunpack.c.h.b16 %v2592
    %v3714 = vunpack.c.l.b16 %v2593
    %v3715 = vunpack.c.l.b16 %v2594
    %v3716 = vunpack.c.h.b16 %v2594
    %v3717 = vunpack.c.l.b16 %v2595
    %v3718 = vunpack.c.h.b16 %v2595
    %v3719 = vunpack.c.l.b16 %v2596
    %v3720 = vunpack.c.h.b16 %v2596
    %v3721 = vunpack.c.l.b16 %v2597
    %v3722 = vunpack.c.l.b16 %v2598
    %v3723 = vunpack.c.h.b16 %v2598
    %v3724 = vunpack.c.l.b16 %v2599
    %v3725 = vunpack.c.h.b16 %v2599
    %v3726 = vunpack.c.l.b16 %v2600
    %v3727 = vunpack.c.h.b16 %v2600
    %v3728 = vunpack.c.l.b16 %v2601
    %v3729 = vunpack.c.l.b16 %v2602
    %v3730 = vunpack.c.h.b16 %v2602
    %v3731 = vunpack.c.l.b16 %v2603
    %v3732 = vunpack.c.h.b16 %v2603
    %v3733 = vunpack.c.l.b16 %v2604
    %v3734 = vunpack.c.h.b16 %v2604
    %v3735 = vunpack.c.l.b16 %v2605
    %v3736 = vunpack.c.l.b16 %v2606
    %v3737 = vunpack.c.h.b16 %v2606
    %v3738 = vunpack.c.l.b16 %v2607
    %v3739 = vunpack.c.h.b16 %v2607
    %v3740 = vunpack.c.l.b16 %v2608
    %v3741 = vunpack.c.h.b16 %v2608
    %v3742 = vunpack.c.l.b16 %v2609
    %v3743 = vunpack.c.l.b16 %v2610
    %v3744 = vunpack.c.h.b16 %v2610
    %v3745 = vunpack.c.l.b16 %v2611
    %v3746 = vunpack.c.h.b16 %v2611
    %v3747 = vunpack.c.l.b16 %v2612
    %v3748 = vunpack.c.h.b16 %v2612
    %v3749 = vunpack.c.l.b16 %v2613
    %v3750 = vunpack.c.l.b16 %v2614
    %v3751 = vunpack.c.h.b16 %v2614
    %v3752 = vunpack.c.l.b16 %v2615
    %v3753 = vunpack.c.h.b16 %v2615
    %v3754 = vunpack.c.l.b16 %v2616
    %v3755 = vunpack.c.h.b16 %v2616
    %v3756 = vunpack.c.l.b16 %v2617
    %v3757 = vunpack.c.l.b16 %v2618
    %v3758 = vunpack.c.h.b16 %v2618
    %v3759 = vunpack.c.l.b16 %v2619
    %v3760 = vunpack.c.h.b16 %v2619
    %v3761 = vunpack.c.l.b16 %v2620
    %v3762 = vunpack.c.h.b16 %v2620
    %v3763 = vunpack.c.l.b16 %v2621
    %v3764 = vunpack.c.l.b16 %v2622
    %v3765 = vunpack.c.h.b16 %v2622
    %v3766 = vunpack.c.l.b16 %v2623
    %v3767 = vunpack.c.h.b16 %v2623
    %v3768 = vunpack.c.l.b16 %v2624
    %v3769 = vunpack.c.h.b16 %v2624
    %v3770 = vunpack.c.l.b16 %v2625
    %v3771 = vunpack.c.l.b16 %v2626
    %v3772 = vunpack.c.h.b16 %v2626
    %v3773 = vunpack.c.l.b16 %v2627
    %v3774 = vunpack.c.h.b16 %v2627
    %v3775 = vunpack.c.l.b16 %v2628
    %v3776 = vunpack.c.h.b16 %v2628
    %v3777 = vunpack.c.l.b16 %v2629
    %v3778 = vunpack.c.l.b16 %v2630
    %v3779 = vunpack.c.h.b16 %v2630
    %v3780 = vunpack.c.l.b16 %v2631
    %v3781 = vunpack.c.h.b16 %v2631
    %v3782 = vunpack.c.l.b16 %v2632
    %v3783 = vunpack.c.h.b16 %v2632
    %v3784 = vunpack.c.l.b16 %v2633
    %v3785 = vunpack.c.l.b16 %v2634
    %v3786 = vunpack.c.h.b16 %v2634
    %v3787 = vunpack.c.l.b16 %v2635
    %v3788 = vunpack.c.h.b16 %v2635
    %v3789 = vunpack.c.l.b16 %v2636
    %v3790 = vunpack.c.h.b16 %v2636
    %v3791 = vunpack.c.l.b16 %v2637
    %v3792 = vunpack.c.l.b16 %v2638
    %v3793 = vunpack.c.h.b16 %v2638
    %v3794 = vunpack.c.l.b16 %v2639
    %v3795 = vunpack.c.h.b16 %v2639
    %v3796 = vunpack.c.l.b16 %v2640
    %v3797 = vunpack.c.h.b16 %v2640
    %v3798 = vunpack.c.l.b16 %v2641
    %v3799 = vunpack.c.l.b16 %v2642
    %v3800 = vunpack.c.h.b16 %v2642
    %v3801 = vunpack.c.l.b16 %v2643
    %v3802 = vunpack.c.h.b16 %v2643
    %v3803 = vunpack.c.l.b16 %v2644
    %v3804 = vunpack.c.h.b16 %v2644
    %v3805 = vunpack.c.l.b16 %v2645
    %v3806 = vunpack.c.l.b16 %v2646
    %v3807 = vunpack.c.h.b16 %v2646
    %v3808 = vunpack.c.l.b16 %v2647
    %v3809 = vunpack.c.h.b16 %v2647
    %v3810 = vunpack.c.l.b16 %v2648
    %v3811 = vunpack.c.h.b16 %v2648
    %v3812 = vunpack.c.l.b16 %v2649
    %v3813 = vunpack.c.l.b16 %v2650
    %v3814 = vunpack.c.h.b16 %v2650
    %v3815 = vunpack.c.l.b16 %v2651
    %v3816 = vunpack.c.h.b16 %v2651
    %v3817 = vunpack.c.l.b16 %v2652
    %v3818 = vunpack.c.h.b16 %v2652
    %v3819 = vunpack.c.l.b16 %v2653
    %v3820 = vunpack.c.l.b16 %v2654
    %v3821 = vunpack.c.h.b16 %v2654
    %v3822 = vunpack.c.l.b16 %v2655
    %v3823 = vunpack.c.h.b16 %v2655
    %v3824 = vunpack.c.l.b16 %v2656
    %v3825 = vunpack.c.h.b16 %v2656
    %v3826 = vunpack.c.l.b16 %v2657
    %v3827 = vunpack.c.l.b16 %v2658
    %v3828 = vunpack.c.h.b16 %v2658
    %v3829 = vunpack.c.l.b16 %v2659
    %v3830 = vunpack.c.h.b16 %v2659
    %v3831 = vunpack.c.l.b16 %v2660
    %v3832 = vunpack.c.h.b16 %v2660
    %v3833 = vunpack.c.l.b16 %v2661
    %v3834 = vunpack.c.l.b16 %v2662
    %v3835 = vunpack.c.h.b16 %v2662
    %v3836 = vunpack.c.l.b16 %v2663
    %v3837 = vunpack.c.h.b16 %v2663
    %v3838 = vunpack.c.l.b16 %v2664
    %v3839 = vunpack.c.h.b16 %v2664
    %v3840 = vunpack.c.l.b16 %v2665
    %v3841 = vunpack.c.l.b16 %v2666
    %v3842 = vunpack.c.h.b16 %v2666
    %v3843 = vunpack.c.l.b16 %v2667
    %v3844 = vunpack.c.h.b16 %v2667
    %v3845 = vunpack.c.l.b16 %v2668
    %v3846 = vunpack.c.h.b16 %v2668
    %v3847 = vunpack.c.l.b16 %v2669
    %v3848 = vunpack.c.l.b16 %v2670
    %v3849 = vunpack.c.h.b16 %v2670
    %v3850 = vunpack.c.l.b16 %v2671
    %v3851 = vunpack.c.h.b16 %v2671
    %v3852 = vunpack.c.l.b16 %v2672
    %v3853 = vunpack.c.h.b16 %v2672
    %v3854 = vunpack.c.l.b16 %v2673
    %v3855 = vunpack.c.l.b16 %v2674
    %v3856 = vunpack.c.h.b16 %v2674
    %v3857 = vunpack.c.l.b16 %v2675
    %v3858 = vunpack.c.h.b16 %v2675
    %v3859 = vunpack.c.l.b16 %v2676
    %v3860 = vunpack.c.h.b16 %v2676
    %v3861 = vunpack.c.l.b16 %v2677
    %v3862 = vunpack.c.l.b16 %v2678
    %v3863 = vunpack.c.h.b16 %v2678
    %v3864 = vunpack.c.l.b16 %v2679
    %v3865 = vunpack.c.h.b16 %v2679
    %v3866 = vunpack.c.l.b16 %v2680
    %v3867 = vunpack.c.h.b16 %v2680
    %v3868 = vunpack.c.l.b16 %v2681
    %v3869 = vunpack.c.l.b16 %v2682
    %v3870 = vunpack.c.h.b16 %v2682
    %v3871 = vunpack.c.l.b16 %v2683
    %v3872 = vunpack.c.h.b16 %v2683
    %v3873 = vunpack.c.l.b16 %v2684
    %v3874 = vunpack.c.h.b16 %v2684
    %v3875 = vunpack.c.l.b16 %v2685
    %v3876 = vunpack.c.l.b16 %v2686
    %v3877 = vunpack.c.h.b16 %v2686
    %v3878 = vunpack.c.l.b16 %v2687
    %v3879 = vunpack.c.h.b16 %v2687
    %v3880 = vunpack.c.l.b16 %v2688
    %v3881 = vunpack.c.h.b16 %v2688
    %v3882 = vunpack.c.l.b16 %v2689
    %v3883 = vunpack.c.l.b16 %v2690
    %v3884 = vunpack.c.h.b16 %v2690
    %v3885 = vunpack.c.l.b16 %v2691
    %v3886 = vunpack.c.h.b16 %v2691
    %v3887 = vunpack.c.l.b16 %v2692
    %v3888 = vunpack.c.h.b16 %v2692
    %v3889 = vunpack.c.l.b16 %v2693
    %v3890 = vunpack.c.l.b16 %v2694
    %v3891 = vunpack.c.h.b16 %v2694
    %v3892 = vunpack.c.l.b16 %v2695
    %v3893 = vunpack.c.h.b16 %v2695
    %v3894 = vunpack.c.l.b16 %v2696
    %v3895 = vunpack.c.h.b16 %v2696
    %v3896 = vunpack.c.l.b16 %v2697
    %v3897 = vunpack.c.l.b16 %v2698
    %v3898 = vunpack.c.h.b16 %v2698
    %v3899 = vunpack.c.l.b16 %v2699
    %v3900 = vunpack.c.h.b16 %v2699
    %v3901 = vunpack.c.l.b16 %v2700
    %v3902 = vunpack.c.h.b16 %v2700
    %v3903 = vunpack.c.l.b16 %v2701
    %v3904 = vunpack.c.l.b16 %v2702
    %v3905 = vunpack.c.h.b16 %v2702
    %v3906 = vunpack.c.l.b16 %v2703
    %v3907 = vunpack.c.h.b16 %v2703
    %v3908 = vunpack.c.l.b16 %v2704
    %v3909 = vunpack.c.h.b16 %v2704
    %v3910 = vunpack.c.l.b16 %v2705
    %v3911 = vunpack.c.l.b16 %v2706
    %v3912 = vunpack.c.h.b16 %v2706
    %v3913 = vunpack.c.l.b16 %v2707
    %v3914 = vunpack.c.h.b16 %v2707
    %v3915 = vunpack.c.l.b16 %v2708
    %v3916 = vunpack.c.h.b16 %v2708
    %v3917 = vunpack.c.l.b16 %v2709
    %v3918 = vunpack.c.l.b16 %v2710
    %v3919 = vunpack.c.h.b16 %v2710
    %v3920 = vunpack.c.l.b16 %v2711
    %v3921 = vunpack.c.h.b16 %v2711
    %v3922 = vunpack.c.l.b16 %v2712
    %v3923 = vunpack.c.h.b16 %v2712
    %v3924 = vunpack.c.l.b16 %v2713
    %v3925 = vunpack.c.l.b16 %v2714
    %v3926 = vunpack.c.h.b16 %v2714
    %v3927 = vunpack.c.l.b16 %v2715
    %v3928 = vunpack.c.h.b16 %v2715
    %v3929 = vunpack.c.l.b16 %v2716
    %v3930 = vunpack.c.h.b16 %v2716
    %v3931 = vunpack.c.l.b16 %v2717
    %v3932 = vunpack.c.l.b16 %v2718
    %v3933 = vunpack.c.h.b16 %v2718
    %v3934 = vunpack.c.l.b16 %v2719
    %v3935 = vunpack.c.h.b16 %v2719
    %v3936 = vunpack.c.l.b16 %v2720
    %v3937 = vunpack.c.h.b16 %v2720
    %v3938 = vunpack.c.l.b16 %v2721
    %v3939 = vunpack.c.l.b16 %v2722
    %v3940 = vunpack.c.h.b16 %v2722
    %v3941 = vunpack.c.l.b16 %v2723
    %v3942 = vunpack.c.h.b16 %v2723
    %v3943 = vunpack.c.l.b16 %v2724
    %v3944 = vunpack.c.h.b16 %v2724
    %v3945 = vunpack.c.l.b16 %v2725
    %v3946 = vunpack.c.l.b16 %v2726
    %v3947 = vunpack.c.h.b16 %v2726
    %v3948 = vunpack.c.l.b16 %v2727
    %v3949 = vunpack.c.h.b16 %v2727
    %v3950 = vunpack.c.l.b16 %v2728
    %v3951 = vunpack.c.h.b16 %v2728
    %v3952 = vunpack.c.l.b16 %v2729
    %v3953 = vunpack.c.l.b16 %v2730
    %v3954 = vunpack.c.h.b16 %v2730
    %v3955 = vunpack.c.l.b16 %v2731
    %v3956 = vunpack.c.h.b16 %v2731
    %v3957 = vunpack.c.l.b16 %v2732
    %v3958 = vunpack.c.h.b16 %v2732
    %v3959 = vunpack.c.l.b16 %v2733
    %v3960 = vunpack.c.l.b16 %v2734
    %v3961 = vunpack.c.h.b16 %v2734
    %v3962 = vunpack.c.l.b16 %v2735
    %v3963 = vunpack.c.h.b16 %v2735
    %v3964 = vunpack.c.l.b16 %v2736
    %v3965 = vunpack.c.h.b16 %v2736
    %v3966 = vunpack.c.l.b16 %v2737
    %v3967 = vunpack.c.l.b16 %v2738
    %v3968 = vunpack.c.h.b16 %v2738
    %v3969 = vunpack.c.l.b16 %v2739
    %v3970 = vunpack.c.h.b16 %v2739
    %v3971 = vunpack.c.l.b16 %v2740
    %v3972 = vunpack.c.h.b16 %v2740
    %v3973 = vunpack.c.l.b16 %v2741
    %v3974 = vpack.c.b16 %v3197, %v3190
    %v3975 = vpack.c.b16 %v3198, %v3191
    %v3976 = vpack.c.b16 %v3199, %v3192
    %v3977 = vpack.c.b16 %v3200, %v3193
    %v3978 = vpack.c.b16 %v3201, %v3194
    %v3979 = vpack.c.b16 %v3202, %v3195
    %v3980 = vpack.c.b16 %v3203, %v3196
    %v3981 = vpack.c.b16 %v3211, %v3204
    %v3982 = vpack.c.b16 %v3212, %v3205
    %v3983 = vpack.c.b16 %v3213, %v3206
    %v3984 = vpack.c.b16 %v3214, %v3207
    %v3985 = vpack.c.b16 %v3215, %v3208
    %v3986 = vpack.c.b16 %v3216, %v3209
    %v3987 = vpack.c.b16 %v3217, %v3210
    %v3988 = vpack.c.b16 %v3225, %v3218
    %v3989 = vpack.c.b16 %v3226, %v3219
    %v3990 = vpack.c.b16 %v3227, %v3220
    %v3991 = vpack.c.b16 %v3228, %v3221
    %v3992 = vpack.c.b16 %v3229, %v3222
    %v3993 = vpack.c.b16 %v3230, %v3223
    %v3994 = vpack.c.b16 %v3231, %v3224
    %v3995 = vpack.c.b16 %v3239, %v3232
    %v3996 = vpack.c.b16 %v3240, %v3233
    %v3997 = vpack.c.b16 %v3241, %v3234
    %v3998 = vpack.c.b16 %v3242, %v3235
    %v3999 = vpack.c.b16 %v3243, %v3236
    %v4000 = vpack.c.b16 %v3244, %v3237
    %v4001 = vpack.c.b16 %v3245, %v3238
    %v4002 = vpack.c.b16 %v3253, %v3246
    %v4003 = vpack.c.b16 %v3254, %v3247
    %v4004 = vpack.c.b16 %v3255, %v3248
    %v4005 = vpack.c.b16 %v3256, %v3249
    %v4006 = vpack.c.b16 %v3257, %v3250
    %v4007 = vpack.c.b16 %v3258, %v3251
    %v4008 = vpack.c.b16 %v3259, %v3252
    %v4009 = vpack.c.b16 %v3267, %v3260
    %v4010 = vpack.c.b16 %v3268, %v3261
    %v4011 = vpack.c.b16 %v3269, %v3262
    %v4012 = vpack.c.b16 %v3270, %v3263
    %v4013 = vpack.c.b16 %v3271, %v3264
    %v4014 = vpack.c.b16 %v3272, %v3265
    %v4015 = vpack.c.b16 %v3273, %v3266
    %v4016 = vpack.c.b16 %v3281, %v3274
    %v4017 = vpack.c.b16 %v3282, %v3275
    %v4018 = vpack.c.b16 %v3283, %v3276
    %v4019 = vpack.c.b16 %v3284, %v3277
    %v4020 = vpack.c.b16 %v3285, %v3278
    %v4021 = vpack.c.b16 %v3286, %v3279
    %v4022 = vpack.c.b16 %v3287, %v3280
    %v4023 = vpack.c.b16 %v3295, %v3288
    %v4024 = vpack.c.b16 %v3296, %v3289
    %v4025 = vpack.c.b16 %v3297, %v3290
    %v4026 = vpack.c.b16 %v3298, %v3291
    %v4027 = vpack.c.b16 %v3299, %v3292
    %v4028 = vpack.c.b16 %v3300, %v3293
    %v4029 = vpack.c.b16 %v3301, %v3294
    %v4030 = vpack.c.b16 %v3309, %v3302
    %v4031 = vpack.c.b16 %v3310, %v3303
    %v4032 = vpack.c.b16 %v3311, %v3304
    %v4033 = vpack.c.b16 %v3312, %v3305
    %v4034 = vpack.c.b16 %v3313, %v3306
    %v4035 = vpack.c.b16 %v3314, %v3307
    %v4036 = vpack.c.b16 %v3315, %v3308
    %v4037 = vpack.c.b16 %v3323, %v3316
    %v4038 = vpack.c.b16 %v3324, %v3317
    %v4039 = vpack.c.b16 %v3325, %v3318
    %v4040 = vpack.c.b16 %v3326, %v3319
    %v4041 = vpack.c.b16 %v3327, %v3320
    %v4042 = vpack.c.b16 %v3328, %v3321
    %v4043 = vpack.c.b16 %v3329, %v3322
    %v4044 = vpack.c.b16 %v3337, %v3330
    %v4045 = vpack.c.b16 %v3338, %v3331
    %v4046 = vpack.c.b16 %v3339, %v3332
    %v4047 = vpack.c.b16 %v3340, %v3333
    %v4048 = vpack.c.b16 %v3341, %v3334
    %v4049 = vpack.c.b16 %v3342, %v3335
    %v4050 = vpack.c.b16 %v3343, %v3336
    %v4051 = vpack.c.b16 %v3351, %v3344
    %v4052 = vpack.c.b16 %v3352, %v3345
    %v4053 = vpack.c.b16 %v3353, %v3346
    %v4054 = vpack.c.b16 %v3354, %v3347
    %v4055 = vpack.c.b16 %v3355, %v3348
    %v4056 = vpack.c.b16 %v3356, %v3349
    %v4057 = vpack.c.b16 %v3357, %v3350
    %v4058 = vpack.c.b16 %v3365, %v3358
    %v4059 = vpack.c.b16 %v3366, %v3359
    %v4060 = vpack.c.b16 %v3367, %v3360
    %v4061 = vpack.c.b16 %v3368, %v3361
    %v4062 = vpack.c.b16 %v3369, %v3362
    %v4063 = vpack.c.b16 %v3370, %v3363
    %v4064 = vpack.c.b16 %v3371, %v3364
    %v4065 = vpack.c.b16 %v3379, %v3372
    %v4066 = vpack.c.b16 %v3380, %v3373
    %v4067 = vpack.c.b16 %v3381, %v3374
    %v4068 = vpack.c.b16 %v3382, %v3375
    %v4069 = vpack.c.b16 %v3383, %v3376
    %v4070 = vpack.c.b16 %v3384, %v3377
    %v4071 = vpack.c.b16 %v3385, %v3378
    %v4072 = vpack.c.b16 %v3393, %v3386
    %v4073 = vpack.c.b16 %v3394, %v3387
    %v4074 = vpack.c.b16 %v3395, %v3388
    %v4075 = vpack.c.b16 %v3396, %v3389
    %v4076 = vpack.c.b16 %v3397, %v3390
    %v4077 = vpack.c.b16 %v3398, %v3391
    %v4078 = vpack.c.b16 %v3399, %v3392
    %v4079 = vpack.c.b16 %v3407, %v3400
    %v4080 = vpack.c.b16 %v3408, %v3401
    %v4081 = vpack.c.b16 %v3409, %v3402
    %v4082 = vpack.c.b16 %v3410, %v3403
    %v4083 = vpack.c.b16 %v3411, %v3404
    %v4084 = vpack.c.b16 %v3412, %v3405
    %v4085 = vpack.c.b16 %v3413, %v3406
    %v4086 = vpack.c.b16 %v3421, %v3414
    %v4087 = vpack.c.b16 %v3422, %v3415
    %v4088 = vpack.c.b16 %v3423, %v3416
    %v4089 = vpack.c.b16 %v3424, %v3417
    %v4090 = vpack.c.b16 %v3425, %v3418
    %v4091 = vpack.c.b16 %v3426, %v3419
    %v4092 = vpack.c.b16 %v3427, %v3420
    %v4093 = vpack.c.b16 %v3435, %v3428
    %v4094 = vpack.c.b16 %v3436, %v3429
    %v4095 = vpack.c.b16 %v3437, %v3430
    %v4096 = vpack.c.b16 %v3438, %v3431
    %v4097 = vpack.c.b16 %v3439, %v3432
    %v4098 = vpack.c.b16 %v3440, %v3433
    %v4099 = vpack.c.b16 %v3441, %v3434
    %v4100 = vpack.c.b16 %v3449, %v3442
    %v4101 = vpack.c.b16 %v3450, %v3443
    %v4102 = vpack.c.b16 %v3451, %v3444
    %v4103 = vpack.c.b16 %v3452, %v3445
    %v4104 = vpack.c.b16 %v3453, %v3446
    %v4105 = vpack.c.b16 %v3454, %v3447
    %v4106 = vpack.c.b16 %v3455, %v3448
    %v4107 = vpack.c.b16 %v3463, %v3456
    %v4108 = vpack.c.b16 %v3464, %v3457
    %v4109 = vpack.c.b16 %v3465, %v3458
    %v4110 = vpack.c.b16 %v3466, %v3459
    %v4111 = vpack.c.b16 %v3467, %v3460
    %v4112 = vpack.c.b16 %v3468, %v3461
    %v4113 = vpack.c.b16 %v3469, %v3462
    %v4114 = vpack.c.b16 %v3477, %v3470
    %v4115 = vpack.c.b16 %v3478, %v3471
    %v4116 = vpack.c.b16 %v3479, %v3472
    %v4117 = vpack.c.b16 %v3480, %v3473
    %v4118 = vpack.c.b16 %v3481, %v3474
    %v4119 = vpack.c.b16 %v3482, %v3475
    %v4120 = vpack.c.b16 %v3483, %v3476
    %v4121 = vpack.c.b16 %v3491, %v3484
    %v4122 = vpack.c.b16 %v3492, %v3485
    %v4123 = vpack.c.b16 %v3493, %v3486
    %v4124 = vpack.c.b16 %v3494, %v3487
    %v4125 = vpack.c.b16 %v3495, %v3488
    %v4126 = vpack.c.b16 %v3496, %v3489
    %v4127 = vpack.c.b16 %v3497, %v3490
    %v4128 = vpack.c.b16 %v3505, %v3498
    %v4129 = vpack.c.b16 %v3506, %v3499
    %v4130 = vpack.c.b16 %v3507, %v3500
    %v4131 = vpack.c.b16 %v3508, %v3501
    %v4132 = vpack.c.b16 %v3509, %v3502
    %v4133 = vpack.c.b16 %v3510, %v3503
    %v4134 = vpack.c.b16 %v3511, %v3504
    %v4135 = vpack.c.b16 %v3519, %v3512
    %v4136 = vpack.c.b16 %v3520, %v3513
    %v4137 = vpack.c.b16 %v3521, %v3514
    %v4138 = vpack.c.b16 %v3522, %v3515
    %v4139 = vpack.c.b16 %v3523, %v3516
    %v4140 = vpack.c.b16 %v3524, %v3517
    %v4141 = vpack.c.b16 %v3525, %v3518
    %v4142 = vpack.c.b16 %v3533, %v3526
    %v4143 = vpack.c.b16 %v3534, %v3527
    %v4144 = vpack.c.b16 %v3535, %v3528
    %v4145 = vpack.c.b16 %v3536, %v3529
    %v4146 = vpack.c.b16 %v3537, %v3530
    %v4147 = vpack.c.b16 %v3538, %v3531
    %v4148 = vpack.c.b16 %v3539, %v3532
    %v4149 = vpack.c.b16 %v3547, %v3540
    %v4150 = vpack.c.b16 %v3548, %v3541
    %v4151 = vpack.c.b16 %v3549, %v3542
    %v4152 = vpack.c.b16 %v3550, %v3543
    %v4153 = vpack.c.b16 %v3551, %v3544
    %v4154 = vpack.c.b16 %v3552, %v3545
    %v4155 = vpack.c.b16 %v3553, %v3546
    %v4156 = vpack.c.b16 %v3561, %v3554
    %v4157 = vpack.c.b16 %v3562, %v3555
    %v4158 = vpack.c.b16 %v3563, %v3556
    %v4159 = vpack.c.b16 %v3564, %v3557
    %v4160 = vpack.c.b16 %v3565, %v3558
    %v4161 = vpack.c.b16 %v3566, %v3559
    %v4162 = vpack.c.b16 %v3567, %v3560
    %v4163 = vpack.c.b16 %v3575, %v3568
    %v4164 = vpack.c.b16 %v3576, %v3569
    %v4165 = vpack.c.b16 %v3577, %v3570
    %v4166 = vpack.c.b16 %v3578, %v3571
    %v4167 = vpack.c.b16 %v3579, %v3572
    %v4168 = vpack.c.b16 %v3580, %v3573
    %v4169 = vpack.c.b16 %v3581, %v3574
    %v4170 = vpack.c.b16 %v3589, %v3582
    %v4171 = vpack.c.b16 %v3590, %v3583
    %v4172 = vpack.c.b16 %v3591, %v3584
    %v4173 = vpack.c.b16 %v3592, %v3585
    %v4174 = vpack.c.b16 %v3593, %v3586
    %v4175 = vpack.c.b16 %v3594, %v3587
    %v4176 = vpack.c.b16 %v3595, %v3588
    %v4177 = vpack.c.b16 %v3603, %v3596
    %v4178 = vpack.c.b16 %v3604, %v3597
    %v4179 = vpack.c.b16 %v3605, %v3598
    %v4180 = vpack.c.b16 %v3606, %v3599
    %v4181 = vpack.c.b16 %v3607, %v3600
    %v4182 = vpack.c.b16 %v3608, %v3601
    %v4183 = vpack.c.b16 %v3609, %v3602
    %v4184 = vpack.c.b16 %v3617, %v3610
    %v4185 = vpack.c.b16 %v3618, %v3611
    %v4186 = vpack.c.b16 %v3619, %v3612
    %v4187 = vpack.c.b16 %v3620, %v3613
    %v4188 = vpack.c.b16 %v3621, %v3614
    %v4189 = vpack.c.b16 %v3622, %v3615
    %v4190 = vpack.c.b16 %v3623, %v3616
    %v4191 = vpack.c.b16 %v3631, %v3624
    %v4192 = vpack.c.b16 %v3632, %v3625
    %v4193 = vpack.c.b16 %v3633, %v3626
    %v4194 = vpack.c.b16 %v3634, %v3627
    %v4195 = vpack.c.b16 %v3635, %v3628
    %v4196 = vpack.c.b16 %v3636, %v3629
    %v4197 = vpack.c.b16 %v3637, %v3630
    %v4198 = vpack.c.b16 %v3645, %v3638
    %v4199 = vpack.c.b16 %v3646, %v3639
    %v4200 = vpack.c.b16 %v3647, %v3640
    %v4201 = vpack.c.b16 %v3648, %v3641
    %v4202 = vpack.c.b16 %v3649, %v3642
    %v4203 = vpack.c.b16 %v3650, %v3643
    %v4204 = vpack.c.b16 %v3651, %v3644
    %v4205 = vpack.c.b16 %v3659, %v3652
    %v4206 = vpack.c.b16 %v3660, %v3653
    %v4207 = vpack.c.b16 %v3661, %v3654
    %v4208 = vpack.c.b16 %v3662, %v3655
    %v4209 = vpack.c.b16 %v3663, %v3656
    %v4210 = vpack.c.b16 %v3664, %v3657
    %v4211 = vpack.c.b16 %v3665, %v3658
    %v4212 = vpack.c.b16 %v3673, %v3666
    %v4213 = vpack.c.b16 %v3674, %v3667
    %v4214 = vpack.c.b16 %v3675, %v3668
    %v4215 = vpack.c.b16 %v3676, %v3669
    %v4216 = vpack.c.b16 %v3677, %v3670
    %v4217 = vpack.c.b16 %v3678, %v3671
    %v4218 = vpack.c.b16 %v3679, %v3672
    %v4219 = vpack.c.b16 %v3687, %v3680
    %v4220 = vpack.c.b16 %v3688, %v3681
    %v4221 = vpack.c.b16 %v3689, %v3682
    %v4222 = vpack.c.b16 %v3690, %v3683
    %v4223 = vpack.c.b16 %v3691, %v3684
    %v4224 = vpack.c.b16 %v3692, %v3685
    %v4225 = vpack.c.b16 %v3693, %v3686
    %v4226 = vpack.c.b16 %v3701, %v3694
    %v4227 = vpack.c.b16 %v3702, %v3695
    %v4228 = vpack.c.b16 %v3703, %v3696
    %v4229 = vpack.c.b16 %v3704, %v3697
    %v4230 = vpack.c.b16 %v3705, %v3698
    %v4231 = vpack.c.b16 %v3706, %v3699
    %v4232 = vpack.c.b16 %v3707, %v3700
    %v4233 = vpack.c.b16 %v3715, %v3708
    %v4234 = vpack.c.b16 %v3716, %v3709
    %v4235 = vpack.c.b16 %v3717, %v3710
    %v4236 = vpack.c.b16 %v3718, %v3711
    %v4237 = vpack.c.b16 %v3719, %v3712
    %v4238 = vpack.c.b16 %v3720, %v3713
    %v4239 = vpack.c.b16 %v3721, %v3714
    %v4240 = vpack.c.b16 %v3729, %v3722
    %v4241 = vpack.c.b16 %v3730, %v3723
    %v4242 = vpack.c.b16 %v3731, %v3724
    %v4243 = vpack.c.b16 %v3732, %v3725
    %v4244 = vpack.c.b16 %v3733, %v3726
    %v4245 = vpack.c.b16 %v3734, %v3727
    %v4246 = vpack.c.b16 %v3735, %v3728
    %v4247 = vpack.c.b16 %v3743, %v3736
    %v4248 = vpack.c.b16 %v3744, %v3737
    %v4249 = vpack.c.b16 %v3745, %v3738
    %v4250 = vpack.c.b16 %v3746, %v3739
    %v4251 = vpack.c.b16 %v3747, %v3740
    %v4252 = vpack.c.b16 %v3748, %v3741
    %v4253 = vpack.c.b16 %v3749, %v3742
    %v4254 = vpack.c.b16 %v3757, %v3750
    %v4255 = vpack.c.b16 %v3758, %v3751
    %v4256 = vpack.c.b16 %v3759, %v3752
    %v4257 = vpack.c.b16 %v3760, %v3753
    %v4258 = vpack.c.b16 %v3761, %v3754
    %v4259 = vpack.c.b16 %v3762, %v3755
    %v4260 = vpack.c.b16 %v3763, %v3756
    %v4261 = vpack.c.b16 %v3771, %v3764
    %v4262 = vpack.c.b16 %v3772, %v3765
    %v4263 = vpack.c.b16 %v3773, %v3766
    %v4264 = vpack.c.b16 %v3774, %v3767
    %v4265 = vpack.c.b16 %v3775, %v3768
    %v4266 = vpack.c.b16 %v3776, %v3769
    %v4267 = vpack.c.b16 %v3777, %v3770
    %v4268 = vpack.c.b16 %v3785, %v3778
    %v4269 = vpack.c.b16 %v3786, %v3779
    %v4270 = vpack.c.b16 %v3787, %v3780
    %v4271 = vpack.c.b16 %v3788, %v3781
    %v4272 = vpack.c.b16 %v3789, %v3782
    %v4273 = vpack.c.b16 %v3790, %v3783
    %v4274 = vpack.c.b16 %v3791, %v3784
    %v4275 = vpack.c.b16 %v3799, %v3792
    %v4276 = vpack.c.b16 %v3800, %v3793
    %v4277 = vpack.c.b16 %v3801, %v3794
    %v4278 = vpack.c.b16 %v3802, %v3795
    %v4279 = vpack.c.b16 %v3803, %v3796
    %v4280 = vpack.c.b16 %v3804, %v3797
    %v4281 = vpack.c.b16 %v3805, %v3798
    %v4282 = vpack.c.b16 %v3813, %v3806
    %v4283 = vpack.c.b16 %v3814, %v3807
    %v4284 = vpack.c.b16 %v3815, %v3808
    %v4285 = vpack.c.b16 %v3816, %v3809
    %v4286 = vpack.c.b16 %v3817, %v3810
    %v4287 = vpack.c.b16 %v3818, %v3811
    %v4288 = vpack.c.b16 %v3819, %v3812
    %v4289 = vpack.c.b16 %v3827, %v3820
    %v4290 = vpack.c.b16 %v3828, %v3821
    %v4291 = vpack.c.b16 %v3829, %v3822
    %v4292 = vpack.c.b16 %v3830, %v3823
    %v4293 = vpack.c.b16 %v3831, %v3824
    %v4294 = vpack.c.b16 %v3832, %v3825
    %v4295 = vpack.c.b16 %v3833, %v3826
    %v4296 = vpack.c.b16 %v3841, %v3834
    %v4297 = vpack.c.b16 %v3842, %v3835
    %v4298 = vpack.c.b16 %v3843, %v3836
    %v4299 = vpack.c.b16 %v3844, %v3837
    %v4300 = vpack.c.b16 %v3845, %v3838
    %v4301 = vpack.c.b16 %v3846, %v3839
    %v4302 = vpack.c.b16 %v3847, %v3840
    %v4303 = vpack.c.b16 %v3855, %v3848
    %v4304 = vpack.c.b16 %v3856, %v3849
    %v4305 = vpack.c.b16 %v3857, %v3850
    %v4306 = vpack.c.b16 %v3858, %v3851
    %v4307 = vpack.c.b16 %v3859, %v3852
    %v4308 = vpack.c.b16 %v3860, %v3853
    %v4309 = vpack.c.b16 %v3861, %v3854
    %v4310 = vpack.c.b16 %v3869, %v3862
    %v4311 = vpack.c.b16 %v3870, %v3863
    %v4312 = vpack.c.b16 %v3871, %v3864
    %v4313 = vpack.c.b16 %v3872, %v3865
    %v4314 = vpack.c.b16 %v3873, %v3866
    %v4315 = vpack.c.b16 %v3874, %v3867
    %v4316 = vpack.c.b16 %v3875, %v3868
    %v4317 = vpack.c.b16 %v3883, %v3876
    %v4318 = vpack.c.b16 %v3884, %v3877
    %v4319 = vpack.c.b16 %v3885, %v3878
    %v4320 = vpack.c.b16 %v3886, %v3879
    %v4321 = vpack.c.b16 %v3887, %v3880
    %v4322 = vpack.c.b16 %v3888, %v3881
    %v4323 = vpack.c.b16 %v3889, %v3882
    %v4324 = vpack.c.b16 %v3897, %v3890
    %v4325 = vpack.c.b16 %v3898, %v3891
    %v4326 = vpack.c.b16 %v3899, %v3892
    %v4327 = vpack.c.b16 %v3900, %v3893
    %v4328 = vpack.c.b16 %v3901, %v3894
    %v4329 = vpack.c.b16 %v3902, %v3895
    %v4330 = vpack.c.b16 %v3903, %v3896
    %v4331 = vpack.c.b16 %v3911, %v3904
    %v4332 = vpack.c.b16 %v3912, %v3905
    %v4333 = vpack.c.b16 %v3913, %v3906
    %v4334 = vpack.c.b16 %v3914, %v3907
    %v4335 = vpack.c.b16 %v3915, %v3908
    %v4336 = vpack.c.b16 %v3916, %v3909
    %v4337 = vpack.c.b16 %v3917, %v3910
    %v4338 = vpack.c.b16 %v3925, %v3918
    %v4339 = vpack.c.b16 %v3926, %v3919
    %v4340 = vpack.c.b16 %v3927, %v3920
    %v4341 = vpack.c.b16 %v3928, %v3921
    %v4342 = vpack.c.b16 %v3929, %v3922
    %v4343 = vpack.c.b16 %v3930, %v3923
    %v4344 = vpack.c.b16 %v3931, %v3924
    %v4345 = vpack.c.b16 %v3939, %v3932
    %v4346 = vpack.c.b16 %v3940, %v3933
    %v4347 = vpack.c.b16 %v3941, %v3934
    %v4348 = vpack.c.b16 %v3942, %v3935
    %v4349 = vpack.c.b16 %v3943, %v3936
    %v4350 = vpack.c.b16 %v3944, %v3937
    %v4351 = vpack.c.b16 %v3945, %v3938
    %v4352 = vpack.c.b16 %v3953, %v3946
    %v4353 = vpack.c.b16 %v3954, %v3947
    %v4354 = vpack.c.b16 %v3955, %v3948
    %v4355 = vpack.c.b16 %v3956, %v3949
    %v4356 = vpack.c.b16 %v3957, %v3950
    %v4357 = vpack.c.b16 %v3958, %v3951
    %v4358 = vpack.c.b16 %v3959, %v3952
    %v4359 = vpack.c.b16 %v3967, %v3960
    %v4360 = vpack.c.b16 %v3968, %v3961
    %v4361 = vpack.c.b16 %v3969, %v3962
    %v4362 = vpack.c.b16 %v3970, %v3963
    %v4363 = vpack.c.b16 %v3971, %v3964
    %v4364 = vpack.c.b16 %v3972, %v3965
    %v4365 = vpack.c.b16 %v3973, %v3966
    %4758 = vmatpush.bf16.msra.mxu0 %v4023
    %4759 = vmatpush.bf16.msra.mxu0 %v4016
    %4760 = vmatpush.bf16.msra.mxu0 %v4009
    %4761 = vmatpush.bf16.msra.mxu0 %v4002
    %4762 = vmatpush.bf16.msra.mxu0 %v3995
    %4763 = vmatpush.bf16.msra.mxu0 %v3988
    %4764 = vmatpush.bf16.msra.mxu0 %v3981
    %4765 = vmatpush.bf16.msra.mxu0 %v3974
    %4766 = vmatmul.bf16.gmra.mxu0 %v2287
    %v4767 = vpop.f32.mrf.mxu0
    %v4768 = vadd.f32 0.0, %v4767
    %v4769 = vpop.f32.mrf.mxu0
    %4770 = vdwg.mxu0
    %4771 = vmatpush.bf16.msra.mxu0 %v4079
    %4772 = vmatpush.bf16.msra.mxu0 %v4072
    %4773 = vmatpush.bf16.msra.mxu0 %v4065
    %4774 = vmatpush.bf16.msra.mxu0 %v4058
    %4775 = vmatpush.bf16.msra.mxu0 %v4051
    %4776 = vmatpush.bf16.msra.mxu0 %v4044
    %4777 = vmatpush.bf16.msra.mxu0 %v4037
    %4778 = vmatpush.bf16.msra.mxu0 %v4030
    %4779 = vmatmul.bf16.gmra.mxu0 %v2288
    %v4780 = vpop.f32.mrf.mxu0
    %v4781 = vadd.f32 %v4768, %v4780
    %v4782 = vpop.f32.mrf.mxu0
    %4783 = vdwg.mxu0
    %4784 = vmatpush.bf16.msra.mxu0 %v4135
    %4785 = vmatpush.bf16.msra.mxu0 %v4128
    %4786 = vmatpush.bf16.msra.mxu0 %v4121
    %4787 = vmatpush.bf16.msra.mxu0 %v4114
    %4788 = vmatpush.bf16.msra.mxu0 %v4107
    %4789 = vmatpush.bf16.msra.mxu0 %v4100
    %4790 = vmatpush.bf16.msra.mxu0 %v4093
    %4791 = vmatpush.bf16.msra.mxu0 %v4086
    %4792 = vmatmul.bf16.gmra.mxu0 %v2289
    %v4793 = vpop.f32.mrf.mxu0
    %v4794 = vadd.f32 %v4781, %v4793
    %v4795 = vpop.f32.mrf.mxu0
    %4796 = vdwg.mxu0
    %4797 = vmatpush.bf16.msra.mxu0 %v4191
    %4798 = vmatpush.bf16.msra.mxu0 %v4184
    %4799 = vmatpush.bf16.msra.mxu0 %v4177
    %4800 = vmatpush.bf16.msra.mxu0 %v4170
    %4801 = vmatpush.bf16.msra.mxu0 %v4163
    %4802 = vmatpush.bf16.msra.mxu0 %v4156
    %4803 = vmatpush.bf16.msra.mxu0 %v4149
    %4804 = vmatpush.bf16.msra.mxu0 %v4142
    %4805 = vmatmul.bf16.gmra.mxu0 %v2290
    %v4806 = vpop.f32.mrf.mxu0
    %v4807 = vadd.f32 %v4794, %v4806
    %v4808 = vpop.f32.mrf.mxu0
    %4809 = vdwg.mxu0
    %4810 = vmatpush.bf16.msra.mxu0 %v4247
    %4811 = vmatpush.bf16.msra.mxu0 %v4240
    %4812 = vmatpush.bf16.msra.mxu0 %v4233
    %4813 = vmatpush.bf16.msra.mxu0 %v4226
    %4814 = vmatpush.bf16.msra.mxu0 %v4219
    %4815 = vmatpush.bf16.msra.mxu0 %v4212
    %4816 = vmatpush.bf16.msra.mxu0 %v4205
    %4817 = vmatpush.bf16.msra.mxu0 %v4198
    %4818 = vmatmul.bf16.gmra.mxu0 %v2291
    %v4819 = vpop.f32.mrf.mxu0
    %v4820 = vadd.f32 %v4807, %v4819
    %v4821 = vpop.f32.mrf.mxu0
    %4822 = vdwg.mxu0
    %4823 = vmatpush.bf16.msra.mxu0 %v4303
    %4824 = vmatpush.bf16.msra.mxu0 %v4296
    %4825 = vmatpush.bf16.msra.mxu0 %v4289
    %4826 = vmatpush.bf16.msra.mxu0 %v4282
    %4827 = vmatpush.bf16.msra.mxu0 %v4275
    %4828 = vmatpush.bf16.msra.mxu0 %v4268
    %4829 = vmatpush.bf16.msra.mxu0 %v4261
    %4830 = vmatpush.bf16.msra.mxu0 %v4254
    %4831 = vmatmul.bf16.gmra.mxu0 %v2292
    %v4832 = vpop.f32.mrf.mxu0
    %v4833 = vadd.f32 %v4820, %v4832
    %v4834 = vpop.f32.mrf.mxu0
    %4835 = vdwg.mxu0
    %4836 = vmatpush.bf16.msra.mxu0 %v4359
    %4837 = vmatpush.bf16.msra.mxu0 %v4352
    %4838 = vmatpush.bf16.msra.mxu0 %v4345
    %4839 = vmatpush.bf16.msra.mxu0 %v4338
    %4840 = vmatpush.bf16.msra.mxu0 %v4331
    %4841 = vmatpush.bf16.msra.mxu0 %v4324
    %4842 = vmatpush.bf16.msra.mxu0 %v4317
    %4843 = vmatpush.bf16.msra.mxu0 %v4310
    %4844 = vmatmul.bf16.gmra.mxu0 %v2293
    %v4845 = vpop.f32.mrf.mxu0
    %v4846 = vadd.f32 %v4833, %v4845
    %v4847 = vpop.f32.mrf.mxu0
    %4848 = vdwg.mxu0
    %4849 = vmatpush.bf16.msra.mxu0 %v4024
    %4850 = vmatpush.bf16.msra.mxu0 %v4017
    %4851 = vmatpush.bf16.msra.mxu0 %v4010
    %4852 = vmatpush.bf16.msra.mxu0 %v4003
    %4853 = vmatpush.bf16.msra.mxu0 %v3996
    %4854 = vmatpush.bf16.msra.mxu0 %v3989
    %4855 = vmatpush.bf16.msra.mxu0 %v3982
    %4856 = vmatpush.bf16.msra.mxu0 %v3975
    %4857 = vmatmul.bf16.gmra.mxu0 %v2287
    %v4858 = vpop.f32.mrf.mxu0
    %v4859 = vadd.f32 0.0, %v4858
    %v4860 = vpop.f32.mrf.mxu0
    %4861 = vdwg.mxu0
    %4862 = vmatpush.bf16.msra.mxu0 %v4080
    %4863 = vmatpush.bf16.msra.mxu0 %v4073
    %4864 = vmatpush.bf16.msra.mxu0 %v4066
    %4865 = vmatpush.bf16.msra.mxu0 %v4059
    %4866 = vmatpush.bf16.msra.mxu0 %v4052
    %4867 = vmatpush.bf16.msra.mxu0 %v4045
    %4868 = vmatpush.bf16.msra.mxu0 %v4038
    %4869 = vmatpush.bf16.msra.mxu0 %v4031
    %4870 = vmatmul.bf16.gmra.mxu0 %v2288
    %v4871 = vpop.f32.mrf.mxu0
    %v4872 = vadd.f32 %v4859, %v4871
    %v4873 = vpop.f32.mrf.mxu0
    %4874 = vdwg.mxu0
    %4875 = vmatpush.bf16.msra.mxu0 %v4136
    %4876 = vmatpush.bf16.msra.mxu0 %v4129
    %4877 = vmatpush.bf16.msra.mxu0 %v4122
    %4878 = vmatpush.bf16.msra.mxu0 %v4115
    %4879 = vmatpush.bf16.msra.mxu0 %v4108
    %4880 = vmatpush.bf16.msra.mxu0 %v4101
    %4881 = vmatpush.bf16.msra.mxu0 %v4094
    %4882 = vmatpush.bf16.msra.mxu0 %v4087
    %4883 = vmatmul.bf16.gmra.mxu0 %v2289
    %v4884 = vpop.f32.mrf.mxu0
    %v4885 = vadd.f32 %v4872, %v4884
    %v4886 = vpop.f32.mrf.mxu0
    %4887 = vdwg.mxu0
    %4888 = vmatpush.bf16.msra.mxu0 %v4192
    %4889 = vmatpush.bf16.msra.mxu0 %v4185
    %4890 = vmatpush.bf16.msra.mxu0 %v4178
    %4891 = vmatpush.bf16.msra.mxu0 %v4171
    %4892 = vmatpush.bf16.msra.mxu0 %v4164
    %4893 = vmatpush.bf16.msra.mxu0 %v4157
    %4894 = vmatpush.bf16.msra.mxu0 %v4150
    %4895 = vmatpush.bf16.msra.mxu0 %v4143
    %4896 = vmatmul.bf16.gmra.mxu0 %v2290
    %v4897 = vpop.f32.mrf.mxu0
    %v4898 = vadd.f32 %v4885, %v4897
    %v4899 = vpop.f32.mrf.mxu0
    %4900 = vdwg.mxu0
    %4901 = vmatpush.bf16.msra.mxu0 %v4248
    %4902 = vmatpush.bf16.msra.mxu0 %v4241
    %4903 = vmatpush.bf16.msra.mxu0 %v4234
    %4904 = vmatpush.bf16.msra.mxu0 %v4227
    %4905 = vmatpush.bf16.msra.mxu0 %v4220
    %4906 = vmatpush.bf16.msra.mxu0 %v4213
    %4907 = vmatpush.bf16.msra.mxu0 %v4206
    %4908 = vmatpush.bf16.msra.mxu0 %v4199
    %4909 = vmatmul.bf16.gmra.mxu0 %v2291
    %v4910 = vpop.f32.mrf.mxu0
    %v4911 = vadd.f32 %v4898, %v4910
    %v4912 = vpop.f32.mrf.mxu0
    %4913 = vdwg.mxu0
    %4914 = vmatpush.bf16.msra.mxu0 %v4304
    %4915 = vmatpush.bf16.msra.mxu0 %v4297
    %4916 = vmatpush.bf16.msra.mxu0 %v4290
    %4917 = vmatpush.bf16.msra.mxu0 %v4283
    %4918 = vmatpush.bf16.msra.mxu0 %v4276
    %4919 = vmatpush.bf16.msra.mxu0 %v4269
    %4920 = vmatpush.bf16.msra.mxu0 %v4262
    %4921 = vmatpush.bf16.msra.mxu0 %v4255
    %4922 = vmatmul.bf16.gmra.mxu0 %v2292
    %v4923 = vpop.f32.mrf.mxu0
    %v4924 = vadd.f32 %v4911, %v4923
    %v4925 = vpop.f32.mrf.mxu0
    %4926 = vdwg.mxu0
    %4927 = vmatpush.bf16.msra.mxu0 %v4360
    %4928 = vmatpush.bf16.msra.mxu0 %v4353
    %4929 = vmatpush.bf16.msra.mxu0 %v4346
    %4930 = vmatpush.bf16.msra.mxu0 %v4339
    %4931 = vmatpush.bf16.msra.mxu0 %v4332
    %4932 = vmatpush.bf16.msra.mxu0 %v4325
    %4933 = vmatpush.bf16.msra.mxu0 %v4318
    %4934 = vmatpush.bf16.msra.mxu0 %v4311
    %4935 = vmatmul.bf16.gmra.mxu0 %v2293
    %v4936 = vpop.f32.mrf.mxu0
    %v4937 = vadd.f32 %v4924, %v4936
    %v4938 = vpop.f32.mrf.mxu0
    %4939 = vdwg.mxu0
    %4940 = vmatpush.bf16.msra.mxu0 %v4025
    %4941 = vmatpush.bf16.msra.mxu0 %v4018
    %4942 = vmatpush.bf16.msra.mxu0 %v4011
    %4943 = vmatpush.bf16.msra.mxu0 %v4004
    %4944 = vmatpush.bf16.msra.mxu0 %v3997
    %4945 = vmatpush.bf16.msra.mxu0 %v3990
    %4946 = vmatpush.bf16.msra.mxu0 %v3983
    %4947 = vmatpush.bf16.msra.mxu0 %v3976
    %4948 = vmatmul.bf16.gmra.mxu0 %v2287
    %v4949 = vpop.f32.mrf.mxu0
    %v4950 = vadd.f32 0.0, %v4949
    %v4951 = vpop.f32.mrf.mxu0
    %4952 = vdwg.mxu0
    %4953 = vmatpush.bf16.msra.mxu0 %v4081
    %4954 = vmatpush.bf16.msra.mxu0 %v4074
    %4955 = vmatpush.bf16.msra.mxu0 %v4067
    %4956 = vmatpush.bf16.msra.mxu0 %v4060
    %4957 = vmatpush.bf16.msra.mxu0 %v4053
    %4958 = vmatpush.bf16.msra.mxu0 %v4046
    %4959 = vmatpush.bf16.msra.mxu0 %v4039
    %4960 = vmatpush.bf16.msra.mxu0 %v4032
    %4961 = vmatmul.bf16.gmra.mxu0 %v2288
    %v4962 = vpop.f32.mrf.mxu0
    %v4963 = vadd.f32 %v4950, %v4962
    %v4964 = vpop.f32.mrf.mxu0
    %4965 = vdwg.mxu0
    %4966 = vmatpush.bf16.msra.mxu0 %v4137
    %4967 = vmatpush.bf16.msra.mxu0 %v4130
    %4968 = vmatpush.bf16.msra.mxu0 %v4123
    %4969 = vmatpush.bf16.msra.mxu0 %v4116
    %4970 = vmatpush.bf16.msra.mxu0 %v4109
    %4971 = vmatpush.bf16.msra.mxu0 %v4102
    %4972 = vmatpush.bf16.msra.mxu0 %v4095
    %4973 = vmatpush.bf16.msra.mxu0 %v4088
    %4974 = vmatmul.bf16.gmra.mxu0 %v2289
    %v4975 = vpop.f32.mrf.mxu0
    %v4976 = vadd.f32 %v4963, %v4975
    %v4977 = vpop.f32.mrf.mxu0
    %4978 = vdwg.mxu0
    %4979 = vmatpush.bf16.msra.mxu0 %v4193
    %4980 = vmatpush.bf16.msra.mxu0 %v4186
    %4981 = vmatpush.bf16.msra.mxu0 %v4179
    %4982 = vmatpush.bf16.msra.mxu0 %v4172
    %4983 = vmatpush.bf16.msra.mxu0 %v4165
    %4984 = vmatpush.bf16.msra.mxu0 %v4158
    %4985 = vmatpush.bf16.msra.mxu0 %v4151
    %4986 = vmatpush.bf16.msra.mxu0 %v4144
    %4987 = vmatmul.bf16.gmra.mxu0 %v2290
    %v4988 = vpop.f32.mrf.mxu0
    %v4989 = vadd.f32 %v4976, %v4988
    %v4990 = vpop.f32.mrf.mxu0
    %4991 = vdwg.mxu0
    %4992 = vmatpush.bf16.msra.mxu0 %v4249
    %4993 = vmatpush.bf16.msra.mxu0 %v4242
    %4994 = vmatpush.bf16.msra.mxu0 %v4235
    %4995 = vmatpush.bf16.msra.mxu0 %v4228
    %4996 = vmatpush.bf16.msra.mxu0 %v4221
    %4997 = vmatpush.bf16.msra.mxu0 %v4214
    %4998 = vmatpush.bf16.msra.mxu0 %v4207
    %4999 = vmatpush.bf16.msra.mxu0 %v4200
    %5000 = vmatmul.bf16.gmra.mxu0 %v2291
    %v5001 = vpop.f32.mrf.mxu0
    %v5002 = vadd.f32 %v4989, %v5001
    %v5003 = vpop.f32.mrf.mxu0
    %5004 = vdwg.mxu0
    %5005 = vmatpush.bf16.msra.mxu0 %v4305
    %5006 = vmatpush.bf16.msra.mxu0 %v4298
    %5007 = vmatpush.bf16.msra.mxu0 %v4291
    %5008 = vmatpush.bf16.msra.mxu0 %v4284
    %5009 = vmatpush.bf16.msra.mxu0 %v4277
    %5010 = vmatpush.bf16.msra.mxu0 %v4270
    %5011 = vmatpush.bf16.msra.mxu0 %v4263
    %5012 = vmatpush.bf16.msra.mxu0 %v4256
    %5013 = vmatmul.bf16.gmra.mxu0 %v2292
    %v5014 = vpop.f32.mrf.mxu0
    %v5015 = vadd.f32 %v5002, %v5014
    %v5016 = vpop.f32.mrf.mxu0
    %5017 = vdwg.mxu0
    %5018 = vmatpush.bf16.msra.mxu0 %v4361
    %5019 = vmatpush.bf16.msra.mxu0 %v4354
    %5020 = vmatpush.bf16.msra.mxu0 %v4347
    %5021 = vmatpush.bf16.msra.mxu0 %v4340
    %5022 = vmatpush.bf16.msra.mxu0 %v4333
    %5023 = vmatpush.bf16.msra.mxu0 %v4326
    %5024 = vmatpush.bf16.msra.mxu0 %v4319
    %5025 = vmatpush.bf16.msra.mxu0 %v4312
    %5026 = vmatmul.bf16.gmra.mxu0 %v2293
    %v5027 = vpop.f32.mrf.mxu0
    %v5028 = vadd.f32 %v5015, %v5027
    %v5029 = vpop.f32.mrf.mxu0
    %5030 = vdwg.mxu0
    %5031 = vmatpush.bf16.msra.mxu0 %v4026
    %5032 = vmatpush.bf16.msra.mxu0 %v4019
    %5033 = vmatpush.bf16.msra.mxu0 %v4012
    %5034 = vmatpush.bf16.msra.mxu0 %v4005
    %5035 = vmatpush.bf16.msra.mxu0 %v3998
    %5036 = vmatpush.bf16.msra.mxu0 %v3991
    %5037 = vmatpush.bf16.msra.mxu0 %v3984
    %5038 = vmatpush.bf16.msra.mxu0 %v3977
    %5039 = vmatmul.bf16.gmra.mxu0 %v2287
    %v5040 = vpop.f32.mrf.mxu0
    %v5041 = vadd.f32 0.0, %v5040
    %v5042 = vpop.f32.mrf.mxu0
    %5043 = vdwg.mxu0
    %5044 = vmatpush.bf16.msra.mxu0 %v4082
    %5045 = vmatpush.bf16.msra.mxu0 %v4075
    %5046 = vmatpush.bf16.msra.mxu0 %v4068
    %5047 = vmatpush.bf16.msra.mxu0 %v4061
    %5048 = vmatpush.bf16.msra.mxu0 %v4054
    %5049 = vmatpush.bf16.msra.mxu0 %v4047
    %5050 = vmatpush.bf16.msra.mxu0 %v4040
    %5051 = vmatpush.bf16.msra.mxu0 %v4033
    %5052 = vmatmul.bf16.gmra.mxu0 %v2288
    %v5053 = vpop.f32.mrf.mxu0
    %v5054 = vadd.f32 %v5041, %v5053
    %v5055 = vpop.f32.mrf.mxu0
    %5056 = vdwg.mxu0
    %5057 = vmatpush.bf16.msra.mxu0 %v4138
    %5058 = vmatpush.bf16.msra.mxu0 %v4131
    %5059 = vmatpush.bf16.msra.mxu0 %v4124
    %5060 = vmatpush.bf16.msra.mxu0 %v4117
    %5061 = vmatpush.bf16.msra.mxu0 %v4110
    %5062 = vmatpush.bf16.msra.mxu0 %v4103
    %5063 = vmatpush.bf16.msra.mxu0 %v4096
    %5064 = vmatpush.bf16.msra.mxu0 %v4089
    %5065 = vmatmul.bf16.gmra.mxu0 %v2289
    %v5066 = vpop.f32.mrf.mxu0
    %v5067 = vadd.f32 %v5054, %v5066
    %v5068 = vpop.f32.mrf.mxu0
    %5069 = vdwg.mxu0
    %5070 = vmatpush.bf16.msra.mxu0 %v4194
    %5071 = vmatpush.bf16.msra.mxu0 %v4187
    %5072 = vmatpush.bf16.msra.mxu0 %v4180
    %5073 = vmatpush.bf16.msra.mxu0 %v4173
    %5074 = vmatpush.bf16.msra.mxu0 %v4166
    %5075 = vmatpush.bf16.msra.mxu0 %v4159
    %5076 = vmatpush.bf16.msra.mxu0 %v4152
    %5077 = vmatpush.bf16.msra.mxu0 %v4145
    %5078 = vmatmul.bf16.gmra.mxu0 %v2290
    %v5079 = vpop.f32.mrf.mxu0
    %v5080 = vadd.f32 %v5067, %v5079
    %v5081 = vpop.f32.mrf.mxu0
    %5082 = vdwg.mxu0
    %5083 = vmatpush.bf16.msra.mxu0 %v4250
    %5084 = vmatpush.bf16.msra.mxu0 %v4243
    %5085 = vmatpush.bf16.msra.mxu0 %v4236
    %5086 = vmatpush.bf16.msra.mxu0 %v4229
    %5087 = vmatpush.bf16.msra.mxu0 %v4222
    %5088 = vmatpush.bf16.msra.mxu0 %v4215
    %5089 = vmatpush.bf16.msra.mxu0 %v4208
    %5090 = vmatpush.bf16.msra.mxu0 %v4201
    %5091 = vmatmul.bf16.gmra.mxu0 %v2291
    %v5092 = vpop.f32.mrf.mxu0
    %v5093 = vadd.f32 %v5080, %v5092
    %v5094 = vpop.f32.mrf.mxu0
    %5095 = vdwg.mxu0
    %5096 = vmatpush.bf16.msra.mxu0 %v4306
    %5097 = vmatpush.bf16.msra.mxu0 %v4299
    %5098 = vmatpush.bf16.msra.mxu0 %v4292
    %5099 = vmatpush.bf16.msra.mxu0 %v4285
    %5100 = vmatpush.bf16.msra.mxu0 %v4278
    %5101 = vmatpush.bf16.msra.mxu0 %v4271
    %5102 = vmatpush.bf16.msra.mxu0 %v4264
    %5103 = vmatpush.bf16.msra.mxu0 %v4257
    %5104 = vmatmul.bf16.gmra.mxu0 %v2292
    %v5105 = vpop.f32.mrf.mxu0
    %v5106 = vadd.f32 %v5093, %v5105
    %v5107 = vpop.f32.mrf.mxu0
    %5108 = vdwg.mxu0
    %5109 = vmatpush.bf16.msra.mxu0 %v4362
    %5110 = vmatpush.bf16.msra.mxu0 %v4355
    %5111 = vmatpush.bf16.msra.mxu0 %v4348
    %5112 = vmatpush.bf16.msra.mxu0 %v4341
    %5113 = vmatpush.bf16.msra.mxu0 %v4334
    %5114 = vmatpush.bf16.msra.mxu0 %v4327
    %5115 = vmatpush.bf16.msra.mxu0 %v4320
    %5116 = vmatpush.bf16.msra.mxu0 %v4313
    %5117 = vmatmul.bf16.gmra.mxu0 %v2293
    %v5118 = vpop.f32.mrf.mxu0
    %v5119 = vadd.f32 %v5106, %v5118
    %v5120 = vpop.f32.mrf.mxu0
    %5121 = vdwg.mxu0
    %5122 = vmatpush.bf16.msra.mxu0 %v4027
    %5123 = vmatpush.bf16.msra.mxu0 %v4020
    %5124 = vmatpush.bf16.msra.mxu0 %v4013
    %5125 = vmatpush.bf16.msra.mxu0 %v4006
    %5126 = vmatpush.bf16.msra.mxu0 %v3999
    %5127 = vmatpush.bf16.msra.mxu0 %v3992
    %5128 = vmatpush.bf16.msra.mxu0 %v3985
    %5129 = vmatpush.bf16.msra.mxu0 %v3978
    %5130 = vmatmul.bf16.gmra.mxu0 %v2287
    %v5131 = vpop.f32.mrf.mxu0
    %v5132 = vadd.f32 0.0, %v5131
    %v5133 = vpop.f32.mrf.mxu0
    %5134 = vdwg.mxu0
    %5135 = vmatpush.bf16.msra.mxu0 %v4083
    %5136 = vmatpush.bf16.msra.mxu0 %v4076
    %5137 = vmatpush.bf16.msra.mxu0 %v4069
    %5138 = vmatpush.bf16.msra.mxu0 %v4062
    %5139 = vmatpush.bf16.msra.mxu0 %v4055
    %5140 = vmatpush.bf16.msra.mxu0 %v4048
    %5141 = vmatpush.bf16.msra.mxu0 %v4041
    %5142 = vmatpush.bf16.msra.mxu0 %v4034
    %5143 = vmatmul.bf16.gmra.mxu0 %v2288
    %v5144 = vpop.f32.mrf.mxu0
    %v5145 = vadd.f32 %v5132, %v5144
    %v5146 = vpop.f32.mrf.mxu0
    %5147 = vdwg.mxu0
    %5148 = vmatpush.bf16.msra.mxu0 %v4139
    %5149 = vmatpush.bf16.msra.mxu0 %v4132
    %5150 = vmatpush.bf16.msra.mxu0 %v4125
    %5151 = vmatpush.bf16.msra.mxu0 %v4118
    %5152 = vmatpush.bf16.msra.mxu0 %v4111
    %5153 = vmatpush.bf16.msra.mxu0 %v4104
    %5154 = vmatpush.bf16.msra.mxu0 %v4097
    %5155 = vmatpush.bf16.msra.mxu0 %v4090
    %5156 = vmatmul.bf16.gmra.mxu0 %v2289
    %v5157 = vpop.f32.mrf.mxu0
    %v5158 = vadd.f32 %v5145, %v5157
    %v5159 = vpop.f32.mrf.mxu0
    %5160 = vdwg.mxu0
    %5161 = vmatpush.bf16.msra.mxu0 %v4195
    %5162 = vmatpush.bf16.msra.mxu0 %v4188
    %5163 = vmatpush.bf16.msra.mxu0 %v4181
    %5164 = vmatpush.bf16.msra.mxu0 %v4174
    %5165 = vmatpush.bf16.msra.mxu0 %v4167
    %5166 = vmatpush.bf16.msra.mxu0 %v4160
    %5167 = vmatpush.bf16.msra.mxu0 %v4153
    %5168 = vmatpush.bf16.msra.mxu0 %v4146
    %5169 = vmatmul.bf16.gmra.mxu0 %v2290
    %v5170 = vpop.f32.mrf.mxu0
    %v5171 = vadd.f32 %v5158, %v5170
    %v5172 = vpop.f32.mrf.mxu0
    %5173 = vdwg.mxu0
    %5174 = vmatpush.bf16.msra.mxu0 %v4251
    %5175 = vmatpush.bf16.msra.mxu0 %v4244
    %5176 = vmatpush.bf16.msra.mxu0 %v4237
    %5177 = vmatpush.bf16.msra.mxu0 %v4230
    %5178 = vmatpush.bf16.msra.mxu0 %v4223
    %5179 = vmatpush.bf16.msra.mxu0 %v4216
    %5180 = vmatpush.bf16.msra.mxu0 %v4209
    %5181 = vmatpush.bf16.msra.mxu0 %v4202
    %5182 = vmatmul.bf16.gmra.mxu0 %v2291
    %v5183 = vpop.f32.mrf.mxu0
    %v5184 = vadd.f32 %v5171, %v5183
    %v5185 = vpop.f32.mrf.mxu0
    %5186 = vdwg.mxu0
    %5187 = vmatpush.bf16.msra.mxu0 %v4307
    %5188 = vmatpush.bf16.msra.mxu0 %v4300
    %5189 = vmatpush.bf16.msra.mxu0 %v4293
    %5190 = vmatpush.bf16.msra.mxu0 %v4286
    %5191 = vmatpush.bf16.msra.mxu0 %v4279
    %5192 = vmatpush.bf16.msra.mxu0 %v4272
    %5193 = vmatpush.bf16.msra.mxu0 %v4265
    %5194 = vmatpush.bf16.msra.mxu0 %v4258
    %5195 = vmatmul.bf16.gmra.mxu0 %v2292
    %v5196 = vpop.f32.mrf.mxu0
    %v5197 = vadd.f32 %v5184, %v5196
    %v5198 = vpop.f32.mrf.mxu0
    %5199 = vdwg.mxu0
    %5200 = vmatpush.bf16.msra.mxu0 %v4363
    %5201 = vmatpush.bf16.msra.mxu0 %v4356
    %5202 = vmatpush.bf16.msra.mxu0 %v4349
    %5203 = vmatpush.bf16.msra.mxu0 %v4342
    %5204 = vmatpush.bf16.msra.mxu0 %v4335
    %5205 = vmatpush.bf16.msra.mxu0 %v4328
    %5206 = vmatpush.bf16.msra.mxu0 %v4321
    %5207 = vmatpush.bf16.msra.mxu0 %v4314
    %5208 = vmatmul.bf16.gmra.mxu0 %v2293
    %v5209 = vpop.f32.mrf.mxu0
    %v5210 = vadd.f32 %v5197, %v5209
    %v5211 = vpop.f32.mrf.mxu0
    %5212 = vdwg.mxu0
    %5213 = vmatpush.bf16.msra.mxu0 %v4028
    %5214 = vmatpush.bf16.msra.mxu0 %v4021
    %5215 = vmatpush.bf16.msra.mxu0 %v4014
    %5216 = vmatpush.bf16.msra.mxu0 %v4007
    %5217 = vmatpush.bf16.msra.mxu0 %v4000
    %5218 = vmatpush.bf16.msra.mxu0 %v3993
    %5219 = vmatpush.bf16.msra.mxu0 %v3986
    %5220 = vmatpush.bf16.msra.mxu0 %v3979
    %5221 = vmatmul.bf16.gmra.mxu0 %v2287
    %v5222 = vpop.f32.mrf.mxu0
    %v5223 = vadd.f32 0.0, %v5222
    %v5224 = vpop.f32.mrf.mxu0
    %5225 = vdwg.mxu0
    %5226 = vmatpush.bf16.msra.mxu0 %v4084
    %5227 = vmatpush.bf16.msra.mxu0 %v4077
    %5228 = vmatpush.bf16.msra.mxu0 %v4070
    %5229 = vmatpush.bf16.msra.mxu0 %v4063
    %5230 = vmatpush.bf16.msra.mxu0 %v4056
    %5231 = vmatpush.bf16.msra.mxu0 %v4049
    %5232 = vmatpush.bf16.msra.mxu0 %v4042
    %5233 = vmatpush.bf16.msra.mxu0 %v4035
    %5234 = vmatmul.bf16.gmra.mxu0 %v2288
    %v5235 = vpop.f32.mrf.mxu0
    %v5236 = vadd.f32 %v5223, %v5235
    %v5237 = vpop.f32.mrf.mxu0
    %5238 = vdwg.mxu0
    %5239 = vmatpush.bf16.msra.mxu0 %v4140
    %5240 = vmatpush.bf16.msra.mxu0 %v4133
    %5241 = vmatpush.bf16.msra.mxu0 %v4126
    %5242 = vmatpush.bf16.msra.mxu0 %v4119
    %5243 = vmatpush.bf16.msra.mxu0 %v4112
    %5244 = vmatpush.bf16.msra.mxu0 %v4105
    %5245 = vmatpush.bf16.msra.mxu0 %v4098
    %5246 = vmatpush.bf16.msra.mxu0 %v4091
    %5247 = vmatmul.bf16.gmra.mxu0 %v2289
    %v5248 = vpop.f32.mrf.mxu0
    %v5249 = vadd.f32 %v5236, %v5248
    %v5250 = vpop.f32.mrf.mxu0
    %5251 = vdwg.mxu0
    %5252 = vmatpush.bf16.msra.mxu0 %v4196
    %5253 = vmatpush.bf16.msra.mxu0 %v4189
    %5254 = vmatpush.bf16.msra.mxu0 %v4182
    %5255 = vmatpush.bf16.msra.mxu0 %v4175
    %5256 = vmatpush.bf16.msra.mxu0 %v4168
    %5257 = vmatpush.bf16.msra.mxu0 %v4161
    %5258 = vmatpush.bf16.msra.mxu0 %v4154
    %5259 = vmatpush.bf16.msra.mxu0 %v4147
    %5260 = vmatmul.bf16.gmra.mxu0 %v2290
    %v5261 = vpop.f32.mrf.mxu0
    %v5262 = vadd.f32 %v5249, %v5261
    %v5263 = vpop.f32.mrf.mxu0
    %5264 = vdwg.mxu0
    %5265 = vmatpush.bf16.msra.mxu0 %v4252
    %5266 = vmatpush.bf16.msra.mxu0 %v4245
    %5267 = vmatpush.bf16.msra.mxu0 %v4238
    %5268 = vmatpush.bf16.msra.mxu0 %v4231
    %5269 = vmatpush.bf16.msra.mxu0 %v4224
    %5270 = vmatpush.bf16.msra.mxu0 %v4217
    %5271 = vmatpush.bf16.msra.mxu0 %v4210
    %5272 = vmatpush.bf16.msra.mxu0 %v4203
    %5273 = vmatmul.bf16.gmra.mxu0 %v2291
    %v5274 = vpop.f32.mrf.mxu0
    %v5275 = vadd.f32 %v5262, %v5274
    %v5276 = vpop.f32.mrf.mxu0
    %5277 = vdwg.mxu0
    %5278 = vmatpush.bf16.msra.mxu0 %v4308
    %5279 = vmatpush.bf16.msra.mxu0 %v4301
    %5280 = vmatpush.bf16.msra.mxu0 %v4294
    %5281 = vmatpush.bf16.msra.mxu0 %v4287
    %5282 = vmatpush.bf16.msra.mxu0 %v4280
    %5283 = vmatpush.bf16.msra.mxu0 %v4273
    %5284 = vmatpush.bf16.msra.mxu0 %v4266
    %5285 = vmatpush.bf16.msra.mxu0 %v4259
    %5286 = vmatmul.bf16.gmra.mxu0 %v2292
    %v5287 = vpop.f32.mrf.mxu0
    %v5288 = vadd.f32 %v5275, %v5287
    %v5289 = vpop.f32.mrf.mxu0
    %5290 = vdwg.mxu0
    %5291 = vmatpush.bf16.msra.mxu0 %v4364
    %5292 = vmatpush.bf16.msra.mxu0 %v4357
    %5293 = vmatpush.bf16.msra.mxu0 %v4350
    %5294 = vmatpush.bf16.msra.mxu0 %v4343
    %5295 = vmatpush.bf16.msra.mxu0 %v4336
    %5296 = vmatpush.bf16.msra.mxu0 %v4329
    %5297 = vmatpush.bf16.msra.mxu0 %v4322
    %5298 = vmatpush.bf16.msra.mxu0 %v4315
    %5299 = vmatmul.bf16.gmra.mxu0 %v2293
    %v5300 = vpop.f32.mrf.mxu0
    %v5301 = vadd.f32 %v5288, %v5300
    %v5302 = vpop.f32.mrf.mxu0
    %5303 = vdwg.mxu0
    %5304 = vmatpush.bf16.msra.mxu0 %v4029
    %5305 = vmatpush.bf16.msra.mxu0 %v4022
    %5306 = vmatpush.bf16.msra.mxu0 %v4015
    %5307 = vmatpush.bf16.msra.mxu0 %v4008
    %5308 = vmatpush.bf16.msra.mxu0 %v4001
    %5309 = vmatpush.bf16.msra.mxu0 %v3994
    %5310 = vmatpush.bf16.msra.mxu0 %v3987
    %5311 = vmatpush.bf16.msra.mxu0 %v3980
    %5312 = vmatmul.bf16.gmra.mxu0 %v2287
    %v5313 = vpop.f32.mrf.mxu0
    %v5314 = vadd.f32 0.0, %v5313
    %v5315 = vpop.f32.mrf.mxu0
    %5316 = vdwg.mxu0
    %5317 = vmatpush.bf16.msra.mxu0 %v4085
    %5318 = vmatpush.bf16.msra.mxu0 %v4078
    %5319 = vmatpush.bf16.msra.mxu0 %v4071
    %5320 = vmatpush.bf16.msra.mxu0 %v4064
    %5321 = vmatpush.bf16.msra.mxu0 %v4057
    %5322 = vmatpush.bf16.msra.mxu0 %v4050
    %5323 = vmatpush.bf16.msra.mxu0 %v4043
    %5324 = vmatpush.bf16.msra.mxu0 %v4036
    %5325 = vmatmul.bf16.gmra.mxu0 %v2288
    %v5326 = vpop.f32.mrf.mxu0
    %v5327 = vadd.f32 %v5314, %v5326
    %v5328 = vpop.f32.mrf.mxu0
    %5329 = vdwg.mxu0
    %5330 = vmatpush.bf16.msra.mxu0 %v4141
    %5331 = vmatpush.bf16.msra.mxu0 %v4134
    %5332 = vmatpush.bf16.msra.mxu0 %v4127
    %5333 = vmatpush.bf16.msra.mxu0 %v4120
    %5334 = vmatpush.bf16.msra.mxu0 %v4113
    %5335 = vmatpush.bf16.msra.mxu0 %v4106
    %5336 = vmatpush.bf16.msra.mxu0 %v4099
    %5337 = vmatpush.bf16.msra.mxu0 %v4092
    %5338 = vmatmul.bf16.gmra.mxu0 %v2289
    %v5339 = vpop.f32.mrf.mxu0
    %v5340 = vadd.f32 %v5327, %v5339
    %v5341 = vpop.f32.mrf.mxu0
    %5342 = vdwg.mxu0
    %5343 = vmatpush.bf16.msra.mxu0 %v4197
    %5344 = vmatpush.bf16.msra.mxu0 %v4190
    %5345 = vmatpush.bf16.msra.mxu0 %v4183
    %5346 = vmatpush.bf16.msra.mxu0 %v4176
    %5347 = vmatpush.bf16.msra.mxu0 %v4169
    %5348 = vmatpush.bf16.msra.mxu0 %v4162
    %5349 = vmatpush.bf16.msra.mxu0 %v4155
    %5350 = vmatpush.bf16.msra.mxu0 %v4148
    %5351 = vmatmul.bf16.gmra.mxu0 %v2290
    %v5352 = vpop.f32.mrf.mxu0
    %v5353 = vadd.f32 %v5340, %v5352
    %v5354 = vpop.f32.mrf.mxu0
    %5355 = vdwg.mxu0
    %5356 = vmatpush.bf16.msra.mxu0 %v4253
    %5357 = vmatpush.bf16.msra.mxu0 %v4246
    %5358 = vmatpush.bf16.msra.mxu0 %v4239
    %5359 = vmatpush.bf16.msra.mxu0 %v4232
    %5360 = vmatpush.bf16.msra.mxu0 %v4225
    %5361 = vmatpush.bf16.msra.mxu0 %v4218
    %5362 = vmatpush.bf16.msra.mxu0 %v4211
    %5363 = vmatpush.bf16.msra.mxu0 %v4204
    %5364 = vmatmul.bf16.gmra.mxu0 %v2291
    %v5365 = vpop.f32.mrf.mxu0
    %v5366 = vadd.f32 %v5353, %v5365
    %v5367 = vpop.f32.mrf.mxu0
    %5368 = vdwg.mxu0
    %5369 = vmatpush.bf16.msra.mxu0 %v4309
    %5370 = vmatpush.bf16.msra.mxu0 %v4302
    %5371 = vmatpush.bf16.msra.mxu0 %v4295
    %5372 = vmatpush.bf16.msra.mxu0 %v4288
    %5373 = vmatpush.bf16.msra.mxu0 %v4281
    %5374 = vmatpush.bf16.msra.mxu0 %v4274
    %5375 = vmatpush.bf16.msra.mxu0 %v4267
    %5376 = vmatpush.bf16.msra.mxu0 %v4260
    %5377 = vmatmul.bf16.gmra.mxu0 %v2292
    %v5378 = vpop.f32.mrf.mxu0
    %v5379 = vadd.f32 %v5366, %v5378
    %v5380 = vpop.f32.mrf.mxu0
    %5381 = vdwg.mxu0
    %5382 = vmatpush.bf16.msra.mxu0 %v4365
    %5383 = vmatpush.bf16.msra.mxu0 %v4358
    %5384 = vmatpush.bf16.msra.mxu0 %v4351
    %5385 = vmatpush.bf16.msra.mxu0 %v4344
    %5386 = vmatpush.bf16.msra.mxu0 %v4337
    %5387 = vmatpush.bf16.msra.mxu0 %v4330
    %5388 = vmatpush.bf16.msra.mxu0 %v4323
    %5389 = vmatpush.bf16.msra.mxu0 %v4316
    %5390 = vmatmul.bf16.gmra.mxu0 %v2293
    %v5391 = vpop.f32.mrf.mxu0
    %v5392 = vadd.f32 %v5379, %v5391
    %v5393 = vpop.f32.mrf.mxu0
    %5394 = vdwg.mxu0
    %v5395 = vrot.slane %v4846, 4
    %v5396 = vadd.f32 %v4846, %v5395
    %v5397 = vrot.slane %v5396, 2
    %v5398 = vadd.f32 %v5396, %v5397
    %v5399 = vrot.slane %v5398, 1
    %v5400 = vadd.f32 %v5398, %v5399
    %v5401 = vrot.slane %v4937, 4
    %v5402 = vadd.f32 %v4937, %v5401
    %v5403 = vrot.slane %v5402, 2
    %v5404 = vadd.f32 %v5402, %v5403
    %v5405 = vrot.slane %v5404, 1
    %v5406 = vadd.f32 %v5404, %v5405
    %v5407 = vrot.slane %v5028, 4
    %v5408 = vadd.f32 %v5028, %v5407
    %v5409 = vrot.slane %v5408, 2
    %v5410 = vadd.f32 %v5408, %v5409
    %v5411 = vrot.slane %v5410, 1
    %v5412 = vadd.f32 %v5410, %v5411
    %v5413 = vrot.slane %v5119, 4
    %v5414 = vadd.f32 %v5119, %v5413
    %v5415 = vrot.slane %v5414, 2
    %v5416 = vadd.f32 %v5414, %v5415
    %v5417 = vrot.slane %v5416, 1
    %v5418 = vadd.f32 %v5416, %v5417
    %v5419 = vrot.slane %v5210, 4
    %v5420 = vadd.f32 %v5210, %v5419
    %v5421 = vrot.slane %v5420, 2
    %v5422 = vadd.f32 %v5420, %v5421
    %v5423 = vrot.slane %v5422, 1
    %v5424 = vadd.f32 %v5422, %v5423
    %v5425 = vrot.slane %v5301, 4
    %v5426 = vadd.f32 %v5301, %v5425
    %v5427 = vrot.slane %v5426, 2
    %v5428 = vadd.f32 %v5426, %v5427
    %v5429 = vrot.slane %v5428, 1
    %v5430 = vadd.f32 %v5428, %v5429
    %v5431 = vrot.slane %v5392, 4
    %v5432 = vadd.f32 %v5392, %v5431
    %v5433 = vrot.slane %v5432, 2
    %v5434 = vadd.f32 %v5432, %v5433
    %v5435 = vrot.slane %v5434, 1
    %v5436 = vadd.f32 %v5434, %v5435
    %v5437 = vmul.f32 %v5400, %v2093
    %v5438 = vmul.f32 %v5406, %v2093
    %v5439 = vmul.f32 %v5412, %v2093
    %v5440 = vmul.f32 %v5418, %v2093
    %v5441 = vmul.f32 %v5424, %v2093
    %v5442 = vmul.f32 %v5430, %v2093
    %v5443 = vmul.f32 %v5436, %v2093
    %v5444 = vsub.f32 %v4846, %v5437
    %v5445 = vsub.f32 %v4937, %v5438
    %v5446 = vsub.f32 %v5028, %v5439
    %v5447 = vsub.f32 %v5119, %v5440
    %v5448 = vsub.f32 %v5210, %v5441
    %v5449 = vsub.f32 %v5301, %v5442
    %v5450 = vsub.f32 %v5392, %v5443
    %v5451 = vmul.f32 %v5444, %v5444
    %v5452 = vmul.f32 %v5445, %v5445
    %v5453 = vmul.f32 %v5446, %v5446
    %v5454 = vmul.f32 %v5447, %v5447
    %v5455 = vmul.f32 %v5448, %v5448
    %v5456 = vmul.f32 %v5449, %v5449
    %v5457 = vmul.f32 %v5450, %v5450
    %v5458 = vrot.slane %v5451, 4
    %v5459 = vadd.f32 %v5451, %v5458
    %v5460 = vrot.slane %v5459, 2
    %v5461 = vadd.f32 %v5459, %v5460
    %v5462 = vrot.slane %v5461, 1
    %v5463 = vadd.f32 %v5461, %v5462
    %v5464 = vrot.slane %v5452, 4
    %v5465 = vadd.f32 %v5452, %v5464
    %v5466 = vrot.slane %v5465, 2
    %v5467 = vadd.f32 %v5465, %v5466
    %v5468 = vrot.slane %v5467, 1
    %v5469 = vadd.f32 %v5467, %v5468
    %v5470 = vrot.slane %v5453, 4
    %v5471 = vadd.f32 %v5453, %v5470
    %v5472 = vrot.slane %v5471, 2
    %v5473 = vadd.f32 %v5471, %v5472
    %v5474 = vrot.slane %v5473, 1
    %v5475 = vadd.f32 %v5473, %v5474
    %v5476 = vrot.slane %v5454, 4
    %v5477 = vadd.f32 %v5454, %v5476
    %v5478 = vrot.slane %v5477, 2
    %v5479 = vadd.f32 %v5477, %v5478
    %v5480 = vrot.slane %v5479, 1
    %v5481 = vadd.f32 %v5479, %v5480
    %v5482 = vrot.slane %v5455, 4
    %v5483 = vadd.f32 %v5455, %v5482
    %v5484 = vrot.slane %v5483, 2
    %v5485 = vadd.f32 %v5483, %v5484
    %v5486 = vrot.slane %v5485, 1
    %v5487 = vadd.f32 %v5485, %v5486
    %v5488 = vrot.slane %v5456, 4
    %v5489 = vadd.f32 %v5456, %v5488
    %v5490 = vrot.slane %v5489, 2
    %v5491 = vadd.f32 %v5489, %v5490
    %v5492 = vrot.slane %v5491, 1
    %v5493 = vadd.f32 %v5491, %v5492
    %v5494 = vrot.slane %v5457, 4
    %v5495 = vadd.f32 %v5457, %v5494
    %v5496 = vrot.slane %v5495, 2
    %v5497 = vadd.f32 %v5495, %v5496
    %v5498 = vrot.slane %v5497, 1
    %v5499 = vadd.f32 %v5497, %v5498
    %v5500 = vmul.f32 %v5463, %v2093
    %v5501 = vmul.f32 %v5469, %v2093
    %v5502 = vmul.f32 %v5475, %v2093
    %v5503 = vmul.f32 %v5481, %v2093
    %v5504 = vmul.f32 %v5487, %v2093
    %v5505 = vmul.f32 %v5493, %v2093
    %v5506 = vmul.f32 %v5499, %v2093
    %v5507 = vadd.f32 %v5500, 1e-05
    %v5508 = vadd.f32 %v5501, 1e-05
    %v5509 = vadd.f32 %v5502, 1e-05
    %v5510 = vadd.f32 %v5503, 1e-05
    %v5511 = vadd.f32 %v5504, 1e-05
    %v5512 = vadd.f32 %v5505, 1e-05
    %v5513 = vadd.f32 %v5506, 1e-05
    %v5514 = vrsqrt.pop %v5507
    %v5515 = vmul.f32 %v5514, %v5507
    %v5516 = vmul.f32 %v5515, %v5514
    %v5517 = vmul.f32 0.5, %v5516
    %v5518 = vsub.f32 1.5, %v5517
    %v5519 = vmul.f32 %v5514, %v5518
    %vm5520 = vweird.f32 %v5507
    %vm5521 = vweird.f32 %v5514
    %vm5522 = vmor %vm5520, %vm5521
    %v5523 = vsel %vm5522, %v5514, %v5519
    %v5524 = vrsqrt.pop %v5508
    %v5525 = vmul.f32 %v5524, %v5508
    %v5526 = vmul.f32 %v5525, %v5524
    %v5527 = vmul.f32 0.5, %v5526
    %v5528 = vsub.f32 1.5, %v5527
    %v5529 = vmul.f32 %v5524, %v5528
    %vm5530 = vweird.f32 %v5508
    %vm5531 = vweird.f32 %v5524
    %vm5532 = vmor %vm5530, %vm5531
    %v5533 = vsel %vm5532, %v5524, %v5529
    %v5534 = vrsqrt.pop %v5509
    %v5535 = vmul.f32 %v5534, %v5509
    %v5536 = vmul.f32 %v5535, %v5534
    %v5537 = vmul.f32 0.5, %v5536
    %v5538 = vsub.f32 1.5, %v5537
    %v5539 = vmul.f32 %v5534, %v5538
    %vm5540 = vweird.f32 %v5509
    %vm5541 = vweird.f32 %v5534
    %vm5542 = vmor %vm5540, %vm5541
    %v5543 = vsel %vm5542, %v5534, %v5539
    %v5544 = vrsqrt.pop %v5510
    %v5545 = vmul.f32 %v5544, %v5510
    %v5546 = vmul.f32 %v5545, %v5544
    %v5547 = vmul.f32 0.5, %v5546
    %v5548 = vsub.f32 1.5, %v5547
    %v5549 = vmul.f32 %v5544, %v5548
    %vm5550 = vweird.f32 %v5510
    %vm5551 = vweird.f32 %v5544
    %vm5552 = vmor %vm5550, %vm5551
    %v5553 = vsel %vm5552, %v5544, %v5549
    %v5554 = vrsqrt.pop %v5511
    %v5555 = vmul.f32 %v5554, %v5511
    %v5556 = vmul.f32 %v5555, %v5554
    %v5557 = vmul.f32 0.5, %v5556
    %v5558 = vsub.f32 1.5, %v5557
    %v5559 = vmul.f32 %v5554, %v5558
    %vm5560 = vweird.f32 %v5511
    %vm5561 = vweird.f32 %v5554
    %vm5562 = vmor %vm5560, %vm5561
    %v5563 = vsel %vm5562, %v5554, %v5559
    %v5564 = vrsqrt.pop %v5512
    %v5565 = vmul.f32 %v5564, %v5512
    %v5566 = vmul.f32 %v5565, %v5564
    %v5567 = vmul.f32 0.5, %v5566
    %v5568 = vsub.f32 1.5, %v5567
    %v5569 = vmul.f32 %v5564, %v5568
    %vm5570 = vweird.f32 %v5512
    %vm5571 = vweird.f32 %v5564
    %vm5572 = vmor %vm5570, %vm5571
    %v5573 = vsel %vm5572, %v5564, %v5569
    %v5574 = vrsqrt.pop %v5513
    %v5575 = vmul.f32 %v5574, %v5513
    %v5576 = vmul.f32 %v5575, %v5574
    %v5577 = vmul.f32 0.5, %v5576
    %v5578 = vsub.f32 1.5, %v5577
    %v5579 = vmul.f32 %v5574, %v5578
    %vm5580 = vweird.f32 %v5513
    %vm5581 = vweird.f32 %v5574
    %vm5582 = vmor %vm5580, %vm5581
    %v5583 = vsel %vm5582, %v5574, %v5579
    %v5584 = vmul.f32 %v5444, %v5523
    %v5585 = vmul.f32 %v5445, %v5533
    %v5586 = vmul.f32 %v5446, %v5543
    %v5587 = vmul.f32 %v5447, %v5553
    %v5588 = vmul.f32 %v5448, %v5563
    %v5589 = vmul.f32 %v5449, %v5573
    %v5590 = vmul.f32 %v5450, %v5583
    %v5591 = vperm.slane %v254, 2
    %v5592 = vperm.slane %v255, 2
    %v5593 = vperm.slane %v256, 2
    %v5594 = vperm.slane %v257, 2
    %v5595 = vperm.slane %v258, 2
    %v5596 = vperm.slane %v259, 2
    %v5597 = vperm.slane %v260, 2
    %v5598 = vmul.f32 %v5584, %v5591
    %v5599 = vmul.f32 %v5585, %v5592
    %v5600 = vmul.f32 %v5586, %v5593
    %v5601 = vmul.f32 %v5587, %v5594
    %v5602 = vmul.f32 %v5588, %v5595
    %v5603 = vmul.f32 %v5589, %v5596
    %v5604 = vmul.f32 %v5590, %v5597
    %v5605 = vperm.slane %v254, 3
    %v5606 = vperm.slane %v255, 3
    %v5607 = vperm.slane %v256, 3
    %v5608 = vperm.slane %v257, 3
    %v5609 = vperm.slane %v258, 3
    %v5610 = vperm.slane %v259, 3
    %v5611 = vperm.slane %v260, 3
    %v5612 = vadd.f32 %v5598, %v5605
    %v5613 = vadd.f32 %v5599, %v5606
    %v5614 = vadd.f32 %v5600, %v5607
    %v5615 = vadd.f32 %v5601, %v5608
    %v5616 = vadd.f32 %v5602, %v5609
    %v5617 = vadd.f32 %v5603, %v5610
    %v5618 = vadd.f32 %v5604, %v5611
    %v5619 = vmax.f32 %v5612, 0.0
    %v5620 = vmax.f32 %v5613, 0.0
    %v5621 = vmax.f32 %v5614, 0.0
    %v5622 = vmax.f32 %v5615, 0.0
    %v5623 = vmax.f32 %v5616, 0.0
    %v5624 = vmax.f32 %v5617, 0.0
    %v5625 = vmax.f32 %v5618, 0.0
    %s5626 = smul.u32 %s2283, 4
    %s5627 = sshll.u32 %s5626, 4
    %5628 = dma.done %s72, %s5627
    %v5629 = vpack.c.bf16 %v5619, %v5619
    %v5630 = vpack.c.bf16 %v5620, %v5620
    %v5631 = vpack.c.bf16 %v5621, %v5621
    %v5632 = vpack.c.bf16 %v5622, %v5622
    %v5633 = vpack.c.bf16 %v5623, %v5623
    %v5634 = vpack.c.bf16 %v5624, %v5624
    %v5635 = vpack.c.bf16 %v5625, %v5625
    %v5636 = vld [vmem:[#allocation4] sm:$0xff]
    %v5637 = vld [vmem:[#allocation4 + $0x8] sm:$0xff]
    %v5638 = vld [vmem:[#allocation4 + $0x10] sm:$0xff]
    %v5639 = vld [vmem:[#allocation4 + $0x18] sm:$0xff]
    %v5640 = vld [vmem:[#allocation4 + $0x20] sm:$0xff]
    %v5641 = vld [vmem:[#allocation4 + $0x28] sm:$0xff]
    %v5642 = vld [vmem:[#allocation4 + $0x30] sm:$0xff]
    %v5643 = vld [vmem:[#allocation4 + $0x38] sm:$0xff]
    %v5644 = vld [vmem:[#allocation4 + $0x40] sm:$0xff]
    %v5645 = vld [vmem:[#allocation4 + $0x48] sm:$0xff]
    %v5646 = vld [vmem:[#allocation4 + $0x50] sm:$0xff]
    %v5647 = vld [vmem:[#allocation4 + $0x58] sm:$0xff]
    %v5648 = vld [vmem:[#allocation4 + $0x60] sm:$0xff]
    %v5649 = vld [vmem:[#allocation4 + $0x68] sm:$0xff]
    %v5650 = vld [vmem:[#allocation4 + $0x70] sm:$0xff]
    %v5651 = vld [vmem:[#allocation4 + $0x78] sm:$0xff]
    %v5652 = vld [vmem:[#allocation4 + $0x80] sm:$0xff]
    %v5653 = vld [vmem:[#allocation4 + $0x88] sm:$0xff]
    %v5654 = vld [vmem:[#allocation4 + $0x90] sm:$0xff]
    %v5655 = vld [vmem:[#allocation4 + $0x98] sm:$0xff]
    %v5656 = vld [vmem:[#allocation4 + $0xa0] sm:$0xff]
    %v5657 = vld [vmem:[#allocation4 + $0xa8] sm:$0xff]
    %v5658 = vld [vmem:[#allocation4 + $0xb0] sm:$0xff]
    %v5659 = vld [vmem:[#allocation4 + $0xb8] sm:$0xff]
    %v5660 = vld [vmem:[#allocation4 + $0xc0] sm:$0xff]
    %v5661 = vld [vmem:[#allocation4 + $0xc8] sm:$0xff]
    %v5662 = vld [vmem:[#allocation4 + $0xd0] sm:$0xff]
    %v5663 = vld [vmem:[#allocation4 + $0xd8] sm:$0xff]
    %v5664 = vld [vmem:[#allocation4 + $0xe0] sm:$0xff]
    %v5665 = vld [vmem:[#allocation4 + $0xe8] sm:$0xff]
    %v5666 = vld [vmem:[#allocation4 + $0xf0] sm:$0xff]
    %v5667 = vld [vmem:[#allocation4 + $0xf8] sm:$0xff]
    %v5668 = vld [vmem:[#allocation4 + $0x100] sm:$0xff]
    %v5669 = vld [vmem:[#allocation4 + $0x108] sm:$0xff]
    %v5670 = vld [vmem:[#allocation4 + $0x110] sm:$0xff]
    %v5671 = vld [vmem:[#allocation4 + $0x118] sm:$0xff]
    %v5672 = vld [vmem:[#allocation4 + $0x120] sm:$0xff]
    %v5673 = vld [vmem:[#allocation4 + $0x128] sm:$0xff]
    %v5674 = vld [vmem:[#allocation4 + $0x130] sm:$0xff]
    %v5675 = vld [vmem:[#allocation4 + $0x138] sm:$0xff]
    %v5676 = vld [vmem:[#allocation4 + $0x140] sm:$0xff]
    %v5677 = vld [vmem:[#allocation4 + $0x148] sm:$0xff]
    %v5678 = vld [vmem:[#allocation4 + $0x150] sm:$0xff]
    %v5679 = vld [vmem:[#allocation4 + $0x158] sm:$0xff]
    %v5680 = vld [vmem:[#allocation4 + $0x160] sm:$0xff]
    %v5681 = vld [vmem:[#allocation4 + $0x168] sm:$0xff]
    %v5682 = vld [vmem:[#allocation4 + $0x170] sm:$0xff]
    %v5683 = vld [vmem:[#allocation4 + $0x178] sm:$0xff]
    %v5684 = vld [vmem:[#allocation4 + $0x180] sm:$0xff]
    %v5685 = vld [vmem:[#allocation4 + $0x188] sm:$0xff]
    %v5686 = vld [vmem:[#allocation4 + $0x190] sm:$0xff]
    %v5687 = vld [vmem:[#allocation4 + $0x198] sm:$0xff]
    %v5688 = vld [vmem:[#allocation4 + $0x1a0] sm:$0xff]
    %v5689 = vld [vmem:[#allocation4 + $0x1a8] sm:$0xff]
    %v5690 = vld [vmem:[#allocation4 + $0x1b0] sm:$0xff]
    %v5691 = vld [vmem:[#allocation4 + $0x1b8] sm:$0xff]
    %v5692 = vld [vmem:[#allocation4 + $0x1c0] sm:$0xff]
    %v5693 = vld [vmem:[#allocation4 + $0x1c8] sm:$0xff]
    %v5694 = vld [vmem:[#allocation4 + $0x1d0] sm:$0xff]
    %v5695 = vld [vmem:[#allocation4 + $0x1d8] sm:$0xff]
    %v5696 = vld [vmem:[#allocation4 + $0x1e0] sm:$0xff]
    %v5697 = vld [vmem:[#allocation4 + $0x1e8] sm:$0xff]
    %v5698 = vld [vmem:[#allocation4 + $0x1f0] sm:$0xff]
    %v5699 = vld [vmem:[#allocation4 + $0x1f8] sm:$0xff]
    %v5700 = vld [vmem:[#allocation4 + $0x200] sm:$0xff]
    %v5701 = vld [vmem:[#allocation4 + $0x208] sm:$0xff]
    %v5702 = vld [vmem:[#allocation4 + $0x210] sm:$0xff]
    %v5703 = vld [vmem:[#allocation4 + $0x218] sm:$0xff]
    %v5704 = vld [vmem:[#allocation4 + $0x220] sm:$0xff]
    %v5705 = vld [vmem:[#allocation4 + $0x228] sm:$0xff]
    %v5706 = vld [vmem:[#allocation4 + $0x230] sm:$0xff]
    %v5707 = vld [vmem:[#allocation4 + $0x238] sm:$0xff]
    %v5708 = vld [vmem:[#allocation4 + $0x240] sm:$0xff]
    %v5709 = vld [vmem:[#allocation4 + $0x248] sm:$0xff]
    %v5710 = vld [vmem:[#allocation4 + $0x250] sm:$0xff]
    %v5711 = vld [vmem:[#allocation4 + $0x258] sm:$0xff]
    %v5712 = vld [vmem:[#allocation4 + $0x260] sm:$0xff]
    %v5713 = vld [vmem:[#allocation4 + $0x268] sm:$0xff]
    %v5714 = vld [vmem:[#allocation4 + $0x270] sm:$0xff]
    %v5715 = vld [vmem:[#allocation4 + $0x278] sm:$0xff]
    %v5716 = vld [vmem:[#allocation4 + $0x280] sm:$0xff]
    %v5717 = vld [vmem:[#allocation4 + $0x288] sm:$0xff]
    %v5718 = vld [vmem:[#allocation4 + $0x290] sm:$0xff]
    %v5719 = vld [vmem:[#allocation4 + $0x298] sm:$0xff]
    %v5720 = vld [vmem:[#allocation4 + $0x2a0] sm:$0xff]
    %v5721 = vld [vmem:[#allocation4 + $0x2a8] sm:$0xff]
    %v5722 = vld [vmem:[#allocation4 + $0x2b0] sm:$0xff]
    %v5723 = vld [vmem:[#allocation4 + $0x2b8] sm:$0xff]
    %v5724 = vld [vmem:[#allocation4 + $0x2c0] sm:$0xff]
    %v5725 = vld [vmem:[#allocation4 + $0x2c8] sm:$0xff]
    %v5726 = vld [vmem:[#allocation4 + $0x2d0] sm:$0xff]
    %v5727 = vld [vmem:[#allocation4 + $0x2d8] sm:$0xff]
    %v5728 = vld [vmem:[#allocation4 + $0x2e0] sm:$0xff]
    %v5729 = vld [vmem:[#allocation4 + $0x2e8] sm:$0xff]
    %v5730 = vld [vmem:[#allocation4 + $0x2f0] sm:$0xff]
    %v5731 = vld [vmem:[#allocation4 + $0x2f8] sm:$0xff]
    %v5732 = vld [vmem:[#allocation4 + $0x300] sm:$0xff]
    %v5733 = vld [vmem:[#allocation4 + $0x308] sm:$0xff]
    %v5734 = vld [vmem:[#allocation4 + $0x310] sm:$0xff]
    %v5735 = vld [vmem:[#allocation4 + $0x318] sm:$0xff]
    %v5736 = vld [vmem:[#allocation4 + $0x320] sm:$0xff]
    %v5737 = vld [vmem:[#allocation4 + $0x328] sm:$0xff]
    %v5738 = vld [vmem:[#allocation4 + $0x330] sm:$0xff]
    %v5739 = vld [vmem:[#allocation4 + $0x338] sm:$0xff]
    %v5740 = vld [vmem:[#allocation4 + $0x340] sm:$0xff]
    %v5741 = vld [vmem:[#allocation4 + $0x348] sm:$0xff]
    %v5742 = vld [vmem:[#allocation4 + $0x350] sm:$0xff]
    %v5743 = vld [vmem:[#allocation4 + $0x358] sm:$0xff]
    %v5744 = vld [vmem:[#allocation4 + $0x360] sm:$0xff]
    %v5745 = vld [vmem:[#allocation4 + $0x368] sm:$0xff]
    %v5746 = vld [vmem:[#allocation4 + $0x370] sm:$0xff]
    %v5747 = vld [vmem:[#allocation4 + $0x378] sm:$0xff]
    %v5748 = vld [vmem:[#allocation4 + $0x380] sm:$0xff]
    %v5749 = vld [vmem:[#allocation4 + $0x388] sm:$0xff]
    %v5750 = vld [vmem:[#allocation4 + $0x390] sm:$0xff]
    %v5751 = vld [vmem:[#allocation4 + $0x398] sm:$0xff]
    %v5752 = vld [vmem:[#allocation4 + $0x3a0] sm:$0xff]
    %v5753 = vld [vmem:[#allocation4 + $0x3a8] sm:$0xff]
    %v5754 = vld [vmem:[#allocation4 + $0x3b0] sm:$0xff]
    %v5755 = vld [vmem:[#allocation4 + $0x3b8] sm:$0xff]
    %v5756 = vld [vmem:[#allocation4 + $0x3c0] sm:$0xff]
    %v5757 = vld [vmem:[#allocation4 + $0x3c8] sm:$0xff]
    %v5758 = vld [vmem:[#allocation4 + $0x3d0] sm:$0xff]
    %v5759 = vld [vmem:[#allocation4 + $0x3d8] sm:$0xff]
    %v5760 = vld [vmem:[#allocation4 + $0x3e0] sm:$0xff]
    %v5761 = vld [vmem:[#allocation4 + $0x3e8] sm:$0xff]
    %v5762 = vld [vmem:[#allocation4 + $0x3f0] sm:$0xff]
    %v5763 = vld [vmem:[#allocation4 + $0x3f8] sm:$0xff]
    %v5764 = vld [vmem:[#allocation4 + $0x400] sm:$0xff]
    %v5765 = vld [vmem:[#allocation4 + $0x408] sm:$0xff]
    %v5766 = vld [vmem:[#allocation4 + $0x410] sm:$0xff]
    %v5767 = vld [vmem:[#allocation4 + $0x418] sm:$0xff]
    %v5768 = vld [vmem:[#allocation4 + $0x420] sm:$0xff]
    %v5769 = vld [vmem:[#allocation4 + $0x428] sm:$0xff]
    %v5770 = vld [vmem:[#allocation4 + $0x430] sm:$0xff]
    %v5771 = vld [vmem:[#allocation4 + $0x438] sm:$0xff]
    %v5772 = vld [vmem:[#allocation4 + $0x440] sm:$0xff]
    %v5773 = vld [vmem:[#allocation4 + $0x448] sm:$0xff]
    %v5774 = vld [vmem:[#allocation4 + $0x450] sm:$0xff]
    %v5775 = vld [vmem:[#allocation4 + $0x458] sm:$0xff]
    %v5776 = vld [vmem:[#allocation4 + $0x460] sm:$0xff]
    %v5777 = vld [vmem:[#allocation4 + $0x468] sm:$0xff]
    %v5778 = vld [vmem:[#allocation4 + $0x470] sm:$0xff]
    %v5779 = vld [vmem:[#allocation4 + $0x478] sm:$0xff]
    %v5780 = vld [vmem:[#allocation4 + $0x480] sm:$0xff]
    %v5781 = vld [vmem:[#allocation4 + $0x488] sm:$0xff]
    %v5782 = vld [vmem:[#allocation4 + $0x490] sm:$0xff]
    %v5783 = vld [vmem:[#allocation4 + $0x498] sm:$0xff]
    %v5784 = vld [vmem:[#allocation4 + $0x4a0] sm:$0xff]
    %v5785 = vld [vmem:[#allocation4 + $0x4a8] sm:$0xff]
    %v5786 = vld [vmem:[#allocation4 + $0x4b0] sm:$0xff]
    %v5787 = vld [vmem:[#allocation4 + $0x4b8] sm:$0xff]
    %v5788 = vld [vmem:[#allocation4 + $0x4c0] sm:$0xff]
    %v5789 = vld [vmem:[#allocation4 + $0x4c8] sm:$0xff]
    %v5790 = vld [vmem:[#allocation4 + $0x4d0] sm:$0xff]
    %v5791 = vld [vmem:[#allocation4 + $0x4d8] sm:$0xff]
    %v5792 = vld [vmem:[#allocation4 + $0x4e0] sm:$0xff]
    %v5793 = vld [vmem:[#allocation4 + $0x4e8] sm:$0xff]
    %v5794 = vld [vmem:[#allocation4 + $0x4f0] sm:$0xff]
    %v5795 = vld [vmem:[#allocation4 + $0x4f8] sm:$0xff]
    %v5796 = vld [vmem:[#allocation4 + $0x500] sm:$0xff]
    %v5797 = vld [vmem:[#allocation4 + $0x508] sm:$0xff]
    %v5798 = vld [vmem:[#allocation4 + $0x510] sm:$0xff]
    %v5799 = vld [vmem:[#allocation4 + $0x518] sm:$0xff]
    %v5800 = vld [vmem:[#allocation4 + $0x520] sm:$0xff]
    %v5801 = vld [vmem:[#allocation4 + $0x528] sm:$0xff]
    %v5802 = vld [vmem:[#allocation4 + $0x530] sm:$0xff]
    %v5803 = vld [vmem:[#allocation4 + $0x538] sm:$0xff]
    %v5804 = vld [vmem:[#allocation4 + $0x540] sm:$0xff]
    %v5805 = vld [vmem:[#allocation4 + $0x548] sm:$0xff]
    %v5806 = vld [vmem:[#allocation4 + $0x550] sm:$0xff]
    %v5807 = vld [vmem:[#allocation4 + $0x558] sm:$0xff]
    %v5808 = vld [vmem:[#allocation4 + $0x560] sm:$0xff]
    %v5809 = vld [vmem:[#allocation4 + $0x568] sm:$0xff]
    %v5810 = vld [vmem:[#allocation4 + $0x570] sm:$0xff]
    %v5811 = vld [vmem:[#allocation4 + $0x578] sm:$0xff]
    %v5812 = vld [vmem:[#allocation4 + $0x580] sm:$0xff]
    %v5813 = vld [vmem:[#allocation4 + $0x588] sm:$0xff]
    %v5814 = vld [vmem:[#allocation4 + $0x590] sm:$0xff]
    %v5815 = vld [vmem:[#allocation4 + $0x598] sm:$0xff]
    %v5816 = vld [vmem:[#allocation4 + $0x5a0] sm:$0xff]
    %v5817 = vld [vmem:[#allocation4 + $0x5a8] sm:$0xff]
    %v5818 = vld [vmem:[#allocation4 + $0x5b0] sm:$0xff]
    %v5819 = vld [vmem:[#allocation4 + $0x5b8] sm:$0xff]
    %v5820 = vld [vmem:[#allocation4 + $0x5c0] sm:$0xff]
    %v5821 = vld [vmem:[#allocation4 + $0x5c8] sm:$0xff]
    %v5822 = vld [vmem:[#allocation4 + $0x5d0] sm:$0xff]
    %v5823 = vld [vmem:[#allocation4 + $0x5d8] sm:$0xff]
    %v5824 = vld [vmem:[#allocation4 + $0x5e0] sm:$0xff]
    %v5825 = vld [vmem:[#allocation4 + $0x5e8] sm:$0xff]
    %v5826 = vld [vmem:[#allocation4 + $0x5f0] sm:$0xff]
    %v5827 = vld [vmem:[#allocation4 + $0x5f8] sm:$0xff]
    %v5828 = vld [vmem:[#allocation4 + $0x600] sm:$0xff]
    %v5829 = vld [vmem:[#allocation4 + $0x608] sm:$0xff]
    %v5830 = vld [vmem:[#allocation4 + $0x610] sm:$0xff]
    %v5831 = vld [vmem:[#allocation4 + $0x618] sm:$0xff]
    %v5832 = vld [vmem:[#allocation4 + $0x620] sm:$0xff]
    %v5833 = vld [vmem:[#allocation4 + $0x628] sm:$0xff]
    %v5834 = vld [vmem:[#allocation4 + $0x630] sm:$0xff]
    %v5835 = vld [vmem:[#allocation4 + $0x638] sm:$0xff]
    %v5836 = vld [vmem:[#allocation4 + $0x640] sm:$0xff]
    %v5837 = vld [vmem:[#allocation4 + $0x648] sm:$0xff]
    %v5838 = vld [vmem:[#allocation4 + $0x650] sm:$0xff]
    %v5839 = vld [vmem:[#allocation4 + $0x658] sm:$0xff]
    %v5840 = vld [vmem:[#allocation4 + $0x660] sm:$0xff]
    %v5841 = vld [vmem:[#allocation4 + $0x668] sm:$0xff]
    %v5842 = vld [vmem:[#allocation4 + $0x670] sm:$0xff]
    %v5843 = vld [vmem:[#allocation4 + $0x678] sm:$0xff]
    %v5844 = vld [vmem:[#allocation4 + $0x680] sm:$0xff]
    %v5845 = vld [vmem:[#allocation4 + $0x688] sm:$0xff]
    %v5846 = vld [vmem:[#allocation4 + $0x690] sm:$0xff]
    %v5847 = vld [vmem:[#allocation4 + $0x698] sm:$0xff]
    %v5848 = vld [vmem:[#allocation4 + $0x6a0] sm:$0xff]
    %v5849 = vld [vmem:[#allocation4 + $0x6a8] sm:$0xff]
    %v5850 = vld [vmem:[#allocation4 + $0x6b0] sm:$0xff]
    %v5851 = vld [vmem:[#allocation4 + $0x6b8] sm:$0xff]
    %v5852 = vld [vmem:[#allocation4 + $0x6c0] sm:$0xff]
    %v5853 = vld [vmem:[#allocation4 + $0x6c8] sm:$0xff]
    %v5854 = vld [vmem:[#allocation4 + $0x6d0] sm:$0xff]
    %v5855 = vld [vmem:[#allocation4 + $0x6d8] sm:$0xff]
    %v5856 = vld [vmem:[#allocation4 + $0x6e0] sm:$0xff]
    %v5857 = vld [vmem:[#allocation4 + $0x6e8] sm:$0xff]
    %v5858 = vld [vmem:[#allocation4 + $0x6f0] sm:$0xff]
    %v5859 = vld [vmem:[#allocation4 + $0x6f8] sm:$0xff]
    %v6084 = vunpack.c.l.b16 %v5636
    %v6085 = vunpack.c.h.b16 %v5636
    %v6086 = vunpack.c.l.b16 %v5637
    %v6087 = vunpack.c.h.b16 %v5637
    %v6088 = vunpack.c.l.b16 %v5638
    %v6089 = vunpack.c.h.b16 %v5638
    %v6090 = vunpack.c.l.b16 %v5639
    %v6091 = vunpack.c.h.b16 %v5639
    %v6092 = vunpack.c.l.b16 %v5640
    %v6093 = vunpack.c.h.b16 %v5640
    %v6094 = vunpack.c.l.b16 %v5641
    %v6095 = vunpack.c.h.b16 %v5641
    %v6096 = vunpack.c.l.b16 %v5642
    %v6097 = vunpack.c.h.b16 %v5642
    %v6098 = vunpack.c.l.b16 %v5643
    %v6099 = vunpack.c.h.b16 %v5643
    %v6100 = vunpack.c.l.b16 %v5644
    %v6101 = vunpack.c.h.b16 %v5644
    %v6102 = vunpack.c.l.b16 %v5645
    %v6103 = vunpack.c.h.b16 %v5645
    %v6104 = vunpack.c.l.b16 %v5646
    %v6105 = vunpack.c.h.b16 %v5646
    %v6106 = vunpack.c.l.b16 %v5647
    %v6107 = vunpack.c.h.b16 %v5647
    %v6108 = vunpack.c.l.b16 %v5648
    %v6109 = vunpack.c.h.b16 %v5648
    %v6110 = vunpack.c.l.b16 %v5649
    %v6111 = vunpack.c.h.b16 %v5649
    %v6112 = vunpack.c.l.b16 %v5650
    %v6113 = vunpack.c.h.b16 %v5650
    %v6114 = vunpack.c.l.b16 %v5651
    %v6115 = vunpack.c.h.b16 %v5651
    %v6116 = vunpack.c.l.b16 %v5652
    %v6117 = vunpack.c.h.b16 %v5652
    %v6118 = vunpack.c.l.b16 %v5653
    %v6119 = vunpack.c.h.b16 %v5653
    %v6120 = vunpack.c.l.b16 %v5654
    %v6121 = vunpack.c.h.b16 %v5654
    %v6122 = vunpack.c.l.b16 %v5655
    %v6123 = vunpack.c.h.b16 %v5655
    %v6124 = vunpack.c.l.b16 %v5656
    %v6125 = vunpack.c.h.b16 %v5656
    %v6126 = vunpack.c.l.b16 %v5657
    %v6127 = vunpack.c.h.b16 %v5657
    %v6128 = vunpack.c.l.b16 %v5658
    %v6129 = vunpack.c.h.b16 %v5658
    %v6130 = vunpack.c.l.b16 %v5659
    %v6131 = vunpack.c.h.b16 %v5659
    %v6132 = vunpack.c.l.b16 %v5660
    %v6133 = vunpack.c.h.b16 %v5660
    %v6134 = vunpack.c.l.b16 %v5661
    %v6135 = vunpack.c.h.b16 %v5661
    %v6136 = vunpack.c.l.b16 %v5662
    %v6137 = vunpack.c.h.b16 %v5662
    %v6138 = vunpack.c.l.b16 %v5663
    %v6139 = vunpack.c.h.b16 %v5663
    %v6140 = vunpack.c.l.b16 %v5664
    %v6141 = vunpack.c.h.b16 %v5664
    %v6142 = vunpack.c.l.b16 %v5665
    %v6143 = vunpack.c.h.b16 %v5665
    %v6144 = vunpack.c.l.b16 %v5666
    %v6145 = vunpack.c.h.b16 %v5666
    %v6146 = vunpack.c.l.b16 %v5667
    %v6147 = vunpack.c.h.b16 %v5667
    %v6148 = vunpack.c.l.b16 %v5668
    %v6149 = vunpack.c.h.b16 %v5668
    %v6150 = vunpack.c.l.b16 %v5669
    %v6151 = vunpack.c.h.b16 %v5669
    %v6152 = vunpack.c.l.b16 %v5670
    %v6153 = vunpack.c.h.b16 %v5670
    %v6154 = vunpack.c.l.b16 %v5671
    %v6155 = vunpack.c.h.b16 %v5671
    %v6156 = vunpack.c.l.b16 %v5672
    %v6157 = vunpack.c.h.b16 %v5672
    %v6158 = vunpack.c.l.b16 %v5673
    %v6159 = vunpack.c.h.b16 %v5673
    %v6160 = vunpack.c.l.b16 %v5674
    %v6161 = vunpack.c.h.b16 %v5674
    %v6162 = vunpack.c.l.b16 %v5675
    %v6163 = vunpack.c.h.b16 %v5675
    %v6164 = vunpack.c.l.b16 %v5676
    %v6165 = vunpack.c.h.b16 %v5676
    %v6166 = vunpack.c.l.b16 %v5677
    %v6167 = vunpack.c.h.b16 %v5677
    %v6168 = vunpack.c.l.b16 %v5678
    %v6169 = vunpack.c.h.b16 %v5678
    %v6170 = vunpack.c.l.b16 %v5679
    %v6171 = vunpack.c.h.b16 %v5679
    %v6172 = vunpack.c.l.b16 %v5680
    %v6173 = vunpack.c.h.b16 %v5680
    %v6174 = vunpack.c.l.b16 %v5681
    %v6175 = vunpack.c.h.b16 %v5681
    %v6176 = vunpack.c.l.b16 %v5682
    %v6177 = vunpack.c.h.b16 %v5682
    %v6178 = vunpack.c.l.b16 %v5683
    %v6179 = vunpack.c.h.b16 %v5683
    %v6180 = vunpack.c.l.b16 %v5684
    %v6181 = vunpack.c.h.b16 %v5684
    %v6182 = vunpack.c.l.b16 %v5685
    %v6183 = vunpack.c.h.b16 %v5685
    %v6184 = vunpack.c.l.b16 %v5686
    %v6185 = vunpack.c.h.b16 %v5686
    %v6186 = vunpack.c.l.b16 %v5687
    %v6187 = vunpack.c.h.b16 %v5687
    %v6188 = vunpack.c.l.b16 %v5688
    %v6189 = vunpack.c.h.b16 %v5688
    %v6190 = vunpack.c.l.b16 %v5689
    %v6191 = vunpack.c.h.b16 %v5689
    %v6192 = vunpack.c.l.b16 %v5690
    %v6193 = vunpack.c.h.b16 %v5690
    %v6194 = vunpack.c.l.b16 %v5691
    %v6195 = vunpack.c.h.b16 %v5691
    %v6196 = vunpack.c.l.b16 %v5692
    %v6197 = vunpack.c.h.b16 %v5692
    %v6198 = vunpack.c.l.b16 %v5693
    %v6199 = vunpack.c.h.b16 %v5693
    %v6200 = vunpack.c.l.b16 %v5694
    %v6201 = vunpack.c.h.b16 %v5694
    %v6202 = vunpack.c.l.b16 %v5695
    %v6203 = vunpack.c.h.b16 %v5695
    %v6204 = vunpack.c.l.b16 %v5696
    %v6205 = vunpack.c.h.b16 %v5696
    %v6206 = vunpack.c.l.b16 %v5697
    %v6207 = vunpack.c.h.b16 %v5697
    %v6208 = vunpack.c.l.b16 %v5698
    %v6209 = vunpack.c.h.b16 %v5698
    %v6210 = vunpack.c.l.b16 %v5699
    %v6211 = vunpack.c.h.b16 %v5699
    %v6212 = vunpack.c.l.b16 %v5700
    %v6213 = vunpack.c.h.b16 %v5700
    %v6214 = vunpack.c.l.b16 %v5701
    %v6215 = vunpack.c.h.b16 %v5701
    %v6216 = vunpack.c.l.b16 %v5702
    %v6217 = vunpack.c.h.b16 %v5702
    %v6218 = vunpack.c.l.b16 %v5703
    %v6219 = vunpack.c.h.b16 %v5703
    %v6220 = vunpack.c.l.b16 %v5704
    %v6221 = vunpack.c.h.b16 %v5704
    %v6222 = vunpack.c.l.b16 %v5705
    %v6223 = vunpack.c.h.b16 %v5705
    %v6224 = vunpack.c.l.b16 %v5706
    %v6225 = vunpack.c.h.b16 %v5706
    %v6226 = vunpack.c.l.b16 %v5707
    %v6227 = vunpack.c.h.b16 %v5707
    %v6228 = vunpack.c.l.b16 %v5708
    %v6229 = vunpack.c.h.b16 %v5708
    %v6230 = vunpack.c.l.b16 %v5709
    %v6231 = vunpack.c.h.b16 %v5709
    %v6232 = vunpack.c.l.b16 %v5710
    %v6233 = vunpack.c.h.b16 %v5710
    %v6234 = vunpack.c.l.b16 %v5711
    %v6235 = vunpack.c.h.b16 %v5711
    %v6236 = vunpack.c.l.b16 %v5712
    %v6237 = vunpack.c.h.b16 %v5712
    %v6238 = vunpack.c.l.b16 %v5713
    %v6239 = vunpack.c.h.b16 %v5713
    %v6240 = vunpack.c.l.b16 %v5714
    %v6241 = vunpack.c.h.b16 %v5714
    %v6242 = vunpack.c.l.b16 %v5715
    %v6243 = vunpack.c.h.b16 %v5715
    %v6244 = vunpack.c.l.b16 %v5716
    %v6245 = vunpack.c.h.b16 %v5716
    %v6246 = vunpack.c.l.b16 %v5717
    %v6247 = vunpack.c.h.b16 %v5717
    %v6248 = vunpack.c.l.b16 %v5718
    %v6249 = vunpack.c.h.b16 %v5718
    %v6250 = vunpack.c.l.b16 %v5719
    %v6251 = vunpack.c.h.b16 %v5719
    %v6252 = vunpack.c.l.b16 %v5720
    %v6253 = vunpack.c.h.b16 %v5720
    %v6254 = vunpack.c.l.b16 %v5721
    %v6255 = vunpack.c.h.b16 %v5721
    %v6256 = vunpack.c.l.b16 %v5722
    %v6257 = vunpack.c.h.b16 %v5722
    %v6258 = vunpack.c.l.b16 %v5723
    %v6259 = vunpack.c.h.b16 %v5723
    %v6260 = vunpack.c.l.b16 %v5724
    %v6261 = vunpack.c.h.b16 %v5724
    %v6262 = vunpack.c.l.b16 %v5725
    %v6263 = vunpack.c.h.b16 %v5725
    %v6264 = vunpack.c.l.b16 %v5726
    %v6265 = vunpack.c.h.b16 %v5726
    %v6266 = vunpack.c.l.b16 %v5727
    %v6267 = vunpack.c.h.b16 %v5727
    %v6268 = vunpack.c.l.b16 %v5728
    %v6269 = vunpack.c.h.b16 %v5728
    %v6270 = vunpack.c.l.b16 %v5729
    %v6271 = vunpack.c.h.b16 %v5729
    %v6272 = vunpack.c.l.b16 %v5730
    %v6273 = vunpack.c.h.b16 %v5730
    %v6274 = vunpack.c.l.b16 %v5731
    %v6275 = vunpack.c.h.b16 %v5731
    %v6276 = vunpack.c.l.b16 %v5732
    %v6277 = vunpack.c.h.b16 %v5732
    %v6278 = vunpack.c.l.b16 %v5733
    %v6279 = vunpack.c.h.b16 %v5733
    %v6280 = vunpack.c.l.b16 %v5734
    %v6281 = vunpack.c.h.b16 %v5734
    %v6282 = vunpack.c.l.b16 %v5735
    %v6283 = vunpack.c.h.b16 %v5735
    %v6284 = vunpack.c.l.b16 %v5736
    %v6285 = vunpack.c.h.b16 %v5736
    %v6286 = vunpack.c.l.b16 %v5737
    %v6287 = vunpack.c.h.b16 %v5737
    %v6288 = vunpack.c.l.b16 %v5738
    %v6289 = vunpack.c.h.b16 %v5738
    %v6290 = vunpack.c.l.b16 %v5739
    %v6291 = vunpack.c.h.b16 %v5739
    %v6292 = vunpack.c.l.b16 %v5740
    %v6293 = vunpack.c.h.b16 %v5740
    %v6294 = vunpack.c.l.b16 %v5741
    %v6295 = vunpack.c.h.b16 %v5741
    %v6296 = vunpack.c.l.b16 %v5742
    %v6297 = vunpack.c.h.b16 %v5742
    %v6298 = vunpack.c.l.b16 %v5743
    %v6299 = vunpack.c.h.b16 %v5743
    %v6300 = vunpack.c.l.b16 %v5744
    %v6301 = vunpack.c.h.b16 %v5744
    %v6302 = vunpack.c.l.b16 %v5745
    %v6303 = vunpack.c.h.b16 %v5745
    %v6304 = vunpack.c.l.b16 %v5746
    %v6305 = vunpack.c.h.b16 %v5746
    %v6306 = vunpack.c.l.b16 %v5747
    %v6307 = vunpack.c.h.b16 %v5747
    %v6308 = vunpack.c.l.b16 %v5748
    %v6309 = vunpack.c.h.b16 %v5748
    %v6310 = vunpack.c.l.b16 %v5749
    %v6311 = vunpack.c.h.b16 %v5749
    %v6312 = vunpack.c.l.b16 %v5750
    %v6313 = vunpack.c.h.b16 %v5750
    %v6314 = vunpack.c.l.b16 %v5751
    %v6315 = vunpack.c.h.b16 %v5751
    %v6316 = vunpack.c.l.b16 %v5752
    %v6317 = vunpack.c.h.b16 %v5752
    %v6318 = vunpack.c.l.b16 %v5753
    %v6319 = vunpack.c.h.b16 %v5753
    %v6320 = vunpack.c.l.b16 %v5754
    %v6321 = vunpack.c.h.b16 %v5754
    %v6322 = vunpack.c.l.b16 %v5755
    %v6323 = vunpack.c.h.b16 %v5755
    %v6324 = vunpack.c.l.b16 %v5756
    %v6325 = vunpack.c.h.b16 %v5756
    %v6326 = vunpack.c.l.b16 %v5757
    %v6327 = vunpack.c.h.b16 %v5757
    %v6328 = vunpack.c.l.b16 %v5758
    %v6329 = vunpack.c.h.b16 %v5758
    %v6330 = vunpack.c.l.b16 %v5759
    %v6331 = vunpack.c.h.b16 %v5759
    %v6332 = vunpack.c.l.b16 %v5760
    %v6333 = vunpack.c.h.b16 %v5760
    %v6334 = vunpack.c.l.b16 %v5761
    %v6335 = vunpack.c.h.b16 %v5761
    %v6336 = vunpack.c.l.b16 %v5762
    %v6337 = vunpack.c.h.b16 %v5762
    %v6338 = vunpack.c.l.b16 %v5763
    %v6339 = vunpack.c.h.b16 %v5763
    %v6340 = vunpack.c.l.b16 %v5764
    %v6341 = vunpack.c.h.b16 %v5764
    %v6342 = vunpack.c.l.b16 %v5765
    %v6343 = vunpack.c.h.b16 %v5765
    %v6344 = vunpack.c.l.b16 %v5766
    %v6345 = vunpack.c.h.b16 %v5766
    %v6346 = vunpack.c.l.b16 %v5767
    %v6347 = vunpack.c.h.b16 %v5767
    %v6348 = vunpack.c.l.b16 %v5768
    %v6349 = vunpack.c.h.b16 %v5768
    %v6350 = vunpack.c.l.b16 %v5769
    %v6351 = vunpack.c.h.b16 %v5769
    %v6352 = vunpack.c.l.b16 %v5770
    %v6353 = vunpack.c.h.b16 %v5770
    %v6354 = vunpack.c.l.b16 %v5771
    %v6355 = vunpack.c.h.b16 %v5771
    %v6356 = vunpack.c.l.b16 %v5772
    %v6357 = vunpack.c.h.b16 %v5772
    %v6358 = vunpack.c.l.b16 %v5773
    %v6359 = vunpack.c.h.b16 %v5773
    %v6360 = vunpack.c.l.b16 %v5774
    %v6361 = vunpack.c.h.b16 %v5774
    %v6362 = vunpack.c.l.b16 %v5775
    %v6363 = vunpack.c.h.b16 %v5775
    %v6364 = vunpack.c.l.b16 %v5776
    %v6365 = vunpack.c.h.b16 %v5776
    %v6366 = vunpack.c.l.b16 %v5777
    %v6367 = vunpack.c.h.b16 %v5777
    %v6368 = vunpack.c.l.b16 %v5778
    %v6369 = vunpack.c.h.b16 %v5778
    %v6370 = vunpack.c.l.b16 %v5779
    %v6371 = vunpack.c.h.b16 %v5779
    %v6372 = vunpack.c.l.b16 %v5780
    %v6373 = vunpack.c.h.b16 %v5780
    %v6374 = vunpack.c.l.b16 %v5781
    %v6375 = vunpack.c.h.b16 %v5781
    %v6376 = vunpack.c.l.b16 %v5782
    %v6377 = vunpack.c.h.b16 %v5782
    %v6378 = vunpack.c.l.b16 %v5783
    %v6379 = vunpack.c.h.b16 %v5783
    %v6380 = vunpack.c.l.b16 %v5784
    %v6381 = vunpack.c.h.b16 %v5784
    %v6382 = vunpack.c.l.b16 %v5785
    %v6383 = vunpack.c.h.b16 %v5785
    %v6384 = vunpack.c.l.b16 %v5786
    %v6385 = vunpack.c.h.b16 %v5786
    %v6386 = vunpack.c.l.b16 %v5787
    %v6387 = vunpack.c.h.b16 %v5787
    %v6388 = vunpack.c.l.b16 %v5788
    %v6389 = vunpack.c.h.b16 %v5788
    %v6390 = vunpack.c.l.b16 %v5789
    %v6391 = vunpack.c.h.b16 %v5789
    %v6392 = vunpack.c.l.b16 %v5790
    %v6393 = vunpack.c.h.b16 %v5790
    %v6394 = vunpack.c.l.b16 %v5791
    %v6395 = vunpack.c.h.b16 %v5791
    %v6396 = vunpack.c.l.b16 %v5792
    %v6397 = vunpack.c.h.b16 %v5792
    %v6398 = vunpack.c.l.b16 %v5793
    %v6399 = vunpack.c.h.b16 %v5793
    %v6400 = vunpack.c.l.b16 %v5794
    %v6401 = vunpack.c.h.b16 %v5794
    %v6402 = vunpack.c.l.b16 %v5795
    %v6403 = vunpack.c.h.b16 %v5795
    %v6404 = vunpack.c.l.b16 %v5796
    %v6405 = vunpack.c.h.b16 %v5796
    %v6406 = vunpack.c.l.b16 %v5797
    %v6407 = vunpack.c.h.b16 %v5797
    %v6408 = vunpack.c.l.b16 %v5798
    %v6409 = vunpack.c.h.b16 %v5798
    %v6410 = vunpack.c.l.b16 %v5799
    %v6411 = vunpack.c.h.b16 %v5799
    %v6412 = vunpack.c.l.b16 %v5800
    %v6413 = vunpack.c.h.b16 %v5800
    %v6414 = vunpack.c.l.b16 %v5801
    %v6415 = vunpack.c.h.b16 %v5801
    %v6416 = vunpack.c.l.b16 %v5802
    %v6417 = vunpack.c.h.b16 %v5802
    %v6418 = vunpack.c.l.b16 %v5803
    %v6419 = vunpack.c.h.b16 %v5803
    %v6420 = vunpack.c.l.b16 %v5804
    %v6421 = vunpack.c.h.b16 %v5804
    %v6422 = vunpack.c.l.b16 %v5805
    %v6423 = vunpack.c.h.b16 %v5805
    %v6424 = vunpack.c.l.b16 %v5806
    %v6425 = vunpack.c.h.b16 %v5806
    %v6426 = vunpack.c.l.b16 %v5807
    %v6427 = vunpack.c.h.b16 %v5807
    %v6428 = vunpack.c.l.b16 %v5808
    %v6429 = vunpack.c.h.b16 %v5808
    %v6430 = vunpack.c.l.b16 %v5809
    %v6431 = vunpack.c.h.b16 %v5809
    %v6432 = vunpack.c.l.b16 %v5810
    %v6433 = vunpack.c.h.b16 %v5810
    %v6434 = vunpack.c.l.b16 %v5811
    %v6435 = vunpack.c.h.b16 %v5811
    %v6436 = vunpack.c.l.b16 %v5812
    %v6437 = vunpack.c.h.b16 %v5812
    %v6438 = vunpack.c.l.b16 %v5813
    %v6439 = vunpack.c.h.b16 %v5813
    %v6440 = vunpack.c.l.b16 %v5814
    %v6441 = vunpack.c.h.b16 %v5814
    %v6442 = vunpack.c.l.b16 %v5815
    %v6443 = vunpack.c.h.b16 %v5815
    %v6444 = vunpack.c.l.b16 %v5816
    %v6445 = vunpack.c.h.b16 %v5816
    %v6446 = vunpack.c.l.b16 %v5817
    %v6447 = vunpack.c.h.b16 %v5817
    %v6448 = vunpack.c.l.b16 %v5818
    %v6449 = vunpack.c.h.b16 %v5818
    %v6450 = vunpack.c.l.b16 %v5819
    %v6451 = vunpack.c.h.b16 %v5819
    %v6452 = vunpack.c.l.b16 %v5820
    %v6453 = vunpack.c.h.b16 %v5820
    %v6454 = vunpack.c.l.b16 %v5821
    %v6455 = vunpack.c.h.b16 %v5821
    %v6456 = vunpack.c.l.b16 %v5822
    %v6457 = vunpack.c.h.b16 %v5822
    %v6458 = vunpack.c.l.b16 %v5823
    %v6459 = vunpack.c.h.b16 %v5823
    %v6460 = vunpack.c.l.b16 %v5824
    %v6461 = vunpack.c.h.b16 %v5824
    %v6462 = vunpack.c.l.b16 %v5825
    %v6463 = vunpack.c.h.b16 %v5825
    %v6464 = vunpack.c.l.b16 %v5826
    %v6465 = vunpack.c.h.b16 %v5826
    %v6466 = vunpack.c.l.b16 %v5827
    %v6467 = vunpack.c.h.b16 %v5827
    %v6468 = vunpack.c.l.b16 %v5828
    %v6469 = vunpack.c.h.b16 %v5828
    %v6470 = vunpack.c.l.b16 %v5829
    %v6471 = vunpack.c.h.b16 %v5829
    %v6472 = vunpack.c.l.b16 %v5830
    %v6473 = vunpack.c.h.b16 %v5830
    %v6474 = vunpack.c.l.b16 %v5831
    %v6475 = vunpack.c.h.b16 %v5831
    %v6476 = vunpack.c.l.b16 %v5832
    %v6477 = vunpack.c.h.b16 %v5832
    %v6478 = vunpack.c.l.b16 %v5833
    %v6479 = vunpack.c.h.b16 %v5833
    %v6480 = vunpack.c.l.b16 %v5834
    %v6481 = vunpack.c.h.b16 %v5834
    %v6482 = vunpack.c.l.b16 %v5835
    %v6483 = vunpack.c.h.b16 %v5835
    %v6484 = vunpack.c.l.b16 %v5836
    %v6485 = vunpack.c.h.b16 %v5836
    %v6486 = vunpack.c.l.b16 %v5837
    %v6487 = vunpack.c.h.b16 %v5837
    %v6488 = vunpack.c.l.b16 %v5838
    %v6489 = vunpack.c.h.b16 %v5838
    %v6490 = vunpack.c.l.b16 %v5839
    %v6491 = vunpack.c.h.b16 %v5839
    %v6492 = vunpack.c.l.b16 %v5840
    %v6493 = vunpack.c.h.b16 %v5840
    %v6494 = vunpack.c.l.b16 %v5841
    %v6495 = vunpack.c.h.b16 %v5841
    %v6496 = vunpack.c.l.b16 %v5842
    %v6497 = vunpack.c.h.b16 %v5842
    %v6498 = vunpack.c.l.b16 %v5843
    %v6499 = vunpack.c.h.b16 %v5843
    %v6500 = vunpack.c.l.b16 %v5844
    %v6501 = vunpack.c.h.b16 %v5844
    %v6502 = vunpack.c.l.b16 %v5845
    %v6503 = vunpack.c.h.b16 %v5845
    %v6504 = vunpack.c.l.b16 %v5846
    %v6505 = vunpack.c.h.b16 %v5846
    %v6506 = vunpack.c.l.b16 %v5847
    %v6507 = vunpack.c.h.b16 %v5847
    %v6508 = vunpack.c.l.b16 %v5848
    %v6509 = vunpack.c.h.b16 %v5848
    %v6510 = vunpack.c.l.b16 %v5849
    %v6511 = vunpack.c.h.b16 %v5849
    %v6512 = vunpack.c.l.b16 %v5850
    %v6513 = vunpack.c.h.b16 %v5850
    %v6514 = vunpack.c.l.b16 %v5851
    %v6515 = vunpack.c.h.b16 %v5851
    %v6516 = vunpack.c.l.b16 %v5852
    %v6517 = vunpack.c.h.b16 %v5852
    %v6518 = vunpack.c.l.b16 %v5853
    %v6519 = vunpack.c.h.b16 %v5853
    %v6520 = vunpack.c.l.b16 %v5854
    %v6521 = vunpack.c.h.b16 %v5854
    %v6522 = vunpack.c.l.b16 %v5855
    %v6523 = vunpack.c.h.b16 %v5855
    %v6524 = vunpack.c.l.b16 %v5856
    %v6525 = vunpack.c.h.b16 %v5856
    %v6526 = vunpack.c.l.b16 %v5857
    %v6527 = vunpack.c.h.b16 %v5857
    %v6528 = vunpack.c.l.b16 %v5858
    %v6529 = vunpack.c.h.b16 %v5858
    %v6530 = vunpack.c.l.b16 %v5859
    %v6531 = vunpack.c.h.b16 %v5859
    %v6532 = vpack.c.b16 %v6088, %v6084
    %v6533 = vpack.c.b16 %v6089, %v6085
    %v6534 = vpack.c.b16 %v6090, %v6086
    %v6535 = vpack.c.b16 %v6091, %v6087
    %v6536 = vpack.c.b16 %v6096, %v6092
    %v6537 = vpack.c.b16 %v6097, %v6093
    %v6538 = vpack.c.b16 %v6098, %v6094
    %v6539 = vpack.c.b16 %v6099, %v6095
    %v6540 = vpack.c.b16 %v6104, %v6100
    %v6541 = vpack.c.b16 %v6105, %v6101
    %v6542 = vpack.c.b16 %v6106, %v6102
    %v6543 = vpack.c.b16 %v6107, %v6103
    %v6544 = vpack.c.b16 %v6112, %v6108
    %v6545 = vpack.c.b16 %v6113, %v6109
    %v6546 = vpack.c.b16 %v6114, %v6110
    %v6547 = vpack.c.b16 %v6115, %v6111
    %v6548 = vpack.c.b16 %v6120, %v6116
    %v6549 = vpack.c.b16 %v6121, %v6117
    %v6550 = vpack.c.b16 %v6122, %v6118
    %v6551 = vpack.c.b16 %v6123, %v6119
    %v6552 = vpack.c.b16 %v6128, %v6124
    %v6553 = vpack.c.b16 %v6129, %v6125
    %v6554 = vpack.c.b16 %v6130, %v6126
    %v6555 = vpack.c.b16 %v6131, %v6127
    %v6556 = vpack.c.b16 %v6136, %v6132
    %v6557 = vpack.c.b16 %v6137, %v6133
    %v6558 = vpack.c.b16 %v6138, %v6134
    %v6559 = vpack.c.b16 %v6139, %v6135
    %v6560 = vpack.c.b16 %v6144, %v6140
    %v6561 = vpack.c.b16 %v6145, %v6141
    %v6562 = vpack.c.b16 %v6146, %v6142
    %v6563 = vpack.c.b16 %v6147, %v6143
    %v6564 = vpack.c.b16 %v6152, %v6148
    %v6565 = vpack.c.b16 %v6153, %v6149
    %v6566 = vpack.c.b16 %v6154, %v6150
    %v6567 = vpack.c.b16 %v6155, %v6151
    %v6568 = vpack.c.b16 %v6160, %v6156
    %v6569 = vpack.c.b16 %v6161, %v6157
    %v6570 = vpack.c.b16 %v6162, %v6158
    %v6571 = vpack.c.b16 %v6163, %v6159
    %v6572 = vpack.c.b16 %v6168, %v6164
    %v6573 = vpack.c.b16 %v6169, %v6165
    %v6574 = vpack.c.b16 %v6170, %v6166
    %v6575 = vpack.c.b16 %v6171, %v6167
    %v6576 = vpack.c.b16 %v6176, %v6172
    %v6577 = vpack.c.b16 %v6177, %v6173
    %v6578 = vpack.c.b16 %v6178, %v6174
    %v6579 = vpack.c.b16 %v6179, %v6175
    %v6580 = vpack.c.b16 %v6184, %v6180
    %v6581 = vpack.c.b16 %v6185, %v6181
    %v6582 = vpack.c.b16 %v6186, %v6182
    %v6583 = vpack.c.b16 %v6187, %v6183
    %v6584 = vpack.c.b16 %v6192, %v6188
    %v6585 = vpack.c.b16 %v6193, %v6189
    %v6586 = vpack.c.b16 %v6194, %v6190
    %v6587 = vpack.c.b16 %v6195, %v6191
    %v6588 = vpack.c.b16 %v6200, %v6196
    %v6589 = vpack.c.b16 %v6201, %v6197
    %v6590 = vpack.c.b16 %v6202, %v6198
    %v6591 = vpack.c.b16 %v6203, %v6199
    %v6592 = vpack.c.b16 %v6208, %v6204
    %v6593 = vpack.c.b16 %v6209, %v6205
    %v6594 = vpack.c.b16 %v6210, %v6206
    %v6595 = vpack.c.b16 %v6211, %v6207
    %v6596 = vpack.c.b16 %v6216, %v6212
    %v6597 = vpack.c.b16 %v6217, %v6213
    %v6598 = vpack.c.b16 %v6218, %v6214
    %v6599 = vpack.c.b16 %v6219, %v6215
    %v6600 = vpack.c.b16 %v6224, %v6220
    %v6601 = vpack.c.b16 %v6225, %v6221
    %v6602 = vpack.c.b16 %v6226, %v6222
    %v6603 = vpack.c.b16 %v6227, %v6223
    %v6604 = vpack.c.b16 %v6232, %v6228
    %v6605 = vpack.c.b16 %v6233, %v6229
    %v6606 = vpack.c.b16 %v6234, %v6230
    %v6607 = vpack.c.b16 %v6235, %v6231
    %v6608 = vpack.c.b16 %v6240, %v6236
    %v6609 = vpack.c.b16 %v6241, %v6237
    %v6610 = vpack.c.b16 %v6242, %v6238
    %v6611 = vpack.c.b16 %v6243, %v6239
    %v6612 = vpack.c.b16 %v6248, %v6244
    %v6613 = vpack.c.b16 %v6249, %v6245
    %v6614 = vpack.c.b16 %v6250, %v6246
    %v6615 = vpack.c.b16 %v6251, %v6247
    %v6616 = vpack.c.b16 %v6256, %v6252
    %v6617 = vpack.c.b16 %v6257, %v6253
    %v6618 = vpack.c.b16 %v6258, %v6254
    %v6619 = vpack.c.b16 %v6259, %v6255
    %v6620 = vpack.c.b16 %v6264, %v6260
    %v6621 = vpack.c.b16 %v6265, %v6261
    %v6622 = vpack.c.b16 %v6266, %v6262
    %v6623 = vpack.c.b16 %v6267, %v6263
    %v6624 = vpack.c.b16 %v6272, %v6268
    %v6625 = vpack.c.b16 %v6273, %v6269
    %v6626 = vpack.c.b16 %v6274, %v6270
    %v6627 = vpack.c.b16 %v6275, %v6271
    %v6628 = vpack.c.b16 %v6280, %v6276
    %v6629 = vpack.c.b16 %v6281, %v6277
    %v6630 = vpack.c.b16 %v6282, %v6278
    %v6631 = vpack.c.b16 %v6283, %v6279
    %v6632 = vpack.c.b16 %v6288, %v6284
    %v6633 = vpack.c.b16 %v6289, %v6285
    %v6634 = vpack.c.b16 %v6290, %v6286
    %v6635 = vpack.c.b16 %v6291, %v6287
    %v6636 = vpack.c.b16 %v6296, %v6292
    %v6637 = vpack.c.b16 %v6297, %v6293
    %v6638 = vpack.c.b16 %v6298, %v6294
    %v6639 = vpack.c.b16 %v6299, %v6295
    %v6640 = vpack.c.b16 %v6304, %v6300
    %v6641 = vpack.c.b16 %v6305, %v6301
    %v6642 = vpack.c.b16 %v6306, %v6302
    %v6643 = vpack.c.b16 %v6307, %v6303
    %v6644 = vpack.c.b16 %v6312, %v6308
    %v6645 = vpack.c.b16 %v6313, %v6309
    %v6646 = vpack.c.b16 %v6314, %v6310
    %v6647 = vpack.c.b16 %v6315, %v6311
    %v6648 = vpack.c.b16 %v6320, %v6316
    %v6649 = vpack.c.b16 %v6321, %v6317
    %v6650 = vpack.c.b16 %v6322, %v6318
    %v6651 = vpack.c.b16 %v6323, %v6319
    %v6652 = vpack.c.b16 %v6328, %v6324
    %v6653 = vpack.c.b16 %v6329, %v6325
    %v6654 = vpack.c.b16 %v6330, %v6326
    %v6655 = vpack.c.b16 %v6331, %v6327
    %v6656 = vpack.c.b16 %v6336, %v6332
    %v6657 = vpack.c.b16 %v6337, %v6333
    %v6658 = vpack.c.b16 %v6338, %v6334
    %v6659 = vpack.c.b16 %v6339, %v6335
    %v6660 = vpack.c.b16 %v6344, %v6340
    %v6661 = vpack.c.b16 %v6345, %v6341
    %v6662 = vpack.c.b16 %v6346, %v6342
    %v6663 = vpack.c.b16 %v6347, %v6343
    %v6664 = vpack.c.b16 %v6352, %v6348
    %v6665 = vpack.c.b16 %v6353, %v6349
    %v6666 = vpack.c.b16 %v6354, %v6350
    %v6667 = vpack.c.b16 %v6355, %v6351
    %v6668 = vpack.c.b16 %v6360, %v6356
    %v6669 = vpack.c.b16 %v6361, %v6357
    %v6670 = vpack.c.b16 %v6362, %v6358
    %v6671 = vpack.c.b16 %v6363, %v6359
    %v6672 = vpack.c.b16 %v6368, %v6364
    %v6673 = vpack.c.b16 %v6369, %v6365
    %v6674 = vpack.c.b16 %v6370, %v6366
    %v6675 = vpack.c.b16 %v6371, %v6367
    %v6676 = vpack.c.b16 %v6376, %v6372
    %v6677 = vpack.c.b16 %v6377, %v6373
    %v6678 = vpack.c.b16 %v6378, %v6374
    %v6679 = vpack.c.b16 %v6379, %v6375
    %v6680 = vpack.c.b16 %v6384, %v6380
    %v6681 = vpack.c.b16 %v6385, %v6381
    %v6682 = vpack.c.b16 %v6386, %v6382
    %v6683 = vpack.c.b16 %v6387, %v6383
    %v6684 = vpack.c.b16 %v6392, %v6388
    %v6685 = vpack.c.b16 %v6393, %v6389
    %v6686 = vpack.c.b16 %v6394, %v6390
    %v6687 = vpack.c.b16 %v6395, %v6391
    %v6688 = vpack.c.b16 %v6400, %v6396
    %v6689 = vpack.c.b16 %v6401, %v6397
    %v6690 = vpack.c.b16 %v6402, %v6398
    %v6691 = vpack.c.b16 %v6403, %v6399
    %v6692 = vpack.c.b16 %v6408, %v6404
    %v6693 = vpack.c.b16 %v6409, %v6405
    %v6694 = vpack.c.b16 %v6410, %v6406
    %v6695 = vpack.c.b16 %v6411, %v6407
    %v6696 = vpack.c.b16 %v6416, %v6412
    %v6697 = vpack.c.b16 %v6417, %v6413
    %v6698 = vpack.c.b16 %v6418, %v6414
    %v6699 = vpack.c.b16 %v6419, %v6415
    %v6700 = vpack.c.b16 %v6424, %v6420
    %v6701 = vpack.c.b16 %v6425, %v6421
    %v6702 = vpack.c.b16 %v6426, %v6422
    %v6703 = vpack.c.b16 %v6427, %v6423
    %v6704 = vpack.c.b16 %v6432, %v6428
    %v6705 = vpack.c.b16 %v6433, %v6429
    %v6706 = vpack.c.b16 %v6434, %v6430
    %v6707 = vpack.c.b16 %v6435, %v6431
    %v6708 = vpack.c.b16 %v6440, %v6436
    %v6709 = vpack.c.b16 %v6441, %v6437
    %v6710 = vpack.c.b16 %v6442, %v6438
    %v6711 = vpack.c.b16 %v6443, %v6439
    %v6712 = vpack.c.b16 %v6448, %v6444
    %v6713 = vpack.c.b16 %v6449, %v6445
    %v6714 = vpack.c.b16 %v6450, %v6446
    %v6715 = vpack.c.b16 %v6451, %v6447
    %v6716 = vpack.c.b16 %v6456, %v6452
    %v6717 = vpack.c.b16 %v6457, %v6453
    %v6718 = vpack.c.b16 %v6458, %v6454
    %v6719 = vpack.c.b16 %v6459, %v6455
    %v6720 = vpack.c.b16 %v6464, %v6460
    %v6721 = vpack.c.b16 %v6465, %v6461
    %v6722 = vpack.c.b16 %v6466, %v6462
    %v6723 = vpack.c.b16 %v6467, %v6463
    %v6724 = vpack.c.b16 %v6472, %v6468
    %v6725 = vpack.c.b16 %v6473, %v6469
    %v6726 = vpack.c.b16 %v6474, %v6470
    %v6727 = vpack.c.b16 %v6475, %v6471
    %v6728 = vpack.c.b16 %v6480, %v6476
    %v6729 = vpack.c.b16 %v6481, %v6477
    %v6730 = vpack.c.b16 %v6482, %v6478
    %v6731 = vpack.c.b16 %v6483, %v6479
    %v6732 = vpack.c.b16 %v6488, %v6484
    %v6733 = vpack.c.b16 %v6489, %v6485
    %v6734 = vpack.c.b16 %v6490, %v6486
    %v6735 = vpack.c.b16 %v6491, %v6487
    %v6736 = vpack.c.b16 %v6496, %v6492
    %v6737 = vpack.c.b16 %v6497, %v6493
    %v6738 = vpack.c.b16 %v6498, %v6494
    %v6739 = vpack.c.b16 %v6499, %v6495
    %v6740 = vpack.c.b16 %v6504, %v6500
    %v6741 = vpack.c.b16 %v6505, %v6501
    %v6742 = vpack.c.b16 %v6506, %v6502
    %v6743 = vpack.c.b16 %v6507, %v6503
    %v6744 = vpack.c.b16 %v6512, %v6508
    %v6745 = vpack.c.b16 %v6513, %v6509
    %v6746 = vpack.c.b16 %v6514, %v6510
    %v6747 = vpack.c.b16 %v6515, %v6511
    %v6748 = vpack.c.b16 %v6520, %v6516
    %v6749 = vpack.c.b16 %v6521, %v6517
    %v6750 = vpack.c.b16 %v6522, %v6518
    %v6751 = vpack.c.b16 %v6523, %v6519
    %v6752 = vpack.c.b16 %v6528, %v6524
    %v6753 = vpack.c.b16 %v6529, %v6525
    %v6754 = vpack.c.b16 %v6530, %v6526
    %v6755 = vpack.c.b16 %v6531, %v6527
    %6980 = vmatpush.bf16.msra.mxu0 %v6560
    %6981 = vmatpush.bf16.msra.mxu0 %v6556
    %6982 = vmatpush.bf16.msra.mxu0 %v6552
    %6983 = vmatpush.bf16.msra.mxu0 %v6548
    %6984 = vmatpush.bf16.msra.mxu0 %v6544
    %6985 = vmatpush.bf16.msra.mxu0 %v6540
    %6986 = vmatpush.bf16.msra.mxu0 %v6536
    %6987 = vmatpush.bf16.msra.mxu0 %v6532
    %6988 = vmatmul.bf16.gmra.mxu0 %v5629
    %v6989 = vpop.f32.mrf.mxu0
    %v6990 = vadd.f32 0.0, %v6989
    %v6991 = vpop.f32.mrf.mxu0
    %6992 = vdwg.mxu0
    %6993 = vmatpush.bf16.msra.mxu0 %v6592
    %6994 = vmatpush.bf16.msra.mxu0 %v6588
    %6995 = vmatpush.bf16.msra.mxu0 %v6584
    %6996 = vmatpush.bf16.msra.mxu0 %v6580
    %6997 = vmatpush.bf16.msra.mxu0 %v6576
    %6998 = vmatpush.bf16.msra.mxu0 %v6572
    %6999 = vmatpush.bf16.msra.mxu0 %v6568
    %7000 = vmatpush.bf16.msra.mxu0 %v6564
    %7001 = vmatmul.bf16.gmra.mxu0 %v5630
    %v7002 = vpop.f32.mrf.mxu0
    %v7003 = vadd.f32 %v6990, %v7002
    %v7004 = vpop.f32.mrf.mxu0
    %7005 = vdwg.mxu0
    %7006 = vmatpush.bf16.msra.mxu0 %v6624
    %7007 = vmatpush.bf16.msra.mxu0 %v6620
    %7008 = vmatpush.bf16.msra.mxu0 %v6616
    %7009 = vmatpush.bf16.msra.mxu0 %v6612
    %7010 = vmatpush.bf16.msra.mxu0 %v6608
    %7011 = vmatpush.bf16.msra.mxu0 %v6604
    %7012 = vmatpush.bf16.msra.mxu0 %v6600
    %7013 = vmatpush.bf16.msra.mxu0 %v6596
    %7014 = vmatmul.bf16.gmra.mxu0 %v5631
    %v7015 = vpop.f32.mrf.mxu0
    %v7016 = vadd.f32 %v7003, %v7015
    %v7017 = vpop.f32.mrf.mxu0
    %7018 = vdwg.mxu0
    %7019 = vmatpush.bf16.msra.mxu0 %v6656
    %7020 = vmatpush.bf16.msra.mxu0 %v6652
    %7021 = vmatpush.bf16.msra.mxu0 %v6648
    %7022 = vmatpush.bf16.msra.mxu0 %v6644
    %7023 = vmatpush.bf16.msra.mxu0 %v6640
    %7024 = vmatpush.bf16.msra.mxu0 %v6636
    %7025 = vmatpush.bf16.msra.mxu0 %v6632
    %7026 = vmatpush.bf16.msra.mxu0 %v6628
    %7027 = vmatmul.bf16.gmra.mxu0 %v5632
    %v7028 = vpop.f32.mrf.mxu0
    %v7029 = vadd.f32 %v7016, %v7028
    %v7030 = vpop.f32.mrf.mxu0
    %7031 = vdwg.mxu0
    %7032 = vmatpush.bf16.msra.mxu0 %v6688
    %7033 = vmatpush.bf16.msra.mxu0 %v6684
    %7034 = vmatpush.bf16.msra.mxu0 %v6680
    %7035 = vmatpush.bf16.msra.mxu0 %v6676
    %7036 = vmatpush.bf16.msra.mxu0 %v6672
    %7037 = vmatpush.bf16.msra.mxu0 %v6668
    %7038 = vmatpush.bf16.msra.mxu0 %v6664
    %7039 = vmatpush.bf16.msra.mxu0 %v6660
    %7040 = vmatmul.bf16.gmra.mxu0 %v5633
    %v7041 = vpop.f32.mrf.mxu0
    %v7042 = vadd.f32 %v7029, %v7041
    %v7043 = vpop.f32.mrf.mxu0
    %7044 = vdwg.mxu0
    %7045 = vmatpush.bf16.msra.mxu0 %v6720
    %7046 = vmatpush.bf16.msra.mxu0 %v6716
    %7047 = vmatpush.bf16.msra.mxu0 %v6712
    %7048 = vmatpush.bf16.msra.mxu0 %v6708
    %7049 = vmatpush.bf16.msra.mxu0 %v6704
    %7050 = vmatpush.bf16.msra.mxu0 %v6700
    %7051 = vmatpush.bf16.msra.mxu0 %v6696
    %7052 = vmatpush.bf16.msra.mxu0 %v6692
    %7053 = vmatmul.bf16.gmra.mxu0 %v5634
    %v7054 = vpop.f32.mrf.mxu0
    %v7055 = vadd.f32 %v7042, %v7054
    %v7056 = vpop.f32.mrf.mxu0
    %7057 = vdwg.mxu0
    %7058 = vmatpush.bf16.msra.mxu0 %v6752
    %7059 = vmatpush.bf16.msra.mxu0 %v6748
    %7060 = vmatpush.bf16.msra.mxu0 %v6744
    %7061 = vmatpush.bf16.msra.mxu0 %v6740
    %7062 = vmatpush.bf16.msra.mxu0 %v6736
    %7063 = vmatpush.bf16.msra.mxu0 %v6732
    %7064 = vmatpush.bf16.msra.mxu0 %v6728
    %7065 = vmatpush.bf16.msra.mxu0 %v6724
    %7066 = vmatmul.bf16.gmra.mxu0 %v5635
    %v7067 = vpop.f32.mrf.mxu0
    %v7068 = vadd.f32 %v7055, %v7067
    %v7069 = vpop.f32.mrf.mxu0
    %7070 = vdwg.mxu0
    %7071 = vmatpush.bf16.msra.mxu0 %v6561
    %7072 = vmatpush.bf16.msra.mxu0 %v6557
    %7073 = vmatpush.bf16.msra.mxu0 %v6553
    %7074 = vmatpush.bf16.msra.mxu0 %v6549
    %7075 = vmatpush.bf16.msra.mxu0 %v6545
    %7076 = vmatpush.bf16.msra.mxu0 %v6541
    %7077 = vmatpush.bf16.msra.mxu0 %v6537
    %7078 = vmatpush.bf16.msra.mxu0 %v6533
    %7079 = vmatmul.bf16.gmra.mxu0 %v5629
    %v7080 = vpop.f32.mrf.mxu0
    %v7081 = vadd.f32 0.0, %v7080
    %v7082 = vpop.f32.mrf.mxu0
    %7083 = vdwg.mxu0
    %7084 = vmatpush.bf16.msra.mxu0 %v6593
    %7085 = vmatpush.bf16.msra.mxu0 %v6589
    %7086 = vmatpush.bf16.msra.mxu0 %v6585
    %7087 = vmatpush.bf16.msra.mxu0 %v6581
    %7088 = vmatpush.bf16.msra.mxu0 %v6577
    %7089 = vmatpush.bf16.msra.mxu0 %v6573
    %7090 = vmatpush.bf16.msra.mxu0 %v6569
    %7091 = vmatpush.bf16.msra.mxu0 %v6565
    %7092 = vmatmul.bf16.gmra.mxu0 %v5630
    %v7093 = vpop.f32.mrf.mxu0
    %v7094 = vadd.f32 %v7081, %v7093
    %v7095 = vpop.f32.mrf.mxu0
    %7096 = vdwg.mxu0
    %7097 = vmatpush.bf16.msra.mxu0 %v6625
    %7098 = vmatpush.bf16.msra.mxu0 %v6621
    %7099 = vmatpush.bf16.msra.mxu0 %v6617
    %7100 = vmatpush.bf16.msra.mxu0 %v6613
    %7101 = vmatpush.bf16.msra.mxu0 %v6609
    %7102 = vmatpush.bf16.msra.mxu0 %v6605
    %7103 = vmatpush.bf16.msra.mxu0 %v6601
    %7104 = vmatpush.bf16.msra.mxu0 %v6597
    %7105 = vmatmul.bf16.gmra.mxu0 %v5631
    %v7106 = vpop.f32.mrf.mxu0
    %v7107 = vadd.f32 %v7094, %v7106
    %v7108 = vpop.f32.mrf.mxu0
    %7109 = vdwg.mxu0
    %7110 = vmatpush.bf16.msra.mxu0 %v6657
    %7111 = vmatpush.bf16.msra.mxu0 %v6653
    %7112 = vmatpush.bf16.msra.mxu0 %v6649
    %7113 = vmatpush.bf16.msra.mxu0 %v6645
    %7114 = vmatpush.bf16.msra.mxu0 %v6641
    %7115 = vmatpush.bf16.msra.mxu0 %v6637
    %7116 = vmatpush.bf16.msra.mxu0 %v6633
    %7117 = vmatpush.bf16.msra.mxu0 %v6629
    %7118 = vmatmul.bf16.gmra.mxu0 %v5632
    %v7119 = vpop.f32.mrf.mxu0
    %v7120 = vadd.f32 %v7107, %v7119
    %v7121 = vpop.f32.mrf.mxu0
    %7122 = vdwg.mxu0
    %7123 = vmatpush.bf16.msra.mxu0 %v6689
    %7124 = vmatpush.bf16.msra.mxu0 %v6685
    %7125 = vmatpush.bf16.msra.mxu0 %v6681
    %7126 = vmatpush.bf16.msra.mxu0 %v6677
    %7127 = vmatpush.bf16.msra.mxu0 %v6673
    %7128 = vmatpush.bf16.msra.mxu0 %v6669
    %7129 = vmatpush.bf16.msra.mxu0 %v6665
    %7130 = vmatpush.bf16.msra.mxu0 %v6661
    %7131 = vmatmul.bf16.gmra.mxu0 %v5633
    %v7132 = vpop.f32.mrf.mxu0
    %v7133 = vadd.f32 %v7120, %v7132
    %v7134 = vpop.f32.mrf.mxu0
    %7135 = vdwg.mxu0
    %7136 = vmatpush.bf16.msra.mxu0 %v6721
    %7137 = vmatpush.bf16.msra.mxu0 %v6717
    %7138 = vmatpush.bf16.msra.mxu0 %v6713
    %7139 = vmatpush.bf16.msra.mxu0 %v6709
    %7140 = vmatpush.bf16.msra.mxu0 %v6705
    %7141 = vmatpush.bf16.msra.mxu0 %v6701
    %7142 = vmatpush.bf16.msra.mxu0 %v6697
    %7143 = vmatpush.bf16.msra.mxu0 %v6693
    %7144 = vmatmul.bf16.gmra.mxu0 %v5634
    %v7145 = vpop.f32.mrf.mxu0
    %v7146 = vadd.f32 %v7133, %v7145
    %v7147 = vpop.f32.mrf.mxu0
    %7148 = vdwg.mxu0
    %7149 = vmatpush.bf16.msra.mxu0 %v6753
    %7150 = vmatpush.bf16.msra.mxu0 %v6749
    %7151 = vmatpush.bf16.msra.mxu0 %v6745
    %7152 = vmatpush.bf16.msra.mxu0 %v6741
    %7153 = vmatpush.bf16.msra.mxu0 %v6737
    %7154 = vmatpush.bf16.msra.mxu0 %v6733
    %7155 = vmatpush.bf16.msra.mxu0 %v6729
    %7156 = vmatpush.bf16.msra.mxu0 %v6725
    %7157 = vmatmul.bf16.gmra.mxu0 %v5635
    %v7158 = vpop.f32.mrf.mxu0
    %v7159 = vadd.f32 %v7146, %v7158
    %v7160 = vpop.f32.mrf.mxu0
    %7161 = vdwg.mxu0
    %7162 = vmatpush.bf16.msra.mxu0 %v6562
    %7163 = vmatpush.bf16.msra.mxu0 %v6558
    %7164 = vmatpush.bf16.msra.mxu0 %v6554
    %7165 = vmatpush.bf16.msra.mxu0 %v6550
    %7166 = vmatpush.bf16.msra.mxu0 %v6546
    %7167 = vmatpush.bf16.msra.mxu0 %v6542
    %7168 = vmatpush.bf16.msra.mxu0 %v6538
    %7169 = vmatpush.bf16.msra.mxu0 %v6534
    %7170 = vmatmul.bf16.gmra.mxu0 %v5629
    %v7171 = vpop.f32.mrf.mxu0
    %v7172 = vadd.f32 0.0, %v7171
    %v7173 = vpop.f32.mrf.mxu0
    %7174 = vdwg.mxu0
    %7175 = vmatpush.bf16.msra.mxu0 %v6594
    %7176 = vmatpush.bf16.msra.mxu0 %v6590
    %7177 = vmatpush.bf16.msra.mxu0 %v6586
    %7178 = vmatpush.bf16.msra.mxu0 %v6582
    %7179 = vmatpush.bf16.msra.mxu0 %v6578
    %7180 = vmatpush.bf16.msra.mxu0 %v6574
    %7181 = vmatpush.bf16.msra.mxu0 %v6570
    %7182 = vmatpush.bf16.msra.mxu0 %v6566
    %7183 = vmatmul.bf16.gmra.mxu0 %v5630
    %v7184 = vpop.f32.mrf.mxu0
    %v7185 = vadd.f32 %v7172, %v7184
    %v7186 = vpop.f32.mrf.mxu0
    %7187 = vdwg.mxu0
    %7188 = vmatpush.bf16.msra.mxu0 %v6626
    %7189 = vmatpush.bf16.msra.mxu0 %v6622
    %7190 = vmatpush.bf16.msra.mxu0 %v6618
    %7191 = vmatpush.bf16.msra.mxu0 %v6614
    %7192 = vmatpush.bf16.msra.mxu0 %v6610
    %7193 = vmatpush.bf16.msra.mxu0 %v6606
    %7194 = vmatpush.bf16.msra.mxu0 %v6602
    %7195 = vmatpush.bf16.msra.mxu0 %v6598
    %7196 = vmatmul.bf16.gmra.mxu0 %v5631
    %v7197 = vpop.f32.mrf.mxu0
    %v7198 = vadd.f32 %v7185, %v7197
    %v7199 = vpop.f32.mrf.mxu0
    %7200 = vdwg.mxu0
    %7201 = vmatpush.bf16.msra.mxu0 %v6658
    %7202 = vmatpush.bf16.msra.mxu0 %v6654
    %7203 = vmatpush.bf16.msra.mxu0 %v6650
    %7204 = vmatpush.bf16.msra.mxu0 %v6646
    %7205 = vmatpush.bf16.msra.mxu0 %v6642
    %7206 = vmatpush.bf16.msra.mxu0 %v6638
    %7207 = vmatpush.bf16.msra.mxu0 %v6634
    %7208 = vmatpush.bf16.msra.mxu0 %v6630
    %7209 = vmatmul.bf16.gmra.mxu0 %v5632
    %v7210 = vpop.f32.mrf.mxu0
    %v7211 = vadd.f32 %v7198, %v7210
    %v7212 = vpop.f32.mrf.mxu0
    %7213 = vdwg.mxu0
    %7214 = vmatpush.bf16.msra.mxu0 %v6690
    %7215 = vmatpush.bf16.msra.mxu0 %v6686
    %7216 = vmatpush.bf16.msra.mxu0 %v6682
    %7217 = vmatpush.bf16.msra.mxu0 %v6678
    %7218 = vmatpush.bf16.msra.mxu0 %v6674
    %7219 = vmatpush.bf16.msra.mxu0 %v6670
    %7220 = vmatpush.bf16.msra.mxu0 %v6666
    %7221 = vmatpush.bf16.msra.mxu0 %v6662
    %7222 = vmatmul.bf16.gmra.mxu0 %v5633
    %v7223 = vpop.f32.mrf.mxu0
    %v7224 = vadd.f32 %v7211, %v7223
    %v7225 = vpop.f32.mrf.mxu0
    %7226 = vdwg.mxu0
    %7227 = vmatpush.bf16.msra.mxu0 %v6722
    %7228 = vmatpush.bf16.msra.mxu0 %v6718
    %7229 = vmatpush.bf16.msra.mxu0 %v6714
    %7230 = vmatpush.bf16.msra.mxu0 %v6710
    %7231 = vmatpush.bf16.msra.mxu0 %v6706
    %7232 = vmatpush.bf16.msra.mxu0 %v6702
    %7233 = vmatpush.bf16.msra.mxu0 %v6698
    %7234 = vmatpush.bf16.msra.mxu0 %v6694
    %7235 = vmatmul.bf16.gmra.mxu0 %v5634
    %v7236 = vpop.f32.mrf.mxu0
    %v7237 = vadd.f32 %v7224, %v7236
    %v7238 = vpop.f32.mrf.mxu0
    %7239 = vdwg.mxu0
    %7240 = vmatpush.bf16.msra.mxu0 %v6754
    %7241 = vmatpush.bf16.msra.mxu0 %v6750
    %7242 = vmatpush.bf16.msra.mxu0 %v6746
    %7243 = vmatpush.bf16.msra.mxu0 %v6742
    %7244 = vmatpush.bf16.msra.mxu0 %v6738
    %7245 = vmatpush.bf16.msra.mxu0 %v6734
    %7246 = vmatpush.bf16.msra.mxu0 %v6730
    %7247 = vmatpush.bf16.msra.mxu0 %v6726
    %7248 = vmatmul.bf16.gmra.mxu0 %v5635
    %v7249 = vpop.f32.mrf.mxu0
    %v7250 = vadd.f32 %v7237, %v7249
    %v7251 = vpop.f32.mrf.mxu0
    %7252 = vdwg.mxu0
    %7253 = vmatpush.bf16.msra.mxu0 %v6563
    %7254 = vmatpush.bf16.msra.mxu0 %v6559
    %7255 = vmatpush.bf16.msra.mxu0 %v6555
    %7256 = vmatpush.bf16.msra.mxu0 %v6551
    %7257 = vmatpush.bf16.msra.mxu0 %v6547
    %7258 = vmatpush.bf16.msra.mxu0 %v6543
    %7259 = vmatpush.bf16.msra.mxu0 %v6539
    %7260 = vmatpush.bf16.msra.mxu0 %v6535
    %7261 = vmatmul.bf16.gmra.mxu0 %v5629
    %v7262 = vpop.f32.mrf.mxu0
    %v7263 = vadd.f32 0.0, %v7262
    %v7264 = vpop.f32.mrf.mxu0
    %7265 = vdwg.mxu0
    %7266 = vmatpush.bf16.msra.mxu0 %v6595
    %7267 = vmatpush.bf16.msra.mxu0 %v6591
    %7268 = vmatpush.bf16.msra.mxu0 %v6587
    %7269 = vmatpush.bf16.msra.mxu0 %v6583
    %7270 = vmatpush.bf16.msra.mxu0 %v6579
    %7271 = vmatpush.bf16.msra.mxu0 %v6575
    %7272 = vmatpush.bf16.msra.mxu0 %v6571
    %7273 = vmatpush.bf16.msra.mxu0 %v6567
    %7274 = vmatmul.bf16.gmra.mxu0 %v5630
    %v7275 = vpop.f32.mrf.mxu0
    %v7276 = vadd.f32 %v7263, %v7275
    %v7277 = vpop.f32.mrf.mxu0
    %7278 = vdwg.mxu0
    %7279 = vmatpush.bf16.msra.mxu0 %v6627
    %7280 = vmatpush.bf16.msra.mxu0 %v6623
    %7281 = vmatpush.bf16.msra.mxu0 %v6619
    %7282 = vmatpush.bf16.msra.mxu0 %v6615
    %7283 = vmatpush.bf16.msra.mxu0 %v6611
    %7284 = vmatpush.bf16.msra.mxu0 %v6607
    %7285 = vmatpush.bf16.msra.mxu0 %v6603
    %7286 = vmatpush.bf16.msra.mxu0 %v6599
    %7287 = vmatmul.bf16.gmra.mxu0 %v5631
    %v7288 = vpop.f32.mrf.mxu0
    %v7289 = vadd.f32 %v7276, %v7288
    %v7290 = vpop.f32.mrf.mxu0
    %7291 = vdwg.mxu0
    %7292 = vmatpush.bf16.msra.mxu0 %v6659
    %7293 = vmatpush.bf16.msra.mxu0 %v6655
    %7294 = vmatpush.bf16.msra.mxu0 %v6651
    %7295 = vmatpush.bf16.msra.mxu0 %v6647
    %7296 = vmatpush.bf16.msra.mxu0 %v6643
    %7297 = vmatpush.bf16.msra.mxu0 %v6639
    %7298 = vmatpush.bf16.msra.mxu0 %v6635
    %7299 = vmatpush.bf16.msra.mxu0 %v6631
    %7300 = vmatmul.bf16.gmra.mxu0 %v5632
    %v7301 = vpop.f32.mrf.mxu0
    %v7302 = vadd.f32 %v7289, %v7301
    %v7303 = vpop.f32.mrf.mxu0
    %7304 = vdwg.mxu0
    %7305 = vmatpush.bf16.msra.mxu0 %v6691
    %7306 = vmatpush.bf16.msra.mxu0 %v6687
    %7307 = vmatpush.bf16.msra.mxu0 %v6683
    %7308 = vmatpush.bf16.msra.mxu0 %v6679
    %7309 = vmatpush.bf16.msra.mxu0 %v6675
    %7310 = vmatpush.bf16.msra.mxu0 %v6671
    %7311 = vmatpush.bf16.msra.mxu0 %v6667
    %7312 = vmatpush.bf16.msra.mxu0 %v6663
    %7313 = vmatmul.bf16.gmra.mxu0 %v5633
    %v7314 = vpop.f32.mrf.mxu0
    %v7315 = vadd.f32 %v7302, %v7314
    %v7316 = vpop.f32.mrf.mxu0
    %7317 = vdwg.mxu0
    %7318 = vmatpush.bf16.msra.mxu0 %v6723
    %7319 = vmatpush.bf16.msra.mxu0 %v6719
    %7320 = vmatpush.bf16.msra.mxu0 %v6715
    %7321 = vmatpush.bf16.msra.mxu0 %v6711
    %7322 = vmatpush.bf16.msra.mxu0 %v6707
    %7323 = vmatpush.bf16.msra.mxu0 %v6703
    %7324 = vmatpush.bf16.msra.mxu0 %v6699
    %7325 = vmatpush.bf16.msra.mxu0 %v6695
    %7326 = vmatmul.bf16.gmra.mxu0 %v5634
    %v7327 = vpop.f32.mrf.mxu0
    %v7328 = vadd.f32 %v7315, %v7327
    %v7329 = vpop.f32.mrf.mxu0
    %7330 = vdwg.mxu0
    %7331 = vmatpush.bf16.msra.mxu0 %v6755
    %7332 = vmatpush.bf16.msra.mxu0 %v6751
    %7333 = vmatpush.bf16.msra.mxu0 %v6747
    %7334 = vmatpush.bf16.msra.mxu0 %v6743
    %7335 = vmatpush.bf16.msra.mxu0 %v6739
    %7336 = vmatpush.bf16.msra.mxu0 %v6735
    %7337 = vmatpush.bf16.msra.mxu0 %v6731
    %7338 = vmatpush.bf16.msra.mxu0 %v6727
    %7339 = vmatmul.bf16.gmra.mxu0 %v5635
    %v7340 = vpop.f32.mrf.mxu0
    %v7341 = vadd.f32 %v7328, %v7340
    %v7342 = vpop.f32.mrf.mxu0
    %7343 = vdwg.mxu0
    %v7344 = vrot.slane %v7068, 4
    %v7345 = vadd.f32 %v7068, %v7344
    %v7346 = vrot.slane %v7345, 2
    %v7347 = vadd.f32 %v7345, %v7346
    %v7348 = vrot.slane %v7347, 1
    %v7349 = vadd.f32 %v7347, %v7348
    %v7350 = vrot.slane %v7159, 4
    %v7351 = vadd.f32 %v7159, %v7350
    %v7352 = vrot.slane %v7351, 2
    %v7353 = vadd.f32 %v7351, %v7352
    %v7354 = vrot.slane %v7353, 1
    %v7355 = vadd.f32 %v7353, %v7354
    %v7356 = vrot.slane %v7250, 4
    %v7357 = vadd.f32 %v7250, %v7356
    %v7358 = vrot.slane %v7357, 2
    %v7359 = vadd.f32 %v7357, %v7358
    %v7360 = vrot.slane %v7359, 1
    %v7361 = vadd.f32 %v7359, %v7360
    %v7362 = vrot.slane %v7341, 4
    %v7363 = vadd.f32 %v7341, %v7362
    %v7364 = vrot.slane %v7363, 2
    %v7365 = vadd.f32 %v7363, %v7364
    %v7366 = vrot.slane %v7365, 1
    %v7367 = vadd.f32 %v7365, %v7366
    %v7368 = vmul.f32 %v7349, %v2093
    %v7369 = vmul.f32 %v7355, %v2093
    %v7370 = vmul.f32 %v7361, %v2093
    %v7371 = vmul.f32 %v7367, %v2093
    %v7372 = vsub.f32 %v7068, %v7368
    %v7373 = vsub.f32 %v7159, %v7369
    %v7374 = vsub.f32 %v7250, %v7370
    %v7375 = vsub.f32 %v7341, %v7371
    %v7376 = vmul.f32 %v7372, %v7372
    %v7377 = vmul.f32 %v7373, %v7373
    %v7378 = vmul.f32 %v7374, %v7374
    %v7379 = vmul.f32 %v7375, %v7375
    %v7380 = vrot.slane %v7376, 4
    %v7381 = vadd.f32 %v7376, %v7380
    %v7382 = vrot.slane %v7381, 2
    %v7383 = vadd.f32 %v7381, %v7382
    %v7384 = vrot.slane %v7383, 1
    %v7385 = vadd.f32 %v7383, %v7384
    %v7386 = vrot.slane %v7377, 4
    %v7387 = vadd.f32 %v7377, %v7386
    %v7388 = vrot.slane %v7387, 2
    %v7389 = vadd.f32 %v7387, %v7388
    %v7390 = vrot.slane %v7389, 1
    %v7391 = vadd.f32 %v7389, %v7390
    %v7392 = vrot.slane %v7378, 4
    %v7393 = vadd.f32 %v7378, %v7392
    %v7394 = vrot.slane %v7393, 2
    %v7395 = vadd.f32 %v7393, %v7394
    %v7396 = vrot.slane %v7395, 1
    %v7397 = vadd.f32 %v7395, %v7396
    %v7398 = vrot.slane %v7379, 4
    %v7399 = vadd.f32 %v7379, %v7398
    %v7400 = vrot.slane %v7399, 2
    %v7401 = vadd.f32 %v7399, %v7400
    %v7402 = vrot.slane %v7401, 1
    %v7403 = vadd.f32 %v7401, %v7402
    %v7404 = vmul.f32 %v7385, %v2093
    %v7405 = vmul.f32 %v7391, %v2093
    %v7406 = vmul.f32 %v7397, %v2093
    %v7407 = vmul.f32 %v7403, %v2093
    %v7408 = vadd.f32 %v7404, 1e-05
    %v7409 = vadd.f32 %v7405, 1e-05
    %v7410 = vadd.f32 %v7406, 1e-05
    %v7411 = vadd.f32 %v7407, 1e-05
    %v7412 = vrsqrt.pop %v7408
    %v7413 = vmul.f32 %v7412, %v7408
    %v7414 = vmul.f32 %v7413, %v7412
    %v7415 = vmul.f32 0.5, %v7414
    %v7416 = vsub.f32 1.5, %v7415
    %v7417 = vmul.f32 %v7412, %v7416
    %vm7418 = vweird.f32 %v7408
    %vm7419 = vweird.f32 %v7412
    %vm7420 = vmor %vm7418, %vm7419
    %v7421 = vsel %vm7420, %v7412, %v7417
    %v7422 = vrsqrt.pop %v7409
    %v7423 = vmul.f32 %v7422, %v7409
    %v7424 = vmul.f32 %v7423, %v7422
    %v7425 = vmul.f32 0.5, %v7424
    %v7426 = vsub.f32 1.5, %v7425
    %v7427 = vmul.f32 %v7422, %v7426
    %vm7428 = vweird.f32 %v7409
    %vm7429 = vweird.f32 %v7422
    %vm7430 = vmor %vm7428, %vm7429
    %v7431 = vsel %vm7430, %v7422, %v7427
    %v7432 = vrsqrt.pop %v7410
    %v7433 = vmul.f32 %v7432, %v7410
    %v7434 = vmul.f32 %v7433, %v7432
    %v7435 = vmul.f32 0.5, %v7434
    %v7436 = vsub.f32 1.5, %v7435
    %v7437 = vmul.f32 %v7432, %v7436
    %vm7438 = vweird.f32 %v7410
    %vm7439 = vweird.f32 %v7432
    %vm7440 = vmor %vm7438, %vm7439
    %v7441 = vsel %vm7440, %v7432, %v7437
    %v7442 = vrsqrt.pop %v7411
    %v7443 = vmul.f32 %v7442, %v7411
    %v7444 = vmul.f32 %v7443, %v7442
    %v7445 = vmul.f32 0.5, %v7444
    %v7446 = vsub.f32 1.5, %v7445
    %v7447 = vmul.f32 %v7442, %v7446
    %vm7448 = vweird.f32 %v7411
    %vm7449 = vweird.f32 %v7442
    %vm7450 = vmor %vm7448, %vm7449
    %v7451 = vsel %vm7450, %v7442, %v7447
    %v7452 = vmul.f32 %v7372, %v7421
    %v7453 = vmul.f32 %v7373, %v7431
    %v7454 = vmul.f32 %v7374, %v7441
    %v7455 = vmul.f32 %v7375, %v7451
    %v7456 = vperm.slane %v254, 4
    %v7457 = vperm.slane %v255, 4
    %v7458 = vperm.slane %v256, 4
    %v7459 = vperm.slane %v257, 4
    %v7460 = vmul.f32 %v7452, %v7456
    %v7461 = vmul.f32 %v7453, %v7457
    %v7462 = vmul.f32 %v7454, %v7458
    %v7463 = vmul.f32 %v7455, %v7459
    %v7464 = vperm.slane %v254, 5
    %v7465 = vperm.slane %v255, 5
    %v7466 = vperm.slane %v256, 5
    %v7467 = vperm.slane %v257, 5
    %v7468 = vadd.f32 %v7460, %v7464
    %v7469 = vadd.f32 %v7461, %v7465
    %v7470 = vadd.f32 %v7462, %v7466
    %v7471 = vadd.f32 %v7463, %v7467
    %v7472 = vmax.f32 %v7468, 0.0
    %v7473 = vmax.f32 %v7469, 0.0
    %v7474 = vmax.f32 %v7470, 0.0
    %v7475 = vmax.f32 %v7471, 0.0
    %s7476 = smul.u32 %s269, 1
    %s7477 = sshll.u32 %s7476, 4
    %7478 = dma.done %s86, %s7477
    %v7479 = vpack.c.bf16 %v7472, %v7472
    %v7480 = vpack.c.bf16 %v7473, %v7473
    %v7481 = vpack.c.bf16 %v7474, %v7474
    %v7482 = vpack.c.bf16 %v7475, %v7475
    %v7483 = vld [vmem:[#allocation5] sm:$0xf]
    %v7484 = vld [vmem:[#allocation5 + $0x4] sm:$0xf]
    %v7485 = vld [vmem:[#allocation5 + $0x8] sm:$0xf]
    %v7486 = vld [vmem:[#allocation5 + $0xc] sm:$0xf]
    %v7487 = vld [vmem:[#allocation5 + $0x10] sm:$0xf]
    %v7488 = vld [vmem:[#allocation5 + $0x14] sm:$0xf]
    %v7489 = vld [vmem:[#allocation5 + $0x18] sm:$0xf]
    %v7490 = vld [vmem:[#allocation5 + $0x1c] sm:$0xf]
    %v7491 = vld [vmem:[#allocation5 + $0x20] sm:$0xf]
    %v7492 = vld [vmem:[#allocation5 + $0x24] sm:$0xf]
    %v7493 = vld [vmem:[#allocation5 + $0x28] sm:$0xf]
    %v7494 = vld [vmem:[#allocation5 + $0x2c] sm:$0xf]
    %v7495 = vld [vmem:[#allocation5 + $0x30] sm:$0xf]
    %v7496 = vld [vmem:[#allocation5 + $0x34] sm:$0xf]
    %v7497 = vld [vmem:[#allocation5 + $0x38] sm:$0xf]
    %v7498 = vld [vmem:[#allocation5 + $0x3c] sm:$0xf]
    %v7499 = vld [vmem:[#allocation5 + $0x40] sm:$0xf]
    %v7500 = vld [vmem:[#allocation5 + $0x44] sm:$0xf]
    %v7501 = vld [vmem:[#allocation5 + $0x48] sm:$0xf]
    %v7502 = vld [vmem:[#allocation5 + $0x4c] sm:$0xf]
    %v7503 = vld [vmem:[#allocation5 + $0x50] sm:$0xf]
    %v7504 = vld [vmem:[#allocation5 + $0x54] sm:$0xf]
    %v7505 = vld [vmem:[#allocation5 + $0x58] sm:$0xf]
    %v7506 = vld [vmem:[#allocation5 + $0x5c] sm:$0xf]
    %v7507 = vld [vmem:[#allocation5 + $0x60] sm:$0xf]
    %v7508 = vld [vmem:[#allocation5 + $0x64] sm:$0xf]
    %v7509 = vld [vmem:[#allocation5 + $0x68] sm:$0xf]
    %v7510 = vld [vmem:[#allocation5 + $0x6c] sm:$0xf]
    %v7511 = vld [vmem:[#allocation5 + $0x70] sm:$0xf]
    %v7512 = vld [vmem:[#allocation5 + $0x74] sm:$0xf]
    %v7513 = vld [vmem:[#allocation5 + $0x78] sm:$0xf]
    %v7514 = vld [vmem:[#allocation5 + $0x7c] sm:$0xf]
    %v7515 = vld [vmem:[#allocation5 + $0x80] sm:$0xf]
    %v7516 = vld [vmem:[#allocation5 + $0x84] sm:$0xf]
    %v7517 = vld [vmem:[#allocation5 + $0x88] sm:$0xf]
    %v7518 = vld [vmem:[#allocation5 + $0x8c] sm:$0xf]
    %v7519 = vld [vmem:[#allocation5 + $0x90] sm:$0xf]
    %v7520 = vld [vmem:[#allocation5 + $0x94] sm:$0xf]
    %v7521 = vld [vmem:[#allocation5 + $0x98] sm:$0xf]
    %v7522 = vld [vmem:[#allocation5 + $0x9c] sm:$0xf]
    %v7523 = vld [vmem:[#allocation5 + $0xa0] sm:$0xf]
    %v7524 = vld [vmem:[#allocation5 + $0xa4] sm:$0xf]
    %v7525 = vld [vmem:[#allocation5 + $0xa8] sm:$0xf]
    %v7526 = vld [vmem:[#allocation5 + $0xac] sm:$0xf]
    %v7527 = vld [vmem:[#allocation5 + $0xb0] sm:$0xf]
    %v7528 = vld [vmem:[#allocation5 + $0xb4] sm:$0xf]
    %v7529 = vld [vmem:[#allocation5 + $0xb8] sm:$0xf]
    %v7530 = vld [vmem:[#allocation5 + $0xbc] sm:$0xf]
    %v7531 = vld [vmem:[#allocation5 + $0xc0] sm:$0xf]
    %v7532 = vld [vmem:[#allocation5 + $0xc4] sm:$0xf]
    %v7533 = vld [vmem:[#allocation5 + $0xc8] sm:$0xf]
    %v7534 = vld [vmem:[#allocation5 + $0xcc] sm:$0xf]
    %v7535 = vld [vmem:[#allocation5 + $0xd0] sm:$0xf]
    %v7536 = vld [vmem:[#allocation5 + $0xd4] sm:$0xf]
    %v7537 = vld [vmem:[#allocation5 + $0xd8] sm:$0xf]
    %v7538 = vld [vmem:[#allocation5 + $0xdc] sm:$0xf]
    %v7539 = vld [vmem:[#allocation5 + $0xe0] sm:$0xf]
    %v7540 = vld [vmem:[#allocation5 + $0xe4] sm:$0xf]
    %v7541 = vld [vmem:[#allocation5 + $0xe8] sm:$0xf]
    %v7542 = vld [vmem:[#allocation5 + $0xec] sm:$0xf]
    %v7543 = vld [vmem:[#allocation5 + $0xf0] sm:$0xf]
    %v7544 = vld [vmem:[#allocation5 + $0xf4] sm:$0xf]
    %v7545 = vld [vmem:[#allocation5 + $0xf8] sm:$0xf]
    %v7546 = vld [vmem:[#allocation5 + $0xfc] sm:$0xf]
    %v7547 = vperm.slane %v254, 6
    %v7612 = vunpack.c.l.b16 %v7483
    %v7613 = vunpack.c.l.b16 %v7484
    %v7614 = vunpack.c.l.b16 %v7485
    %v7615 = vunpack.c.l.b16 %v7486
    %v7616 = vunpack.c.l.b16 %v7487
    %v7617 = vunpack.c.l.b16 %v7488
    %v7618 = vunpack.c.l.b16 %v7489
    %v7619 = vunpack.c.l.b16 %v7490
    %v7620 = vunpack.c.l.b16 %v7491
    %v7621 = vunpack.c.l.b16 %v7492
    %v7622 = vunpack.c.l.b16 %v7493
    %v7623 = vunpack.c.l.b16 %v7494
    %v7624 = vunpack.c.l.b16 %v7495
    %v7625 = vunpack.c.l.b16 %v7496
    %v7626 = vunpack.c.l.b16 %v7497
    %v7627 = vunpack.c.l.b16 %v7498
    %v7628 = vunpack.c.l.b16 %v7499
    %v7629 = vunpack.c.l.b16 %v7500
    %v7630 = vunpack.c.l.b16 %v7501
    %v7631 = vunpack.c.l.b16 %v7502
    %v7632 = vunpack.c.l.b16 %v7503
    %v7633 = vunpack.c.l.b16 %v7504
    %v7634 = vunpack.c.l.b16 %v7505
    %v7635 = vunpack.c.l.b16 %v7506
    %v7636 = vunpack.c.l.b16 %v7507
    %v7637 = vunpack.c.l.b16 %v7508
    %v7638 = vunpack.c.l.b16 %v7509
    %v7639 = vunpack.c.l.b16 %v7510
    %v7640 = vunpack.c.l.b16 %v7511
    %v7641 = vunpack.c.l.b16 %v7512
    %v7642 = vunpack.c.l.b16 %v7513
    %v7643 = vunpack.c.l.b16 %v7514
    %v7644 = vunpack.c.l.b16 %v7515
    %v7645 = vunpack.c.l.b16 %v7516
    %v7646 = vunpack.c.l.b16 %v7517
    %v7647 = vunpack.c.l.b16 %v7518
    %v7648 = vunpack.c.l.b16 %v7519
    %v7649 = vunpack.c.l.b16 %v7520
    %v7650 = vunpack.c.l.b16 %v7521
    %v7651 = vunpack.c.l.b16 %v7522
    %v7652 = vunpack.c.l.b16 %v7523
    %v7653 = vunpack.c.l.b16 %v7524
    %v7654 = vunpack.c.l.b16 %v7525
    %v7655 = vunpack.c.l.b16 %v7526
    %v7656 = vunpack.c.l.b16 %v7527
    %v7657 = vunpack.c.l.b16 %v7528
    %v7658 = vunpack.c.l.b16 %v7529
    %v7659 = vunpack.c.l.b16 %v7530
    %v7660 = vunpack.c.l.b16 %v7531
    %v7661 = vunpack.c.l.b16 %v7532
    %v7662 = vunpack.c.l.b16 %v7533
    %v7663 = vunpack.c.l.b16 %v7534
    %v7664 = vunpack.c.l.b16 %v7535
    %v7665 = vunpack.c.l.b16 %v7536
    %v7666 = vunpack.c.l.b16 %v7537
    %v7667 = vunpack.c.l.b16 %v7538
    %v7668 = vunpack.c.l.b16 %v7539
    %v7669 = vunpack.c.l.b16 %v7540
    %v7670 = vunpack.c.l.b16 %v7541
    %v7671 = vunpack.c.l.b16 %v7542
    %v7672 = vunpack.c.l.b16 %v7543
    %v7673 = vunpack.c.l.b16 %v7544
    %v7674 = vunpack.c.l.b16 %v7545
    %v7675 = vunpack.c.l.b16 %v7546
    %v7676 = vpack.c.b16 %v7613, %v7612
    %v7677 = vpack.c.b16 %v7615, %v7614
    %v7678 = vpack.c.b16 %v7617, %v7616
    %v7679 = vpack.c.b16 %v7619, %v7618
    %v7680 = vpack.c.b16 %v7621, %v7620
    %v7681 = vpack.c.b16 %v7623, %v7622
    %v7682 = vpack.c.b16 %v7625, %v7624
    %v7683 = vpack.c.b16 %v7627, %v7626
    %v7684 = vpack.c.b16 %v7629, %v7628
    %v7685 = vpack.c.b16 %v7631, %v7630
    %v7686 = vpack.c.b16 %v7633, %v7632
    %v7687 = vpack.c.b16 %v7635, %v7634
    %v7688 = vpack.c.b16 %v7637, %v7636
    %v7689 = vpack.c.b16 %v7639, %v7638
    %v7690 = vpack.c.b16 %v7641, %v7640
    %v7691 = vpack.c.b16 %v7643, %v7642
    %v7692 = vpack.c.b16 %v7645, %v7644
    %v7693 = vpack.c.b16 %v7647, %v7646
    %v7694 = vpack.c.b16 %v7649, %v7648
    %v7695 = vpack.c.b16 %v7651, %v7650
    %v7696 = vpack.c.b16 %v7653, %v7652
    %v7697 = vpack.c.b16 %v7655, %v7654
    %v7698 = vpack.c.b16 %v7657, %v7656
    %v7699 = vpack.c.b16 %v7659, %v7658
    %v7700 = vpack.c.b16 %v7661, %v7660
    %v7701 = vpack.c.b16 %v7663, %v7662
    %v7702 = vpack.c.b16 %v7665, %v7664
    %v7703 = vpack.c.b16 %v7667, %v7666
    %v7704 = vpack.c.b16 %v7669, %v7668
    %v7705 = vpack.c.b16 %v7671, %v7670
    %v7706 = vpack.c.b16 %v7673, %v7672
    %v7707 = vpack.c.b16 %v7675, %v7674
    %7740 = vmatpush.bf16.msra.mxu0 %v7683
    %7741 = vmatpush.bf16.msra.mxu0 %v7682
    %7742 = vmatpush.bf16.msra.mxu0 %v7681
    %7743 = vmatpush.bf16.msra.mxu0 %v7680
    %7744 = vmatpush.bf16.msra.mxu0 %v7679
    %7745 = vmatpush.bf16.msra.mxu0 %v7678
    %7746 = vmatpush.bf16.msra.mxu0 %v7677
    %7747 = vmatpush.bf16.msra.mxu0 %v7676
    %7748 = vmatmul.bf16.gmra.mxu0 %v7479
    %v7749 = vpop.f32.mrf.mxu0
    %v7750 = vadd.f32 %v7547, %v7749
    %v7751 = vpop.f32.mrf.mxu0
    %7752 = vdwg.mxu0
    %7753 = vmatpush.bf16.msra.mxu0 %v7691
    %7754 = vmatpush.bf16.msra.mxu0 %v7690
    %7755 = vmatpush.bf16.msra.mxu0 %v7689
    %7756 = vmatpush.bf16.msra.mxu0 %v7688
    %7757 = vmatpush.bf16.msra.mxu0 %v7687
    %7758 = vmatpush.bf16.msra.mxu0 %v7686
    %7759 = vmatpush.bf16.msra.mxu0 %v7685
    %7760 = vmatpush.bf16.msra.mxu0 %v7684
    %7761 = vmatmul.bf16.gmra.mxu0 %v7480
    %v7762 = vpop.f32.mrf.mxu0
    %v7763 = vadd.f32 %v7750, %v7762
    %v7764 = vpop.f32.mrf.mxu0
    %7765 = vdwg.mxu0
    %7766 = vmatpush.bf16.msra.mxu0 %v7699
    %7767 = vmatpush.bf16.msra.mxu0 %v7698
    %7768 = vmatpush.bf16.msra.mxu0 %v7697
    %7769 = vmatpush.bf16.msra.mxu0 %v7696
    %7770 = vmatpush.bf16.msra.mxu0 %v7695
    %7771 = vmatpush.bf16.msra.mxu0 %v7694
    %7772 = vmatpush.bf16.msra.mxu0 %v7693
    %7773 = vmatpush.bf16.msra.mxu0 %v7692
    %7774 = vmatmul.bf16.gmra.mxu0 %v7481
    %v7775 = vpop.f32.mrf.mxu0
    %v7776 = vadd.f32 %v7763, %v7775
    %v7777 = vpop.f32.mrf.mxu0
    %7778 = vdwg.mxu0
    %7779 = vmatpush.bf16.msra.mxu0 %v7707
    %7780 = vmatpush.bf16.msra.mxu0 %v7706
    %7781 = vmatpush.bf16.msra.mxu0 %v7705
    %7782 = vmatpush.bf16.msra.mxu0 %v7704
    %7783 = vmatpush.bf16.msra.mxu0 %v7703
    %7784 = vmatpush.bf16.msra.mxu0 %v7702
    %7785 = vmatpush.bf16.msra.mxu0 %v7701
    %7786 = vmatpush.bf16.msra.mxu0 %v7700
    %7787 = vmatmul.bf16.gmra.mxu0 %v7482
    %v7788 = vpop.f32.mrf.mxu0
    %v7789 = vadd.f32 %v7776, %v7788
    %v7790 = vpop.f32.mrf.mxu0
    %7791 = vdwg.mxu0
    %7792 = vst [vmem:[#allocation12] sm:$0xff] %v7789
    // Predicated region
    $region34: #{tpu_custom_call.1} parent=1 // pred_check
      _
    $region35: #{tpu_custom_call.1} parent=1 // pred_check_branch
      %7794 = sbr.rel (0) target = $region37
    $region36: #{tpu_custom_call.1} parent=1 // pred_region
      %7796 = vsyncadd [#allocation9], 0
      %s7798 = sshll.u32 [#allocation12], 4
      %s7799 = int_to_ptr.vmem [resolvable:$true] %s7798
      %s7800 = sshll.u32 %s6, 4
      %s7801 = int_to_ptr.hbm [resolvable:$true] %s7800
      %7803 = dma.vmem_to_hbm [thread:$0]  %s7799, 128, %s7801, [#allocation9]
    $region37: #{tpu_custom_call.1} parent=1 // pred_fallthru
      _
    // Predicated region
    $region38: #{tpu_custom_call.1} parent=1 // pred_check
      _
    $region39: #{tpu_custom_call.1} parent=1 // pred_check_branch
      %7805 = sbr.rel (0) target = $region41
    $region40: #{tpu_custom_call.1} parent=1 // pred_region
      %7807 = dma.done [#allocation9], 128
    $region41: #{tpu_custom_call.1} parent=1 // pred_fallthru
      _
    %7808 = vsyncpa [#allocation8], 1
    %7809 = vsyncpa [#allocation11], 1
    %7810 = vsyncpa [#allocation9], 1
  %7811 = vsyncmov [#allocation6]
  %s7812 = vpop.sfrf %7811
  %p7813 = scmp.eq.s32.totalorder %s7812, 0
  %p7814 = pneg %p7813
  %7816 = shalt.err (%p7814)
  %s7817 = scalar_lea.sflag [#allocation6], 1
  %7818 = vsyncmov %s7817
  %s7819 = vpop.sfrf %7818
  %p7820 = scmp.eq.s32.totalorder %s7819, 0
  %p7821 = pneg %p7820
  %7823 = shalt.err (%p7821)
  %s7824 = scalar_lea.sflag [#allocation6], 2
  %7825 = vsyncmov %s7824
  %s7826 = vpop.sfrf %7825
  %p7827 = scmp.eq.s32.totalorder %s7826, 0
  %p7828 = pneg %p7827
  %7830 = shalt.err (%p7828)
  %s7831 = scalar_lea.sflag [#allocation6], 3
  %7832 = vsyncmov %s7831
  %s7833 = vpop.sfrf %7832
  %p7834 = scmp.eq.s32.totalorder %s7833, 0
  %p7835 = pneg %p7834
  %7837 = shalt.err (%p7835)

</llo_original>
